<compile_context>
chip_gen: v6e
topology: v6e:2x2x1
jax: 0.10.0
libtpu: 0.0.40
codegen_flags: <defaults>
</compile_context>

<pallas_src>
import functools

import jax
import jax.numpy as jnp
from jax.experimental import pallas as pl
from jax.experimental.pallas import tpu as pltpu

LANE = 128          # lane width: every Cout is padded up to this
LARGE_TILE = 512    # row tile for the big (M = N*H*W = 2048) convs


def _round_up(x, m):
    return ((x + m - 1) // m) * m


def _choose_row_tile(m):
    """Row tile: big tiles for big M, full-extent tiles for tiny deep blocks."""
    m8 = _round_up(m, 8)
    if m8 >= 2 * LARGE_TILE:
        return LARGE_TILE                      # grid >= 2 -> both v7x TCs busy
    if m8 >= 256:
        return _round_up(m8 // 2, 8)           # split in two (keep grid >= 2)
    return m8                                  # tiny M: single full-extent tile


# ---------------------------------------------------------------------------
# Pallas kernel: one (tile_m, K) x (K, 128) tile matmul with fused epilogue
# ---------------------------------------------------------------------------
def _conv_matmul_kernel(a_ref, w_ref, shift_ref, o_ref, *, relu):
    acc = jnp.dot(a_ref[...], w_ref[...], preferred_element_type=jnp.float32)
    acc = acc + shift_ref[...]
    if relu:
        acc = jnp.maximum(acc, 0.0)
    o_ref[...] = acc.astype(o_ref.dtype)


def _matmul_epilogue(patches, w, shift, relu, cout):
    """patches: [M, K] f32, w: [K, Cpad] bf16, shift: [Cpad] f32 -> [M, cout] f32."""
    M, K = patches.shape
    _, Cp = w.shape                            # Cp is Cout padded to 128

    tile_m = _choose_row_tile(M)
    m_pad = _round_up(M, tile_m)
    if m_pad != M:
        patches = jnp.pad(patches, ((0, m_pad - M), (0, 0)))

    patches = patches.astype(jnp.bfloat16)     # halve DMA bytes, native MXU rate
    w = w.astype(jnp.bfloat16)

    kernel = functools.partial(_conv_matmul_kernel, relu=relu)
    out = pl.pallas_call(
        kernel,
        out_shape=jax.ShapeDtypeStruct((m_pad, Cp), jnp.float32),
        grid_spec=pltpu.PrefetchScalarGridSpec(
            num_scalar_prefetch=0,
            grid=(m_pad // tile_m,),
            in_specs=[
                pl.BlockSpec((tile_m, K), lambda i: (i, 0)),
                pl.BlockSpec((K, Cp), lambda i: (0, 0)),
                pl.BlockSpec((1, Cp), lambda i: (0, 0)),
            ],
            out_specs=pl.BlockSpec((tile_m, Cp), lambda i: (i, 0)),
        ),
        compiler_params=pltpu.CompilerParams(
            dimension_semantics=("parallel",)),
    )(patches, w, shift.reshape(1, Cp))
    return out[:M, :cout]


# ---------------------------------------------------------------------------
# Conv2d = im2col (glue) + Pallas matmul kernel (hot path)
# ---------------------------------------------------------------------------
def _im2col(x, kh, kw, stride, pad):
    """x: [N, H, W, C] -> ([N*Ho*Wo, kh*kw*C], Ho, Wo)."""
    # TODO(synk): im2col materializes a kh*kw-times-larger patch array in HBM;
    # an in-kernel tap loop (halo DMA + kh*kw shifted dots into a VMEM
    # accumulator) would remove that bandwidth blow-up entirely.
    x = jnp.pad(x, ((0, 0), (pad, pad), (pad, pad), (0, 0)))
    N, Hp, Wp, C = x.shape
    Ho = (Hp - kh) // stride + 1
    Wo = (Wp - kw) // stride + 1
    cols = []
    for i in range(kh):
        for j in range(kw):
            cols.append(x[:, i:i + stride * Ho:stride,
                          j:j + stride * Wo:stride, :])
    patches = jnp.concatenate(cols, axis=-1)          # (i, j, c) ordering
    return patches.reshape(N * Ho * Wo, kh * kw * C), Ho, Wo


def conv2d(x, p, stride=1, pad=1, relu=False):
    """x: NHWC; p = {'w': [KH,KW,Cin,Cpad] bf16, 'shift': [Cpad] f32, 'cout': int}."""
    w = p["w"]
    kh, kw, cin, cpad = w.shape
    cout = p["cout"]
    patches, Ho, Wo = _im2col(x, kh, kw, stride, pad)
    y = _matmul_epilogue(patches, w.reshape(kh * kw * cin, cpad),
                         p["shift"], relu, cout)
    return y.reshape(x.shape[0], Ho, Wo, cout)


# ---------------------------------------------------------------------------
# Deterministic parameter construction (synthetic weights, no checkpoint)
# ---------------------------------------------------------------------------
def _raw_conv(key, kh, kw, cin, cout, bias=True, bn=False):
    k1, k2, k3 = jax.random.split(key, 3)
    fan_in = kh * kw * cin
    w = jax.random.normal(k1, (kh, kw, cin, cout), jnp.float32) / jnp.sqrt(fan_in)
    if bn:  # inference-mode BatchNorm folded into (scale, shift)
        gamma = 1.0 + 0.1 * jax.random.normal(k2, (cout,), jnp.float32)
        beta = 0.1 * jax.random.normal(k3, (cout,), jnp.float32)
        mean = jnp.zeros((cout,), jnp.float32)
        var = jnp.ones((cout,), jnp.float32)
        scale = gamma / jnp.sqrt(var + 1e-5)
        shift = beta - mean * scale
    else:
        scale = jnp.ones((cout,), jnp.float32)
        shift = (0.1 * jax.random.normal(k2, (cout,), jnp.float32)
                 if bias else jnp.zeros((cout,), jnp.float32))
    return w, scale, shift


def _fold_pad(w, scale, shift):
    """Fold scale into weight columns, zero-pad Cout -> 128, cast weights bf16."""
    kh, kw, cin, cout = w.shape
    w = w * scale[None, None, None, :]
    cpad = _round_up(cout, LANE)
    w = jnp.pad(w, ((0, 0), (0, 0), (0, 0), (0, cpad - cout))).astype(jnp.bfloat16)
    shift = jnp.pad(shift, (0, cpad - cout)).astype(jnp.float32)
    return {"w": w, "shift": shift, "cout": cout}


def _init_conv(key, kh, kw, cin, cout, bias=True, bn=False):
    return _fold_pad(*_raw_conv(key, kh, kw, cin, cout, bias=bias, bn=bn))


def init_params(key, in_ch, block_channel, mff_ch, num_tasks):
    keys = jax.random.split(key, 9 + num_tasks)
    params = {}

    # Encoder E: 4 strided 3x3 conv blocks
    enc, c = [], in_ch
    for i, bc in enumerate(block_channel):
        enc.append(_init_conv(keys[i], 3, 3, c, bc, bias=True))
        c = bc
    params["E"] = enc

    # MFF
    mff = {"up": []}
    for i, bc in enumerate(block_channel):
        mff["up"].append(_init_conv(keys[4 + i], 3, 3, bc, mff_ch,
                                    bias=False, bn=True))
    mff["fuse"] = _init_conv(keys[8], 5, 5, mff_ch * 4, mff_ch * 4,
                             bias=False, bn=True)
    params["MFF"] = mff

    # Uncertainty_depth task heads, batched into two convs:
    #   c1: per-task weights concatenated along Cout (independent heads share input)
    #   c2: block-diagonal weights (task t's 2 outputs only see task t's 16 chans)
    mff4 = mff_ch * 4
    c1_w, c1_s, c1_b = [], [], []
    c2_parts = []
    for t in range(num_tasks):
        k1, k2 = jax.random.split(keys[9 + t], 2)
        w1, s1, b1 = _raw_conv(k1, 3, 3, mff4, mff4, bias=True)
        w2, s2, b2 = _raw_conv(k2, 3, 3, mff4, 2, bias=True)
        c1_w.append(w1); c1_s.append(s1); c1_b.append(b1)
        c2_parts.append((w2, s2, b2))
    c1_w = jnp.concatenate(c1_w, axis=-1)
    c1_s = jnp.concatenate(c1_s, axis=-1)
    c1_b = jnp.concatenate(c1_b, axis=-1)

    c2_w = jnp.zeros((3, 3, num_tasks * mff4, num_tasks * 2), jnp.float32)
    c2_s = jnp.zeros((num_tasks * 2,), jnp.float32)
    c2_b = jnp.zeros((num_tasks * 2,), jnp.float32)
    for t, (w2, s2, b2) in enumerate(c2_parts):
        c2_w = c2_w.at[:, :, t * mff4:(t + 1) * mff4, t * 2:(t + 1) * 2].set(w2)
        c2_s = c2_s.at[t * 2:(t + 1) * 2].set(s2)
        c2_b = c2_b.at[t * 2:(t + 1) * 2].set(b2)

    params["tasks"] = {
        "c1": _fold_pad(c1_w, c1_s, c1_b),
        "c2": _fold_pad(c2_w, c2_s, c2_b),
        "num_tasks": num_tasks,
        "per_task_out": 2,
    }
    return params


# ---------------------------------------------------------------------------
# model_ll forward
# ---------------------------------------------------------------------------
def model_ll_forward(params, x_nchw):
    x = jnp.transpose(x_nchw, (0, 2, 3, 1))  # NCHW -> NHWC

    # --- Encoder E: x_block1..4 ---
    blocks, h = [], x
    for p in params["E"]:
        h = conv2d(h, p, stride=2, pad=1, relu=True)
        blocks.append(h)
    x_block1 = blocks[0]

    # --- MFF at size [2*H1, 2*W1] ---
    size = (x_block1.shape[1] * 2, x_block1.shape[2] * 2)
    ups = []
    for blk, p in zip(blocks, params["MFF"]["up"]):
        n, _, _, c = blk.shape
        # TODO(synk): bilinear upsample kept in plain JAX (interpolation glue).
        blk_up = jax.image.resize(blk, (n, size[0], size[1], c),
                                  method="bilinear")
        ups.append(conv2d(blk_up, p, stride=1, pad=1, relu=True))
    cat = jnp.concatenate(ups, axis=-1)
    x_mff = conv2d(cat, params["MFF"]["fuse"], stride=1, pad=2, relu=True)

    # --- per-task Uncertainty_depth heads (batched: one pallas_call per layer) ---
    tp = params["tasks"]
    t1 = conv2d(x_mff, tp["c1"], stride=1, pad=1, relu=True)   # all heads' c1
    t2 = conv2d(t1, tp["c2"], stride=1, pad=1, relu=False)     # block-diag c2
    out = {}
    oc = tp["per_task_out"]
    for i in range(tp["num_tasks"]):
        out[i] = jnp.transpose(t2[..., i * oc:(i + 1) * oc], (0, 3, 1, 2))
    return out, jnp.transpose(x_mff, (0, 3, 1, 2))


if __name__ == "__main__":
    key = jax.random.PRNGKey(0)
    pkey, xkey = jax.random.split(key)

    block_channel = [8, 16, 32, 64]
    num_tasks = 2
    params = init_params(pkey, in_ch=3, block_channel=block_channel,
                         mff_ch=4, num_tasks=num_tasks)

    x = jax.random.normal(xkey, (2, 3, 32, 32), jnp.float32)  # NCHW input

    # params are closed over (they contain static Python ints like 'cout').
    fwd = jax.jit(lambda inp: model_ll_forward(params, inp))
    out, x_mff = fwd(x)
    jax.block_until_ready((out, x_mff))

    assert x_mff.shape == (2, 16, 32, 32)
    for i in range(num_tasks):
        assert out[i].shape == (2, 2, 32, 32)
    print("KERNEL_OK")
</pallas_src>

<mosaic_0001>
module attributes {stable_mosaic.version = 11 : i64} {
  func.func @_conv_matmul_kernel(%arg0: i32, %arg1: memref<256x27xbf16, #tpu.memory_space<vmem>>, %arg2: memref<27x128xbf16, #tpu.memory_space<vmem>>, %arg3: memref<1x128xf32, #tpu.memory_space<vmem>>, %arg4: memref<256x128xf32, #tpu.memory_space<vmem>>) attributes {dimension_semantics = [#tpu.dimension_semantics<parallel>], iteration_bounds = array<i64: 2>, scalar_prefetch = 0 : i64, scratch_operands = 0 : i64, tpu.core_type = #tpu.core_type<tc>, window_params = [{transform_indices = @transform_0, window_bounds = array<i64: 256, 27>}, {pipeline_mode = #tpu.pipeline_mode<synchronous>, transform_indices = @transform_1, window_bounds = array<i64: 27, 128>}, {pipeline_mode = #tpu.pipeline_mode<synchronous>, transform_indices = @transform_2, window_bounds = array<i64: 1, 128>}, {transform_indices = @transform_3, window_bounds = array<i64: 256, 128>}]} {
    %c0 = arith.constant 0 : index
    %c0_0 = arith.constant 0 : index
    %0 = vector.load %arg1[%c0, %c0_0] : memref<256x27xbf16, #tpu.memory_space<vmem>>, vector<256x27xbf16>
    %c0_1 = arith.constant 0 : index
    %c0_2 = arith.constant 0 : index
    %1 = vector.load %arg2[%c0_1, %c0_2] : memref<27x128xbf16, #tpu.memory_space<vmem>>, vector<27x128xbf16>
    %cst = arith.constant dense<0.000000e+00> : vector<256x128xf32>
    %2 = tpu.matmul %0, %1, %cst {dimension_numbers = #tpu.dot_dimension_numbers<[1], [0], [0], [1], [0, 0, 1, 1], [], []>} : vector<256x27xbf16>, vector<27x128xbf16>, vector<256x128xf32> -> vector<256x128xf32>
    %c0_3 = arith.constant 0 : index
    %c0_4 = arith.constant 0 : index
    %3 = vector.load %arg3[%c0_3, %c0_4] : memref<1x128xf32, #tpu.memory_space<vmem>>, vector<1x128xf32>
    %4 = vector.broadcast %3 : vector<1x128xf32> to vector<256x128xf32>
    %5 = arith.addf %2, %4 : vector<256x128xf32>
    %cst_5 = arith.constant 0.000000e+00 : f32
    %6 = vector.broadcast %cst_5 : f32 to vector<256x128xf32>
    %7 = arith.maximumf %5, %6 : vector<256x128xf32>
    %c0_6 = arith.constant 0 : index
    %c0_7 = arith.constant 0 : index
    %8 = vector.load %arg4[%c0_6, %c0_7] : memref<256x128xf32, #tpu.memory_space<vmem>>, vector<256x128xf32>
    tpu.vector_store %arg4[%c0_6, %c0_7], %7 {strides = array<i32>} : memref<256x128xf32, #tpu.memory_space<vmem>>, vector<256x128xf32>,
    return
  }
  func.func @transform_0(%arg0: i32) -> (i32, i32) {
    %c0_i32 = arith.constant 0 : i32
    %c0_i32_0 = arith.constant 0 : i32
    return %arg0, %c0_i32 : i32, i32
  }
  func.func @transform_1(%arg0: i32) -> (i32, i32) {
    %c0_i32 = arith.constant 0 : i32
    %c0_i32_0 = arith.constant 0 : i32
    %c0_i32_1 = arith.constant 0 : i32
    return %c0_i32, %c0_i32_0 : i32, i32
  }
  func.func @transform_2(%arg0: i32) -> (i32, i32) {
    %c0_i32 = arith.constant 0 : i32
    %c0_i32_0 = arith.constant 0 : i32
    %c0_i32_1 = arith.constant 0 : i32
    return %c0_i32, %c0_i32_0 : i32, i32
  }
  func.func @transform_3(%arg0: i32) -> (i32, i32) {
    %c0_i32 = arith.constant 0 : i32
    %c0_i32_0 = arith.constant 0 : i32
    return %arg0, %c0_i32 : i32, i32
  }
}

module attributes {stable_mosaic.version = 11 : i64} {
  func.func @_conv_matmul_kernel(%arg0: i32, %arg1: memref<128x72xbf16, #tpu.memory_space<vmem>>, %arg2: memref<72x128xbf16, #tpu.memory_space<vmem>>, %arg3: memref<1x128xf32, #tpu.memory_space<vmem>>, %arg4: memref<128x128xf32, #tpu.memory_space<vmem>>) attributes {dimension_semantics = [#tpu.dimension_semantics<parallel>], iteration_bounds = array<i64: 1>, scalar_prefetch = 0 : i64, scratch_operands = 0 : i64, tpu.core_type = #tpu.core_type<tc>, window_params = [{transform_indices = @transform_0, window_bounds = array<i64: 128, 72>}, {pipeline_mode = #tpu.pipeline_mode<synchronous>, transform_indices = @transform_1, window_bounds = array<i64: 72, 128>}, {pipeline_mode = #tpu.pipeline_mode<synchronous>, transform_indices = @transform_2, window_bounds = array<i64: 1, 128>}, {transform_indices = @transform_3, window_bounds = array<i64: 128, 128>}]} {
    %c0 = arith.constant 0 : index
    %c0_0 = arith.constant 0 : index
    %0 = vector.load %arg1[%c0, %c0_0] : memref<128x72xbf16, #tpu.memory_space<vmem>>, vector<128x72xbf16>
    %c0_1 = arith.constant 0 : index
    %c0_2 = arith.constant 0 : index
    %1 = vector.load %arg2[%c0_1, %c0_2] : memref<72x128xbf16, #tpu.memory_space<vmem>>, vector<72x128xbf16>
    %cst = arith.constant dense<0.000000e+00> : vector<128x128xf32>
    %2 = tpu.matmul %0, %1, %cst {dimension_numbers = #tpu.dot_dimension_numbers<[1], [0], [0], [1], [0, 0, 1, 1], [], []>} : vector<128x72xbf16>, vector<72x128xbf16>, vector<128x128xf32> -> vector<128x128xf32>
    %c0_3 = arith.constant 0 : index
    %c0_4 = arith.constant 0 : index
    %3 = vector.load %arg3[%c0_3, %c0_4] : memref<1x128xf32, #tpu.memory_space<vmem>>, vector<1x128xf32>
    %4 = vector.broadcast %3 : vector<1x128xf32> to vector<128x128xf32>
    %5 = arith.addf %2, %4 : vector<128x128xf32>
    %cst_5 = arith.constant 0.000000e+00 : f32
    %6 = vector.broadcast %cst_5 : f32 to vector<128x128xf32>
    %7 = arith.maximumf %5, %6 : vector<128x128xf32>
    %c0_6 = arith.constant 0 : index
    %c0_7 = arith.constant 0 : index
    %8 = vector.load %arg4[%c0_6, %c0_7] : memref<128x128xf32, #tpu.memory_space<vmem>>, vector<128x128xf32>
    tpu.vector_store %arg4[%c0_6, %c0_7], %7 {strides = array<i32>} : memref<128x128xf32, #tpu.memory_space<vmem>>, vector<128x128xf32>,
    return
  }
  func.func @transform_0(%arg0: i32) -> (i32, i32) {
    %c0_i32 = arith.constant 0 : i32
    %c0_i32_0 = arith.constant 0 : i32
    return %arg0, %c0_i32 : i32, i32
  }
  func.func @transform_1(%arg0: i32) -> (i32, i32) {
    %c0_i32 = arith.constant 0 : i32
    %c0_i32_0 = arith.constant 0 : i32
    %c0_i32_1 = arith.constant 0 : i32
    return %c0_i32, %c0_i32_0 : i32, i32
  }
  func.func @transform_2(%arg0: i32) -> (i32, i32) {
    %c0_i32 = arith.constant 0 : i32
    %c0_i32_0 = arith.constant 0 : i32
    %c0_i32_1 = arith.constant 0 : i32
    return %c0_i32, %c0_i32_0 : i32, i32
  }
  func.func @transform_3(%arg0: i32) -> (i32, i32) {
    %c0_i32 = arith.constant 0 : i32
    %c0_i32_0 = arith.constant 0 : i32
    return %arg0, %c0_i32 : i32, i32
  }
}

module attributes {stable_mosaic.version = 11 : i64} {
  func.func @_conv_matmul_kernel(%arg0: i32, %arg1: memref<32x144xbf16, #tpu.memory_space<vmem>>, %arg2: memref<144x128xbf16, #tpu.memory_space<vmem>>, %arg3: memref<1x128xf32, #tpu.memory_space<vmem>>, %arg4: memref<32x128xf32, #tpu.memory_space<vmem>>) attributes {dimension_semantics = [#tpu.dimension_semantics<parallel>], iteration_bounds = array<i64: 1>, scalar_prefetch = 0 : i64, scratch_operands = 0 : i64, tpu.core_type = #tpu.core_type<tc>, window_params = [{transform_indices = @transform_0, window_bounds = array<i64: 32, 144>}, {pipeline_mode = #tpu.pipeline_mode<synchronous>, transform_indices = @transform_1, window_bounds = array<i64: 144, 128>}, {pipeline_mode = #tpu.pipeline_mode<synchronous>, transform_indices = @transform_2, window_bounds = array<i64: 1, 128>}, {transform_indices = @transform_3, window_bounds = array<i64: 32, 128>}]} {
    %c0 = arith.constant 0 : index
    %c0_0 = arith.constant 0 : index
    %0 = vector.load %arg1[%c0, %c0_0] : memref<32x144xbf16, #tpu.memory_space<vmem>>, vector<32x144xbf16>
    %c0_1 = arith.constant 0 : index
    %c0_2 = arith.constant 0 : index
    %1 = vector.load %arg2[%c0_1, %c0_2] : memref<144x128xbf16, #tpu.memory_space<vmem>>, vector<144x128xbf16>
    %cst = arith.constant dense<0.000000e+00> : vector<32x128xf32>
    %2 = tpu.matmul %0, %1, %cst {dimension_numbers = #tpu.dot_dimension_numbers<[1], [0], [0], [1], [0, 0, 1, 1], [], []>} : vector<32x144xbf16>, vector<144x128xbf16>, vector<32x128xf32> -> vector<32x128xf32>
    %c0_3 = arith.constant 0 : index
    %c0_4 = arith.constant 0 : index
    %3 = vector.load %arg3[%c0_3, %c0_4] : memref<1x128xf32, #tpu.memory_space<vmem>>, vector<1x128xf32>
    %4 = vector.broadcast %3 : vector<1x128xf32> to vector<32x128xf32>
    %5 = arith.addf %2, %4 : vector<32x128xf32>
    %cst_5 = arith.constant 0.000000e+00 : f32
    %6 = vector.broadcast %cst_5 : f32 to vector<32x128xf32>
    %7 = arith.maximumf %5, %6 : vector<32x128xf32>
    %c0_6 = arith.constant 0 : index
    %c0_7 = arith.constant 0 : index
    %8 = vector.load %arg4[%c0_6, %c0_7] : memref<32x128xf32, #tpu.memory_space<vmem>>, vector<32x128xf32>
    tpu.vector_store %arg4[%c0_6, %c0_7], %7 {strides = array<i32>} : memref<32x128xf32, #tpu.memory_space<vmem>>, vector<32x128xf32>,
    return
  }
  func.func @transform_0(%arg0: i32) -> (i32, i32) {
    %c0_i32 = arith.constant 0 : i32
    %c0_i32_0 = arith.constant 0 : i32
    return %arg0, %c0_i32 : i32, i32
  }
  func.func @transform_1(%arg0: i32) -> (i32, i32) {
    %c0_i32 = arith.constant 0 : i32
    %c0_i32_0 = arith.constant 0 : i32
    %c0_i32_1 = arith.constant 0 : i32
    return %c0_i32, %c0_i32_0 : i32, i32
  }
  func.func @transform_2(%arg0: i32) -> (i32, i32) {
    %c0_i32 = arith.constant 0 : i32
    %c0_i32_0 = arith.constant 0 : i32
    %c0_i32_1 = arith.constant 0 : i32
    return %c0_i32, %c0_i32_0 : i32, i32
  }
  func.func @transform_3(%arg0: i32) -> (i32, i32) {
    %c0_i32 = arith.constant 0 : i32
    %c0_i32_0 = arith.constant 0 : i32
    return %arg0, %c0_i32 : i32, i32
  }
}

module attributes {stable_mosaic.version = 11 : i64} {
  func.func @_conv_matmul_kernel(%arg0: i32, %arg1: memref<8x288xbf16, #tpu.memory_space<vmem>>, %arg2: memref<288x128xbf16, #tpu.memory_space<vmem>>, %arg3: memref<1x128xf32, #tpu.memory_space<vmem>>, %arg4: memref<8x128xf32, #tpu.memory_space<vmem>>) attributes {dimension_semantics = [#tpu.dimension_semantics<parallel>], iteration_bounds = array<i64: 1>, scalar_prefetch = 0 : i64, scratch_operands = 0 : i64, tpu.core_type = #tpu.core_type<tc>, window_params = [{transform_indices = @transform_0, window_bounds = array<i64: 8, 288>}, {pipeline_mode = #tpu.pipeline_mode<synchronous>, transform_indices = @transform_1, window_bounds = array<i64: 288, 128>}, {pipeline_mode = #tpu.pipeline_mode<synchronous>, transform_indices = @transform_2, window_bounds = array<i64: 1, 128>}, {transform_indices = @transform_3, window_bounds = array<i64: 8, 128>}]} {
    %c0 = arith.constant 0 : index
    %c0_0 = arith.constant 0 : index
    %0 = vector.load %arg1[%c0, %c0_0] : memref<8x288xbf16, #tpu.memory_space<vmem>>, vector<8x288xbf16>
    %c0_1 = arith.constant 0 : index
    %c0_2 = arith.constant 0 : index
    %1 = vector.load %arg2[%c0_1, %c0_2] : memref<288x128xbf16, #tpu.memory_space<vmem>>, vector<288x128xbf16>
    %cst = arith.constant dense<0.000000e+00> : vector<8x128xf32>
    %2 = tpu.matmul %0, %1, %cst {dimension_numbers = #tpu.dot_dimension_numbers<[1], [0], [0], [1], [0, 0, 1, 1], [], []>} : vector<8x288xbf16>, vector<288x128xbf16>, vector<8x128xf32> -> vector<8x128xf32>
    %c0_3 = arith.constant 0 : index
    %c0_4 = arith.constant 0 : index
    %3 = vector.load %arg3[%c0_3, %c0_4] : memref<1x128xf32, #tpu.memory_space<vmem>>, vector<1x128xf32>
    %4 = vector.broadcast %3 : vector<1x128xf32> to vector<8x128xf32>
    %5 = arith.addf %2, %4 : vector<8x128xf32>
    %cst_5 = arith.constant 0.000000e+00 : f32
    %6 = vector.broadcast %cst_5 : f32 to vector<8x128xf32>
    %7 = arith.maximumf %5, %6 : vector<8x128xf32>
    %c0_6 = arith.constant 0 : index
    %c0_7 = arith.constant 0 : index
    %8 = vector.load %arg4[%c0_6, %c0_7] : memref<8x128xf32, #tpu.memory_space<vmem>>, vector<8x128xf32>
    tpu.vector_store %arg4[%c0_6, %c0_7], %7 {strides = array<i32>} : memref<8x128xf32, #tpu.memory_space<vmem>>, vector<8x128xf32>,
    return
  }
  func.func @transform_0(%arg0: i32) -> (i32, i32) {
    %c0_i32 = arith.constant 0 : i32
    %c0_i32_0 = arith.constant 0 : i32
    return %arg0, %c0_i32 : i32, i32
  }
  func.func @transform_1(%arg0: i32) -> (i32, i32) {
    %c0_i32 = arith.constant 0 : i32
    %c0_i32_0 = arith.constant 0 : i32
    %c0_i32_1 = arith.constant 0 : i32
    return %c0_i32, %c0_i32_0 : i32, i32
  }
  func.func @transform_2(%arg0: i32) -> (i32, i32) {
    %c0_i32 = arith.constant 0 : i32
    %c0_i32_0 = arith.constant 0 : i32
    %c0_i32_1 = arith.constant 0 : i32
    return %c0_i32, %c0_i32_0 : i32, i32
  }
  func.func @transform_3(%arg0: i32) -> (i32, i32) {
    %c0_i32 = arith.constant 0 : i32
    %c0_i32_0 = arith.constant 0 : i32
    return %arg0, %c0_i32 : i32, i32
  }
}

module attributes {stable_mosaic.version = 11 : i64} {
  func.func @_conv_matmul_kernel(%arg0: i32, %arg1: memref<512x72xbf16, #tpu.memory_space<vmem>>, %arg2: memref<72x128xbf16, #tpu.memory_space<vmem>>, %arg3: memref<1x128xf32, #tpu.memory_space<vmem>>, %arg4: memref<512x128xf32, #tpu.memory_space<vmem>>) attributes {dimension_semantics = [#tpu.dimension_semantics<parallel>], iteration_bounds = array<i64: 4>, scalar_prefetch = 0 : i64, scratch_operands = 0 : i64, tpu.core_type = #tpu.core_type<tc>, window_params = [{transform_indices = @transform_0, window_bounds = array<i64: 512, 72>}, {pipeline_mode = #tpu.pipeline_mode<synchronous>, transform_indices = @transform_1, window_bounds = array<i64: 72, 128>}, {pipeline_mode = #tpu.pipeline_mode<synchronous>, transform_indices = @transform_2, window_bounds = array<i64: 1, 128>}, {transform_indices = @transform_3, window_bounds = array<i64: 512, 128>}]} {
    %c0 = arith.constant 0 : index
    %c0_0 = arith.constant 0 : index
    %0 = vector.load %arg1[%c0, %c0_0] : memref<512x72xbf16, #tpu.memory_space<vmem>>, vector<512x72xbf16>
    %c0_1 = arith.constant 0 : index
    %c0_2 = arith.constant 0 : index
    %1 = vector.load %arg2[%c0_1, %c0_2] : memref<72x128xbf16, #tpu.memory_space<vmem>>, vector<72x128xbf16>
    %cst = arith.constant dense<0.000000e+00> : vector<512x128xf32>
    %2 = tpu.matmul %0, %1, %cst {dimension_numbers = #tpu.dot_dimension_numbers<[1], [0], [0], [1], [0, 0, 1, 1], [], []>} : vector<512x72xbf16>, vector<72x128xbf16>, vector<512x128xf32> -> vector<512x128xf32>
    %c0_3 = arith.constant 0 : index
    %c0_4 = arith.constant 0 : index
    %3 = vector.load %arg3[%c0_3, %c0_4] : memref<1x128xf32, #tpu.memory_space<vmem>>, vector<1x128xf32>
    %4 = vector.broadcast %3 : vector<1x128xf32> to vector<512x128xf32>
    %5 = arith.addf %2, %4 : vector<512x128xf32>
    %cst_5 = arith.constant 0.000000e+00 : f32
    %6 = vector.broadcast %cst_5 : f32 to vector<512x128xf32>
    %7 = arith.maximumf %5, %6 : vector<512x128xf32>
    %c0_6 = arith.constant 0 : index
    %c0_7 = arith.constant 0 : index
    %8 = vector.load %arg4[%c0_6, %c0_7] : memref<512x128xf32, #tpu.memory_space<vmem>>, vector<512x128xf32>
    tpu.vector_store %arg4[%c0_6, %c0_7], %7 {strides = array<i32>} : memref<512x128xf32, #tpu.memory_space<vmem>>, vector<512x128xf32>,
    return
  }
  func.func @transform_0(%arg0: i32) -> (i32, i32) {
    %c0_i32 = arith.constant 0 : i32
    %c0_i32_0 = arith.constant 0 : i32
    return %arg0, %c0_i32 : i32, i32
  }
  func.func @transform_1(%arg0: i32) -> (i32, i32) {
    %c0_i32 = arith.constant 0 : i32
    %c0_i32_0 = arith.constant 0 : i32
    %c0_i32_1 = arith.constant 0 : i32
    return %c0_i32, %c0_i32_0 : i32, i32
  }
  func.func @transform_2(%arg0: i32) -> (i32, i32) {
    %c0_i32 = arith.constant 0 : i32
    %c0_i32_0 = arith.constant 0 : i32
    %c0_i32_1 = arith.constant 0 : i32
    return %c0_i32, %c0_i32_0 : i32, i32
  }
  func.func @transform_3(%arg0: i32) -> (i32, i32) {
    %c0_i32 = arith.constant 0 : i32
    %c0_i32_0 = arith.constant 0 : i32
    return %arg0, %c0_i32 : i32, i32
  }
}

module attributes {stable_mosaic.version = 11 : i64} {
  func.func @_conv_matmul_kernel(%arg0: i32, %arg1: memref<512x144xbf16, #tpu.memory_space<vmem>>, %arg2: memref<144x128xbf16, #tpu.memory_space<vmem>>, %arg3: memref<1x128xf32, #tpu.memory_space<vmem>>, %arg4: memref<512x128xf32, #tpu.memory_space<vmem>>) attributes {dimension_semantics = [#tpu.dimension_semantics<parallel>], iteration_bounds = array<i64: 4>, scalar_prefetch = 0 : i64, scratch_operands = 0 : i64, tpu.core_type = #tpu.core_type<tc>, window_params = [{transform_indices = @transform_0, window_bounds = array<i64: 512, 144>}, {pipeline_mode = #tpu.pipeline_mode<synchronous>, transform_indices = @transform_1, window_bounds = array<i64: 144, 128>}, {pipeline_mode = #tpu.pipeline_mode<synchronous>, transform_indices = @transform_2, window_bounds = array<i64: 1, 128>}, {transform_indices = @transform_3, window_bounds = array<i64: 512, 128>}]} {
    %c0 = arith.constant 0 : index
    %c0_0 = arith.constant 0 : index
    %0 = vector.load %arg1[%c0, %c0_0] : memref<512x144xbf16, #tpu.memory_space<vmem>>, vector<512x144xbf16>
    %c0_1 = arith.constant 0 : index
    %c0_2 = arith.constant 0 : index
    %1 = vector.load %arg2[%c0_1, %c0_2] : memref<144x128xbf16, #tpu.memory_space<vmem>>, vector<144x128xbf16>
    %cst = arith.constant dense<0.000000e+00> : vector<512x128xf32>
    %2 = tpu.matmul %0, %1, %cst {dimension_numbers = #tpu.dot_dimension_numbers<[1], [0], [0], [1], [0, 0, 1, 1], [], []>} : vector<512x144xbf16>, vector<144x128xbf16>, vector<512x128xf32> -> vector<512x128xf32>
    %c0_3 = arith.constant 0 : index
    %c0_4 = arith.constant 0 : index
    %3 = vector.load %arg3[%c0_3, %c0_4] : memref<1x128xf32, #tpu.memory_space<vmem>>, vector<1x128xf32>
    %4 = vector.broadcast %3 : vector<1x128xf32> to vector<512x128xf32>
    %5 = arith.addf %2, %4 : vector<512x128xf32>
    %cst_5 = arith.constant 0.000000e+00 : f32
    %6 = vector.broadcast %cst_5 : f32 to vector<512x128xf32>
    %7 = arith.maximumf %5, %6 : vector<512x128xf32>
    %c0_6 = arith.constant 0 : index
    %c0_7 = arith.constant 0 : index
    %8 = vector.load %arg4[%c0_6, %c0_7] : memref<512x128xf32, #tpu.memory_space<vmem>>, vector<512x128xf32>
    tpu.vector_store %arg4[%c0_6, %c0_7], %7 {strides = array<i32>} : memref<512x128xf32, #tpu.memory_space<vmem>>, vector<512x128xf32>,
    return
  }
  func.func @transform_0(%arg0: i32) -> (i32, i32) {
    %c0_i32 = arith.constant 0 : i32
    %c0_i32_0 = arith.constant 0 : i32
    return %arg0, %c0_i32 : i32, i32
  }
  func.func @transform_1(%arg0: i32) -> (i32, i32) {
    %c0_i32 = arith.constant 0 : i32
    %c0_i32_0 = arith.constant 0 : i32
    %c0_i32_1 = arith.constant 0 : i32
    return %c0_i32, %c0_i32_0 : i32, i32
  }
  func.func @transform_2(%arg0: i32) -> (i32, i32) {
    %c0_i32 = arith.constant 0 : i32
    %c0_i32_0 = arith.constant 0 : i32
    %c0_i32_1 = arith.constant 0 : i32
    return %c0_i32, %c0_i32_0 : i32, i32
  }
  func.func @transform_3(%arg0: i32) -> (i32, i32) {
    %c0_i32 = arith.constant 0 : i32
    %c0_i32_0 = arith.constant 0 : i32
    return %arg0, %c0_i32 : i32, i32
  }
}

module attributes {stable_mosaic.version = 11 : i64} {
  func.func @_conv_matmul_kernel(%arg0: i32, %arg1: memref<512x576xbf16, #tpu.memory_space<vmem>>, %arg2: memref<576x128xbf16, #tpu.memory_space<vmem>>, %arg3: memref<1x128xf32, #tpu.memory_space<vmem>>, %arg4: memref<512x128xf32, #tpu.memory_space<vmem>>) attributes {dimension_semantics = [#tpu.dimension_semantics<parallel>], iteration_bounds = array<i64: 4>, scalar_prefetch = 0 : i64, scratch_operands = 0 : i64, tpu.core_type = #tpu.core_type<tc>, window_params = [{transform_indices = @transform_0, window_bounds = array<i64: 512, 576>}, {pipeline_mode = #tpu.pipeline_mode<synchronous>, transform_indices = @transform_1, window_bounds = array<i64: 576, 128>}, {pipeline_mode = #tpu.pipeline_mode<synchronous>, transform_indices = @transform_2, window_bounds = array<i64: 1, 128>}, {transform_indices = @transform_3, window_bounds = array<i64: 512, 128>}]} {
    %c0 = arith.constant 0 : index
    %c0_0 = arith.constant 0 : index
    %0 = vector.load %arg1[%c0, %c0_0] : memref<512x576xbf16, #tpu.memory_space<vmem>>, vector<512x576xbf16>
    %c0_1 = arith.constant 0 : index
    %c0_2 = arith.constant 0 : index
    %1 = vector.load %arg2[%c0_1, %c0_2] : memref<576x128xbf16, #tpu.memory_space<vmem>>, vector<576x128xbf16>
    %cst = arith.constant dense<0.000000e+00> : vector<512x128xf32>
    %2 = tpu.matmul %0, %1, %cst {dimension_numbers = #tpu.dot_dimension_numbers<[1], [0], [0], [1], [0, 0, 1, 1], [], []>} : vector<512x576xbf16>, vector<576x128xbf16>, vector<512x128xf32> -> vector<512x128xf32>
    %c0_3 = arith.constant 0 : index
    %c0_4 = arith.constant 0 : index
    %3 = vector.load %arg3[%c0_3, %c0_4] : memref<1x128xf32, #tpu.memory_space<vmem>>, vector<1x128xf32>
    %4 = vector.broadcast %3 : vector<1x128xf32> to vector<512x128xf32>
    %5 = arith.addf %2, %4 : vector<512x128xf32>
    %cst_5 = arith.constant 0.000000e+00 : f32
    %6 = vector.broadcast %cst_5 : f32 to vector<512x128xf32>
    %7 = arith.maximumf %5, %6 : vector<512x128xf32>
    %c0_6 = arith.constant 0 : index
    %c0_7 = arith.constant 0 : index
    %8 = vector.load %arg4[%c0_6, %c0_7] : memref<512x128xf32, #tpu.memory_space<vmem>>, vector<512x128xf32>
    tpu.vector_store %arg4[%c0_6, %c0_7], %7 {strides = array<i32>} : memref<512x128xf32, #tpu.memory_space<vmem>>, vector<512x128xf32>,
    return
  }
  func.func @transform_0(%arg0: i32) -> (i32, i32) {
    %c0_i32 = arith.constant 0 : i32
    %c0_i32_0 = arith.constant 0 : i32
    return %arg0, %c0_i32 : i32, i32
  }
  func.func @transform_1(%arg0: i32) -> (i32, i32) {
    %c0_i32 = arith.constant 0 : i32
    %c0_i32_0 = arith.constant 0 : i32
    %c0_i32_1 = arith.constant 0 : i32
    return %c0_i32, %c0_i32_0 : i32, i32
  }
  func.func @transform_2(%arg0: i32) -> (i32, i32) {
    %c0_i32 = arith.constant 0 : i32
    %c0_i32_0 = arith.constant 0 : i32
    %c0_i32_1 = arith.constant 0 : i32
    return %c0_i32, %c0_i32_0 : i32, i32
  }
  func.func @transform_3(%arg0: i32) -> (i32, i32) {
    %c0_i32 = arith.constant 0 : i32
    %c0_i32_0 = arith.constant 0 : i32
    return %arg0, %c0_i32 : i32, i32
  }
}

module attributes {stable_mosaic.version = 11 : i64} {
  func.func @_conv_matmul_kernel(%arg0: i32, %arg1: memref<512x288xbf16, #tpu.memory_space<vmem>>, %arg2: memref<288x128xbf16, #tpu.memory_space<vmem>>, %arg3: memref<1x128xf32, #tpu.memory_space<vmem>>, %arg4: memref<512x128xf32, #tpu.memory_space<vmem>>) attributes {dimension_semantics = [#tpu.dimension_semantics<parallel>], iteration_bounds = array<i64: 4>, scalar_prefetch = 0 : i64, scratch_operands = 0 : i64, tpu.core_type = #tpu.core_type<tc>, window_params = [{transform_indices = @transform_0, window_bounds = array<i64: 512, 288>}, {pipeline_mode = #tpu.pipeline_mode<synchronous>, transform_indices = @transform_1, window_bounds = array<i64: 288, 128>}, {pipeline_mode = #tpu.pipeline_mode<synchronous>, transform_indices = @transform_2, window_bounds = array<i64: 1, 128>}, {transform_indices = @transform_3, window_bounds = array<i64: 512, 128>}]} {
    %c0 = arith.constant 0 : index
    %c0_0 = arith.constant 0 : index
    %0 = vector.load %arg1[%c0, %c0_0] : memref<512x288xbf16, #tpu.memory_space<vmem>>, vector<512x288xbf16>
    %c0_1 = arith.constant 0 : index
    %c0_2 = arith.constant 0 : index
    %1 = vector.load %arg2[%c0_1, %c0_2] : memref<288x128xbf16, #tpu.memory_space<vmem>>, vector<288x128xbf16>
    %cst = arith.constant dense<0.000000e+00> : vector<512x128xf32>
    %2 = tpu.matmul %0, %1, %cst {dimension_numbers = #tpu.dot_dimension_numbers<[1], [0], [0], [1], [0, 0, 1, 1], [], []>} : vector<512x288xbf16>, vector<288x128xbf16>, vector<512x128xf32> -> vector<512x128xf32>
    %c0_3 = arith.constant 0 : index
    %c0_4 = arith.constant 0 : index
    %3 = vector.load %arg3[%c0_3, %c0_4] : memref<1x128xf32, #tpu.memory_space<vmem>>, vector<1x128xf32>
    %4 = vector.broadcast %3 : vector<1x128xf32> to vector<512x128xf32>
    %5 = arith.addf %2, %4 : vector<512x128xf32>
    %cst_5 = arith.constant 0.000000e+00 : f32
    %6 = vector.broadcast %cst_5 : f32 to vector<512x128xf32>
    %7 = arith.maximumf %5, %6 : vector<512x128xf32>
    %c0_6 = arith.constant 0 : index
    %c0_7 = arith.constant 0 : index
    %8 = vector.load %arg4[%c0_6, %c0_7] : memref<512x128xf32, #tpu.memory_space<vmem>>, vector<512x128xf32>
    tpu.vector_store %arg4[%c0_6, %c0_7], %7 {strides = array<i32>} : memref<512x128xf32, #tpu.memory_space<vmem>>, vector<512x128xf32>,
    return
  }
  func.func @transform_0(%arg0: i32) -> (i32, i32) {
    %c0_i32 = arith.constant 0 : i32
    %c0_i32_0 = arith.constant 0 : i32
    return %arg0, %c0_i32 : i32, i32
  }
  func.func @transform_1(%arg0: i32) -> (i32, i32) {
    %c0_i32 = arith.constant 0 : i32
    %c0_i32_0 = arith.constant 0 : i32
    %c0_i32_1 = arith.constant 0 : i32
    return %c0_i32, %c0_i32_0 : i32, i32
  }
  func.func @transform_2(%arg0: i32) -> (i32, i32) {
    %c0_i32 = arith.constant 0 : i32
    %c0_i32_0 = arith.constant 0 : i32
    %c0_i32_1 = arith.constant 0 : i32
    return %c0_i32, %c0_i32_0 : i32, i32
  }
  func.func @transform_3(%arg0: i32) -> (i32, i32) {
    %c0_i32 = arith.constant 0 : i32
    %c0_i32_0 = arith.constant 0 : i32
    return %arg0, %c0_i32 : i32, i32
  }
}

module attributes {stable_mosaic.version = 11 : i64} {
  func.func @_conv_matmul_kernel(%arg0: i32, %arg1: memref<512x400xbf16, #tpu.memory_space<vmem>>, %arg2: memref<400x128xbf16, #tpu.memory_space<vmem>>, %arg3: memref<1x128xf32, #tpu.memory_space<vmem>>, %arg4: memref<512x128xf32, #tpu.memory_space<vmem>>) attributes {dimension_semantics = [#tpu.dimension_semantics<parallel>], iteration_bounds = array<i64: 4>, scalar_prefetch = 0 : i64, scratch_operands = 0 : i64, tpu.core_type = #tpu.core_type<tc>, window_params = [{transform_indices = @transform_0, window_bounds = array<i64: 512, 400>}, {pipeline_mode = #tpu.pipeline_mode<synchronous>, transform_indices = @transform_1, window_bounds = array<i64: 400, 128>}, {pipeline_mode = #tpu.pipeline_mode<synchronous>, transform_indices = @transform_2, window_bounds = array<i64: 1, 128>}, {transform_indices = @transform_3, window_bounds = array<i64: 512, 128>}]} {
    %c0 = arith.constant 0 : index
    %c0_0 = arith.constant 0 : index
    %0 = vector.load %arg1[%c0, %c0_0] : memref<512x400xbf16, #tpu.memory_space<vmem>>, vector<512x400xbf16>
    %c0_1 = arith.constant 0 : index
    %c0_2 = arith.constant 0 : index
    %1 = vector.load %arg2[%c0_1, %c0_2] : memref<400x128xbf16, #tpu.memory_space<vmem>>, vector<400x128xbf16>
    %cst = arith.constant dense<0.000000e+00> : vector<512x128xf32>
    %2 = tpu.matmul %0, %1, %cst {dimension_numbers = #tpu.dot_dimension_numbers<[1], [0], [0], [1], [0, 0, 1, 1], [], []>} : vector<512x400xbf16>, vector<400x128xbf16>, vector<512x128xf32> -> vector<512x128xf32>
    %c0_3 = arith.constant 0 : index
    %c0_4 = arith.constant 0 : index
    %3 = vector.load %arg3[%c0_3, %c0_4] : memref<1x128xf32, #tpu.memory_space<vmem>>, vector<1x128xf32>
    %4 = vector.broadcast %3 : vector<1x128xf32> to vector<512x128xf32>
    %5 = arith.addf %2, %4 : vector<512x128xf32>
    %cst_5 = arith.constant 0.000000e+00 : f32
    %6 = vector.broadcast %cst_5 : f32 to vector<512x128xf32>
    %7 = arith.maximumf %5, %6 : vector<512x128xf32>
    %c0_6 = arith.constant 0 : index
    %c0_7 = arith.constant 0 : index
    %8 = vector.load %arg4[%c0_6, %c0_7] : memref<512x128xf32, #tpu.memory_space<vmem>>, vector<512x128xf32>
    tpu.vector_store %arg4[%c0_6, %c0_7], %7 {strides = array<i32>} : memref<512x128xf32, #tpu.memory_space<vmem>>, vector<512x128xf32>,
    return
  }
  func.func @transform_0(%arg0: i32) -> (i32, i32) {
    %c0_i32 = arith.constant 0 : i32
    %c0_i32_0 = arith.constant 0 : i32
    return %arg0, %c0_i32 : i32, i32
  }
  func.func @transform_1(%arg0: i32) -> (i32, i32) {
    %c0_i32 = arith.constant 0 : i32
    %c0_i32_0 = arith.constant 0 : i32
    %c0_i32_1 = arith.constant 0 : i32
    return %c0_i32, %c0_i32_0 : i32, i32
  }
  func.func @transform_2(%arg0: i32) -> (i32, i32) {
    %c0_i32 = arith.constant 0 : i32
    %c0_i32_0 = arith.constant 0 : i32
    %c0_i32_1 = arith.constant 0 : i32
    return %c0_i32, %c0_i32_0 : i32, i32
  }
  func.func @transform_3(%arg0: i32) -> (i32, i32) {
    %c0_i32 = arith.constant 0 : i32
    %c0_i32_0 = arith.constant 0 : i32
    return %arg0, %c0_i32 : i32, i32
  }
}

module attributes {stable_mosaic.version = 11 : i64} {
  func.func @_conv_matmul_kernel(%arg0: i32, %arg1: memref<512x288xbf16, #tpu.memory_space<vmem>>, %arg2: memref<288x128xbf16, #tpu.memory_space<vmem>>, %arg3: memref<1x128xf32, #tpu.memory_space<vmem>>, %arg4: memref<512x128xf32, #tpu.memory_space<vmem>>) attributes {dimension_semantics = [#tpu.dimension_semantics<parallel>], iteration_bounds = array<i64: 4>, scalar_prefetch = 0 : i64, scratch_operands = 0 : i64, tpu.core_type = #tpu.core_type<tc>, window_params = [{transform_indices = @transform_0, window_bounds = array<i64: 512, 288>}, {pipeline_mode = #tpu.pipeline_mode<synchronous>, transform_indices = @transform_1, window_bounds = array<i64: 288, 128>}, {pipeline_mode = #tpu.pipeline_mode<synchronous>, transform_indices = @transform_2, window_bounds = array<i64: 1, 128>}, {transform_indices = @transform_3, window_bounds = array<i64: 512, 128>}]} {
    %c0 = arith.constant 0 : index
    %c0_0 = arith.constant 0 : index
    %0 = vector.load %arg1[%c0, %c0_0] : memref<512x288xbf16, #tpu.memory_space<vmem>>, vector<512x288xbf16>
    %c0_1 = arith.constant 0 : index
    %c0_2 = arith.constant 0 : index
    %1 = vector.load %arg2[%c0_1, %c0_2] : memref<288x128xbf16, #tpu.memory_space<vmem>>, vector<288x128xbf16>
    %cst = arith.constant dense<0.000000e+00> : vector<512x128xf32>
    %2 = tpu.matmul %0, %1, %cst {dimension_numbers = #tpu.dot_dimension_numbers<[1], [0], [0], [1], [0, 0, 1, 1], [], []>} : vector<512x288xbf16>, vector<288x128xbf16>, vector<512x128xf32> -> vector<512x128xf32>
    %c0_3 = arith.constant 0 : index
    %c0_4 = arith.constant 0 : index
    %3 = vector.load %arg3[%c0_3, %c0_4] : memref<1x128xf32, #tpu.memory_space<vmem>>, vector<1x128xf32>
    %4 = vector.broadcast %3 : vector<1x128xf32> to vector<512x128xf32>
    %5 = arith.addf %2, %4 : vector<512x128xf32>
    %c0_5 = arith.constant 0 : index
    %c0_6 = arith.constant 0 : index
    %6 = vector.load %arg4[%c0_5, %c0_6] : memref<512x128xf32, #tpu.memory_space<vmem>>, vector<512x128xf32>
    tpu.vector_store %arg4[%c0_5, %c0_6], %5 {strides = array<i32>} : memref<512x128xf32, #tpu.memory_space<vmem>>, vector<512x128xf32>,
    return
  }
  func.func @transform_0(%arg0: i32) -> (i32, i32) {
    %c0_i32 = arith.constant 0 : i32
    %c0_i32_0 = arith.constant 0 : i32
    return %arg0, %c0_i32 : i32, i32
  }
  func.func @transform_1(%arg0: i32) -> (i32, i32) {
    %c0_i32 = arith.constant 0 : i32
    %c0_i32_0 = arith.constant 0 : i32
    %c0_i32_1 = arith.constant 0 : i32
    return %c0_i32, %c0_i32_0 : i32, i32
  }
  func.func @transform_2(%arg0: i32) -> (i32, i32) {
    %c0_i32 = arith.constant 0 : i32
    %c0_i32_0 = arith.constant 0 : i32
    %c0_i32_1 = arith.constant 0 : i32
    return %c0_i32, %c0_i32_0 : i32, i32
  }
  func.func @transform_3(%arg0: i32) -> (i32, i32) {
    %c0_i32 = arith.constant 0 : i32
    %c0_i32_0 = arith.constant 0 : i32
    return %arg0, %c0_i32 : i32, i32
  }
}

</mosaic_0001>

<llo_original>
// kernel: _lambda_.11
$region0: #{_lambda_.11}
  #allocation0 [shape = 'u32[]', space=smem, size = 0x4, offset = 0x4, fixed_abs, tag = 'smem constant byte address 0x4 - core index']
  #allocation1 [shape = 'u32[144,128]{1,0:T(1,128)}', space=vmem, size = 0x12000, scoped, tag = 'internal scratch']
  %s0 = inlined_call_operand.vmem [shape: bf16[512,27], index: 0, kind: input, shape index: {}]
  %s1 = inlined_call_operand.hbm [shape: bf16[27,128], index: 1, kind: input, shape index: {}]
  %s2 = inlined_call_operand.hbm [shape: f32[1,128], index: 2, kind: input, shape index: {}]
  %s3 = inlined_call_operand.vmem [shape: f32[512,128], index: 3, kind: output, shape index: {}]
  %s4 = sld [smem:[#allocation0]]
  $region53: #{_lambda_.11} parent=0
    _
  %s6 = ssub.s32 1, %s4
  %s7 = scalar_select 0, %s6, %s4
  $region1: #{_lambda_.11} parent=0
    #allocation2 [shape = 'u8[8192]{0}', space=vmem, size = 0x2000, scoped, tag = 'input window, operand 1, single buffered']
    #allocation3 [shape = 's32[2]{0}', space=sflag, size = 0x8, scoped, tag = 'scoped memory for _lambda_.11']
    #allocation4 [shape = 'u8[512]{0}', space=vmem, size = 0x400, scoped, tag = 'input window, operand 2, single buffered']
    #allocation5 [shape = 's32[1]{0}', space=sflag, size = 0x4, scoped, tag = 'scoped memory for _lambda_.11']
    %8 = vsyncpa [#allocation3], 0
    %9 = vsyncpa [#allocation5], 0
    loop: start=0, step=1, limit=4
    $region2: #{_lambda_.11} parent=1 // loop_pre_header
      _
    $region3: #{_lambda_.11} parent=1 // loop_header
      %s11 = sphi 0, %s15
      %p12 = scmp.ge.s32.totalorder %s11, 4
      %s21 = sphi 0, %s23
      %s24 = sphi 0, %s21
      %s25 = sphi 0, %s24
      %s41 = sphi 0, %s25
      %s45 = sphi 0, %s45
      %s47 = sphi 0, %s45
      %s48 = sphi 0, %s47
      %s62 = sphi 0, %s48
      %s66 = sphi 0, %s66
      %s68 = sphi 0, %s66
      %s69 = sphi 0, %s68
      %s83 = sphi 0, %s69
      %s89 = sphi 0, %s91
      %s92 = sphi 0, %s89
      %s93 = sphi 0, %s92
      %s109 = sphi 0, %s93
    $region4: #{_lambda_.11} parent=1 // loop_header_branch
      %14 = sbr.rel (%p12) target = $region8
    $region5: #{_lambda_.11} parent=1 // loop_body
      %s16 = ssub.s32 %s11, 1
      %s17 = ssub.s32 %s11, 2
      %s18 = sadd.s32 %s11, 1
      %s19 = ssub.s32 %s11, %s18
      %p20 = scmp.eq.s32.totalorder %s19, 0
      %s22 = sadd.s32 %s21, 1
      %s23 = scalar_select %p20, %s21, %s22
      %p26 = pneg %p20
      %p27 = scmp.eq.s32.totalorder %s11, 1
      %p28 = por %p26, %p27
      %p29 = scmp.ne.s32.totalorder %s21, %s24
      %p30 = scmp.eq.s32.totalorder %s11, 0
      %p31 = por %p29, %p30
      %p32 = scmp.ne.s32.totalorder %s21, %s24
      %p33 = scmp.eq.s32.totalorder %s16, 1
      %p34 = por %p32, %p33
      %p35 = scmp.ne.s32.totalorder %s24, %s25
      %p36 = scmp.eq.s32.totalorder %s16, 0
      %p37 = por %p35, %p36
      %p38 = scmp.ne.s32.totalorder %s24, %s25
      %p39 = scmp.eq.s32.totalorder %s17, 1
      %p40 = por %p38, %p39
      %p42 = scmp.ne.s32.totalorder %s25, %s41
      %p43 = scmp.eq.s32.totalorder %s17, 0
      %p44 = por %p42, %p43
      %s46 = sadd.s32 %s45, 1
      %p49 = scmp.eq.s32.totalorder %s11, 1
      %p50 = scmp.ne.s32.totalorder %s45, %s47
      %p51 = scmp.eq.s32.totalorder %s11, 0
      %p52 = por %p50, %p51
      %p53 = scmp.ne.s32.totalorder %s45, %s47
      %p54 = scmp.eq.s32.totalorder %s16, 1
      %p55 = por %p53, %p54
      %p56 = scmp.ne.s32.totalorder %s47, %s48
      %p57 = scmp.eq.s32.totalorder %s16, 0
      %p58 = por %p56, %p57
      %p59 = scmp.ne.s32.totalorder %s47, %s48
      %p60 = scmp.eq.s32.totalorder %s17, 1
      %p61 = por %p59, %p60
      %p63 = scmp.ne.s32.totalorder %s48, %s62
      %p64 = scmp.eq.s32.totalorder %s17, 0
      %p65 = por %p63, %p64
      %s67 = sadd.s32 %s66, 1
      %p70 = scmp.eq.s32.totalorder %s11, 1
      %p71 = scmp.ne.s32.totalorder %s66, %s68
      %p72 = scmp.eq.s32.totalorder %s11, 0
      %p73 = por %p71, %p72
      %p74 = scmp.ne.s32.totalorder %s66, %s68
      %p75 = scmp.eq.s32.totalorder %s16, 1
      %p76 = por %p74, %p75
      %p77 = scmp.ne.s32.totalorder %s68, %s69
      %p78 = scmp.eq.s32.totalorder %s16, 0
      %p79 = por %p77, %p78
      %p80 = scmp.ne.s32.totalorder %s68, %s69
      %p81 = scmp.eq.s32.totalorder %s17, 1
      %p82 = por %p80, %p81
      %p84 = scmp.ne.s32.totalorder %s69, %s83
      %p85 = scmp.eq.s32.totalorder %s17, 0
      %p86 = por %p84, %p85
      %s87 = ssub.s32 %s11, %s18
      %p88 = scmp.eq.s32.totalorder %s87, 0
      %s90 = sadd.s32 %s89, 1
      %s91 = scalar_select %p88, %s89, %s90
      %p94 = pneg %p88
      %p95 = scmp.eq.s32.totalorder %s11, 1
      %p96 = por %p94, %p95
      %p97 = scmp.ne.s32.totalorder %s89, %s92
      %p98 = scmp.eq.s32.totalorder %s11, 0
      %p99 = por %p97, %p98
      %p100 = scmp.ne.s32.totalorder %s89, %s92
      %p101 = scmp.eq.s32.totalorder %s16, 1
      %p102 = por %p100, %p101
      %p103 = scmp.ne.s32.totalorder %s92, %s93
      %p104 = scmp.eq.s32.totalorder %s16, 0
      %p105 = por %p103, %p104
      %p106 = scmp.ne.s32.totalorder %s92, %s93
      %p107 = scmp.eq.s32.totalorder %s17, 1
      %p108 = por %p106, %p107
      %p110 = scmp.ne.s32.totalorder %s93, %s109
      %p111 = scmp.eq.s32.totalorder %s17, 0
      %p112 = por %p110, %p111
      %p113 = scmp.le.s32.totalorder 1, %s11
      %p114 = scmp.lt.s32.totalorder %s11, 3
      %p115 = pnand %p113, %p114
      %p116 = pneg %p115
      // Predicated region
      $region9: #{_lambda_.11} parent=5 // pred_check
        _
      $region10: #{_lambda_.11} parent=5 // pred_check_branch
        %118 = sbr.rel (%p115) target = $region12
      $region11: #{_lambda_.11} parent=5 // pred_region
        %s119 = ssub.s32 %s11, 1
        // Predicated region
        $region13: #{_lambda_.11} parent=11 // pred_check
          %p120 = pneg %p58
        $region14: #{_lambda_.11} parent=11 // pred_check_branch
          %122 = sbr.rel (%p120) target = $region16
        $region15: #{_lambda_.11} parent=11 // pred_region
          %s124 = ssub.s32 256, 256
          %125 = vsyncadd [#allocation3], %s124
          %s126 = sshll.u32 [#allocation2], 4
          %s127 = int_to_ptr.vmem [resolvable:$true] %s126
          %132 = dma.hbm_to_vmem [thread:$0]  %s1, 256, %s127, [#allocation3], 64, 64, 4
        $region16: #{_lambda_.11} parent=11 // pred_fallthru
          _
        // Predicated region
        $region17: #{_lambda_.11} parent=11 // pred_check
          %p133 = pneg %p79
        $region18: #{_lambda_.11} parent=11 // pred_check_branch
          %135 = sbr.rel (%p133) target = $region20
        $region19: #{_lambda_.11} parent=11 // pred_region
          %s137 = ssub.s32 16, 16
          %138 = vsyncadd [#allocation5], %s137
          %s140 = sshll.u32 [#allocation4], 4
          %s141 = int_to_ptr.vmem [resolvable:$true] %s140
          %143 = dma.hbm_to_vmem [thread:$0]  %s2, 16, %s141, [#allocation5]
        $region20: #{_lambda_.11} parent=11 // pred_fallthru
          _
      $region12: #{_lambda_.11} parent=5 // pred_fallthru
        _
      %p144 = scmp.lt.s32.totalorder %s11, 2
      // Predicated region
      $region21: #{_lambda_.11} parent=5 // pred_check
        %p145 = pneg %p144
      $region22: #{_lambda_.11} parent=5 // pred_check_branch
        %147 = sbr.rel (%p145) target = $region24
      $region23: #{_lambda_.11} parent=5 // pred_region
        // Predicated region
        $region25: #{_lambda_.11} parent=23 // pred_check
          %p148 = pneg %p31
        $region26: #{_lambda_.11} parent=23 // pred_check_branch
          %150 = sbr.rel (%p148) target = $region28
        $region27: #{_lambda_.11} parent=23 // pred_region
          %s151 = smul.u32 32, %s11
          %p152 = scmp.lt.s32.totalorder %s151, 63
          %s153 = scalar_select %p152, %s151, 63
          %s154 = smul.addr %s153, 4
          %s155 = scalar_lea.vmem %s0, %s154
          %s156 = smul.u32 32, %s11
        $region28: #{_lambda_.11} parent=23 // pred_fallthru
          _
      $region24: #{_lambda_.11} parent=5 // pred_fallthru
        _
      %p157 = scmp.le.s32.totalorder 1, %s11
      %p158 = scmp.lt.s32.totalorder %s11, 3
      %p159 = pnand %p157, %p158
      %p160 = pneg %p159
      // Predicated region
      $region29: #{_lambda_.11} parent=5 // pred_check
        _
      $region30: #{_lambda_.11} parent=5 // pred_check_branch
        %162 = sbr.rel (%p159) target = $region32
      $region31: #{_lambda_.11} parent=5 // pred_region
        %s163 = ssub.s32 %s11, 1
        // Predicated region
        $region33: #{_lambda_.11} parent=31 // pred_check
          %p164 = pneg %p58
        $region34: #{_lambda_.11} parent=31 // pred_check_branch
          %166 = sbr.rel (%p164) target = $region36
        $region35: #{_lambda_.11} parent=31 // pred_region
          %167 = dma.done [#allocation3], 256
        $region36: #{_lambda_.11} parent=31 // pred_fallthru
          _
        // Predicated region
        $region37: #{_lambda_.11} parent=31 // pred_check
          %p168 = pneg %p79
        $region38: #{_lambda_.11} parent=31 // pred_check_branch
          %170 = sbr.rel (%p168) target = $region40
        $region39: #{_lambda_.11} parent=31 // pred_region
          %171 = dma.done [#allocation5], 16
        $region40: #{_lambda_.11} parent=31 // pred_fallthru
          _
        %s172 = smul.u32 32, %s16
        %p173 = scmp.lt.s32.totalorder %s172, 63
        %s174 = scalar_select %p173, %s172, 63
        %s175 = smul.addr %s174, 4
        %s176 = scalar_lea.vmem %s0, %s175
        %p177 = pneg %p37
        %p178 = pneg %p34
        %p179 = pneg %p58
        %p180 = pneg %p55
        %p181 = pneg %p79
        %p182 = pneg %p76
        %p183 = pneg %p105
        %p184 = pneg %p102
        %s185 = smul.u32 32, %s16
        %p186 = scmp.lt.s32.totalorder %s185, 63
        %s187 = scalar_select %p186, %s185, 63
        %s188 = smul.addr %s187, 8
        %s189 = scalar_lea.vmem %s3, %s188
        %s190 = smul.u32 32, %s16
        %p191 = scmp.lt.s32.totalorder %s190, 63
        %s192 = scalar_select %p191, %s190, 63
        %s193 = smul.addr %s192, 4
        %s194 = scalar_lea.vmem %s0, %s193
        %s195 = smul.u32 32, %s16
        %s196 = smul.u32 32, %s16
        %p197 = scmp.lt.s32.totalorder %s196, 63
        %s198 = scalar_select %p197, %s196, 63
        %s199 = smul.addr %s198, 8
        %s200 = scalar_lea.vmem %s3, %s199
        %s201 = smul.u32 32, %s16
        %v203 = vld [vmem:[%s194] sm:$0xf]
        %v204 = vld [vmem:[%s194 + $0x4] sm:$0xf]
        %v205 = vld [vmem:[%s194 + $0x8] sm:$0xf]
        %v206 = vld [vmem:[%s194 + $0xc] sm:$0xf]
        %v207 = vld [vmem:[%s194 + $0x10] sm:$0xf]
        %v208 = vld [vmem:[%s194 + $0x14] sm:$0xf]
        %v209 = vld [vmem:[%s194 + $0x18] sm:$0xf]
        %v210 = vld [vmem:[%s194 + $0x1c] sm:$0xf]
        %v211 = vld [vmem:[%s194 + $0x20] sm:$0xf]
        %v212 = vld [vmem:[%s194 + $0x24] sm:$0xf]
        %v213 = vld [vmem:[%s194 + $0x28] sm:$0xf]
        %v214 = vld [vmem:[%s194 + $0x2c] sm:$0xf]
        %v215 = vld [vmem:[%s194 + $0x30] sm:$0xf]
        %v216 = vld [vmem:[%s194 + $0x34] sm:$0xf]
        %v217 = vld [vmem:[%s194 + $0x38] sm:$0xf]
        %v218 = vld [vmem:[%s194 + $0x3c] sm:$0xf]
        %v219 = vld [vmem:[%s194 + $0x40] sm:$0xf]
        %v220 = vld [vmem:[%s194 + $0x44] sm:$0xf]
        %v221 = vld [vmem:[%s194 + $0x48] sm:$0xf]
        %v222 = vld [vmem:[%s194 + $0x4c] sm:$0xf]
        %v223 = vld [vmem:[%s194 + $0x50] sm:$0xf]
        %v224 = vld [vmem:[%s194 + $0x54] sm:$0xf]
        %v225 = vld [vmem:[%s194 + $0x58] sm:$0xf]
        %v226 = vld [vmem:[%s194 + $0x5c] sm:$0xf]
        %v227 = vld [vmem:[%s194 + $0x60] sm:$0xf]
        %v228 = vld [vmem:[%s194 + $0x64] sm:$0xf]
        %v229 = vld [vmem:[%s194 + $0x68] sm:$0xf]
        %v230 = vld [vmem:[%s194 + $0x6c] sm:$0xf]
        %v231 = vld [vmem:[%s194 + $0x70] sm:$0xf]
        %v232 = vld [vmem:[%s194 + $0x74] sm:$0xf]
        %v233 = vld [vmem:[%s194 + $0x78] sm:$0xf]
        %v234 = vld [vmem:[%s194 + $0x7c] sm:$0xf]
        %v235 = vld [vmem:[#allocation2] sm:$0xf]
        %v236 = vld [vmem:[#allocation2 + $0x4] sm:$0xf]
        %v237 = vld [vmem:[#allocation2 + $0x8] sm:$0xf]
        %v238 = vld [vmem:[#allocation2 + $0xc] sm:$0x3]
        %v239 = vld [vmem:[#allocation4] sm:$0x1]
        %v241 = vlaneseq
        %v242 = vshrl.u32 %v241, 7
        %v243 = vsub.s32 0, %v242
        %v244 = vrot.slane %v239, %v243
        %v278 = vunpack.c.l.b16 %v203
        %v279 = vunpack.c.l.b16 %v204
        %v280 = vunpack.c.l.b16 %v205
        %v281 = vunpack.c.l.b16 %v206
        %v282 = vunpack.c.l.b16 %v207
        %v283 = vunpack.c.l.b16 %v208
        %v284 = vunpack.c.l.b16 %v209
        %v285 = vunpack.c.l.b16 %v210
        %v286 = vunpack.c.l.b16 %v211
        %v287 = vunpack.c.l.b16 %v212
        %v288 = vunpack.c.l.b16 %v213
        %v289 = vunpack.c.l.b16 %v214
        %v290 = vunpack.c.l.b16 %v215
        %v291 = vunpack.c.l.b16 %v216
        %v292 = vunpack.c.l.b16 %v217
        %v293 = vunpack.c.l.b16 %v218
        %v294 = vunpack.c.l.b16 %v219
        %v295 = vunpack.c.l.b16 %v220
        %v296 = vunpack.c.l.b16 %v221
        %v297 = vunpack.c.l.b16 %v222
        %v298 = vunpack.c.l.b16 %v223
        %v299 = vunpack.c.l.b16 %v224
        %v300 = vunpack.c.l.b16 %v225
        %v301 = vunpack.c.l.b16 %v226
        %v302 = vunpack.c.l.b16 %v227
        %v303 = vunpack.c.l.b16 %v228
        %v304 = vunpack.c.l.b16 %v229
        %v305 = vunpack.c.l.b16 %v230
        %v306 = vunpack.c.l.b16 %v231
        %v307 = vunpack.c.l.b16 %v232
        %v308 = vunpack.c.l.b16 %v233
        %v309 = vunpack.c.l.b16 %v234
        %v310 = vpack.c.b16 %v279, %v278
        %v311 = vpack.c.b16 %v281, %v280
        %v312 = vpack.c.b16 %v283, %v282
        %v313 = vpack.c.b16 %v285, %v284
        %v314 = vpack.c.b16 %v287, %v286
        %v315 = vpack.c.b16 %v289, %v288
        %v316 = vpack.c.b16 %v291, %v290
        %v317 = vpack.c.b16 %v293, %v292
        %v318 = vpack.c.b16 %v295, %v294
        %v319 = vpack.c.b16 %v297, %v296
        %v320 = vpack.c.b16 %v299, %v298
        %v321 = vpack.c.b16 %v301, %v300
        %v322 = vpack.c.b16 %v303, %v302
        %v323 = vpack.c.b16 %v305, %v304
        %v324 = vpack.c.b16 %v307, %v306
        %v325 = vpack.c.b16 %v309, %v308
        %v330 = vunpack.c.l.b16 %v235
        %v331 = vunpack.c.l.b16 %v236
        %v332 = vunpack.c.l.b16 %v237
        %v333 = vunpack.c.l.b16 %v238
        %v334 = vpack.c.b16 %v331, %v330
        %v335 = vpack.c.b16 %v333, %v332
        %vm337 = vcmask 220160
        %v339 = vsel %vm337, %v310, 0
        %v342 = vsel %vm337, %v311, 0
        %v345 = vsel %vm337, %v312, 0
        %v348 = vsel %vm337, %v313, 0
        %v351 = vsel %vm337, %v314, 0
        %v354 = vsel %vm337, %v315, 0
        %v357 = vsel %vm337, %v316, 0
        %v360 = vsel %vm337, %v317, 0
        %v363 = vsel %vm337, %v318, 0
        %v366 = vsel %vm337, %v319, 0
        %v369 = vsel %vm337, %v320, 0
        %v372 = vsel %vm337, %v321, 0
        %v375 = vsel %vm337, %v322, 0
        %v378 = vsel %vm337, %v323, 0
        %v381 = vsel %vm337, %v324, 0
        %v384 = vsel %vm337, %v325, 0
        %vm386 = vcmask 1044480
        %vm387 = vcmask 1045504
        %v388 = vsel %vm386, 4294967295, 65535
        %v389 = vsel %vm387, %v388, 0
        %v391 = vand.u32 %v335, %v389
        %393 = vmatprep.subr.bf16.mxu0 0
        %394 = vmatpush1.bf16.msra.mxu0 0
        %395 = vmatprep.subr.bf16.mxu0 0
        %396 = vmatpush1.bf16.msra.mxu0 0
        %397 = vmatprep.subr.bf16.mxu0 0
        %398 = vmatpush1.bf16.msra.mxu0 0
        %399 = vmatprep.subr.bf16.mxu0 0
        %400 = vmatpush1.bf16.msra.mxu0 0
        %401 = vmatprep.subr.bf16.mxu0 0
        %402 = vmatpush1.bf16.msra.mxu0 0
        %403 = vmatprep.subr.bf16.mxu0 0
        %404 = vmatpush1.bf16.msra.mxu0 0
        %405 = vmatprep.subr.bf16.mxu0 0
        %406 = vmatpush1.bf16.msra.mxu0 %v391
        %407 = vmatprep.subr.bf16.mxu0 0
        %408 = vmatpush1.bf16.msra.mxu0 %v334
        %409 = vmatprep.subr.bf16.mxu0 0
        %410 = vmatpush2.bf16.msra.mxu0 0
        %411 = vmatprep.subr.bf16.mxu0 0
        %412 = vmatpush2.bf16.msra.mxu0 0
        %413 = vmatprep.subr.bf16.mxu0 0
        %414 = vmatpush2.bf16.msra.mxu0 0
        %415 = vmatprep.subr.bf16.mxu0 0
        %416 = vmatpush2.bf16.msra.mxu0 0
        %417 = vmatprep.subr.bf16.mxu0 0
        %418 = vmatpush2.bf16.msra.mxu0 0
        %419 = vmatprep.subr.bf16.mxu0 0
        %420 = vmatpush2.bf16.msra.mxu0 0
        %421 = vmatprep.subr.bf16.mxu0 0
        %422 = vmatpush2.bf16.msra.mxu0 0
        %423 = vmatprep.subr.bf16.mxu0 0
        %424 = vmatpush2.bf16.msra.mxu0 0
        %425 = vmatprep.mubr.bf16.mxu0 0
        %426 = vmatmul.mubr.bf16.gmra.mxu0 %v339
        %v427 = vpop.f32.mrf.mxu0
        %v428 = vadd.f32 %v244, %v427
        %v429 = vpop.f32.mrf.mxu0
        %v430 = vpop.f32.mrf.mxu0
        %v431 = vadd.f32 %v244, %v430
        %v432 = vpop.f32.mrf.mxu0
        %433 = vmatprep.mubr.bf16.mxu0 0
        %434 = vmatmul.mubr.bf16.gmra.mxu0 %v342
        %v435 = vpop.f32.mrf.mxu0
        %v436 = vadd.f32 %v244, %v435
        %v437 = vpop.f32.mrf.mxu0
        %v438 = vpop.f32.mrf.mxu0
        %v439 = vadd.f32 %v244, %v438
        %v440 = vpop.f32.mrf.mxu0
        %441 = vmatprep.mubr.bf16.mxu0 0
        %442 = vmatmul.mubr.bf16.gmra.mxu0 %v345
        %v443 = vpop.f32.mrf.mxu0
        %v444 = vadd.f32 %v244, %v443
        %v445 = vpop.f32.mrf.mxu0
        %v446 = vpop.f32.mrf.mxu0
        %v447 = vadd.f32 %v244, %v446
        %v448 = vpop.f32.mrf.mxu0
        %449 = vmatprep.mubr.bf16.mxu0 0
        %450 = vmatmul.mubr.bf16.gmra.mxu0 %v348
        %v451 = vpop.f32.mrf.mxu0
        %v452 = vadd.f32 %v244, %v451
        %v453 = vpop.f32.mrf.mxu0
        %v454 = vpop.f32.mrf.mxu0
        %v455 = vadd.f32 %v244, %v454
        %v456 = vpop.f32.mrf.mxu0
        %457 = vmatprep.mubr.bf16.mxu0 0
        %458 = vmatmul.mubr.bf16.gmra.mxu0 %v351
        %v459 = vpop.f32.mrf.mxu0
        %v460 = vadd.f32 %v244, %v459
        %v461 = vpop.f32.mrf.mxu0
        %v462 = vpop.f32.mrf.mxu0
        %v463 = vadd.f32 %v244, %v462
        %v464 = vpop.f32.mrf.mxu0
        %465 = vmatprep.mubr.bf16.mxu0 0
        %466 = vmatmul.mubr.bf16.gmra.mxu0 %v354
        %v467 = vpop.f32.mrf.mxu0
        %v468 = vadd.f32 %v244, %v467
        %v469 = vpop.f32.mrf.mxu0
        %v470 = vpop.f32.mrf.mxu0
        %v471 = vadd.f32 %v244, %v470
        %v472 = vpop.f32.mrf.mxu0
        %473 = vmatprep.mubr.bf16.mxu0 0
        %474 = vmatmul.mubr.bf16.gmra.mxu0 %v357
        %v475 = vpop.f32.mrf.mxu0
        %v476 = vadd.f32 %v244, %v475
        %v477 = vpop.f32.mrf.mxu0
        %v478 = vpop.f32.mrf.mxu0
        %v479 = vadd.f32 %v244, %v478
        %v480 = vpop.f32.mrf.mxu0
        %481 = vmatprep.mubr.bf16.mxu0 0
        %482 = vmatmul.mubr.bf16.gmra.mxu0 %v360
        %v483 = vpop.f32.mrf.mxu0
        %v484 = vadd.f32 %v244, %v483
        %v485 = vpop.f32.mrf.mxu0
        %v486 = vpop.f32.mrf.mxu0
        %v487 = vadd.f32 %v244, %v486
        %v488 = vpop.f32.mrf.mxu0
        %489 = vmatprep.mubr.bf16.mxu0 0
        %490 = vmatmul.mubr.bf16.gmra.mxu0 %v363
        %v491 = vpop.f32.mrf.mxu0
        %v492 = vadd.f32 %v244, %v491
        %v493 = vpop.f32.mrf.mxu0
        %v494 = vpop.f32.mrf.mxu0
        %v495 = vadd.f32 %v244, %v494
        %v496 = vpop.f32.mrf.mxu0
        %497 = vmatprep.mubr.bf16.mxu0 0
        %498 = vmatmul.mubr.bf16.gmra.mxu0 %v366
        %v499 = vpop.f32.mrf.mxu0
        %v500 = vadd.f32 %v244, %v499
        %v501 = vpop.f32.mrf.mxu0
        %v502 = vpop.f32.mrf.mxu0
        %v503 = vadd.f32 %v244, %v502
        %v504 = vpop.f32.mrf.mxu0
        %505 = vmatprep.mubr.bf16.mxu0 0
        %506 = vmatmul.mubr.bf16.gmra.mxu0 %v369
        %v507 = vpop.f32.mrf.mxu0
        %v508 = vadd.f32 %v244, %v507
        %v509 = vpop.f32.mrf.mxu0
        %v510 = vpop.f32.mrf.mxu0
        %v511 = vadd.f32 %v244, %v510
        %v512 = vpop.f32.mrf.mxu0
        %513 = vmatprep.mubr.bf16.mxu0 0
        %514 = vmatmul.mubr.bf16.gmra.mxu0 %v372
        %v515 = vpop.f32.mrf.mxu0
        %v516 = vadd.f32 %v244, %v515
        %v517 = vpop.f32.mrf.mxu0
        %v518 = vpop.f32.mrf.mxu0
        %v519 = vadd.f32 %v244, %v518
        %v520 = vpop.f32.mrf.mxu0
        %521 = vmatprep.mubr.bf16.mxu0 0
        %522 = vmatmul.mubr.bf16.gmra.mxu0 %v375
        %v523 = vpop.f32.mrf.mxu0
        %v524 = vadd.f32 %v244, %v523
        %v525 = vpop.f32.mrf.mxu0
        %v526 = vpop.f32.mrf.mxu0
        %v527 = vadd.f32 %v244, %v526
        %v528 = vpop.f32.mrf.mxu0
        %529 = vmatprep.mubr.bf16.mxu0 0
        %530 = vmatmul.mubr.bf16.gmra.mxu0 %v378
        %v531 = vpop.f32.mrf.mxu0
        %v532 = vadd.f32 %v244, %v531
        %v533 = vpop.f32.mrf.mxu0
        %v534 = vpop.f32.mrf.mxu0
        %v535 = vadd.f32 %v244, %v534
        %v536 = vpop.f32.mrf.mxu0
        %537 = vmatprep.mubr.bf16.mxu0 0
        %538 = vmatmul.mubr.bf16.gmra.mxu0 %v381
        %v539 = vpop.f32.mrf.mxu0
        %v540 = vadd.f32 %v244, %v539
        %v541 = vpop.f32.mrf.mxu0
        %v542 = vpop.f32.mrf.mxu0
        %v543 = vadd.f32 %v244, %v542
        %v544 = vpop.f32.mrf.mxu0
        %545 = vmatprep.mubr.bf16.mxu0 0
        %546 = vmatmul.mubr.bf16.gmra.mxu0 %v384
        %v547 = vpop.f32.mrf.mxu0
        %v548 = vadd.f32 %v244, %v547
        %v549 = vpop.f32.mrf.mxu0
        %v550 = vpop.f32.mrf.mxu0
        %v551 = vadd.f32 %v244, %v550
        %v552 = vpop.f32.mrf.mxu0
        %553 = vdwg.mxu0
        %v554 = vmax.f32 %v428, 0.0
        %v555 = vmax.f32 %v431, 0.0
        %v556 = vmax.f32 %v436, 0.0
        %v557 = vmax.f32 %v439, 0.0
        %v558 = vmax.f32 %v444, 0.0
        %v559 = vmax.f32 %v447, 0.0
        %v560 = vmax.f32 %v452, 0.0
        %v561 = vmax.f32 %v455, 0.0
        %v562 = vmax.f32 %v460, 0.0
        %v563 = vmax.f32 %v463, 0.0
        %v564 = vmax.f32 %v468, 0.0
        %v565 = vmax.f32 %v471, 0.0
        %v566 = vmax.f32 %v476, 0.0
        %v567 = vmax.f32 %v479, 0.0
        %v568 = vmax.f32 %v484, 0.0
        %v569 = vmax.f32 %v487, 0.0
        %v570 = vmax.f32 %v492, 0.0
        %v571 = vmax.f32 %v495, 0.0
        %v572 = vmax.f32 %v500, 0.0
        %v573 = vmax.f32 %v503, 0.0
        %v574 = vmax.f32 %v508, 0.0
        %v575 = vmax.f32 %v511, 0.0
        %v576 = vmax.f32 %v516, 0.0
        %v577 = vmax.f32 %v519, 0.0
        %v578 = vmax.f32 %v524, 0.0
        %v579 = vmax.f32 %v527, 0.0
        %v580 = vmax.f32 %v532, 0.0
        %v581 = vmax.f32 %v535, 0.0
        %v582 = vmax.f32 %v540, 0.0
        %v583 = vmax.f32 %v543, 0.0
        %v584 = vmax.f32 %v548, 0.0
        %v585 = vmax.f32 %v551, 0.0
        %586 = vst [vmem:[%s200] sm:$0xff] %v554
        %587 = vst [vmem:[%s200 + $0x8] sm:$0xff] %v555
        %588 = vst [vmem:[%s200 + $0x10] sm:$0xff] %v556
        %589 = vst [vmem:[%s200 + $0x18] sm:$0xff] %v557
        %590 = vst [vmem:[%s200 + $0x20] sm:$0xff] %v558
        %591 = vst [vmem:[%s200 + $0x28] sm:$0xff] %v559
        %592 = vst [vmem:[%s200 + $0x30] sm:$0xff] %v560
        %593 = vst [vmem:[%s200 + $0x38] sm:$0xff] %v561
        %594 = vst [vmem:[%s200 + $0x40] sm:$0xff] %v562
        %595 = vst [vmem:[%s200 + $0x48] sm:$0xff] %v563
        %596 = vst [vmem:[%s200 + $0x50] sm:$0xff] %v564
        %597 = vst [vmem:[%s200 + $0x58] sm:$0xff] %v565
        %598 = vst [vmem:[%s200 + $0x60] sm:$0xff] %v566
        %599 = vst [vmem:[%s200 + $0x68] sm:$0xff] %v567
        %600 = vst [vmem:[%s200 + $0x70] sm:$0xff] %v568
        %601 = vst [vmem:[%s200 + $0x78] sm:$0xff] %v569
        %602 = vst [vmem:[%s200 + $0x80] sm:$0xff] %v570
        %603 = vst [vmem:[%s200 + $0x88] sm:$0xff] %v571
        %604 = vst [vmem:[%s200 + $0x90] sm:$0xff] %v572
        %605 = vst [vmem:[%s200 + $0x98] sm:$0xff] %v573
        %606 = vst [vmem:[%s200 + $0xa0] sm:$0xff] %v574
        %607 = vst [vmem:[%s200 + $0xa8] sm:$0xff] %v575
        %608 = vst [vmem:[%s200 + $0xb0] sm:$0xff] %v576
        %609 = vst [vmem:[%s200 + $0xb8] sm:$0xff] %v577
        %610 = vst [vmem:[%s200 + $0xc0] sm:$0xff] %v578
        %611 = vst [vmem:[%s200 + $0xc8] sm:$0xff] %v579
        %612 = vst [vmem:[%s200 + $0xd0] sm:$0xff] %v580
        %613 = vst [vmem:[%s200 + $0xd8] sm:$0xff] %v581
        %614 = vst [vmem:[%s200 + $0xe0] sm:$0xff] %v582
        %615 = vst [vmem:[%s200 + $0xe8] sm:$0xff] %v583
        %616 = vst [vmem:[%s200 + $0xf0] sm:$0xff] %v584
        %617 = vst [vmem:[%s200 + $0xf8] sm:$0xff] %v585
        %s618 = smul.u32 32, %s16
        %p619 = scmp.lt.s32.totalorder %s618, 63
        %s620 = scalar_select %p619, %s618, 63
        %s621 = smul.addr %s620, 8
        %s622 = scalar_lea.vmem %s3, %s621
        // Predicated region
        $region41: #{_lambda_.11} parent=31 // pred_check
          %p623 = pneg %p102
        $region42: #{_lambda_.11} parent=31 // pred_check_branch
          %625 = sbr.rel (%p623) target = $region44
        $region43: #{_lambda_.11} parent=31 // pred_region
          %s626 = smul.u32 32, %s16
        $region44: #{_lambda_.11} parent=31 // pred_fallthru
          _
      $region32: #{_lambda_.11} parent=5 // pred_fallthru
        _
      %p627 = scmp.le.s32.totalorder 2, %s11
      // Predicated region
      $region45: #{_lambda_.11} parent=5 // pred_check
        %p628 = pneg %p627
      $region46: #{_lambda_.11} parent=5 // pred_check_branch
        %630 = sbr.rel (%p628) target = $region48
      $region47: #{_lambda_.11} parent=5 // pred_region
        %s631 = ssub.s32 %s11, 2
        // Predicated region
        $region49: #{_lambda_.11} parent=47 // pred_check
          %p632 = pneg %p108
        $region50: #{_lambda_.11} parent=47 // pred_check_branch
          %634 = sbr.rel (%p632) target = $region52
        $region51: #{_lambda_.11} parent=47 // pred_region
          %s635 = smul.u32 32, %s17
          %p636 = scmp.lt.s32.totalorder %s635, 63
          %s637 = scalar_select %p636, %s635, 63
          %s638 = smul.addr %s637, 8
          %s639 = scalar_lea.vmem %s3, %s638
        $region52: #{_lambda_.11} parent=47 // pred_fallthru
          _
      $region48: #{_lambda_.11} parent=5 // pred_fallthru
        _
    $region6: #{_lambda_.11} parent=1 // loop_footer
      %s15 = sadd.s32 1, %s11
    $region7: #{_lambda_.11} parent=1 // loop_footer_branch
      %10 = sbr.rel target = $region3
    $region8: #{_lambda_.11} parent=1 // loop_exit
      _
    %640 = vsyncpa [#allocation3], 1
    %s641 = scalar_lea.sflag [#allocation3], 1
    %642 = vsyncpa %s641, 1
    %643 = vsyncpa [#allocation5], 1

// kernel: _lambda_.12
$region0: #{_lambda_.12}
  #allocation0 [shape = 'u32[]', space=smem, size = 0x4, offset = 0x4, fixed_abs, tag = 'smem constant byte address 0x4 - core index']
  #allocation1 [shape = 'u32[144,128]{1,0:T(1,128)}', space=vmem, size = 0x12000, scoped, tag = 'internal scratch']
  %s0 = inlined_call_operand.vmem [shape: bf16[128,72], index: 0, kind: input, shape index: {}]
  %s1 = inlined_call_operand.vmem [shape: bf16[72,128], index: 1, kind: input, shape index: {}]
  %s2 = inlined_call_operand.vmem [shape: f32[1,128], index: 2, kind: input, shape index: {}]
  %s3 = inlined_call_operand.vmem [shape: f32[128,128], index: 3, kind: output, shape index: {}]
  %s4 = sld [smem:[#allocation0]]
  $region22: #{_lambda_.12} parent=0
    _
  %s6 = ssub.s32 1, %s4
  %s7 = scalar_select 0, %s6, %s4
  // Predicated region
  $region2: #{_lambda_.12} parent=0 // pred_check
    _
  $region3: #{_lambda_.12} parent=0 // pred_check_branch
    %9 = sbr.rel (0) target = $region5
  $region4: #{_lambda_.12} parent=0 // pred_region
    _
  $region5: #{_lambda_.12} parent=0 // pred_fallthru
    _
  // Predicated region
  $region6: #{_lambda_.12} parent=0 // pred_check
    _
  $region7: #{_lambda_.12} parent=0 // pred_check_branch
    %11 = sbr.rel (0) target = $region9
  $region8: #{_lambda_.12} parent=0 // pred_region
    _
  $region9: #{_lambda_.12} parent=0 // pred_fallthru
    _
  // Predicated region
  $region10: #{_lambda_.12} parent=0 // pred_check
    _
  $region11: #{_lambda_.12} parent=0 // pred_check_branch
    %13 = sbr.rel (0) target = $region13
  $region12: #{_lambda_.12} parent=0 // pred_region
    _
  $region13: #{_lambda_.12} parent=0 // pred_fallthru
    _
  %v15 = vld [vmem:[%s0] sm:$0xf]
  %v16 = vld [vmem:[%s0 + $0x4] sm:$0xf]
  %v17 = vld [vmem:[%s0 + $0x8] sm:$0xf]
  %v18 = vld [vmem:[%s0 + $0xc] sm:$0xf]
  %v19 = vld [vmem:[%s0 + $0x10] sm:$0xf]
  %v20 = vld [vmem:[%s0 + $0x14] sm:$0xf]
  %v21 = vld [vmem:[%s0 + $0x18] sm:$0xf]
  %v22 = vld [vmem:[%s0 + $0x1c] sm:$0xf]
  %v23 = vld [vmem:[%s0 + $0x20] sm:$0xf]
  %v24 = vld [vmem:[%s0 + $0x24] sm:$0xf]
  %v25 = vld [vmem:[%s0 + $0x28] sm:$0xf]
  %v26 = vld [vmem:[%s0 + $0x2c] sm:$0xf]
  %v27 = vld [vmem:[%s0 + $0x30] sm:$0xf]
  %v28 = vld [vmem:[%s0 + $0x34] sm:$0xf]
  %v29 = vld [vmem:[%s0 + $0x38] sm:$0xf]
  %v30 = vld [vmem:[%s0 + $0x3c] sm:$0xf]
  %v31 = vld [vmem:[%s1] sm:$0xf]
  %v32 = vld [vmem:[%s1 + $0x4] sm:$0xf]
  %v33 = vld [vmem:[%s1 + $0x8] sm:$0xf]
  %v34 = vld [vmem:[%s1 + $0xc] sm:$0xf]
  %v35 = vld [vmem:[%s1 + $0x10] sm:$0xf]
  %v36 = vld [vmem:[%s1 + $0x14] sm:$0xf]
  %v37 = vld [vmem:[%s1 + $0x18] sm:$0xf]
  %v38 = vld [vmem:[%s1 + $0x1c] sm:$0xf]
  %v39 = vld [vmem:[%s1 + $0x20] sm:$0xf]
  %v40 = vld [vmem:[%s2] sm:$0x1]
  %v42 = vlaneseq
  %v43 = vshrl.u32 %v42, 7
  %v44 = vsub.s32 0, %v43
  %v45 = vrot.slane %v40, %v44
  %v63 = vunpack.c.l.b16 %v15
  %v64 = vunpack.c.l.b16 %v16
  %v65 = vunpack.c.l.b16 %v17
  %v66 = vunpack.c.l.b16 %v18
  %v67 = vunpack.c.l.b16 %v19
  %v68 = vunpack.c.l.b16 %v20
  %v69 = vunpack.c.l.b16 %v21
  %v70 = vunpack.c.l.b16 %v22
  %v71 = vunpack.c.l.b16 %v23
  %v72 = vunpack.c.l.b16 %v24
  %v73 = vunpack.c.l.b16 %v25
  %v74 = vunpack.c.l.b16 %v26
  %v75 = vunpack.c.l.b16 %v27
  %v76 = vunpack.c.l.b16 %v28
  %v77 = vunpack.c.l.b16 %v29
  %v78 = vunpack.c.l.b16 %v30
  %v79 = vpack.c.b16 %v64, %v63
  %v80 = vpack.c.b16 %v66, %v65
  %v81 = vpack.c.b16 %v68, %v67
  %v82 = vpack.c.b16 %v70, %v69
  %v83 = vpack.c.b16 %v72, %v71
  %v84 = vpack.c.b16 %v74, %v73
  %v85 = vpack.c.b16 %v76, %v75
  %v86 = vpack.c.b16 %v78, %v77
  %v96 = vunpack.c.l.b16 %v31
  %v97 = vunpack.c.l.b16 %v32
  %v98 = vunpack.c.l.b16 %v33
  %v99 = vunpack.c.l.b16 %v34
  %v100 = vunpack.c.l.b16 %v35
  %v101 = vunpack.c.l.b16 %v36
  %v102 = vunpack.c.l.b16 %v37
  %v103 = vunpack.c.l.b16 %v38
  %v104 = vunpack.c.l.b16 %v39
  %v105 = vpack.c.b16 %v97, %v96
  %v106 = vpack.c.b16 %v99, %v98
  %v107 = vpack.c.b16 %v101, %v100
  %v108 = vpack.c.b16 %v103, %v102
  %v109 = vpack.c.b16 %v104, %v104
  %vm114 = vcmask 588800
  %v116 = vsel %vm114, %v79, 0
  %v119 = vsel %vm114, %v80, 0
  %v122 = vsel %vm114, %v81, 0
  %v125 = vsel %vm114, %v82, 0
  %v128 = vsel %vm114, %v83, 0
  %v131 = vsel %vm114, %v84, 0
  %v134 = vsel %vm114, %v85, 0
  %v137 = vsel %vm114, %v86, 0
  %vm139 = vcmask 1043456
  %v141 = vsel %vm139, %v109, 0
  %143 = vmatprep.subr.bf16.mxu0 0
  %144 = vmatpush1.bf16.msra.mxu0 0
  %145 = vmatprep.subr.bf16.mxu0 0
  %146 = vmatpush1.bf16.msra.mxu0 0
  %147 = vmatprep.subr.bf16.mxu0 0
  %148 = vmatpush1.bf16.msra.mxu0 0
  %149 = vmatprep.subr.bf16.mxu0 0
  %150 = vmatpush1.bf16.msra.mxu0 %v141
  %151 = vmatprep.subr.bf16.mxu0 0
  %152 = vmatpush1.bf16.msra.mxu0 %v108
  %153 = vmatprep.subr.bf16.mxu0 0
  %154 = vmatpush1.bf16.msra.mxu0 %v107
  %155 = vmatprep.subr.bf16.mxu0 0
  %156 = vmatpush1.bf16.msra.mxu0 %v106
  %157 = vmatprep.subr.bf16.mxu0 0
  %158 = vmatpush1.bf16.msra.mxu0 %v105
  %159 = vmatprep.subr.bf16.mxu0 0
  %160 = vmatpush2.bf16.msra.mxu0 0
  %161 = vmatprep.subr.bf16.mxu0 0
  %162 = vmatpush2.bf16.msra.mxu0 0
  %163 = vmatprep.subr.bf16.mxu0 0
  %164 = vmatpush2.bf16.msra.mxu0 0
  %165 = vmatprep.subr.bf16.mxu0 0
  %166 = vmatpush2.bf16.msra.mxu0 0
  %167 = vmatprep.subr.bf16.mxu0 0
  %168 = vmatpush2.bf16.msra.mxu0 0
  %169 = vmatprep.subr.bf16.mxu0 0
  %170 = vmatpush2.bf16.msra.mxu0 0
  %171 = vmatprep.subr.bf16.mxu0 0
  %172 = vmatpush2.bf16.msra.mxu0 0
  %173 = vmatprep.subr.bf16.mxu0 0
  %174 = vmatpush2.bf16.msra.mxu0 0
  %175 = vmatprep.mubr.bf16.mxu0 0
  %176 = vmatmul.mubr.bf16.gmra.mxu0 %v116
  %v177 = vpop.f32.mrf.mxu0
  %v178 = vadd.f32 %v45, %v177
  %v179 = vpop.f32.mrf.mxu0
  %v180 = vpop.f32.mrf.mxu0
  %v181 = vadd.f32 %v45, %v180
  %v182 = vpop.f32.mrf.mxu0
  %183 = vmatprep.mubr.bf16.mxu0 0
  %184 = vmatmul.mubr.bf16.gmra.mxu0 %v119
  %v185 = vpop.f32.mrf.mxu0
  %v186 = vadd.f32 %v45, %v185
  %v187 = vpop.f32.mrf.mxu0
  %v188 = vpop.f32.mrf.mxu0
  %v189 = vadd.f32 %v45, %v188
  %v190 = vpop.f32.mrf.mxu0
  %191 = vmatprep.mubr.bf16.mxu0 0
  %192 = vmatmul.mubr.bf16.gmra.mxu0 %v122
  %v193 = vpop.f32.mrf.mxu0
  %v194 = vadd.f32 %v45, %v193
  %v195 = vpop.f32.mrf.mxu0
  %v196 = vpop.f32.mrf.mxu0
  %v197 = vadd.f32 %v45, %v196
  %v198 = vpop.f32.mrf.mxu0
  %199 = vmatprep.mubr.bf16.mxu0 0
  %200 = vmatmul.mubr.bf16.gmra.mxu0 %v125
  %v201 = vpop.f32.mrf.mxu0
  %v202 = vadd.f32 %v45, %v201
  %v203 = vpop.f32.mrf.mxu0
  %v204 = vpop.f32.mrf.mxu0
  %v205 = vadd.f32 %v45, %v204
  %v206 = vpop.f32.mrf.mxu0
  %207 = vmatprep.mubr.bf16.mxu0 0
  %208 = vmatmul.mubr.bf16.gmra.mxu0 %v128
  %v209 = vpop.f32.mrf.mxu0
  %v210 = vadd.f32 %v45, %v209
  %v211 = vpop.f32.mrf.mxu0
  %v212 = vpop.f32.mrf.mxu0
  %v213 = vadd.f32 %v45, %v212
  %v214 = vpop.f32.mrf.mxu0
  %215 = vmatprep.mubr.bf16.mxu0 0
  %216 = vmatmul.mubr.bf16.gmra.mxu0 %v131
  %v217 = vpop.f32.mrf.mxu0
  %v218 = vadd.f32 %v45, %v217
  %v219 = vpop.f32.mrf.mxu0
  %v220 = vpop.f32.mrf.mxu0
  %v221 = vadd.f32 %v45, %v220
  %v222 = vpop.f32.mrf.mxu0
  %223 = vmatprep.mubr.bf16.mxu0 0
  %224 = vmatmul.mubr.bf16.gmra.mxu0 %v134
  %v225 = vpop.f32.mrf.mxu0
  %v226 = vadd.f32 %v45, %v225
  %v227 = vpop.f32.mrf.mxu0
  %v228 = vpop.f32.mrf.mxu0
  %v229 = vadd.f32 %v45, %v228
  %v230 = vpop.f32.mrf.mxu0
  %231 = vmatprep.mubr.bf16.mxu0 0
  %232 = vmatmul.mubr.bf16.gmra.mxu0 %v137
  %v233 = vpop.f32.mrf.mxu0
  %v234 = vadd.f32 %v45, %v233
  %v235 = vpop.f32.mrf.mxu0
  %v236 = vpop.f32.mrf.mxu0
  %v237 = vadd.f32 %v45, %v236
  %v238 = vpop.f32.mrf.mxu0
  %239 = vdwg.mxu0
  %v240 = vmax.f32 %v178, 0.0
  %v241 = vmax.f32 %v181, 0.0
  %v242 = vmax.f32 %v186, 0.0
  %v243 = vmax.f32 %v189, 0.0
  %v244 = vmax.f32 %v194, 0.0
  %v245 = vmax.f32 %v197, 0.0
  %v246 = vmax.f32 %v202, 0.0
  %v247 = vmax.f32 %v205, 0.0
  %v248 = vmax.f32 %v210, 0.0
  %v249 = vmax.f32 %v213, 0.0
  %v250 = vmax.f32 %v218, 0.0
  %v251 = vmax.f32 %v221, 0.0
  %v252 = vmax.f32 %v226, 0.0
  %v253 = vmax.f32 %v229, 0.0
  %v254 = vmax.f32 %v234, 0.0
  %v255 = vmax.f32 %v237, 0.0
  %256 = vst [vmem:[%s3] sm:$0xff] %v240
  %257 = vst [vmem:[%s3 + $0x8] sm:$0xff] %v241
  %258 = vst [vmem:[%s3 + $0x10] sm:$0xff] %v242
  %259 = vst [vmem:[%s3 + $0x18] sm:$0xff] %v243
  %260 = vst [vmem:[%s3 + $0x20] sm:$0xff] %v244
  %261 = vst [vmem:[%s3 + $0x28] sm:$0xff] %v245
  %262 = vst [vmem:[%s3 + $0x30] sm:$0xff] %v246
  %263 = vst [vmem:[%s3 + $0x38] sm:$0xff] %v247
  %264 = vst [vmem:[%s3 + $0x40] sm:$0xff] %v248
  %265 = vst [vmem:[%s3 + $0x48] sm:$0xff] %v249
  %266 = vst [vmem:[%s3 + $0x50] sm:$0xff] %v250
  %267 = vst [vmem:[%s3 + $0x58] sm:$0xff] %v251
  %268 = vst [vmem:[%s3 + $0x60] sm:$0xff] %v252
  %269 = vst [vmem:[%s3 + $0x68] sm:$0xff] %v253
  %270 = vst [vmem:[%s3 + $0x70] sm:$0xff] %v254
  %271 = vst [vmem:[%s3 + $0x78] sm:$0xff] %v255
  // Predicated region
  $region14: #{_lambda_.12} parent=0 // pred_check
    _
  $region15: #{_lambda_.12} parent=0 // pred_check_branch
    %273 = sbr.rel (0) target = $region17
  $region16: #{_lambda_.12} parent=0 // pred_region
    _
  $region17: #{_lambda_.12} parent=0 // pred_fallthru
    _
  // Predicated region
  $region18: #{_lambda_.12} parent=0 // pred_check
    _
  $region19: #{_lambda_.12} parent=0 // pred_check_branch
    %275 = sbr.rel (0) target = $region21
  $region20: #{_lambda_.12} parent=0 // pred_region
    _
  $region21: #{_lambda_.12} parent=0 // pred_fallthru
    _

// kernel: _lambda_.13
$region0: #{_lambda_.13}
  #allocation0 [shape = 'u32[]', space=smem, size = 0x4, offset = 0x4, fixed_abs, tag = 'smem constant byte address 0x4 - core index']
  #allocation1 [shape = 'u32[144,128]{1,0:T(1,128)}', space=vmem, size = 0x12000, scoped, tag = 'internal scratch']
  %s0 = inlined_call_operand.vmem [shape: bf16[32,144], index: 0, kind: input, shape index: {}]
  %s1 = inlined_call_operand.vmem [shape: bf16[144,128], index: 1, kind: input, shape index: {}]
  %s2 = inlined_call_operand.vmem [shape: f32[1,128], index: 2, kind: input, shape index: {}]
  %s3 = inlined_call_operand.vmem [shape: f32[32,128], index: 3, kind: output, shape index: {}]
  %s4 = sld [smem:[#allocation0]]
  $region22: #{_lambda_.13} parent=0
    _
  %s6 = ssub.s32 1, %s4
  %s7 = scalar_select 0, %s6, %s4
  // Predicated region
  $region2: #{_lambda_.13} parent=0 // pred_check
    _
  $region3: #{_lambda_.13} parent=0 // pred_check_branch
    %9 = sbr.rel (0) target = $region5
  $region4: #{_lambda_.13} parent=0 // pred_region
    _
  $region5: #{_lambda_.13} parent=0 // pred_fallthru
    _
  // Predicated region
  $region6: #{_lambda_.13} parent=0 // pred_check
    _
  $region7: #{_lambda_.13} parent=0 // pred_check_branch
    %11 = sbr.rel (0) target = $region9
  $region8: #{_lambda_.13} parent=0 // pred_region
    _
  $region9: #{_lambda_.13} parent=0 // pred_fallthru
    _
  // Predicated region
  $region10: #{_lambda_.13} parent=0 // pred_check
    _
  $region11: #{_lambda_.13} parent=0 // pred_check_branch
    %13 = sbr.rel (0) target = $region13
  $region12: #{_lambda_.13} parent=0 // pred_region
    _
  $region13: #{_lambda_.13} parent=0 // pred_fallthru
    _
  %v15 = vld [vmem:[%s0] sm:$0xff]
  %v16 = vld [vmem:[%s0 + $0x8] sm:$0xff]
  %v17 = vld [vmem:[%s0 + $0x10] sm:$0xff]
  %v18 = vld [vmem:[%s0 + $0x18] sm:$0xff]
  %v19 = vld [vmem:[%s1] sm:$0xf]
  %v20 = vld [vmem:[%s1 + $0x4] sm:$0xf]
  %v21 = vld [vmem:[%s1 + $0x8] sm:$0xf]
  %v22 = vld [vmem:[%s1 + $0xc] sm:$0xf]
  %v23 = vld [vmem:[%s1 + $0x10] sm:$0xf]
  %v24 = vld [vmem:[%s1 + $0x14] sm:$0xf]
  %v25 = vld [vmem:[%s1 + $0x18] sm:$0xf]
  %v26 = vld [vmem:[%s1 + $0x1c] sm:$0xf]
  %v27 = vld [vmem:[%s1 + $0x20] sm:$0xf]
  %v28 = vld [vmem:[%s1 + $0x24] sm:$0xf]
  %v29 = vld [vmem:[%s1 + $0x28] sm:$0xf]
  %v30 = vld [vmem:[%s1 + $0x2c] sm:$0xf]
  %v31 = vld [vmem:[%s1 + $0x30] sm:$0xf]
  %v32 = vld [vmem:[%s1 + $0x34] sm:$0xf]
  %v33 = vld [vmem:[%s1 + $0x38] sm:$0xf]
  %v34 = vld [vmem:[%s1 + $0x3c] sm:$0xf]
  %v35 = vld [vmem:[%s1 + $0x40] sm:$0xf]
  %v36 = vld [vmem:[%s1 + $0x44] sm:$0xf]
  %v37 = vld [vmem:[%s2] sm:$0x1]
  %v39 = vlaneseq
  %v40 = vshrl.u32 %v39, 7
  %v41 = vsub.s32 0, %v40
  %v42 = vrot.slane %v37, %v41
  %v48 = vunpack.c.l.b16 %v15
  %v49 = vunpack.c.h.b16 %v15
  %v50 = vunpack.c.l.b16 %v16
  %v51 = vunpack.c.h.b16 %v16
  %v52 = vunpack.c.l.b16 %v17
  %v53 = vunpack.c.h.b16 %v17
  %v54 = vunpack.c.l.b16 %v18
  %v55 = vunpack.c.h.b16 %v18
  %v56 = vpack.c.b16 %v50, %v48
  %v57 = vpack.c.b16 %v51, %v49
  %v58 = vpack.c.b16 %v54, %v52
  %v59 = vpack.c.b16 %v55, %v53
  %v80 = vunpack.c.l.b16 %v19
  %v81 = vunpack.c.l.b16 %v20
  %v82 = vunpack.c.l.b16 %v21
  %v83 = vunpack.c.l.b16 %v22
  %v84 = vunpack.c.l.b16 %v23
  %v85 = vunpack.c.l.b16 %v24
  %v86 = vunpack.c.l.b16 %v25
  %v87 = vunpack.c.l.b16 %v26
  %v88 = vunpack.c.l.b16 %v27
  %v89 = vunpack.c.l.b16 %v28
  %v90 = vunpack.c.l.b16 %v29
  %v91 = vunpack.c.l.b16 %v30
  %v92 = vunpack.c.l.b16 %v31
  %v93 = vunpack.c.l.b16 %v32
  %v94 = vunpack.c.l.b16 %v33
  %v95 = vunpack.c.l.b16 %v34
  %v96 = vunpack.c.l.b16 %v35
  %v97 = vunpack.c.l.b16 %v36
  %v98 = vpack.c.b16 %v81, %v80
  %v99 = vpack.c.b16 %v83, %v82
  %v100 = vpack.c.b16 %v85, %v84
  %v101 = vpack.c.b16 %v87, %v86
  %v102 = vpack.c.b16 %v89, %v88
  %v103 = vpack.c.b16 %v91, %v90
  %v104 = vpack.c.b16 %v93, %v92
  %v105 = vpack.c.b16 %v95, %v94
  %v106 = vpack.c.b16 %v97, %v96
  %vm116 = vcmask 130048
  %v118 = vsel %vm116, %v57, 0
  %v121 = vsel %vm116, %v59, 0
  %123 = vmatprep.subr.bf16.mxu0 0
  %124 = vmatpush1.bf16.msra.mxu0 %v105
  %125 = vmatprep.subr.bf16.mxu0 0
  %126 = vmatpush1.bf16.msra.mxu0 %v104
  %127 = vmatprep.subr.bf16.mxu0 0
  %128 = vmatpush1.bf16.msra.mxu0 %v103
  %129 = vmatprep.subr.bf16.mxu0 0
  %130 = vmatpush1.bf16.msra.mxu0 %v102
  %131 = vmatprep.subr.bf16.mxu0 0
  %132 = vmatpush1.bf16.msra.mxu0 %v101
  %133 = vmatprep.subr.bf16.mxu0 0
  %134 = vmatpush1.bf16.msra.mxu0 %v100
  %135 = vmatprep.subr.bf16.mxu0 0
  %136 = vmatpush1.bf16.msra.mxu0 %v99
  %137 = vmatprep.subr.bf16.mxu0 0
  %138 = vmatpush1.bf16.msra.mxu0 %v98
  %139 = vmatprep.subr.bf16.mxu0 0
  %140 = vmatpush2.bf16.msra.mxu0 0
  %141 = vmatprep.subr.bf16.mxu0 0
  %142 = vmatpush2.bf16.msra.mxu0 0
  %143 = vmatprep.subr.bf16.mxu0 0
  %144 = vmatpush2.bf16.msra.mxu0 0
  %145 = vmatprep.subr.bf16.mxu0 0
  %146 = vmatpush2.bf16.msra.mxu0 0
  %147 = vmatprep.subr.bf16.mxu0 0
  %148 = vmatpush2.bf16.msra.mxu0 0
  %149 = vmatprep.subr.bf16.mxu0 0
  %150 = vmatpush2.bf16.msra.mxu0 0
  %151 = vmatprep.subr.bf16.mxu0 0
  %152 = vmatpush2.bf16.msra.mxu0 0
  %153 = vmatprep.subr.bf16.mxu0 0
  %154 = vmatpush2.bf16.msra.mxu0 %v106
  %155 = vmatprep.mubr.bf16.mxu0 %v118
  %156 = vmatmul.mubr.bf16.gmra.mxu0 %v56
  %v157 = vpop.f32.mrf.mxu0
  %v158 = vadd.f32 %v42, %v157
  %v159 = vpop.f32.mrf.mxu0
  %v160 = vpop.f32.mrf.mxu0
  %v161 = vadd.f32 %v42, %v160
  %v162 = vpop.f32.mrf.mxu0
  %163 = vmatprep.mubr.bf16.mxu0 %v121
  %164 = vmatmul.mubr.bf16.gmra.mxu0 %v58
  %v165 = vpop.f32.mrf.mxu0
  %v166 = vadd.f32 %v42, %v165
  %v167 = vpop.f32.mrf.mxu0
  %v168 = vpop.f32.mrf.mxu0
  %v169 = vadd.f32 %v42, %v168
  %v170 = vpop.f32.mrf.mxu0
  %171 = vdwg.mxu0
  %v172 = vmax.f32 %v158, 0.0
  %v173 = vmax.f32 %v161, 0.0
  %v174 = vmax.f32 %v166, 0.0
  %v175 = vmax.f32 %v169, 0.0
  %176 = vst [vmem:[%s3] sm:$0xff] %v172
  %177 = vst [vmem:[%s3 + $0x8] sm:$0xff] %v173
  %178 = vst [vmem:[%s3 + $0x10] sm:$0xff] %v174
  %179 = vst [vmem:[%s3 + $0x18] sm:$0xff] %v175
  // Predicated region
  $region14: #{_lambda_.13} parent=0 // pred_check
    _
  $region15: #{_lambda_.13} parent=0 // pred_check_branch
    %181 = sbr.rel (0) target = $region17
  $region16: #{_lambda_.13} parent=0 // pred_region
    _
  $region17: #{_lambda_.13} parent=0 // pred_fallthru
    _
  // Predicated region
  $region18: #{_lambda_.13} parent=0 // pred_check
    _
  $region19: #{_lambda_.13} parent=0 // pred_check_branch
    %183 = sbr.rel (0) target = $region21
  $region20: #{_lambda_.13} parent=0 // pred_region
    _
  $region21: #{_lambda_.13} parent=0 // pred_fallthru
    _

// kernel: _lambda_.14
$region0: #{_lambda_.14}
  #allocation0 [shape = 'u32[]', space=smem, size = 0x4, offset = 0x4, fixed_abs, tag = 'smem constant byte address 0x4 - core index']
  #allocation1 [shape = 'u32[144,128]{1,0:T(1,128)}', space=vmem, size = 0x12000, scoped, tag = 'internal scratch']
  %s0 = inlined_call_operand.vmem [shape: bf16[8,288], index: 0, kind: input, shape index: {}]
  %s1 = inlined_call_operand.vmem [shape: bf16[288,128], index: 1, kind: input, shape index: {}]
  %s2 = inlined_call_operand.vmem [shape: f32[1,128], index: 2, kind: input, shape index: {}]
  %s3 = inlined_call_operand.vmem [shape: f32[8,128], index: 3, kind: output, shape index: {}]
  %s4 = sld [smem:[#allocation0]]
  $region22: #{_lambda_.14} parent=0
    _
  %s6 = ssub.s32 1, %s4
  %s7 = scalar_select 0, %s6, %s4
  // Predicated region
  $region2: #{_lambda_.14} parent=0 // pred_check
    _
  $region3: #{_lambda_.14} parent=0 // pred_check_branch
    %9 = sbr.rel (0) target = $region5
  $region4: #{_lambda_.14} parent=0 // pred_region
    _
  $region5: #{_lambda_.14} parent=0 // pred_fallthru
    _
  // Predicated region
  $region6: #{_lambda_.14} parent=0 // pred_check
    _
  $region7: #{_lambda_.14} parent=0 // pred_check_branch
    %11 = sbr.rel (0) target = $region9
  $region8: #{_lambda_.14} parent=0 // pred_region
    _
  $region9: #{_lambda_.14} parent=0 // pred_fallthru
    _
  // Predicated region
  $region10: #{_lambda_.14} parent=0 // pred_check
    _
  $region11: #{_lambda_.14} parent=0 // pred_check_branch
    %13 = sbr.rel (0) target = $region13
  $region12: #{_lambda_.14} parent=0 // pred_region
    _
  $region13: #{_lambda_.14} parent=0 // pred_fallthru
    _
  %v15 = vld [vmem:[%s0] sm:$0xff]
  %v16 = vld [vmem:[%s0 + $0x8] sm:$0xf]
  %v17 = vld [vmem:[%s1] sm:$0xf]
  %v18 = vld [vmem:[%s1 + $0x4] sm:$0xf]
  %v19 = vld [vmem:[%s1 + $0x8] sm:$0xf]
  %v20 = vld [vmem:[%s1 + $0xc] sm:$0xf]
  %v21 = vld [vmem:[%s1 + $0x10] sm:$0xf]
  %v22 = vld [vmem:[%s1 + $0x14] sm:$0xf]
  %v23 = vld [vmem:[%s1 + $0x18] sm:$0xf]
  %v24 = vld [vmem:[%s1 + $0x1c] sm:$0xf]
  %v25 = vld [vmem:[%s1 + $0x20] sm:$0xf]
  %v26 = vld [vmem:[%s1 + $0x24] sm:$0xf]
  %v27 = vld [vmem:[%s1 + $0x28] sm:$0xf]
  %v28 = vld [vmem:[%s1 + $0x2c] sm:$0xf]
  %v29 = vld [vmem:[%s1 + $0x30] sm:$0xf]
  %v30 = vld [vmem:[%s1 + $0x34] sm:$0xf]
  %v31 = vld [vmem:[%s1 + $0x38] sm:$0xf]
  %v32 = vld [vmem:[%s1 + $0x3c] sm:$0xf]
  %v33 = vld [vmem:[%s1 + $0x40] sm:$0xf]
  %v34 = vld [vmem:[%s1 + $0x44] sm:$0xf]
  %v35 = vld [vmem:[%s1 + $0x48] sm:$0xf]
  %v36 = vld [vmem:[%s1 + $0x4c] sm:$0xf]
  %v37 = vld [vmem:[%s1 + $0x50] sm:$0xf]
  %v38 = vld [vmem:[%s1 + $0x54] sm:$0xf]
  %v39 = vld [vmem:[%s1 + $0x58] sm:$0xf]
  %v40 = vld [vmem:[%s1 + $0x5c] sm:$0xf]
  %v41 = vld [vmem:[%s1 + $0x60] sm:$0xf]
  %v42 = vld [vmem:[%s1 + $0x64] sm:$0xf]
  %v43 = vld [vmem:[%s1 + $0x68] sm:$0xf]
  %v44 = vld [vmem:[%s1 + $0x6c] sm:$0xf]
  %v45 = vld [vmem:[%s1 + $0x70] sm:$0xf]
  %v46 = vld [vmem:[%s1 + $0x74] sm:$0xf]
  %v47 = vld [vmem:[%s1 + $0x78] sm:$0xf]
  %v48 = vld [vmem:[%s1 + $0x7c] sm:$0xf]
  %v49 = vld [vmem:[%s1 + $0x80] sm:$0xf]
  %v50 = vld [vmem:[%s1 + $0x84] sm:$0xf]
  %v51 = vld [vmem:[%s1 + $0x88] sm:$0xf]
  %v52 = vld [vmem:[%s1 + $0x8c] sm:$0xf]
  %v53 = vld [vmem:[%s2] sm:$0x1]
  %v55 = vlaneseq
  %v56 = vshrl.u32 %v55, 7
  %v57 = vsub.s32 0, %v56
  %v58 = vrot.slane %v53, %v57
  %v62 = vunpack.c.l.b16 %v15
  %v63 = vunpack.c.h.b16 %v15
  %v64 = vunpack.c.l.b16 %v16
  %v65 = vpack.c.b16 %v62, %v62
  %v66 = vpack.c.b16 %v63, %v63
  %v67 = vpack.c.b16 %v64, %v64
  %v106 = vunpack.c.l.b16 %v17
  %v107 = vunpack.c.l.b16 %v18
  %v108 = vunpack.c.l.b16 %v19
  %v109 = vunpack.c.l.b16 %v20
  %v110 = vunpack.c.l.b16 %v21
  %v111 = vunpack.c.l.b16 %v22
  %v112 = vunpack.c.l.b16 %v23
  %v113 = vunpack.c.l.b16 %v24
  %v114 = vunpack.c.l.b16 %v25
  %v115 = vunpack.c.l.b16 %v26
  %v116 = vunpack.c.l.b16 %v27
  %v117 = vunpack.c.l.b16 %v28
  %v118 = vunpack.c.l.b16 %v29
  %v119 = vunpack.c.l.b16 %v30
  %v120 = vunpack.c.l.b16 %v31
  %v121 = vunpack.c.l.b16 %v32
  %v122 = vunpack.c.l.b16 %v33
  %v123 = vunpack.c.l.b16 %v34
  %v124 = vunpack.c.l.b16 %v35
  %v125 = vunpack.c.l.b16 %v36
  %v126 = vunpack.c.l.b16 %v37
  %v127 = vunpack.c.l.b16 %v38
  %v128 = vunpack.c.l.b16 %v39
  %v129 = vunpack.c.l.b16 %v40
  %v130 = vunpack.c.l.b16 %v41
  %v131 = vunpack.c.l.b16 %v42
  %v132 = vunpack.c.l.b16 %v43
  %v133 = vunpack.c.l.b16 %v44
  %v134 = vunpack.c.l.b16 %v45
  %v135 = vunpack.c.l.b16 %v46
  %v136 = vunpack.c.l.b16 %v47
  %v137 = vunpack.c.l.b16 %v48
  %v138 = vunpack.c.l.b16 %v49
  %v139 = vunpack.c.l.b16 %v50
  %v140 = vunpack.c.l.b16 %v51
  %v141 = vunpack.c.l.b16 %v52
  %v142 = vpack.c.b16 %v107, %v106
  %v143 = vpack.c.b16 %v109, %v108
  %v144 = vpack.c.b16 %v111, %v110
  %v145 = vpack.c.b16 %v113, %v112
  %v146 = vpack.c.b16 %v115, %v114
  %v147 = vpack.c.b16 %v117, %v116
  %v148 = vpack.c.b16 %v119, %v118
  %v149 = vpack.c.b16 %v121, %v120
  %v150 = vpack.c.b16 %v123, %v122
  %v151 = vpack.c.b16 %v125, %v124
  %v152 = vpack.c.b16 %v127, %v126
  %v153 = vpack.c.b16 %v129, %v128
  %v154 = vpack.c.b16 %v131, %v130
  %v155 = vpack.c.b16 %v133, %v132
  %v156 = vpack.c.b16 %v135, %v134
  %v157 = vpack.c.b16 %v137, %v136
  %v158 = vpack.c.b16 %v139, %v138
  %v159 = vpack.c.b16 %v141, %v140
  %vm178 = vcmask 261120
  %v180 = vsel %vm178, %v67, 0
  %182 = vmatprep.subr.bf16.mxu0 0
  %183 = vmatpush1.bf16.msra.mxu0 %v149
  %184 = vmatprep.subr.bf16.mxu0 0
  %185 = vmatpush1.bf16.msra.mxu0 %v148
  %186 = vmatprep.subr.bf16.mxu0 0
  %187 = vmatpush1.bf16.msra.mxu0 %v147
  %188 = vmatprep.subr.bf16.mxu0 0
  %189 = vmatpush1.bf16.msra.mxu0 %v146
  %190 = vmatprep.subr.bf16.mxu0 0
  %191 = vmatpush1.bf16.msra.mxu0 %v145
  %192 = vmatprep.subr.bf16.mxu0 0
  %193 = vmatpush1.bf16.msra.mxu0 %v144
  %194 = vmatprep.subr.bf16.mxu0 0
  %195 = vmatpush1.bf16.msra.mxu0 %v143
  %196 = vmatprep.subr.bf16.mxu0 0
  %197 = vmatpush1.bf16.msra.mxu0 %v142
  %198 = vmatprep.subr.bf16.mxu0 0
  %199 = vmatpush2.bf16.msra.mxu0 %v157
  %200 = vmatprep.subr.bf16.mxu0 0
  %201 = vmatpush2.bf16.msra.mxu0 %v156
  %202 = vmatprep.subr.bf16.mxu0 0
  %203 = vmatpush2.bf16.msra.mxu0 %v155
  %204 = vmatprep.subr.bf16.mxu0 0
  %205 = vmatpush2.bf16.msra.mxu0 %v154
  %206 = vmatprep.subr.bf16.mxu0 0
  %207 = vmatpush2.bf16.msra.mxu0 %v153
  %208 = vmatprep.subr.bf16.mxu0 0
  %209 = vmatpush2.bf16.msra.mxu0 %v152
  %210 = vmatprep.subr.bf16.mxu0 0
  %211 = vmatpush2.bf16.msra.mxu0 %v151
  %212 = vmatprep.subr.bf16.mxu0 0
  %213 = vmatpush2.bf16.msra.mxu0 %v150
  %214 = vmatprep.mubr.bf16.mxu0 %v66
  %215 = vmatmul.mubr.bf16.gmra.mxu0 %v65
  %v216 = vpop.f32.mrf.mxu0
  %v217 = vadd.f32 %v58, %v216
  %v218 = vpop.f32.mrf.mxu0
  %v219 = vpop.f32.mrf.mxu0
  %v220 = vpop.f32.mrf.mxu0
  %221 = vdwg.mxu0
  %222 = vmatprep.subr.bf16.mxu0 0
  %223 = vmatpush1.bf16.msra.mxu0 0
  %224 = vmatprep.subr.bf16.mxu0 0
  %225 = vmatpush1.bf16.msra.mxu0 0
  %226 = vmatprep.subr.bf16.mxu0 0
  %227 = vmatpush1.bf16.msra.mxu0 0
  %228 = vmatprep.subr.bf16.mxu0 0
  %229 = vmatpush1.bf16.msra.mxu0 0
  %230 = vmatprep.subr.bf16.mxu0 0
  %231 = vmatpush1.bf16.msra.mxu0 0
  %232 = vmatprep.subr.bf16.mxu0 0
  %233 = vmatpush1.bf16.msra.mxu0 0
  %234 = vmatprep.subr.bf16.mxu0 0
  %235 = vmatpush1.bf16.msra.mxu0 %v159
  %236 = vmatprep.subr.bf16.mxu0 0
  %237 = vmatpush1.bf16.msra.mxu0 %v158
  %238 = vmatprep.subr.bf16.mxu0 0
  %239 = vmatpush2.bf16.msra.mxu0 0
  %240 = vmatprep.subr.bf16.mxu0 0
  %241 = vmatpush2.bf16.msra.mxu0 0
  %242 = vmatprep.subr.bf16.mxu0 0
  %243 = vmatpush2.bf16.msra.mxu0 0
  %244 = vmatprep.subr.bf16.mxu0 0
  %245 = vmatpush2.bf16.msra.mxu0 0
  %246 = vmatprep.subr.bf16.mxu0 0
  %247 = vmatpush2.bf16.msra.mxu0 0
  %248 = vmatprep.subr.bf16.mxu0 0
  %249 = vmatpush2.bf16.msra.mxu0 0
  %250 = vmatprep.subr.bf16.mxu0 0
  %251 = vmatpush2.bf16.msra.mxu0 0
  %252 = vmatprep.subr.bf16.mxu0 0
  %253 = vmatpush2.bf16.msra.mxu0 0
  %254 = vmatprep.mubr.bf16.mxu0 0
  %255 = vmatmul.mubr.bf16.gmra.mxu0 %v180
  %v256 = vpop.f32.mrf.mxu0
  %v257 = vadd.f32 %v217, %v256
  %v258 = vpop.f32.mrf.mxu0
  %v259 = vpop.f32.mrf.mxu0
  %v260 = vpop.f32.mrf.mxu0
  %261 = vdwg.mxu0
  %v262 = vmax.f32 %v257, 0.0
  %263 = vst [vmem:[%s3] sm:$0xff] %v262
  // Predicated region
  $region14: #{_lambda_.14} parent=0 // pred_check
    _
  $region15: #{_lambda_.14} parent=0 // pred_check_branch
    %265 = sbr.rel (0) target = $region17
  $region16: #{_lambda_.14} parent=0 // pred_region
    _
  $region17: #{_lambda_.14} parent=0 // pred_fallthru
    _
  // Predicated region
  $region18: #{_lambda_.14} parent=0 // pred_check
    _
  $region19: #{_lambda_.14} parent=0 // pred_check_branch
    %267 = sbr.rel (0) target = $region21
  $region20: #{_lambda_.14} parent=0 // pred_region
    _
  $region21: #{_lambda_.14} parent=0 // pred_fallthru
    _

// kernel: _lambda_.15
$region0: #{_lambda_.15}
  #allocation0 [shape = 'u32[]', space=smem, size = 0x4, offset = 0x4, fixed_abs, tag = 'smem constant byte address 0x4 - core index']
  #allocation1 [shape = 'u32[144,128]{1,0:T(1,128)}', space=vmem, size = 0x12000, scoped, tag = 'internal scratch']
  %s0 = inlined_call_operand.vmem [shape: bf16[2048,72], index: 0, kind: input, shape index: {}]
  %s1 = inlined_call_operand.vmem [shape: bf16[72,128], index: 1, kind: input, shape index: {}]
  %s2 = inlined_call_operand.vmem [shape: f32[1,128], index: 2, kind: input, shape index: {}]
  %s3 = inlined_call_operand.vmem [shape: f32[2048,128], index: 3, kind: output, shape index: {}]
  %s4 = sld [smem:[#allocation0]]
  $region45: #{_lambda_.15} parent=0
    _
  %s6 = ssub.s32 1, %s4
  %s7 = scalar_select 0, %s6, %s4
  loop: start=0, step=1, limit=6
  $region2: #{_lambda_.15} parent=0 // loop_pre_header
    _
  $region3: #{_lambda_.15} parent=0 // loop_header
    %s9 = sphi 0, %s13
    %p10 = scmp.ge.s32.totalorder %s9, 6
    %s19 = sphi 0, %s21
    %s22 = sphi 0, %s19
    %s23 = sphi 0, %s22
    %s39 = sphi 0, %s23
    %s43 = sphi 0, %s43
    %s45 = sphi 0, %s43
    %s46 = sphi 0, %s45
    %s60 = sphi 0, %s46
    %s64 = sphi 0, %s64
    %s66 = sphi 0, %s64
    %s67 = sphi 0, %s66
    %s81 = sphi 0, %s67
    %s87 = sphi 0, %s89
    %s90 = sphi 0, %s87
    %s91 = sphi 0, %s90
    %s107 = sphi 0, %s91
  $region4: #{_lambda_.15} parent=0 // loop_header_branch
    %12 = sbr.rel (%p10) target = $region8
  $region5: #{_lambda_.15} parent=0 // loop_body
    %s14 = ssub.s32 %s9, 1
    %s15 = ssub.s32 %s9, 2
    %s16 = sadd.s32 %s9, 1
    %s17 = ssub.s32 %s9, %s16
    %p18 = scmp.eq.s32.totalorder %s17, 0
    %s20 = sadd.s32 %s19, 1
    %s21 = scalar_select %p18, %s19, %s20
    %p24 = pneg %p18
    %p25 = scmp.eq.s32.totalorder %s9, 3
    %p26 = por %p24, %p25
    %p27 = scmp.ne.s32.totalorder %s19, %s22
    %p28 = scmp.eq.s32.totalorder %s9, 0
    %p29 = por %p27, %p28
    %p30 = scmp.ne.s32.totalorder %s19, %s22
    %p31 = scmp.eq.s32.totalorder %s14, 3
    %p32 = por %p30, %p31
    %p33 = scmp.ne.s32.totalorder %s22, %s23
    %p34 = scmp.eq.s32.totalorder %s14, 0
    %p35 = por %p33, %p34
    %p36 = scmp.ne.s32.totalorder %s22, %s23
    %p37 = scmp.eq.s32.totalorder %s15, 3
    %p38 = por %p36, %p37
    %p40 = scmp.ne.s32.totalorder %s23, %s39
    %p41 = scmp.eq.s32.totalorder %s15, 0
    %p42 = por %p40, %p41
    %s44 = sadd.s32 %s43, 1
    %p47 = scmp.eq.s32.totalorder %s9, 3
    %p48 = scmp.ne.s32.totalorder %s43, %s45
    %p49 = scmp.eq.s32.totalorder %s9, 0
    %p50 = por %p48, %p49
    %p51 = scmp.ne.s32.totalorder %s43, %s45
    %p52 = scmp.eq.s32.totalorder %s14, 3
    %p53 = por %p51, %p52
    %p54 = scmp.ne.s32.totalorder %s45, %s46
    %p55 = scmp.eq.s32.totalorder %s14, 0
    %p56 = por %p54, %p55
    %p57 = scmp.ne.s32.totalorder %s45, %s46
    %p58 = scmp.eq.s32.totalorder %s15, 3
    %p59 = por %p57, %p58
    %p61 = scmp.ne.s32.totalorder %s46, %s60
    %p62 = scmp.eq.s32.totalorder %s15, 0
    %p63 = por %p61, %p62
    %s65 = sadd.s32 %s64, 1
    %p68 = scmp.eq.s32.totalorder %s9, 3
    %p69 = scmp.ne.s32.totalorder %s64, %s66
    %p70 = scmp.eq.s32.totalorder %s9, 0
    %p71 = por %p69, %p70
    %p72 = scmp.ne.s32.totalorder %s64, %s66
    %p73 = scmp.eq.s32.totalorder %s14, 3
    %p74 = por %p72, %p73
    %p75 = scmp.ne.s32.totalorder %s66, %s67
    %p76 = scmp.eq.s32.totalorder %s14, 0
    %p77 = por %p75, %p76
    %p78 = scmp.ne.s32.totalorder %s66, %s67
    %p79 = scmp.eq.s32.totalorder %s15, 3
    %p80 = por %p78, %p79
    %p82 = scmp.ne.s32.totalorder %s67, %s81
    %p83 = scmp.eq.s32.totalorder %s15, 0
    %p84 = por %p82, %p83
    %s85 = ssub.s32 %s9, %s16
    %p86 = scmp.eq.s32.totalorder %s85, 0
    %s88 = sadd.s32 %s87, 1
    %s89 = scalar_select %p86, %s87, %s88
    %p92 = pneg %p86
    %p93 = scmp.eq.s32.totalorder %s9, 3
    %p94 = por %p92, %p93
    %p95 = scmp.ne.s32.totalorder %s87, %s90
    %p96 = scmp.eq.s32.totalorder %s9, 0
    %p97 = por %p95, %p96
    %p98 = scmp.ne.s32.totalorder %s87, %s90
    %p99 = scmp.eq.s32.totalorder %s14, 3
    %p100 = por %p98, %p99
    %p101 = scmp.ne.s32.totalorder %s90, %s91
    %p102 = scmp.eq.s32.totalorder %s14, 0
    %p103 = por %p101, %p102
    %p104 = scmp.ne.s32.totalorder %s90, %s91
    %p105 = scmp.eq.s32.totalorder %s15, 3
    %p106 = por %p104, %p105
    %p108 = scmp.ne.s32.totalorder %s91, %s107
    %p109 = scmp.eq.s32.totalorder %s15, 0
    %p110 = por %p108, %p109
    %p111 = scmp.le.s32.totalorder 1, %s9
    %p112 = scmp.lt.s32.totalorder %s9, 5
    %p113 = pnand %p111, %p112
    %p114 = pneg %p113
    // Predicated region
    $region9: #{_lambda_.15} parent=5 // pred_check
      _
    $region10: #{_lambda_.15} parent=5 // pred_check_branch
      %116 = sbr.rel (%p113) target = $region12
    $region11: #{_lambda_.15} parent=5 // pred_region
      %s117 = ssub.s32 %s9, 1
      // Predicated region
      $region13: #{_lambda_.15} parent=11 // pred_check
        %p118 = pneg %p56
      $region14: #{_lambda_.15} parent=11 // pred_check_branch
        %120 = sbr.rel (%p118) target = $region16
      $region15: #{_lambda_.15} parent=11 // pred_region
        _
      $region16: #{_lambda_.15} parent=11 // pred_fallthru
        _
      // Predicated region
      $region17: #{_lambda_.15} parent=11 // pred_check
        %p121 = pneg %p77
      $region18: #{_lambda_.15} parent=11 // pred_check_branch
        %123 = sbr.rel (%p121) target = $region20
      $region19: #{_lambda_.15} parent=11 // pred_region
        _
      $region20: #{_lambda_.15} parent=11 // pred_fallthru
        _
    $region12: #{_lambda_.15} parent=5 // pred_fallthru
      _
    %p124 = scmp.lt.s32.totalorder %s9, 4
    // Predicated region
    $region21: #{_lambda_.15} parent=5 // pred_check
      %p125 = pneg %p124
    $region22: #{_lambda_.15} parent=5 // pred_check_branch
      %127 = sbr.rel (%p125) target = $region24
    $region23: #{_lambda_.15} parent=5 // pred_region
      // Predicated region
      $region25: #{_lambda_.15} parent=23 // pred_check
        %p128 = pneg %p29
      $region26: #{_lambda_.15} parent=23 // pred_check_branch
        %130 = sbr.rel (%p128) target = $region28
      $region27: #{_lambda_.15} parent=23 // pred_region
        %s131 = smul.u32 64, %s9
        %p132 = scmp.lt.s32.totalorder %s131, 255
        %s133 = scalar_select %p132, %s131, 255
        %s134 = smul.addr %s133, 4
        %s135 = scalar_lea.vmem %s0, %s134
        %s136 = smul.u32 64, %s9
      $region28: #{_lambda_.15} parent=23 // pred_fallthru
        _
    $region24: #{_lambda_.15} parent=5 // pred_fallthru
      _
    %p137 = scmp.le.s32.totalorder 1, %s9
    %p138 = scmp.lt.s32.totalorder %s9, 5
    %p139 = pnand %p137, %p138
    %p140 = pneg %p139
    // Predicated region
    $region29: #{_lambda_.15} parent=5 // pred_check
      _
    $region30: #{_lambda_.15} parent=5 // pred_check_branch
      %142 = sbr.rel (%p139) target = $region32
    $region31: #{_lambda_.15} parent=5 // pred_region
      %s143 = ssub.s32 %s9, 1
      %s144 = smul.u32 64, %s14
      %p145 = scmp.lt.s32.totalorder %s144, 255
      %s146 = scalar_select %p145, %s144, 255
      %s147 = smul.addr %s146, 4
      %s148 = scalar_lea.vmem %s0, %s147
      %p149 = pneg %p35
      %p150 = pneg %p32
      %p151 = pneg %p56
      %p152 = pneg %p53
      %p153 = pneg %p77
      %p154 = pneg %p74
      %p155 = pneg %p103
      %p156 = pneg %p100
      %s157 = smul.u32 64, %s14
      %p158 = scmp.lt.s32.totalorder %s157, 255
      %s159 = scalar_select %p158, %s157, 255
      %s160 = smul.addr %s159, 8
      %s161 = scalar_lea.vmem %s3, %s160
      %s162 = smul.u32 64, %s14
      %p163 = scmp.lt.s32.totalorder %s162, 255
      %s164 = scalar_select %p163, %s162, 255
      %s165 = smul.addr %s164, 4
      %s166 = scalar_lea.vmem %s0, %s165
      %s167 = smul.u32 64, %s14
      %s168 = smul.u32 64, %s14
      %p169 = scmp.lt.s32.totalorder %s168, 255
      %s170 = scalar_select %p169, %s168, 255
      %s171 = smul.addr %s170, 8
      %s172 = scalar_lea.vmem %s3, %s171
      %s173 = smul.u32 64, %s14
      %v175 = vld [vmem:[%s166] sm:$0xf]
      %v176 = vld [vmem:[%s166 + $0x4] sm:$0xf]
      %v177 = vld [vmem:[%s166 + $0x8] sm:$0xf]
      %v178 = vld [vmem:[%s166 + $0xc] sm:$0xf]
      %v179 = vld [vmem:[%s166 + $0x10] sm:$0xf]
      %v180 = vld [vmem:[%s166 + $0x14] sm:$0xf]
      %v181 = vld [vmem:[%s166 + $0x18] sm:$0xf]
      %v182 = vld [vmem:[%s166 + $0x1c] sm:$0xf]
      %v183 = vld [vmem:[%s166 + $0x20] sm:$0xf]
      %v184 = vld [vmem:[%s166 + $0x24] sm:$0xf]
      %v185 = vld [vmem:[%s166 + $0x28] sm:$0xf]
      %v186 = vld [vmem:[%s166 + $0x2c] sm:$0xf]
      %v187 = vld [vmem:[%s166 + $0x30] sm:$0xf]
      %v188 = vld [vmem:[%s166 + $0x34] sm:$0xf]
      %v189 = vld [vmem:[%s166 + $0x38] sm:$0xf]
      %v190 = vld [vmem:[%s166 + $0x3c] sm:$0xf]
      %v191 = vld [vmem:[%s166 + $0x40] sm:$0xf]
      %v192 = vld [vmem:[%s166 + $0x44] sm:$0xf]
      %v193 = vld [vmem:[%s166 + $0x48] sm:$0xf]
      %v194 = vld [vmem:[%s166 + $0x4c] sm:$0xf]
      %v195 = vld [vmem:[%s166 + $0x50] sm:$0xf]
      %v196 = vld [vmem:[%s166 + $0x54] sm:$0xf]
      %v197 = vld [vmem:[%s166 + $0x58] sm:$0xf]
      %v198 = vld [vmem:[%s166 + $0x5c] sm:$0xf]
      %v199 = vld [vmem:[%s166 + $0x60] sm:$0xf]
      %v200 = vld [vmem:[%s166 + $0x64] sm:$0xf]
      %v201 = vld [vmem:[%s166 + $0x68] sm:$0xf]
      %v202 = vld [vmem:[%s166 + $0x6c] sm:$0xf]
      %v203 = vld [vmem:[%s166 + $0x70] sm:$0xf]
      %v204 = vld [vmem:[%s166 + $0x74] sm:$0xf]
      %v205 = vld [vmem:[%s166 + $0x78] sm:$0xf]
      %v206 = vld [vmem:[%s166 + $0x7c] sm:$0xf]
      %v207 = vld [vmem:[%s166 + $0x80] sm:$0xf]
      %v208 = vld [vmem:[%s166 + $0x84] sm:$0xf]
      %v209 = vld [vmem:[%s166 + $0x88] sm:$0xf]
      %v210 = vld [vmem:[%s166 + $0x8c] sm:$0xf]
      %v211 = vld [vmem:[%s166 + $0x90] sm:$0xf]
      %v212 = vld [vmem:[%s166 + $0x94] sm:$0xf]
      %v213 = vld [vmem:[%s166 + $0x98] sm:$0xf]
      %v214 = vld [vmem:[%s166 + $0x9c] sm:$0xf]
      %v215 = vld [vmem:[%s166 + $0xa0] sm:$0xf]
      %v216 = vld [vmem:[%s166 + $0xa4] sm:$0xf]
      %v217 = vld [vmem:[%s166 + $0xa8] sm:$0xf]
      %v218 = vld [vmem:[%s166 + $0xac] sm:$0xf]
      %v219 = vld [vmem:[%s166 + $0xb0] sm:$0xf]
      %v220 = vld [vmem:[%s166 + $0xb4] sm:$0xf]
      %v221 = vld [vmem:[%s166 + $0xb8] sm:$0xf]
      %v222 = vld [vmem:[%s166 + $0xbc] sm:$0xf]
      %v223 = vld [vmem:[%s166 + $0xc0] sm:$0xf]
      %v224 = vld [vmem:[%s166 + $0xc4] sm:$0xf]
      %v225 = vld [vmem:[%s166 + $0xc8] sm:$0xf]
      %v226 = vld [vmem:[%s166 + $0xcc] sm:$0xf]
      %v227 = vld [vmem:[%s166 + $0xd0] sm:$0xf]
      %v228 = vld [vmem:[%s166 + $0xd4] sm:$0xf]
      %v229 = vld [vmem:[%s166 + $0xd8] sm:$0xf]
      %v230 = vld [vmem:[%s166 + $0xdc] sm:$0xf]
      %v231 = vld [vmem:[%s166 + $0xe0] sm:$0xf]
      %v232 = vld [vmem:[%s166 + $0xe4] sm:$0xf]
      %v233 = vld [vmem:[%s166 + $0xe8] sm:$0xf]
      %v234 = vld [vmem:[%s166 + $0xec] sm:$0xf]
      %v235 = vld [vmem:[%s166 + $0xf0] sm:$0xf]
      %v236 = vld [vmem:[%s166 + $0xf4] sm:$0xf]
      %v237 = vld [vmem:[%s166 + $0xf8] sm:$0xf]
      %v238 = vld [vmem:[%s166 + $0xfc] sm:$0xf]
      %v239 = vld [vmem:[%s1] sm:$0xf]
      %v240 = vld [vmem:[%s1 + $0x4] sm:$0xf]
      %v241 = vld [vmem:[%s1 + $0x8] sm:$0xf]
      %v242 = vld [vmem:[%s1 + $0xc] sm:$0xf]
      %v243 = vld [vmem:[%s1 + $0x10] sm:$0xf]
      %v244 = vld [vmem:[%s1 + $0x14] sm:$0xf]
      %v245 = vld [vmem:[%s1 + $0x18] sm:$0xf]
      %v246 = vld [vmem:[%s1 + $0x1c] sm:$0xf]
      %v247 = vld [vmem:[%s1 + $0x20] sm:$0xf]
      %v248 = vld [vmem:[%s2] sm:$0x1]
      %v250 = vlaneseq
      %v251 = vshrl.u32 %v250, 7
      %v252 = vsub.s32 0, %v251
      %v253 = vrot.slane %v248, %v252
      %v319 = vunpack.c.l.b16 %v175
      %v320 = vunpack.c.l.b16 %v176
      %v321 = vunpack.c.l.b16 %v177
      %v322 = vunpack.c.l.b16 %v178
      %v323 = vunpack.c.l.b16 %v179
      %v324 = vunpack.c.l.b16 %v180
      %v325 = vunpack.c.l.b16 %v181
      %v326 = vunpack.c.l.b16 %v182
      %v327 = vunpack.c.l.b16 %v183
      %v328 = vunpack.c.l.b16 %v184
      %v329 = vunpack.c.l.b16 %v185
      %v330 = vunpack.c.l.b16 %v186
      %v331 = vunpack.c.l.b16 %v187
      %v332 = vunpack.c.l.b16 %v188
      %v333 = vunpack.c.l.b16 %v189
      %v334 = vunpack.c.l.b16 %v190
      %v335 = vunpack.c.l.b16 %v191
      %v336 = vunpack.c.l.b16 %v192
      %v337 = vunpack.c.l.b16 %v193
      %v338 = vunpack.c.l.b16 %v194
      %v339 = vunpack.c.l.b16 %v195
      %v340 = vunpack.c.l.b16 %v196
      %v341 = vunpack.c.l.b16 %v197
      %v342 = vunpack.c.l.b16 %v198
      %v343 = vunpack.c.l.b16 %v199
      %v344 = vunpack.c.l.b16 %v200
      %v345 = vunpack.c.l.b16 %v201
      %v346 = vunpack.c.l.b16 %v202
      %v347 = vunpack.c.l.b16 %v203
      %v348 = vunpack.c.l.b16 %v204
      %v349 = vunpack.c.l.b16 %v205
      %v350 = vunpack.c.l.b16 %v206
      %v351 = vunpack.c.l.b16 %v207
      %v352 = vunpack.c.l.b16 %v208
      %v353 = vunpack.c.l.b16 %v209
      %v354 = vunpack.c.l.b16 %v210
      %v355 = vunpack.c.l.b16 %v211
      %v356 = vunpack.c.l.b16 %v212
      %v357 = vunpack.c.l.b16 %v213
      %v358 = vunpack.c.l.b16 %v214
      %v359 = vunpack.c.l.b16 %v215
      %v360 = vunpack.c.l.b16 %v216
      %v361 = vunpack.c.l.b16 %v217
      %v362 = vunpack.c.l.b16 %v218
      %v363 = vunpack.c.l.b16 %v219
      %v364 = vunpack.c.l.b16 %v220
      %v365 = vunpack.c.l.b16 %v221
      %v366 = vunpack.c.l.b16 %v222
      %v367 = vunpack.c.l.b16 %v223
      %v368 = vunpack.c.l.b16 %v224
      %v369 = vunpack.c.l.b16 %v225
      %v370 = vunpack.c.l.b16 %v226
      %v371 = vunpack.c.l.b16 %v227
      %v372 = vunpack.c.l.b16 %v228
      %v373 = vunpack.c.l.b16 %v229
      %v374 = vunpack.c.l.b16 %v230
      %v375 = vunpack.c.l.b16 %v231
      %v376 = vunpack.c.l.b16 %v232
      %v377 = vunpack.c.l.b16 %v233
      %v378 = vunpack.c.l.b16 %v234
      %v379 = vunpack.c.l.b16 %v235
      %v380 = vunpack.c.l.b16 %v236
      %v381 = vunpack.c.l.b16 %v237
      %v382 = vunpack.c.l.b16 %v238
      %v383 = vpack.c.b16 %v320, %v319
      %v384 = vpack.c.b16 %v322, %v321
      %v385 = vpack.c.b16 %v324, %v323
      %v386 = vpack.c.b16 %v326, %v325
      %v387 = vpack.c.b16 %v328, %v327
      %v388 = vpack.c.b16 %v330, %v329
      %v389 = vpack.c.b16 %v332, %v331
      %v390 = vpack.c.b16 %v334, %v333
      %v391 = vpack.c.b16 %v336, %v335
      %v392 = vpack.c.b16 %v338, %v337
      %v393 = vpack.c.b16 %v340, %v339
      %v394 = vpack.c.b16 %v342, %v341
      %v395 = vpack.c.b16 %v344, %v343
      %v396 = vpack.c.b16 %v346, %v345
      %v397 = vpack.c.b16 %v348, %v347
      %v398 = vpack.c.b16 %v350, %v349
      %v399 = vpack.c.b16 %v352, %v351
      %v400 = vpack.c.b16 %v354, %v353
      %v401 = vpack.c.b16 %v356, %v355
      %v402 = vpack.c.b16 %v358, %v357
      %v403 = vpack.c.b16 %v360, %v359
      %v404 = vpack.c.b16 %v362, %v361
      %v405 = vpack.c.b16 %v364, %v363
      %v406 = vpack.c.b16 %v366, %v365
      %v407 = vpack.c.b16 %v368, %v367
      %v408 = vpack.c.b16 %v370, %v369
      %v409 = vpack.c.b16 %v372, %v371
      %v410 = vpack.c.b16 %v374, %v373
      %v411 = vpack.c.b16 %v376, %v375
      %v412 = vpack.c.b16 %v378, %v377
      %v413 = vpack.c.b16 %v380, %v379
      %v414 = vpack.c.b16 %v382, %v381
      %v424 = vunpack.c.l.b16 %v239
      %v425 = vunpack.c.l.b16 %v240
      %v426 = vunpack.c.l.b16 %v241
      %v427 = vunpack.c.l.b16 %v242
      %v428 = vunpack.c.l.b16 %v243
      %v429 = vunpack.c.l.b16 %v244
      %v430 = vunpack.c.l.b16 %v245
      %v431 = vunpack.c.l.b16 %v246
      %v432 = vunpack.c.l.b16 %v247
      %v433 = vpack.c.b16 %v425, %v424
      %v434 = vpack.c.b16 %v427, %v426
      %v435 = vpack.c.b16 %v429, %v428
      %v436 = vpack.c.b16 %v431, %v430
      %v437 = vpack.c.b16 %v432, %v432
      %vm442 = vcmask 588800
      %v444 = vsel %vm442, %v383, 0
      %v447 = vsel %vm442, %v384, 0
      %v450 = vsel %vm442, %v385, 0
      %v453 = vsel %vm442, %v386, 0
      %v456 = vsel %vm442, %v387, 0
      %v459 = vsel %vm442, %v388, 0
      %v462 = vsel %vm442, %v389, 0
      %v465 = vsel %vm442, %v390, 0
      %v468 = vsel %vm442, %v391, 0
      %v471 = vsel %vm442, %v392, 0
      %v474 = vsel %vm442, %v393, 0
      %v477 = vsel %vm442, %v394, 0
      %v480 = vsel %vm442, %v395, 0
      %v483 = vsel %vm442, %v396, 0
      %v486 = vsel %vm442, %v397, 0
      %v489 = vsel %vm442, %v398, 0
      %v492 = vsel %vm442, %v399, 0
      %v495 = vsel %vm442, %v400, 0
      %v498 = vsel %vm442, %v401, 0
      %v501 = vsel %vm442, %v402, 0
      %v504 = vsel %vm442, %v403, 0
      %v507 = vsel %vm442, %v404, 0
      %v510 = vsel %vm442, %v405, 0
      %v513 = vsel %vm442, %v406, 0
      %v516 = vsel %vm442, %v407, 0
      %v519 = vsel %vm442, %v408, 0
      %v522 = vsel %vm442, %v409, 0
      %v525 = vsel %vm442, %v410, 0
      %v528 = vsel %vm442, %v411, 0
      %v531 = vsel %vm442, %v412, 0
      %v534 = vsel %vm442, %v413, 0
      %v537 = vsel %vm442, %v414, 0
      %vm539 = vcmask 1043456
      %v541 = vsel %vm539, %v437, 0
      %543 = vmatprep.subr.bf16.mxu0 0
      %544 = vmatpush1.bf16.msra.mxu0 0
      %545 = vmatprep.subr.bf16.mxu0 0
      %546 = vmatpush1.bf16.msra.mxu0 0
      %547 = vmatprep.subr.bf16.mxu0 0
      %548 = vmatpush1.bf16.msra.mxu0 0
      %549 = vmatprep.subr.bf16.mxu0 0
      %550 = vmatpush1.bf16.msra.mxu0 %v541
      %551 = vmatprep.subr.bf16.mxu0 0
      %552 = vmatpush1.bf16.msra.mxu0 %v436
      %553 = vmatprep.subr.bf16.mxu0 0
      %554 = vmatpush1.bf16.msra.mxu0 %v435
      %555 = vmatprep.subr.bf16.mxu0 0
      %556 = vmatpush1.bf16.msra.mxu0 %v434
      %557 = vmatprep.subr.bf16.mxu0 0
      %558 = vmatpush1.bf16.msra.mxu0 %v433
      %559 = vmatprep.subr.bf16.mxu0 0
      %560 = vmatpush2.bf16.msra.mxu0 0
      %561 = vmatprep.subr.bf16.mxu0 0
      %562 = vmatpush2.bf16.msra.mxu0 0
      %563 = vmatprep.subr.bf16.mxu0 0
      %564 = vmatpush2.bf16.msra.mxu0 0
      %565 = vmatprep.subr.bf16.mxu0 0
      %566 = vmatpush2.bf16.msra.mxu0 0
      %567 = vmatprep.subr.bf16.mxu0 0
      %568 = vmatpush2.bf16.msra.mxu0 0
      %569 = vmatprep.subr.bf16.mxu0 0
      %570 = vmatpush2.bf16.msra.mxu0 0
      %571 = vmatprep.subr.bf16.mxu0 0
      %572 = vmatpush2.bf16.msra.mxu0 0
      %573 = vmatprep.subr.bf16.mxu0 0
      %574 = vmatpush2.bf16.msra.mxu0 0
      %575 = vmatprep.mubr.bf16.mxu0 0
      %576 = vmatmul.mubr.bf16.gmra.mxu0 %v444
      %v577 = vpop.f32.mrf.mxu0
      %v578 = vadd.f32 %v253, %v577
      %v579 = vpop.f32.mrf.mxu0
      %v580 = vpop.f32.mrf.mxu0
      %v581 = vadd.f32 %v253, %v580
      %v582 = vpop.f32.mrf.mxu0
      %583 = vmatprep.mubr.bf16.mxu0 0
      %584 = vmatmul.mubr.bf16.gmra.mxu0 %v447
      %v585 = vpop.f32.mrf.mxu0
      %v586 = vadd.f32 %v253, %v585
      %v587 = vpop.f32.mrf.mxu0
      %v588 = vpop.f32.mrf.mxu0
      %v589 = vadd.f32 %v253, %v588
      %v590 = vpop.f32.mrf.mxu0
      %591 = vmatprep.mubr.bf16.mxu0 0
      %592 = vmatmul.mubr.bf16.gmra.mxu0 %v450
      %v593 = vpop.f32.mrf.mxu0
      %v594 = vadd.f32 %v253, %v593
      %v595 = vpop.f32.mrf.mxu0
      %v596 = vpop.f32.mrf.mxu0
      %v597 = vadd.f32 %v253, %v596
      %v598 = vpop.f32.mrf.mxu0
      %599 = vmatprep.mubr.bf16.mxu0 0
      %600 = vmatmul.mubr.bf16.gmra.mxu0 %v453
      %v601 = vpop.f32.mrf.mxu0
      %v602 = vadd.f32 %v253, %v601
      %v603 = vpop.f32.mrf.mxu0
      %v604 = vpop.f32.mrf.mxu0
      %v605 = vadd.f32 %v253, %v604
      %v606 = vpop.f32.mrf.mxu0
      %607 = vmatprep.mubr.bf16.mxu0 0
      %608 = vmatmul.mubr.bf16.gmra.mxu0 %v456
      %v609 = vpop.f32.mrf.mxu0
      %v610 = vadd.f32 %v253, %v609
      %v611 = vpop.f32.mrf.mxu0
      %v612 = vpop.f32.mrf.mxu0
      %v613 = vadd.f32 %v253, %v612
      %v614 = vpop.f32.mrf.mxu0
      %615 = vmatprep.mubr.bf16.mxu0 0
      %616 = vmatmul.mubr.bf16.gmra.mxu0 %v459
      %v617 = vpop.f32.mrf.mxu0
      %v618 = vadd.f32 %v253, %v617
      %v619 = vpop.f32.mrf.mxu0
      %v620 = vpop.f32.mrf.mxu0
      %v621 = vadd.f32 %v253, %v620
      %v622 = vpop.f32.mrf.mxu0
      %623 = vmatprep.mubr.bf16.mxu0 0
      %624 = vmatmul.mubr.bf16.gmra.mxu0 %v462
      %v625 = vpop.f32.mrf.mxu0
      %v626 = vadd.f32 %v253, %v625
      %v627 = vpop.f32.mrf.mxu0
      %v628 = vpop.f32.mrf.mxu0
      %v629 = vadd.f32 %v253, %v628
      %v630 = vpop.f32.mrf.mxu0
      %631 = vmatprep.mubr.bf16.mxu0 0
      %632 = vmatmul.mubr.bf16.gmra.mxu0 %v465
      %v633 = vpop.f32.mrf.mxu0
      %v634 = vadd.f32 %v253, %v633
      %v635 = vpop.f32.mrf.mxu0
      %v636 = vpop.f32.mrf.mxu0
      %v637 = vadd.f32 %v253, %v636
      %v638 = vpop.f32.mrf.mxu0
      %639 = vmatprep.mubr.bf16.mxu0 0
      %640 = vmatmul.mubr.bf16.gmra.mxu0 %v468
      %v641 = vpop.f32.mrf.mxu0
      %v642 = vadd.f32 %v253, %v641
      %v643 = vpop.f32.mrf.mxu0
      %v644 = vpop.f32.mrf.mxu0
      %v645 = vadd.f32 %v253, %v644
      %v646 = vpop.f32.mrf.mxu0
      %647 = vmatprep.mubr.bf16.mxu0 0
      %648 = vmatmul.mubr.bf16.gmra.mxu0 %v471
      %v649 = vpop.f32.mrf.mxu0
      %v650 = vadd.f32 %v253, %v649
      %v651 = vpop.f32.mrf.mxu0
      %v652 = vpop.f32.mrf.mxu0
      %v653 = vadd.f32 %v253, %v652
      %v654 = vpop.f32.mrf.mxu0
      %655 = vmatprep.mubr.bf16.mxu0 0
      %656 = vmatmul.mubr.bf16.gmra.mxu0 %v474
      %v657 = vpop.f32.mrf.mxu0
      %v658 = vadd.f32 %v253, %v657
      %v659 = vpop.f32.mrf.mxu0
      %v660 = vpop.f32.mrf.mxu0
      %v661 = vadd.f32 %v253, %v660
      %v662 = vpop.f32.mrf.mxu0
      %663 = vmatprep.mubr.bf16.mxu0 0
      %664 = vmatmul.mubr.bf16.gmra.mxu0 %v477
      %v665 = vpop.f32.mrf.mxu0
      %v666 = vadd.f32 %v253, %v665
      %v667 = vpop.f32.mrf.mxu0
      %v668 = vpop.f32.mrf.mxu0
      %v669 = vadd.f32 %v253, %v668
      %v670 = vpop.f32.mrf.mxu0
      %671 = vmatprep.mubr.bf16.mxu0 0
      %672 = vmatmul.mubr.bf16.gmra.mxu0 %v480
      %v673 = vpop.f32.mrf.mxu0
      %v674 = vadd.f32 %v253, %v673
      %v675 = vpop.f32.mrf.mxu0
      %v676 = vpop.f32.mrf.mxu0
      %v677 = vadd.f32 %v253, %v676
      %v678 = vpop.f32.mrf.mxu0
      %679 = vmatprep.mubr.bf16.mxu0 0
      %680 = vmatmul.mubr.bf16.gmra.mxu0 %v483
      %v681 = vpop.f32.mrf.mxu0
      %v682 = vadd.f32 %v253, %v681
      %v683 = vpop.f32.mrf.mxu0
      %v684 = vpop.f32.mrf.mxu0
      %v685 = vadd.f32 %v253, %v684
      %v686 = vpop.f32.mrf.mxu0
      %687 = vmatprep.mubr.bf16.mxu0 0
      %688 = vmatmul.mubr.bf16.gmra.mxu0 %v486
      %v689 = vpop.f32.mrf.mxu0
      %v690 = vadd.f32 %v253, %v689
      %v691 = vpop.f32.mrf.mxu0
      %v692 = vpop.f32.mrf.mxu0
      %v693 = vadd.f32 %v253, %v692
      %v694 = vpop.f32.mrf.mxu0
      %695 = vmatprep.mubr.bf16.mxu0 0
      %696 = vmatmul.mubr.bf16.gmra.mxu0 %v489
      %v697 = vpop.f32.mrf.mxu0
      %v698 = vadd.f32 %v253, %v697
      %v699 = vpop.f32.mrf.mxu0
      %v700 = vpop.f32.mrf.mxu0
      %v701 = vadd.f32 %v253, %v700
      %v702 = vpop.f32.mrf.mxu0
      %703 = vmatprep.mubr.bf16.mxu0 0
      %704 = vmatmul.mubr.bf16.gmra.mxu0 %v492
      %v705 = vpop.f32.mrf.mxu0
      %v706 = vadd.f32 %v253, %v705
      %v707 = vpop.f32.mrf.mxu0
      %v708 = vpop.f32.mrf.mxu0
      %v709 = vadd.f32 %v253, %v708
      %v710 = vpop.f32.mrf.mxu0
      %711 = vmatprep.mubr.bf16.mxu0 0
      %712 = vmatmul.mubr.bf16.gmra.mxu0 %v495
      %v713 = vpop.f32.mrf.mxu0
      %v714 = vadd.f32 %v253, %v713
      %v715 = vpop.f32.mrf.mxu0
      %v716 = vpop.f32.mrf.mxu0
      %v717 = vadd.f32 %v253, %v716
      %v718 = vpop.f32.mrf.mxu0
      %719 = vmatprep.mubr.bf16.mxu0 0
      %720 = vmatmul.mubr.bf16.gmra.mxu0 %v498
      %v721 = vpop.f32.mrf.mxu0
      %v722 = vadd.f32 %v253, %v721
      %v723 = vpop.f32.mrf.mxu0
      %v724 = vpop.f32.mrf.mxu0
      %v725 = vadd.f32 %v253, %v724
      %v726 = vpop.f32.mrf.mxu0
      %727 = vmatprep.mubr.bf16.mxu0 0
      %728 = vmatmul.mubr.bf16.gmra.mxu0 %v501
      %v729 = vpop.f32.mrf.mxu0
      %v730 = vadd.f32 %v253, %v729
      %v731 = vpop.f32.mrf.mxu0
      %v732 = vpop.f32.mrf.mxu0
      %v733 = vadd.f32 %v253, %v732
      %v734 = vpop.f32.mrf.mxu0
      %735 = vmatprep.mubr.bf16.mxu0 0
      %736 = vmatmul.mubr.bf16.gmra.mxu0 %v504
      %v737 = vpop.f32.mrf.mxu0
      %v738 = vadd.f32 %v253, %v737
      %v739 = vpop.f32.mrf.mxu0
      %v740 = vpop.f32.mrf.mxu0
      %v741 = vadd.f32 %v253, %v740
      %v742 = vpop.f32.mrf.mxu0
      %743 = vmatprep.mubr.bf16.mxu0 0
      %744 = vmatmul.mubr.bf16.gmra.mxu0 %v507
      %v745 = vpop.f32.mrf.mxu0
      %v746 = vadd.f32 %v253, %v745
      %v747 = vpop.f32.mrf.mxu0
      %v748 = vpop.f32.mrf.mxu0
      %v749 = vadd.f32 %v253, %v748
      %v750 = vpop.f32.mrf.mxu0
      %751 = vmatprep.mubr.bf16.mxu0 0
      %752 = vmatmul.mubr.bf16.gmra.mxu0 %v510
      %v753 = vpop.f32.mrf.mxu0
      %v754 = vadd.f32 %v253, %v753
      %v755 = vpop.f32.mrf.mxu0
      %v756 = vpop.f32.mrf.mxu0
      %v757 = vadd.f32 %v253, %v756
      %v758 = vpop.f32.mrf.mxu0
      %759 = vmatprep.mubr.bf16.mxu0 0
      %760 = vmatmul.mubr.bf16.gmra.mxu0 %v513
      %v761 = vpop.f32.mrf.mxu0
      %v762 = vadd.f32 %v253, %v761
      %v763 = vpop.f32.mrf.mxu0
      %v764 = vpop.f32.mrf.mxu0
      %v765 = vadd.f32 %v253, %v764
      %v766 = vpop.f32.mrf.mxu0
      %767 = vmatprep.mubr.bf16.mxu0 0
      %768 = vmatmul.mubr.bf16.gmra.mxu0 %v516
      %v769 = vpop.f32.mrf.mxu0
      %v770 = vadd.f32 %v253, %v769
      %v771 = vpop.f32.mrf.mxu0
      %v772 = vpop.f32.mrf.mxu0
      %v773 = vadd.f32 %v253, %v772
      %v774 = vpop.f32.mrf.mxu0
      %775 = vmatprep.mubr.bf16.mxu0 0
      %776 = vmatmul.mubr.bf16.gmra.mxu0 %v519
      %v777 = vpop.f32.mrf.mxu0
      %v778 = vadd.f32 %v253, %v777
      %v779 = vpop.f32.mrf.mxu0
      %v780 = vpop.f32.mrf.mxu0
      %v781 = vadd.f32 %v253, %v780
      %v782 = vpop.f32.mrf.mxu0
      %783 = vmatprep.mubr.bf16.mxu0 0
      %784 = vmatmul.mubr.bf16.gmra.mxu0 %v522
      %v785 = vpop.f32.mrf.mxu0
      %v786 = vadd.f32 %v253, %v785
      %v787 = vpop.f32.mrf.mxu0
      %v788 = vpop.f32.mrf.mxu0
      %v789 = vadd.f32 %v253, %v788
      %v790 = vpop.f32.mrf.mxu0
      %791 = vmatprep.mubr.bf16.mxu0 0
      %792 = vmatmul.mubr.bf16.gmra.mxu0 %v525
      %v793 = vpop.f32.mrf.mxu0
      %v794 = vadd.f32 %v253, %v793
      %v795 = vpop.f32.mrf.mxu0
      %v796 = vpop.f32.mrf.mxu0
      %v797 = vadd.f32 %v253, %v796
      %v798 = vpop.f32.mrf.mxu0
      %799 = vmatprep.mubr.bf16.mxu0 0
      %800 = vmatmul.mubr.bf16.gmra.mxu0 %v528
      %v801 = vpop.f32.mrf.mxu0
      %v802 = vadd.f32 %v253, %v801
      %v803 = vpop.f32.mrf.mxu0
      %v804 = vpop.f32.mrf.mxu0
      %v805 = vadd.f32 %v253, %v804
      %v806 = vpop.f32.mrf.mxu0
      %807 = vmatprep.mubr.bf16.mxu0 0
      %808 = vmatmul.mubr.bf16.gmra.mxu0 %v531
      %v809 = vpop.f32.mrf.mxu0
      %v810 = vadd.f32 %v253, %v809
      %v811 = vpop.f32.mrf.mxu0
      %v812 = vpop.f32.mrf.mxu0
      %v813 = vadd.f32 %v253, %v812
      %v814 = vpop.f32.mrf.mxu0
      %815 = vmatprep.mubr.bf16.mxu0 0
      %816 = vmatmul.mubr.bf16.gmra.mxu0 %v534
      %v817 = vpop.f32.mrf.mxu0
      %v818 = vadd.f32 %v253, %v817
      %v819 = vpop.f32.mrf.mxu0
      %v820 = vpop.f32.mrf.mxu0
      %v821 = vadd.f32 %v253, %v820
      %v822 = vpop.f32.mrf.mxu0
      %823 = vmatprep.mubr.bf16.mxu0 0
      %824 = vmatmul.mubr.bf16.gmra.mxu0 %v537
      %v825 = vpop.f32.mrf.mxu0
      %v826 = vadd.f32 %v253, %v825
      %v827 = vpop.f32.mrf.mxu0
      %v828 = vpop.f32.mrf.mxu0
      %v829 = vadd.f32 %v253, %v828
      %v830 = vpop.f32.mrf.mxu0
      %831 = vdwg.mxu0
      %v832 = vmax.f32 %v578, 0.0
      %v833 = vmax.f32 %v581, 0.0
      %v834 = vmax.f32 %v586, 0.0
      %v835 = vmax.f32 %v589, 0.0
      %v836 = vmax.f32 %v594, 0.0
      %v837 = vmax.f32 %v597, 0.0
      %v838 = vmax.f32 %v602, 0.0
      %v839 = vmax.f32 %v605, 0.0
      %v840 = vmax.f32 %v610, 0.0
      %v841 = vmax.f32 %v613, 0.0
      %v842 = vmax.f32 %v618, 0.0
      %v843 = vmax.f32 %v621, 0.0
      %v844 = vmax.f32 %v626, 0.0
      %v845 = vmax.f32 %v629, 0.0
      %v846 = vmax.f32 %v634, 0.0
      %v847 = vmax.f32 %v637, 0.0
      %v848 = vmax.f32 %v642, 0.0
      %v849 = vmax.f32 %v645, 0.0
      %v850 = vmax.f32 %v650, 0.0
      %v851 = vmax.f32 %v653, 0.0
      %v852 = vmax.f32 %v658, 0.0
      %v853 = vmax.f32 %v661, 0.0
      %v854 = vmax.f32 %v666, 0.0
      %v855 = vmax.f32 %v669, 0.0
      %v856 = vmax.f32 %v674, 0.0
      %v857 = vmax.f32 %v677, 0.0
      %v858 = vmax.f32 %v682, 0.0
      %v859 = vmax.f32 %v685, 0.0
      %v860 = vmax.f32 %v690, 0.0
      %v861 = vmax.f32 %v693, 0.0
      %v862 = vmax.f32 %v698, 0.0
      %v863 = vmax.f32 %v701, 0.0
      %v864 = vmax.f32 %v706, 0.0
      %v865 = vmax.f32 %v709, 0.0
      %v866 = vmax.f32 %v714, 0.0
      %v867 = vmax.f32 %v717, 0.0
      %v868 = vmax.f32 %v722, 0.0
      %v869 = vmax.f32 %v725, 0.0
      %v870 = vmax.f32 %v730, 0.0
      %v871 = vmax.f32 %v733, 0.0
      %v872 = vmax.f32 %v738, 0.0
      %v873 = vmax.f32 %v741, 0.0
      %v874 = vmax.f32 %v746, 0.0
      %v875 = vmax.f32 %v749, 0.0
      %v876 = vmax.f32 %v754, 0.0
      %v877 = vmax.f32 %v757, 0.0
      %v878 = vmax.f32 %v762, 0.0
      %v879 = vmax.f32 %v765, 0.0
      %v880 = vmax.f32 %v770, 0.0
      %v881 = vmax.f32 %v773, 0.0
      %v882 = vmax.f32 %v778, 0.0
      %v883 = vmax.f32 %v781, 0.0
      %v884 = vmax.f32 %v786, 0.0
      %v885 = vmax.f32 %v789, 0.0
      %v886 = vmax.f32 %v794, 0.0
      %v887 = vmax.f32 %v797, 0.0
      %v888 = vmax.f32 %v802, 0.0
      %v889 = vmax.f32 %v805, 0.0
      %v890 = vmax.f32 %v810, 0.0
      %v891 = vmax.f32 %v813, 0.0
      %v892 = vmax.f32 %v818, 0.0
      %v893 = vmax.f32 %v821, 0.0
      %v894 = vmax.f32 %v826, 0.0
      %v895 = vmax.f32 %v829, 0.0
      %896 = vst [vmem:[%s172] sm:$0xff] %v832
      %897 = vst [vmem:[%s172 + $0x8] sm:$0xff] %v833
      %898 = vst [vmem:[%s172 + $0x10] sm:$0xff] %v834
      %899 = vst [vmem:[%s172 + $0x18] sm:$0xff] %v835
      %900 = vst [vmem:[%s172 + $0x20] sm:$0xff] %v836
      %901 = vst [vmem:[%s172 + $0x28] sm:$0xff] %v837
      %902 = vst [vmem:[%s172 + $0x30] sm:$0xff] %v838
      %903 = vst [vmem:[%s172 + $0x38] sm:$0xff] %v839
      %904 = vst [vmem:[%s172 + $0x40] sm:$0xff] %v840
      %905 = vst [vmem:[%s172 + $0x48] sm:$0xff] %v841
      %906 = vst [vmem:[%s172 + $0x50] sm:$0xff] %v842
      %907 = vst [vmem:[%s172 + $0x58] sm:$0xff] %v843
      %908 = vst [vmem:[%s172 + $0x60] sm:$0xff] %v844
      %909 = vst [vmem:[%s172 + $0x68] sm:$0xff] %v845
      %910 = vst [vmem:[%s172 + $0x70] sm:$0xff] %v846
      %911 = vst [vmem:[%s172 + $0x78] sm:$0xff] %v847
      %912 = vst [vmem:[%s172 + $0x80] sm:$0xff] %v848
      %913 = vst [vmem:[%s172 + $0x88] sm:$0xff] %v849
      %914 = vst [vmem:[%s172 + $0x90] sm:$0xff] %v850
      %915 = vst [vmem:[%s172 + $0x98] sm:$0xff] %v851
      %916 = vst [vmem:[%s172 + $0xa0] sm:$0xff] %v852
      %917 = vst [vmem:[%s172 + $0xa8] sm:$0xff] %v853
      %918 = vst [vmem:[%s172 + $0xb0] sm:$0xff] %v854
      %919 = vst [vmem:[%s172 + $0xb8] sm:$0xff] %v855
      %920 = vst [vmem:[%s172 + $0xc0] sm:$0xff] %v856
      %921 = vst [vmem:[%s172 + $0xc8] sm:$0xff] %v857
      %922 = vst [vmem:[%s172 + $0xd0] sm:$0xff] %v858
      %923 = vst [vmem:[%s172 + $0xd8] sm:$0xff] %v859
      %924 = vst [vmem:[%s172 + $0xe0] sm:$0xff] %v860
      %925 = vst [vmem:[%s172 + $0xe8] sm:$0xff] %v861
      %926 = vst [vmem:[%s172 + $0xf0] sm:$0xff] %v862
      %927 = vst [vmem:[%s172 + $0xf8] sm:$0xff] %v863
      %928 = vst [vmem:[%s172 + $0x100] sm:$0xff] %v864
      %929 = vst [vmem:[%s172 + $0x108] sm:$0xff] %v865
      %930 = vst [vmem:[%s172 + $0x110] sm:$0xff] %v866
      %931 = vst [vmem:[%s172 + $0x118] sm:$0xff] %v867
      %932 = vst [vmem:[%s172 + $0x120] sm:$0xff] %v868
      %933 = vst [vmem:[%s172 + $0x128] sm:$0xff] %v869
      %934 = vst [vmem:[%s172 + $0x130] sm:$0xff] %v870
      %935 = vst [vmem:[%s172 + $0x138] sm:$0xff] %v871
      %936 = vst [vmem:[%s172 + $0x140] sm:$0xff] %v872
      %937 = vst [vmem:[%s172 + $0x148] sm:$0xff] %v873
      %938 = vst [vmem:[%s172 + $0x150] sm:$0xff] %v874
      %939 = vst [vmem:[%s172 + $0x158] sm:$0xff] %v875
      %940 = vst [vmem:[%s172 + $0x160] sm:$0xff] %v876
      %941 = vst [vmem:[%s172 + $0x168] sm:$0xff] %v877
      %942 = vst [vmem:[%s172 + $0x170] sm:$0xff] %v878
      %943 = vst [vmem:[%s172 + $0x178] sm:$0xff] %v879
      %944 = vst [vmem:[%s172 + $0x180] sm:$0xff] %v880
      %945 = vst [vmem:[%s172 + $0x188] sm:$0xff] %v881
      %946 = vst [vmem:[%s172 + $0x190] sm:$0xff] %v882
      %947 = vst [vmem:[%s172 + $0x198] sm:$0xff] %v883
      %948 = vst [vmem:[%s172 + $0x1a0] sm:$0xff] %v884
      %949 = vst [vmem:[%s172 + $0x1a8] sm:$0xff] %v885
      %950 = vst [vmem:[%s172 + $0x1b0] sm:$0xff] %v886
      %951 = vst [vmem:[%s172 + $0x1b8] sm:$0xff] %v887
      %952 = vst [vmem:[%s172 + $0x1c0] sm:$0xff] %v888
      %953 = vst [vmem:[%s172 + $0x1c8] sm:$0xff] %v889
      %954 = vst [vmem:[%s172 + $0x1d0] sm:$0xff] %v890
      %955 = vst [vmem:[%s172 + $0x1d8] sm:$0xff] %v891
      %956 = vst [vmem:[%s172 + $0x1e0] sm:$0xff] %v892
      %957 = vst [vmem:[%s172 + $0x1e8] sm:$0xff] %v893
      %958 = vst [vmem:[%s172 + $0x1f0] sm:$0xff] %v894
      %959 = vst [vmem:[%s172 + $0x1f8] sm:$0xff] %v895
      %s960 = smul.u32 64, %s14
      %p961 = scmp.lt.s32.totalorder %s960, 255
      %s962 = scalar_select %p961, %s960, 255
      %s963 = smul.addr %s962, 8
      %s964 = scalar_lea.vmem %s3, %s963
      // Predicated region
      $region33: #{_lambda_.15} parent=31 // pred_check
        %p965 = pneg %p100
      $region34: #{_lambda_.15} parent=31 // pred_check_branch
        %967 = sbr.rel (%p965) target = $region36
      $region35: #{_lambda_.15} parent=31 // pred_region
        %s968 = smul.u32 64, %s14
      $region36: #{_lambda_.15} parent=31 // pred_fallthru
        _
    $region32: #{_lambda_.15} parent=5 // pred_fallthru
      _
    %p969 = scmp.le.s32.totalorder 2, %s9
    // Predicated region
    $region37: #{_lambda_.15} parent=5 // pred_check
      %p970 = pneg %p969
    $region38: #{_lambda_.15} parent=5 // pred_check_branch
      %972 = sbr.rel (%p970) target = $region40
    $region39: #{_lambda_.15} parent=5 // pred_region
      %s973 = ssub.s32 %s9, 2
      // Predicated region
      $region41: #{_lambda_.15} parent=39 // pred_check
        %p974 = pneg %p106
      $region42: #{_lambda_.15} parent=39 // pred_check_branch
        %976 = sbr.rel (%p974) target = $region44
      $region43: #{_lambda_.15} parent=39 // pred_region
        %s977 = smul.u32 64, %s15
        %p978 = scmp.lt.s32.totalorder %s977, 255
        %s979 = scalar_select %p978, %s977, 255
        %s980 = smul.addr %s979, 8
        %s981 = scalar_lea.vmem %s3, %s980
      $region44: #{_lambda_.15} parent=39 // pred_fallthru
        _
    $region40: #{_lambda_.15} parent=5 // pred_fallthru
      _
  $region6: #{_lambda_.15} parent=0 // loop_footer
    %s13 = sadd.s32 1, %s9
  $region7: #{_lambda_.15} parent=0 // loop_footer_branch
    %8 = sbr.rel target = $region3
  $region8: #{_lambda_.15} parent=0 // loop_exit
    _

// kernel: _lambda_.16
$region0: #{_lambda_.16}
  #allocation0 [shape = 'u32[]', space=smem, size = 0x4, offset = 0x4, fixed_abs, tag = 'smem constant byte address 0x4 - core index']
  #allocation1 [shape = 'u32[144,128]{1,0:T(1,128)}', space=vmem, size = 0x12000, scoped, tag = 'internal scratch']
  %s0 = inlined_call_operand.vmem [shape: bf16[2048,144], index: 0, kind: input, shape index: {}]
  %s1 = inlined_call_operand.vmem [shape: bf16[144,128], index: 1, kind: input, shape index: {}]
  %s2 = inlined_call_operand.vmem [shape: f32[1,128], index: 2, kind: input, shape index: {}]
  %s3 = inlined_call_operand.vmem [shape: f32[2048,128], index: 3, kind: output, shape index: {}]
  %s4 = sld [smem:[#allocation0]]
  $region45: #{_lambda_.16} parent=0
    _
  %s6 = ssub.s32 1, %s4
  %s7 = scalar_select 0, %s6, %s4
  loop: start=0, step=1, limit=6
  $region2: #{_lambda_.16} parent=0 // loop_pre_header
    _
  $region3: #{_lambda_.16} parent=0 // loop_header
    %s9 = sphi 0, %s13
    %p10 = scmp.ge.s32.totalorder %s9, 6
    %s19 = sphi 0, %s21
    %s22 = sphi 0, %s19
    %s23 = sphi 0, %s22
    %s39 = sphi 0, %s23
    %s43 = sphi 0, %s43
    %s45 = sphi 0, %s43
    %s46 = sphi 0, %s45
    %s60 = sphi 0, %s46
    %s64 = sphi 0, %s64
    %s66 = sphi 0, %s64
    %s67 = sphi 0, %s66
    %s81 = sphi 0, %s67
    %s87 = sphi 0, %s89
    %s90 = sphi 0, %s87
    %s91 = sphi 0, %s90
    %s107 = sphi 0, %s91
  $region4: #{_lambda_.16} parent=0 // loop_header_branch
    %12 = sbr.rel (%p10) target = $region8
  $region5: #{_lambda_.16} parent=0 // loop_body
    %s14 = ssub.s32 %s9, 1
    %s15 = ssub.s32 %s9, 2
    %s16 = sadd.s32 %s9, 1
    %s17 = ssub.s32 %s9, %s16
    %p18 = scmp.eq.s32.totalorder %s17, 0
    %s20 = sadd.s32 %s19, 1
    %s21 = scalar_select %p18, %s19, %s20
    %p24 = pneg %p18
    %p25 = scmp.eq.s32.totalorder %s9, 3
    %p26 = por %p24, %p25
    %p27 = scmp.ne.s32.totalorder %s19, %s22
    %p28 = scmp.eq.s32.totalorder %s9, 0
    %p29 = por %p27, %p28
    %p30 = scmp.ne.s32.totalorder %s19, %s22
    %p31 = scmp.eq.s32.totalorder %s14, 3
    %p32 = por %p30, %p31
    %p33 = scmp.ne.s32.totalorder %s22, %s23
    %p34 = scmp.eq.s32.totalorder %s14, 0
    %p35 = por %p33, %p34
    %p36 = scmp.ne.s32.totalorder %s22, %s23
    %p37 = scmp.eq.s32.totalorder %s15, 3
    %p38 = por %p36, %p37
    %p40 = scmp.ne.s32.totalorder %s23, %s39
    %p41 = scmp.eq.s32.totalorder %s15, 0
    %p42 = por %p40, %p41
    %s44 = sadd.s32 %s43, 1
    %p47 = scmp.eq.s32.totalorder %s9, 3
    %p48 = scmp.ne.s32.totalorder %s43, %s45
    %p49 = scmp.eq.s32.totalorder %s9, 0
    %p50 = por %p48, %p49
    %p51 = scmp.ne.s32.totalorder %s43, %s45
    %p52 = scmp.eq.s32.totalorder %s14, 3
    %p53 = por %p51, %p52
    %p54 = scmp.ne.s32.totalorder %s45, %s46
    %p55 = scmp.eq.s32.totalorder %s14, 0
    %p56 = por %p54, %p55
    %p57 = scmp.ne.s32.totalorder %s45, %s46
    %p58 = scmp.eq.s32.totalorder %s15, 3
    %p59 = por %p57, %p58
    %p61 = scmp.ne.s32.totalorder %s46, %s60
    %p62 = scmp.eq.s32.totalorder %s15, 0
    %p63 = por %p61, %p62
    %s65 = sadd.s32 %s64, 1
    %p68 = scmp.eq.s32.totalorder %s9, 3
    %p69 = scmp.ne.s32.totalorder %s64, %s66
    %p70 = scmp.eq.s32.totalorder %s9, 0
    %p71 = por %p69, %p70
    %p72 = scmp.ne.s32.totalorder %s64, %s66
    %p73 = scmp.eq.s32.totalorder %s14, 3
    %p74 = por %p72, %p73
    %p75 = scmp.ne.s32.totalorder %s66, %s67
    %p76 = scmp.eq.s32.totalorder %s14, 0
    %p77 = por %p75, %p76
    %p78 = scmp.ne.s32.totalorder %s66, %s67
    %p79 = scmp.eq.s32.totalorder %s15, 3
    %p80 = por %p78, %p79
    %p82 = scmp.ne.s32.totalorder %s67, %s81
    %p83 = scmp.eq.s32.totalorder %s15, 0
    %p84 = por %p82, %p83
    %s85 = ssub.s32 %s9, %s16
    %p86 = scmp.eq.s32.totalorder %s85, 0
    %s88 = sadd.s32 %s87, 1
    %s89 = scalar_select %p86, %s87, %s88
    %p92 = pneg %p86
    %p93 = scmp.eq.s32.totalorder %s9, 3
    %p94 = por %p92, %p93
    %p95 = scmp.ne.s32.totalorder %s87, %s90
    %p96 = scmp.eq.s32.totalorder %s9, 0
    %p97 = por %p95, %p96
    %p98 = scmp.ne.s32.totalorder %s87, %s90
    %p99 = scmp.eq.s32.totalorder %s14, 3
    %p100 = por %p98, %p99
    %p101 = scmp.ne.s32.totalorder %s90, %s91
    %p102 = scmp.eq.s32.totalorder %s14, 0
    %p103 = por %p101, %p102
    %p104 = scmp.ne.s32.totalorder %s90, %s91
    %p105 = scmp.eq.s32.totalorder %s15, 3
    %p106 = por %p104, %p105
    %p108 = scmp.ne.s32.totalorder %s91, %s107
    %p109 = scmp.eq.s32.totalorder %s15, 0
    %p110 = por %p108, %p109
    %p111 = scmp.le.s32.totalorder 1, %s9
    %p112 = scmp.lt.s32.totalorder %s9, 5
    %p113 = pnand %p111, %p112
    %p114 = pneg %p113
    // Predicated region
    $region9: #{_lambda_.16} parent=5 // pred_check
      _
    $region10: #{_lambda_.16} parent=5 // pred_check_branch
      %116 = sbr.rel (%p113) target = $region12
    $region11: #{_lambda_.16} parent=5 // pred_region
      %s117 = ssub.s32 %s9, 1
      // Predicated region
      $region13: #{_lambda_.16} parent=11 // pred_check
        %p118 = pneg %p56
      $region14: #{_lambda_.16} parent=11 // pred_check_branch
        %120 = sbr.rel (%p118) target = $region16
      $region15: #{_lambda_.16} parent=11 // pred_region
        _
      $region16: #{_lambda_.16} parent=11 // pred_fallthru
        _
      // Predicated region
      $region17: #{_lambda_.16} parent=11 // pred_check
        %p121 = pneg %p77
      $region18: #{_lambda_.16} parent=11 // pred_check_branch
        %123 = sbr.rel (%p121) target = $region20
      $region19: #{_lambda_.16} parent=11 // pred_region
        _
      $region20: #{_lambda_.16} parent=11 // pred_fallthru
        _
    $region12: #{_lambda_.16} parent=5 // pred_fallthru
      _
    %p124 = scmp.lt.s32.totalorder %s9, 4
    // Predicated region
    $region21: #{_lambda_.16} parent=5 // pred_check
      %p125 = pneg %p124
    $region22: #{_lambda_.16} parent=5 // pred_check_branch
      %127 = sbr.rel (%p125) target = $region24
    $region23: #{_lambda_.16} parent=5 // pred_region
      // Predicated region
      $region25: #{_lambda_.16} parent=23 // pred_check
        %p128 = pneg %p29
      $region26: #{_lambda_.16} parent=23 // pred_check_branch
        %130 = sbr.rel (%p128) target = $region28
      $region27: #{_lambda_.16} parent=23 // pred_region
        %s131 = smul.u32 64, %s9
        %p132 = scmp.lt.s32.totalorder %s131, 255
        %s133 = scalar_select %p132, %s131, 255
        %s134 = smul.addr %s133, 2
        %s135 = smul.addr %s134, 4
        %s136 = scalar_lea.vmem %s0, %s135
        %s137 = smul.u32 64, %s9
      $region28: #{_lambda_.16} parent=23 // pred_fallthru
        _
    $region24: #{_lambda_.16} parent=5 // pred_fallthru
      _
    %p138 = scmp.le.s32.totalorder 1, %s9
    %p139 = scmp.lt.s32.totalorder %s9, 5
    %p140 = pnand %p138, %p139
    %p141 = pneg %p140
    // Predicated region
    $region29: #{_lambda_.16} parent=5 // pred_check
      _
    $region30: #{_lambda_.16} parent=5 // pred_check_branch
      %143 = sbr.rel (%p140) target = $region32
    $region31: #{_lambda_.16} parent=5 // pred_region
      %s144 = ssub.s32 %s9, 1
      %s145 = smul.u32 64, %s14
      %p146 = scmp.lt.s32.totalorder %s145, 255
      %s147 = scalar_select %p146, %s145, 255
      %s148 = smul.addr %s147, 2
      %s149 = smul.addr %s148, 4
      %s150 = scalar_lea.vmem %s0, %s149
      %p151 = pneg %p35
      %p152 = pneg %p32
      %p153 = pneg %p56
      %p154 = pneg %p53
      %p155 = pneg %p77
      %p156 = pneg %p74
      %p157 = pneg %p103
      %p158 = pneg %p100
      %s159 = smul.u32 64, %s14
      %p160 = scmp.lt.s32.totalorder %s159, 255
      %s161 = scalar_select %p160, %s159, 255
      %s162 = smul.addr %s161, 8
      %s163 = scalar_lea.vmem %s3, %s162
      %s164 = smul.u32 64, %s14
      %p165 = scmp.lt.s32.totalorder %s164, 255
      %s166 = scalar_select %p165, %s164, 255
      %s167 = smul.addr %s166, 2
      %s168 = smul.addr %s167, 4
      %s169 = scalar_lea.vmem %s0, %s168
      %s170 = smul.u32 64, %s14
      %s171 = smul.u32 64, %s14
      %p172 = scmp.lt.s32.totalorder %s171, 255
      %s173 = scalar_select %p172, %s171, 255
      %s174 = smul.addr %s173, 8
      %s175 = scalar_lea.vmem %s3, %s174
      %s176 = smul.u32 64, %s14
      %v178 = vld [vmem:[%s169] sm:$0xff]
      %v179 = vld [vmem:[%s169 + $0x8] sm:$0xff]
      %v180 = vld [vmem:[%s169 + $0x10] sm:$0xff]
      %v181 = vld [vmem:[%s169 + $0x18] sm:$0xff]
      %v182 = vld [vmem:[%s169 + $0x20] sm:$0xff]
      %v183 = vld [vmem:[%s169 + $0x28] sm:$0xff]
      %v184 = vld [vmem:[%s169 + $0x30] sm:$0xff]
      %v185 = vld [vmem:[%s169 + $0x38] sm:$0xff]
      %v186 = vld [vmem:[%s169 + $0x40] sm:$0xff]
      %v187 = vld [vmem:[%s169 + $0x48] sm:$0xff]
      %v188 = vld [vmem:[%s169 + $0x50] sm:$0xff]
      %v189 = vld [vmem:[%s169 + $0x58] sm:$0xff]
      %v190 = vld [vmem:[%s169 + $0x60] sm:$0xff]
      %v191 = vld [vmem:[%s169 + $0x68] sm:$0xff]
      %v192 = vld [vmem:[%s169 + $0x70] sm:$0xff]
      %v193 = vld [vmem:[%s169 + $0x78] sm:$0xff]
      %v194 = vld [vmem:[%s169 + $0x80] sm:$0xff]
      %v195 = vld [vmem:[%s169 + $0x88] sm:$0xff]
      %v196 = vld [vmem:[%s169 + $0x90] sm:$0xff]
      %v197 = vld [vmem:[%s169 + $0x98] sm:$0xff]
      %v198 = vld [vmem:[%s169 + $0xa0] sm:$0xff]
      %v199 = vld [vmem:[%s169 + $0xa8] sm:$0xff]
      %v200 = vld [vmem:[%s169 + $0xb0] sm:$0xff]
      %v201 = vld [vmem:[%s169 + $0xb8] sm:$0xff]
      %v202 = vld [vmem:[%s169 + $0xc0] sm:$0xff]
      %v203 = vld [vmem:[%s169 + $0xc8] sm:$0xff]
      %v204 = vld [vmem:[%s169 + $0xd0] sm:$0xff]
      %v205 = vld [vmem:[%s169 + $0xd8] sm:$0xff]
      %v206 = vld [vmem:[%s169 + $0xe0] sm:$0xff]
      %v207 = vld [vmem:[%s169 + $0xe8] sm:$0xff]
      %v208 = vld [vmem:[%s169 + $0xf0] sm:$0xff]
      %v209 = vld [vmem:[%s169 + $0xf8] sm:$0xff]
      %v210 = vld [vmem:[%s169 + $0x100] sm:$0xff]
      %v211 = vld [vmem:[%s169 + $0x108] sm:$0xff]
      %v212 = vld [vmem:[%s169 + $0x110] sm:$0xff]
      %v213 = vld [vmem:[%s169 + $0x118] sm:$0xff]
      %v214 = vld [vmem:[%s169 + $0x120] sm:$0xff]
      %v215 = vld [vmem:[%s169 + $0x128] sm:$0xff]
      %v216 = vld [vmem:[%s169 + $0x130] sm:$0xff]
      %v217 = vld [vmem:[%s169 + $0x138] sm:$0xff]
      %v218 = vld [vmem:[%s169 + $0x140] sm:$0xff]
      %v219 = vld [vmem:[%s169 + $0x148] sm:$0xff]
      %v220 = vld [vmem:[%s169 + $0x150] sm:$0xff]
      %v221 = vld [vmem:[%s169 + $0x158] sm:$0xff]
      %v222 = vld [vmem:[%s169 + $0x160] sm:$0xff]
      %v223 = vld [vmem:[%s169 + $0x168] sm:$0xff]
      %v224 = vld [vmem:[%s169 + $0x170] sm:$0xff]
      %v225 = vld [vmem:[%s169 + $0x178] sm:$0xff]
      %v226 = vld [vmem:[%s169 + $0x180] sm:$0xff]
      %v227 = vld [vmem:[%s169 + $0x188] sm:$0xff]
      %v228 = vld [vmem:[%s169 + $0x190] sm:$0xff]
      %v229 = vld [vmem:[%s169 + $0x198] sm:$0xff]
      %v230 = vld [vmem:[%s169 + $0x1a0] sm:$0xff]
      %v231 = vld [vmem:[%s169 + $0x1a8] sm:$0xff]
      %v232 = vld [vmem:[%s169 + $0x1b0] sm:$0xff]
      %v233 = vld [vmem:[%s169 + $0x1b8] sm:$0xff]
      %v234 = vld [vmem:[%s169 + $0x1c0] sm:$0xff]
      %v235 = vld [vmem:[%s169 + $0x1c8] sm:$0xff]
      %v236 = vld [vmem:[%s169 + $0x1d0] sm:$0xff]
      %v237 = vld [vmem:[%s169 + $0x1d8] sm:$0xff]
      %v238 = vld [vmem:[%s169 + $0x1e0] sm:$0xff]
      %v239 = vld [vmem:[%s169 + $0x1e8] sm:$0xff]
      %v240 = vld [vmem:[%s169 + $0x1f0] sm:$0xff]
      %v241 = vld [vmem:[%s169 + $0x1f8] sm:$0xff]
      %v242 = vld [vmem:[%s1] sm:$0xf]
      %v243 = vld [vmem:[%s1 + $0x4] sm:$0xf]
      %v244 = vld [vmem:[%s1 + $0x8] sm:$0xf]
      %v245 = vld [vmem:[%s1 + $0xc] sm:$0xf]
      %v246 = vld [vmem:[%s1 + $0x10] sm:$0xf]
      %v247 = vld [vmem:[%s1 + $0x14] sm:$0xf]
      %v248 = vld [vmem:[%s1 + $0x18] sm:$0xf]
      %v249 = vld [vmem:[%s1 + $0x1c] sm:$0xf]
      %v250 = vld [vmem:[%s1 + $0x20] sm:$0xf]
      %v251 = vld [vmem:[%s1 + $0x24] sm:$0xf]
      %v252 = vld [vmem:[%s1 + $0x28] sm:$0xf]
      %v253 = vld [vmem:[%s1 + $0x2c] sm:$0xf]
      %v254 = vld [vmem:[%s1 + $0x30] sm:$0xf]
      %v255 = vld [vmem:[%s1 + $0x34] sm:$0xf]
      %v256 = vld [vmem:[%s1 + $0x38] sm:$0xf]
      %v257 = vld [vmem:[%s1 + $0x3c] sm:$0xf]
      %v258 = vld [vmem:[%s1 + $0x40] sm:$0xf]
      %v259 = vld [vmem:[%s1 + $0x44] sm:$0xf]
      %v260 = vld [vmem:[%s2] sm:$0x1]
      %v262 = vlaneseq
      %v263 = vshrl.u32 %v262, 7
      %v264 = vsub.s32 0, %v263
      %v265 = vrot.slane %v260, %v264
      %v331 = vunpack.c.l.b16 %v178
      %v332 = vunpack.c.h.b16 %v178
      %v333 = vunpack.c.l.b16 %v179
      %v334 = vunpack.c.h.b16 %v179
      %v335 = vunpack.c.l.b16 %v180
      %v336 = vunpack.c.h.b16 %v180
      %v337 = vunpack.c.l.b16 %v181
      %v338 = vunpack.c.h.b16 %v181
      %v339 = vunpack.c.l.b16 %v182
      %v340 = vunpack.c.h.b16 %v182
      %v341 = vunpack.c.l.b16 %v183
      %v342 = vunpack.c.h.b16 %v183
      %v343 = vunpack.c.l.b16 %v184
      %v344 = vunpack.c.h.b16 %v184
      %v345 = vunpack.c.l.b16 %v185
      %v346 = vunpack.c.h.b16 %v185
      %v347 = vunpack.c.l.b16 %v186
      %v348 = vunpack.c.h.b16 %v186
      %v349 = vunpack.c.l.b16 %v187
      %v350 = vunpack.c.h.b16 %v187
      %v351 = vunpack.c.l.b16 %v188
      %v352 = vunpack.c.h.b16 %v188
      %v353 = vunpack.c.l.b16 %v189
      %v354 = vunpack.c.h.b16 %v189
      %v355 = vunpack.c.l.b16 %v190
      %v356 = vunpack.c.h.b16 %v190
      %v357 = vunpack.c.l.b16 %v191
      %v358 = vunpack.c.h.b16 %v191
      %v359 = vunpack.c.l.b16 %v192
      %v360 = vunpack.c.h.b16 %v192
      %v361 = vunpack.c.l.b16 %v193
      %v362 = vunpack.c.h.b16 %v193
      %v363 = vunpack.c.l.b16 %v194
      %v364 = vunpack.c.h.b16 %v194
      %v365 = vunpack.c.l.b16 %v195
      %v366 = vunpack.c.h.b16 %v195
      %v367 = vunpack.c.l.b16 %v196
      %v368 = vunpack.c.h.b16 %v196
      %v369 = vunpack.c.l.b16 %v197
      %v370 = vunpack.c.h.b16 %v197
      %v371 = vunpack.c.l.b16 %v198
      %v372 = vunpack.c.h.b16 %v198
      %v373 = vunpack.c.l.b16 %v199
      %v374 = vunpack.c.h.b16 %v199
      %v375 = vunpack.c.l.b16 %v200
      %v376 = vunpack.c.h.b16 %v200
      %v377 = vunpack.c.l.b16 %v201
      %v378 = vunpack.c.h.b16 %v201
      %v379 = vunpack.c.l.b16 %v202
      %v380 = vunpack.c.h.b16 %v202
      %v381 = vunpack.c.l.b16 %v203
      %v382 = vunpack.c.h.b16 %v203
      %v383 = vunpack.c.l.b16 %v204
      %v384 = vunpack.c.h.b16 %v204
      %v385 = vunpack.c.l.b16 %v205
      %v386 = vunpack.c.h.b16 %v205
      %v387 = vunpack.c.l.b16 %v206
      %v388 = vunpack.c.h.b16 %v206
      %v389 = vunpack.c.l.b16 %v207
      %v390 = vunpack.c.h.b16 %v207
      %v391 = vunpack.c.l.b16 %v208
      %v392 = vunpack.c.h.b16 %v208
      %v393 = vunpack.c.l.b16 %v209
      %v394 = vunpack.c.h.b16 %v209
      %v395 = vunpack.c.l.b16 %v210
      %v396 = vunpack.c.h.b16 %v210
      %v397 = vunpack.c.l.b16 %v211
      %v398 = vunpack.c.h.b16 %v211
      %v399 = vunpack.c.l.b16 %v212
      %v400 = vunpack.c.h.b16 %v212
      %v401 = vunpack.c.l.b16 %v213
      %v402 = vunpack.c.h.b16 %v213
      %v403 = vunpack.c.l.b16 %v214
      %v404 = vunpack.c.h.b16 %v214
      %v405 = vunpack.c.l.b16 %v215
      %v406 = vunpack.c.h.b16 %v215
      %v407 = vunpack.c.l.b16 %v216
      %v408 = vunpack.c.h.b16 %v216
      %v409 = vunpack.c.l.b16 %v217
      %v410 = vunpack.c.h.b16 %v217
      %v411 = vunpack.c.l.b16 %v218
      %v412 = vunpack.c.h.b16 %v218
      %v413 = vunpack.c.l.b16 %v219
      %v414 = vunpack.c.h.b16 %v219
      %v415 = vunpack.c.l.b16 %v220
      %v416 = vunpack.c.h.b16 %v220
      %v417 = vunpack.c.l.b16 %v221
      %v418 = vunpack.c.h.b16 %v221
      %v419 = vunpack.c.l.b16 %v222
      %v420 = vunpack.c.h.b16 %v222
      %v421 = vunpack.c.l.b16 %v223
      %v422 = vunpack.c.h.b16 %v223
      %v423 = vunpack.c.l.b16 %v224
      %v424 = vunpack.c.h.b16 %v224
      %v425 = vunpack.c.l.b16 %v225
      %v426 = vunpack.c.h.b16 %v225
      %v427 = vunpack.c.l.b16 %v226
      %v428 = vunpack.c.h.b16 %v226
      %v429 = vunpack.c.l.b16 %v227
      %v430 = vunpack.c.h.b16 %v227
      %v431 = vunpack.c.l.b16 %v228
      %v432 = vunpack.c.h.b16 %v228
      %v433 = vunpack.c.l.b16 %v229
      %v434 = vunpack.c.h.b16 %v229
      %v435 = vunpack.c.l.b16 %v230
      %v436 = vunpack.c.h.b16 %v230
      %v437 = vunpack.c.l.b16 %v231
      %v438 = vunpack.c.h.b16 %v231
      %v439 = vunpack.c.l.b16 %v232
      %v440 = vunpack.c.h.b16 %v232
      %v441 = vunpack.c.l.b16 %v233
      %v442 = vunpack.c.h.b16 %v233
      %v443 = vunpack.c.l.b16 %v234
      %v444 = vunpack.c.h.b16 %v234
      %v445 = vunpack.c.l.b16 %v235
      %v446 = vunpack.c.h.b16 %v235
      %v447 = vunpack.c.l.b16 %v236
      %v448 = vunpack.c.h.b16 %v236
      %v449 = vunpack.c.l.b16 %v237
      %v450 = vunpack.c.h.b16 %v237
      %v451 = vunpack.c.l.b16 %v238
      %v452 = vunpack.c.h.b16 %v238
      %v453 = vunpack.c.l.b16 %v239
      %v454 = vunpack.c.h.b16 %v239
      %v455 = vunpack.c.l.b16 %v240
      %v456 = vunpack.c.h.b16 %v240
      %v457 = vunpack.c.l.b16 %v241
      %v458 = vunpack.c.h.b16 %v241
      %v459 = vpack.c.b16 %v333, %v331
      %v460 = vpack.c.b16 %v334, %v332
      %v461 = vpack.c.b16 %v337, %v335
      %v462 = vpack.c.b16 %v338, %v336
      %v463 = vpack.c.b16 %v341, %v339
      %v464 = vpack.c.b16 %v342, %v340
      %v465 = vpack.c.b16 %v345, %v343
      %v466 = vpack.c.b16 %v346, %v344
      %v467 = vpack.c.b16 %v349, %v347
      %v468 = vpack.c.b16 %v350, %v348
      %v469 = vpack.c.b16 %v353, %v351
      %v470 = vpack.c.b16 %v354, %v352
      %v471 = vpack.c.b16 %v357, %v355
      %v472 = vpack.c.b16 %v358, %v356
      %v473 = vpack.c.b16 %v361, %v359
      %v474 = vpack.c.b16 %v362, %v360
      %v475 = vpack.c.b16 %v365, %v363
      %v476 = vpack.c.b16 %v366, %v364
      %v477 = vpack.c.b16 %v369, %v367
      %v478 = vpack.c.b16 %v370, %v368
      %v479 = vpack.c.b16 %v373, %v371
      %v480 = vpack.c.b16 %v374, %v372
      %v481 = vpack.c.b16 %v377, %v375
      %v482 = vpack.c.b16 %v378, %v376
      %v483 = vpack.c.b16 %v381, %v379
      %v484 = vpack.c.b16 %v382, %v380
      %v485 = vpack.c.b16 %v385, %v383
      %v486 = vpack.c.b16 %v386, %v384
      %v487 = vpack.c.b16 %v389, %v387
      %v488 = vpack.c.b16 %v390, %v388
      %v489 = vpack.c.b16 %v393, %v391
      %v490 = vpack.c.b16 %v394, %v392
      %v491 = vpack.c.b16 %v397, %v395
      %v492 = vpack.c.b16 %v398, %v396
      %v493 = vpack.c.b16 %v401, %v399
      %v494 = vpack.c.b16 %v402, %v400
      %v495 = vpack.c.b16 %v405, %v403
      %v496 = vpack.c.b16 %v406, %v404
      %v497 = vpack.c.b16 %v409, %v407
      %v498 = vpack.c.b16 %v410, %v408
      %v499 = vpack.c.b16 %v413, %v411
      %v500 = vpack.c.b16 %v414, %v412
      %v501 = vpack.c.b16 %v417, %v415
      %v502 = vpack.c.b16 %v418, %v416
      %v503 = vpack.c.b16 %v421, %v419
      %v504 = vpack.c.b16 %v422, %v420
      %v505 = vpack.c.b16 %v425, %v423
      %v506 = vpack.c.b16 %v426, %v424
      %v507 = vpack.c.b16 %v429, %v427
      %v508 = vpack.c.b16 %v430, %v428
      %v509 = vpack.c.b16 %v433, %v431
      %v510 = vpack.c.b16 %v434, %v432
      %v511 = vpack.c.b16 %v437, %v435
      %v512 = vpack.c.b16 %v438, %v436
      %v513 = vpack.c.b16 %v441, %v439
      %v514 = vpack.c.b16 %v442, %v440
      %v515 = vpack.c.b16 %v445, %v443
      %v516 = vpack.c.b16 %v446, %v444
      %v517 = vpack.c.b16 %v449, %v447
      %v518 = vpack.c.b16 %v450, %v448
      %v519 = vpack.c.b16 %v453, %v451
      %v520 = vpack.c.b16 %v454, %v452
      %v521 = vpack.c.b16 %v457, %v455
      %v522 = vpack.c.b16 %v458, %v456
      %v573 = vunpack.c.l.b16 %v242
      %v574 = vunpack.c.l.b16 %v243
      %v575 = vunpack.c.l.b16 %v244
      %v576 = vunpack.c.l.b16 %v245
      %v577 = vunpack.c.l.b16 %v246
      %v578 = vunpack.c.l.b16 %v247
      %v579 = vunpack.c.l.b16 %v248
      %v580 = vunpack.c.l.b16 %v249
      %v581 = vunpack.c.l.b16 %v250
      %v582 = vunpack.c.l.b16 %v251
      %v583 = vunpack.c.l.b16 %v252
      %v584 = vunpack.c.l.b16 %v253
      %v585 = vunpack.c.l.b16 %v254
      %v586 = vunpack.c.l.b16 %v255
      %v587 = vunpack.c.l.b16 %v256
      %v588 = vunpack.c.l.b16 %v257
      %v589 = vunpack.c.l.b16 %v258
      %v590 = vunpack.c.l.b16 %v259
      %v591 = vpack.c.b16 %v574, %v573
      %v592 = vpack.c.b16 %v576, %v575
      %v593 = vpack.c.b16 %v578, %v577
      %v594 = vpack.c.b16 %v580, %v579
      %v595 = vpack.c.b16 %v582, %v581
      %v596 = vpack.c.b16 %v584, %v583
      %v597 = vpack.c.b16 %v586, %v585
      %v598 = vpack.c.b16 %v588, %v587
      %v599 = vpack.c.b16 %v590, %v589
      %vm609 = vcmask 130048
      %v611 = vsel %vm609, %v460, 0
      %v614 = vsel %vm609, %v462, 0
      %v617 = vsel %vm609, %v464, 0
      %v620 = vsel %vm609, %v466, 0
      %v623 = vsel %vm609, %v468, 0
      %v626 = vsel %vm609, %v470, 0
      %v629 = vsel %vm609, %v472, 0
      %v632 = vsel %vm609, %v474, 0
      %v635 = vsel %vm609, %v476, 0
      %v638 = vsel %vm609, %v478, 0
      %v641 = vsel %vm609, %v480, 0
      %v644 = vsel %vm609, %v482, 0
      %v647 = vsel %vm609, %v484, 0
      %v650 = vsel %vm609, %v486, 0
      %v653 = vsel %vm609, %v488, 0
      %v656 = vsel %vm609, %v490, 0
      %v659 = vsel %vm609, %v492, 0
      %v662 = vsel %vm609, %v494, 0
      %v665 = vsel %vm609, %v496, 0
      %v668 = vsel %vm609, %v498, 0
      %v671 = vsel %vm609, %v500, 0
      %v674 = vsel %vm609, %v502, 0
      %v677 = vsel %vm609, %v504, 0
      %v680 = vsel %vm609, %v506, 0
      %v683 = vsel %vm609, %v508, 0
      %v686 = vsel %vm609, %v510, 0
      %v689 = vsel %vm609, %v512, 0
      %v692 = vsel %vm609, %v514, 0
      %v695 = vsel %vm609, %v516, 0
      %v698 = vsel %vm609, %v518, 0
      %v701 = vsel %vm609, %v520, 0
      %v704 = vsel %vm609, %v522, 0
      %706 = vmatprep.subr.bf16.mxu0 0
      %707 = vmatpush1.bf16.msra.mxu0 %v598
      %708 = vmatprep.subr.bf16.mxu0 0
      %709 = vmatpush1.bf16.msra.mxu0 %v597
      %710 = vmatprep.subr.bf16.mxu0 0
      %711 = vmatpush1.bf16.msra.mxu0 %v596
      %712 = vmatprep.subr.bf16.mxu0 0
      %713 = vmatpush1.bf16.msra.mxu0 %v595
      %714 = vmatprep.subr.bf16.mxu0 0
      %715 = vmatpush1.bf16.msra.mxu0 %v594
      %716 = vmatprep.subr.bf16.mxu0 0
      %717 = vmatpush1.bf16.msra.mxu0 %v593
      %718 = vmatprep.subr.bf16.mxu0 0
      %719 = vmatpush1.bf16.msra.mxu0 %v592
      %720 = vmatprep.subr.bf16.mxu0 0
      %721 = vmatpush1.bf16.msra.mxu0 %v591
      %722 = vmatprep.subr.bf16.mxu0 0
      %723 = vmatpush2.bf16.msra.mxu0 0
      %724 = vmatprep.subr.bf16.mxu0 0
      %725 = vmatpush2.bf16.msra.mxu0 0
      %726 = vmatprep.subr.bf16.mxu0 0
      %727 = vmatpush2.bf16.msra.mxu0 0
      %728 = vmatprep.subr.bf16.mxu0 0
      %729 = vmatpush2.bf16.msra.mxu0 0
      %730 = vmatprep.subr.bf16.mxu0 0
      %731 = vmatpush2.bf16.msra.mxu0 0
      %732 = vmatprep.subr.bf16.mxu0 0
      %733 = vmatpush2.bf16.msra.mxu0 0
      %734 = vmatprep.subr.bf16.mxu0 0
      %735 = vmatpush2.bf16.msra.mxu0 0
      %736 = vmatprep.subr.bf16.mxu0 0
      %737 = vmatpush2.bf16.msra.mxu0 %v599
      %738 = vmatprep.mubr.bf16.mxu0 %v611
      %739 = vmatmul.mubr.bf16.gmra.mxu0 %v459
      %v740 = vpop.f32.mrf.mxu0
      %v741 = vadd.f32 %v265, %v740
      %v742 = vpop.f32.mrf.mxu0
      %v743 = vpop.f32.mrf.mxu0
      %v744 = vadd.f32 %v265, %v743
      %v745 = vpop.f32.mrf.mxu0
      %746 = vmatprep.mubr.bf16.mxu0 %v614
      %747 = vmatmul.mubr.bf16.gmra.mxu0 %v461
      %v748 = vpop.f32.mrf.mxu0
      %v749 = vadd.f32 %v265, %v748
      %v750 = vpop.f32.mrf.mxu0
      %v751 = vpop.f32.mrf.mxu0
      %v752 = vadd.f32 %v265, %v751
      %v753 = vpop.f32.mrf.mxu0
      %754 = vmatprep.mubr.bf16.mxu0 %v617
      %755 = vmatmul.mubr.bf16.gmra.mxu0 %v463
      %v756 = vpop.f32.mrf.mxu0
      %v757 = vadd.f32 %v265, %v756
      %v758 = vpop.f32.mrf.mxu0
      %v759 = vpop.f32.mrf.mxu0
      %v760 = vadd.f32 %v265, %v759
      %v761 = vpop.f32.mrf.mxu0
      %762 = vmatprep.mubr.bf16.mxu0 %v620
      %763 = vmatmul.mubr.bf16.gmra.mxu0 %v465
      %v764 = vpop.f32.mrf.mxu0
      %v765 = vadd.f32 %v265, %v764
      %v766 = vpop.f32.mrf.mxu0
      %v767 = vpop.f32.mrf.mxu0
      %v768 = vadd.f32 %v265, %v767
      %v769 = vpop.f32.mrf.mxu0
      %770 = vmatprep.mubr.bf16.mxu0 %v623
      %771 = vmatmul.mubr.bf16.gmra.mxu0 %v467
      %v772 = vpop.f32.mrf.mxu0
      %v773 = vadd.f32 %v265, %v772
      %v774 = vpop.f32.mrf.mxu0
      %v775 = vpop.f32.mrf.mxu0
      %v776 = vadd.f32 %v265, %v775
      %v777 = vpop.f32.mrf.mxu0
      %778 = vmatprep.mubr.bf16.mxu0 %v626
      %779 = vmatmul.mubr.bf16.gmra.mxu0 %v469
      %v780 = vpop.f32.mrf.mxu0
      %v781 = vadd.f32 %v265, %v780
      %v782 = vpop.f32.mrf.mxu0
      %v783 = vpop.f32.mrf.mxu0
      %v784 = vadd.f32 %v265, %v783
      %v785 = vpop.f32.mrf.mxu0
      %786 = vmatprep.mubr.bf16.mxu0 %v629
      %787 = vmatmul.mubr.bf16.gmra.mxu0 %v471
      %v788 = vpop.f32.mrf.mxu0
      %v789 = vadd.f32 %v265, %v788
      %v790 = vpop.f32.mrf.mxu0
      %v791 = vpop.f32.mrf.mxu0
      %v792 = vadd.f32 %v265, %v791
      %v793 = vpop.f32.mrf.mxu0
      %794 = vmatprep.mubr.bf16.mxu0 %v632
      %795 = vmatmul.mubr.bf16.gmra.mxu0 %v473
      %v796 = vpop.f32.mrf.mxu0
      %v797 = vadd.f32 %v265, %v796
      %v798 = vpop.f32.mrf.mxu0
      %v799 = vpop.f32.mrf.mxu0
      %v800 = vadd.f32 %v265, %v799
      %v801 = vpop.f32.mrf.mxu0
      %802 = vmatprep.mubr.bf16.mxu0 %v635
      %803 = vmatmul.mubr.bf16.gmra.mxu0 %v475
      %v804 = vpop.f32.mrf.mxu0
      %v805 = vadd.f32 %v265, %v804
      %v806 = vpop.f32.mrf.mxu0
      %v807 = vpop.f32.mrf.mxu0
      %v808 = vadd.f32 %v265, %v807
      %v809 = vpop.f32.mrf.mxu0
      %810 = vmatprep.mubr.bf16.mxu0 %v638
      %811 = vmatmul.mubr.bf16.gmra.mxu0 %v477
      %v812 = vpop.f32.mrf.mxu0
      %v813 = vadd.f32 %v265, %v812
      %v814 = vpop.f32.mrf.mxu0
      %v815 = vpop.f32.mrf.mxu0
      %v816 = vadd.f32 %v265, %v815
      %v817 = vpop.f32.mrf.mxu0
      %818 = vmatprep.mubr.bf16.mxu0 %v641
      %819 = vmatmul.mubr.bf16.gmra.mxu0 %v479
      %v820 = vpop.f32.mrf.mxu0
      %v821 = vadd.f32 %v265, %v820
      %v822 = vpop.f32.mrf.mxu0
      %v823 = vpop.f32.mrf.mxu0
      %v824 = vadd.f32 %v265, %v823
      %v825 = vpop.f32.mrf.mxu0
      %826 = vmatprep.mubr.bf16.mxu0 %v644
      %827 = vmatmul.mubr.bf16.gmra.mxu0 %v481
      %v828 = vpop.f32.mrf.mxu0
      %v829 = vadd.f32 %v265, %v828
      %v830 = vpop.f32.mrf.mxu0
      %v831 = vpop.f32.mrf.mxu0
      %v832 = vadd.f32 %v265, %v831
      %v833 = vpop.f32.mrf.mxu0
      %834 = vmatprep.mubr.bf16.mxu0 %v647
      %835 = vmatmul.mubr.bf16.gmra.mxu0 %v483
      %v836 = vpop.f32.mrf.mxu0
      %v837 = vadd.f32 %v265, %v836
      %v838 = vpop.f32.mrf.mxu0
      %v839 = vpop.f32.mrf.mxu0
      %v840 = vadd.f32 %v265, %v839
      %v841 = vpop.f32.mrf.mxu0
      %842 = vmatprep.mubr.bf16.mxu0 %v650
      %843 = vmatmul.mubr.bf16.gmra.mxu0 %v485
      %v844 = vpop.f32.mrf.mxu0
      %v845 = vadd.f32 %v265, %v844
      %v846 = vpop.f32.mrf.mxu0
      %v847 = vpop.f32.mrf.mxu0
      %v848 = vadd.f32 %v265, %v847
      %v849 = vpop.f32.mrf.mxu0
      %850 = vmatprep.mubr.bf16.mxu0 %v653
      %851 = vmatmul.mubr.bf16.gmra.mxu0 %v487
      %v852 = vpop.f32.mrf.mxu0
      %v853 = vadd.f32 %v265, %v852
      %v854 = vpop.f32.mrf.mxu0
      %v855 = vpop.f32.mrf.mxu0
      %v856 = vadd.f32 %v265, %v855
      %v857 = vpop.f32.mrf.mxu0
      %858 = vmatprep.mubr.bf16.mxu0 %v656
      %859 = vmatmul.mubr.bf16.gmra.mxu0 %v489
      %v860 = vpop.f32.mrf.mxu0
      %v861 = vadd.f32 %v265, %v860
      %v862 = vpop.f32.mrf.mxu0
      %v863 = vpop.f32.mrf.mxu0
      %v864 = vadd.f32 %v265, %v863
      %v865 = vpop.f32.mrf.mxu0
      %866 = vmatprep.mubr.bf16.mxu0 %v659
      %867 = vmatmul.mubr.bf16.gmra.mxu0 %v491
      %v868 = vpop.f32.mrf.mxu0
      %v869 = vadd.f32 %v265, %v868
      %v870 = vpop.f32.mrf.mxu0
      %v871 = vpop.f32.mrf.mxu0
      %v872 = vadd.f32 %v265, %v871
      %v873 = vpop.f32.mrf.mxu0
      %874 = vmatprep.mubr.bf16.mxu0 %v662
      %875 = vmatmul.mubr.bf16.gmra.mxu0 %v493
      %v876 = vpop.f32.mrf.mxu0
      %v877 = vadd.f32 %v265, %v876
      %v878 = vpop.f32.mrf.mxu0
      %v879 = vpop.f32.mrf.mxu0
      %v880 = vadd.f32 %v265, %v879
      %v881 = vpop.f32.mrf.mxu0
      %882 = vmatprep.mubr.bf16.mxu0 %v665
      %883 = vmatmul.mubr.bf16.gmra.mxu0 %v495
      %v884 = vpop.f32.mrf.mxu0
      %v885 = vadd.f32 %v265, %v884
      %v886 = vpop.f32.mrf.mxu0
      %v887 = vpop.f32.mrf.mxu0
      %v888 = vadd.f32 %v265, %v887
      %v889 = vpop.f32.mrf.mxu0
      %890 = vmatprep.mubr.bf16.mxu0 %v668
      %891 = vmatmul.mubr.bf16.gmra.mxu0 %v497
      %v892 = vpop.f32.mrf.mxu0
      %v893 = vadd.f32 %v265, %v892
      %v894 = vpop.f32.mrf.mxu0
      %v895 = vpop.f32.mrf.mxu0
      %v896 = vadd.f32 %v265, %v895
      %v897 = vpop.f32.mrf.mxu0
      %898 = vmatprep.mubr.bf16.mxu0 %v671
      %899 = vmatmul.mubr.bf16.gmra.mxu0 %v499
      %v900 = vpop.f32.mrf.mxu0
      %v901 = vadd.f32 %v265, %v900
      %v902 = vpop.f32.mrf.mxu0
      %v903 = vpop.f32.mrf.mxu0
      %v904 = vadd.f32 %v265, %v903
      %v905 = vpop.f32.mrf.mxu0
      %906 = vmatprep.mubr.bf16.mxu0 %v674
      %907 = vmatmul.mubr.bf16.gmra.mxu0 %v501
      %v908 = vpop.f32.mrf.mxu0
      %v909 = vadd.f32 %v265, %v908
      %v910 = vpop.f32.mrf.mxu0
      %v911 = vpop.f32.mrf.mxu0
      %v912 = vadd.f32 %v265, %v911
      %v913 = vpop.f32.mrf.mxu0
      %914 = vmatprep.mubr.bf16.mxu0 %v677
      %915 = vmatmul.mubr.bf16.gmra.mxu0 %v503
      %v916 = vpop.f32.mrf.mxu0
      %v917 = vadd.f32 %v265, %v916
      %v918 = vpop.f32.mrf.mxu0
      %v919 = vpop.f32.mrf.mxu0
      %v920 = vadd.f32 %v265, %v919
      %v921 = vpop.f32.mrf.mxu0
      %922 = vmatprep.mubr.bf16.mxu0 %v680
      %923 = vmatmul.mubr.bf16.gmra.mxu0 %v505
      %v924 = vpop.f32.mrf.mxu0
      %v925 = vadd.f32 %v265, %v924
      %v926 = vpop.f32.mrf.mxu0
      %v927 = vpop.f32.mrf.mxu0
      %v928 = vadd.f32 %v265, %v927
      %v929 = vpop.f32.mrf.mxu0
      %930 = vmatprep.mubr.bf16.mxu0 %v683
      %931 = vmatmul.mubr.bf16.gmra.mxu0 %v507
      %v932 = vpop.f32.mrf.mxu0
      %v933 = vadd.f32 %v265, %v932
      %v934 = vpop.f32.mrf.mxu0
      %v935 = vpop.f32.mrf.mxu0
      %v936 = vadd.f32 %v265, %v935
      %v937 = vpop.f32.mrf.mxu0
      %938 = vmatprep.mubr.bf16.mxu0 %v686
      %939 = vmatmul.mubr.bf16.gmra.mxu0 %v509
      %v940 = vpop.f32.mrf.mxu0
      %v941 = vadd.f32 %v265, %v940
      %v942 = vpop.f32.mrf.mxu0
      %v943 = vpop.f32.mrf.mxu0
      %v944 = vadd.f32 %v265, %v943
      %v945 = vpop.f32.mrf.mxu0
      %946 = vmatprep.mubr.bf16.mxu0 %v689
      %947 = vmatmul.mubr.bf16.gmra.mxu0 %v511
      %v948 = vpop.f32.mrf.mxu0
      %v949 = vadd.f32 %v265, %v948
      %v950 = vpop.f32.mrf.mxu0
      %v951 = vpop.f32.mrf.mxu0
      %v952 = vadd.f32 %v265, %v951
      %v953 = vpop.f32.mrf.mxu0
      %954 = vmatprep.mubr.bf16.mxu0 %v692
      %955 = vmatmul.mubr.bf16.gmra.mxu0 %v513
      %v956 = vpop.f32.mrf.mxu0
      %v957 = vadd.f32 %v265, %v956
      %v958 = vpop.f32.mrf.mxu0
      %v959 = vpop.f32.mrf.mxu0
      %v960 = vadd.f32 %v265, %v959
      %v961 = vpop.f32.mrf.mxu0
      %962 = vmatprep.mubr.bf16.mxu0 %v695
      %963 = vmatmul.mubr.bf16.gmra.mxu0 %v515
      %v964 = vpop.f32.mrf.mxu0
      %v965 = vadd.f32 %v265, %v964
      %v966 = vpop.f32.mrf.mxu0
      %v967 = vpop.f32.mrf.mxu0
      %v968 = vadd.f32 %v265, %v967
      %v969 = vpop.f32.mrf.mxu0
      %970 = vmatprep.mubr.bf16.mxu0 %v698
      %971 = vmatmul.mubr.bf16.gmra.mxu0 %v517
      %v972 = vpop.f32.mrf.mxu0
      %v973 = vadd.f32 %v265, %v972
      %v974 = vpop.f32.mrf.mxu0
      %v975 = vpop.f32.mrf.mxu0
      %v976 = vadd.f32 %v265, %v975
      %v977 = vpop.f32.mrf.mxu0
      %978 = vmatprep.mubr.bf16.mxu0 %v701
      %979 = vmatmul.mubr.bf16.gmra.mxu0 %v519
      %v980 = vpop.f32.mrf.mxu0
      %v981 = vadd.f32 %v265, %v980
      %v982 = vpop.f32.mrf.mxu0
      %v983 = vpop.f32.mrf.mxu0
      %v984 = vadd.f32 %v265, %v983
      %v985 = vpop.f32.mrf.mxu0
      %986 = vmatprep.mubr.bf16.mxu0 %v704
      %987 = vmatmul.mubr.bf16.gmra.mxu0 %v521
      %v988 = vpop.f32.mrf.mxu0
      %v989 = vadd.f32 %v265, %v988
      %v990 = vpop.f32.mrf.mxu0
      %v991 = vpop.f32.mrf.mxu0
      %v992 = vadd.f32 %v265, %v991
      %v993 = vpop.f32.mrf.mxu0
      %994 = vdwg.mxu0
      %v995 = vmax.f32 %v741, 0.0
      %v996 = vmax.f32 %v744, 0.0
      %v997 = vmax.f32 %v749, 0.0
      %v998 = vmax.f32 %v752, 0.0
      %v999 = vmax.f32 %v757, 0.0
      %v1000 = vmax.f32 %v760, 0.0
      %v1001 = vmax.f32 %v765, 0.0
      %v1002 = vmax.f32 %v768, 0.0
      %v1003 = vmax.f32 %v773, 0.0
      %v1004 = vmax.f32 %v776, 0.0
      %v1005 = vmax.f32 %v781, 0.0
      %v1006 = vmax.f32 %v784, 0.0
      %v1007 = vmax.f32 %v789, 0.0
      %v1008 = vmax.f32 %v792, 0.0
      %v1009 = vmax.f32 %v797, 0.0
      %v1010 = vmax.f32 %v800, 0.0
      %v1011 = vmax.f32 %v805, 0.0
      %v1012 = vmax.f32 %v808, 0.0
      %v1013 = vmax.f32 %v813, 0.0
      %v1014 = vmax.f32 %v816, 0.0
      %v1015 = vmax.f32 %v821, 0.0
      %v1016 = vmax.f32 %v824, 0.0
      %v1017 = vmax.f32 %v829, 0.0
      %v1018 = vmax.f32 %v832, 0.0
      %v1019 = vmax.f32 %v837, 0.0
      %v1020 = vmax.f32 %v840, 0.0
      %v1021 = vmax.f32 %v845, 0.0
      %v1022 = vmax.f32 %v848, 0.0
      %v1023 = vmax.f32 %v853, 0.0
      %v1024 = vmax.f32 %v856, 0.0
      %v1025 = vmax.f32 %v861, 0.0
      %v1026 = vmax.f32 %v864, 0.0
      %v1027 = vmax.f32 %v869, 0.0
      %v1028 = vmax.f32 %v872, 0.0
      %v1029 = vmax.f32 %v877, 0.0
      %v1030 = vmax.f32 %v880, 0.0
      %v1031 = vmax.f32 %v885, 0.0
      %v1032 = vmax.f32 %v888, 0.0
      %v1033 = vmax.f32 %v893, 0.0
      %v1034 = vmax.f32 %v896, 0.0
      %v1035 = vmax.f32 %v901, 0.0
      %v1036 = vmax.f32 %v904, 0.0
      %v1037 = vmax.f32 %v909, 0.0
      %v1038 = vmax.f32 %v912, 0.0
      %v1039 = vmax.f32 %v917, 0.0
      %v1040 = vmax.f32 %v920, 0.0
      %v1041 = vmax.f32 %v925, 0.0
      %v1042 = vmax.f32 %v928, 0.0
      %v1043 = vmax.f32 %v933, 0.0
      %v1044 = vmax.f32 %v936, 0.0
      %v1045 = vmax.f32 %v941, 0.0
      %v1046 = vmax.f32 %v944, 0.0
      %v1047 = vmax.f32 %v949, 0.0
      %v1048 = vmax.f32 %v952, 0.0
      %v1049 = vmax.f32 %v957, 0.0
      %v1050 = vmax.f32 %v960, 0.0
      %v1051 = vmax.f32 %v965, 0.0
      %v1052 = vmax.f32 %v968, 0.0
      %v1053 = vmax.f32 %v973, 0.0
      %v1054 = vmax.f32 %v976, 0.0
      %v1055 = vmax.f32 %v981, 0.0
      %v1056 = vmax.f32 %v984, 0.0
      %v1057 = vmax.f32 %v989, 0.0
      %v1058 = vmax.f32 %v992, 0.0
      %1059 = vst [vmem:[%s175] sm:$0xff] %v995
      %1060 = vst [vmem:[%s175 + $0x8] sm:$0xff] %v996
      %1061 = vst [vmem:[%s175 + $0x10] sm:$0xff] %v997
      %1062 = vst [vmem:[%s175 + $0x18] sm:$0xff] %v998
      %1063 = vst [vmem:[%s175 + $0x20] sm:$0xff] %v999
      %1064 = vst [vmem:[%s175 + $0x28] sm:$0xff] %v1000
      %1065 = vst [vmem:[%s175 + $0x30] sm:$0xff] %v1001
      %1066 = vst [vmem:[%s175 + $0x38] sm:$0xff] %v1002
      %1067 = vst [vmem:[%s175 + $0x40] sm:$0xff] %v1003
      %1068 = vst [vmem:[%s175 + $0x48] sm:$0xff] %v1004
      %1069 = vst [vmem:[%s175 + $0x50] sm:$0xff] %v1005
      %1070 = vst [vmem:[%s175 + $0x58] sm:$0xff] %v1006
      %1071 = vst [vmem:[%s175 + $0x60] sm:$0xff] %v1007
      %1072 = vst [vmem:[%s175 + $0x68] sm:$0xff] %v1008
      %1073 = vst [vmem:[%s175 + $0x70] sm:$0xff] %v1009
      %1074 = vst [vmem:[%s175 + $0x78] sm:$0xff] %v1010
      %1075 = vst [vmem:[%s175 + $0x80] sm:$0xff] %v1011
      %1076 = vst [vmem:[%s175 + $0x88] sm:$0xff] %v1012
      %1077 = vst [vmem:[%s175 + $0x90] sm:$0xff] %v1013
      %1078 = vst [vmem:[%s175 + $0x98] sm:$0xff] %v1014
      %1079 = vst [vmem:[%s175 + $0xa0] sm:$0xff] %v1015
      %1080 = vst [vmem:[%s175 + $0xa8] sm:$0xff] %v1016
      %1081 = vst [vmem:[%s175 + $0xb0] sm:$0xff] %v1017
      %1082 = vst [vmem:[%s175 + $0xb8] sm:$0xff] %v1018
      %1083 = vst [vmem:[%s175 + $0xc0] sm:$0xff] %v1019
      %1084 = vst [vmem:[%s175 + $0xc8] sm:$0xff] %v1020
      %1085 = vst [vmem:[%s175 + $0xd0] sm:$0xff] %v1021
      %1086 = vst [vmem:[%s175 + $0xd8] sm:$0xff] %v1022
      %1087 = vst [vmem:[%s175 + $0xe0] sm:$0xff] %v1023
      %1088 = vst [vmem:[%s175 + $0xe8] sm:$0xff] %v1024
      %1089 = vst [vmem:[%s175 + $0xf0] sm:$0xff] %v1025
      %1090 = vst [vmem:[%s175 + $0xf8] sm:$0xff] %v1026
      %1091 = vst [vmem:[%s175 + $0x100] sm:$0xff] %v1027
      %1092 = vst [vmem:[%s175 + $0x108] sm:$0xff] %v1028
      %1093 = vst [vmem:[%s175 + $0x110] sm:$0xff] %v1029
      %1094 = vst [vmem:[%s175 + $0x118] sm:$0xff] %v1030
      %1095 = vst [vmem:[%s175 + $0x120] sm:$0xff] %v1031
      %1096 = vst [vmem:[%s175 + $0x128] sm:$0xff] %v1032
      %1097 = vst [vmem:[%s175 + $0x130] sm:$0xff] %v1033
      %1098 = vst [vmem:[%s175 + $0x138] sm:$0xff] %v1034
      %1099 = vst [vmem:[%s175 + $0x140] sm:$0xff] %v1035
      %1100 = vst [vmem:[%s175 + $0x148] sm:$0xff] %v1036
      %1101 = vst [vmem:[%s175 + $0x150] sm:$0xff] %v1037
      %1102 = vst [vmem:[%s175 + $0x158] sm:$0xff] %v1038
      %1103 = vst [vmem:[%s175 + $0x160] sm:$0xff] %v1039
      %1104 = vst [vmem:[%s175 + $0x168] sm:$0xff] %v1040
      %1105 = vst [vmem:[%s175 + $0x170] sm:$0xff] %v1041
      %1106 = vst [vmem:[%s175 + $0x178] sm:$0xff] %v1042
      %1107 = vst [vmem:[%s175 + $0x180] sm:$0xff] %v1043
      %1108 = vst [vmem:[%s175 + $0x188] sm:$0xff] %v1044
      %1109 = vst [vmem:[%s175 + $0x190] sm:$0xff] %v1045
      %1110 = vst [vmem:[%s175 + $0x198] sm:$0xff] %v1046
      %1111 = vst [vmem:[%s175 + $0x1a0] sm:$0xff] %v1047
      %1112 = vst [vmem:[%s175 + $0x1a8] sm:$0xff] %v1048
      %1113 = vst [vmem:[%s175 + $0x1b0] sm:$0xff] %v1049
      %1114 = vst [vmem:[%s175 + $0x1b8] sm:$0xff] %v1050
      %1115 = vst [vmem:[%s175 + $0x1c0] sm:$0xff] %v1051
      %1116 = vst [vmem:[%s175 + $0x1c8] sm:$0xff] %v1052
      %1117 = vst [vmem:[%s175 + $0x1d0] sm:$0xff] %v1053
      %1118 = vst [vmem:[%s175 + $0x1d8] sm:$0xff] %v1054
      %1119 = vst [vmem:[%s175 + $0x1e0] sm:$0xff] %v1055
      %1120 = vst [vmem:[%s175 + $0x1e8] sm:$0xff] %v1056
      %1121 = vst [vmem:[%s175 + $0x1f0] sm:$0xff] %v1057
      %1122 = vst [vmem:[%s175 + $0x1f8] sm:$0xff] %v1058
      %s1123 = smul.u32 64, %s14
      %p1124 = scmp.lt.s32.totalorder %s1123, 255
      %s1125 = scalar_select %p1124, %s1123, 255
      %s1126 = smul.addr %s1125, 8
      %s1127 = scalar_lea.vmem %s3, %s1126
      // Predicated region
      $region33: #{_lambda_.16} parent=31 // pred_check
        %p1128 = pneg %p100
      $region34: #{_lambda_.16} parent=31 // pred_check_branch
        %1130 = sbr.rel (%p1128) target = $region36
      $region35: #{_lambda_.16} parent=31 // pred_region
        %s1131 = smul.u32 64, %s14
      $region36: #{_lambda_.16} parent=31 // pred_fallthru
        _
    $region32: #{_lambda_.16} parent=5 // pred_fallthru
      _
    %p1132 = scmp.le.s32.totalorder 2, %s9
    // Predicated region
    $region37: #{_lambda_.16} parent=5 // pred_check
      %p1133 = pneg %p1132
    $region38: #{_lambda_.16} parent=5 // pred_check_branch
      %1135 = sbr.rel (%p1133) target = $region40
    $region39: #{_lambda_.16} parent=5 // pred_region
      %s1136 = ssub.s32 %s9, 2
      // Predicated region
      $region41: #{_lambda_.16} parent=39 // pred_check
        %p1137 = pneg %p106
      $region42: #{_lambda_.16} parent=39 // pred_check_branch
        %1139 = sbr.rel (%p1137) target = $region44
      $region43: #{_lambda_.16} parent=39 // pred_region
        %s1140 = smul.u32 64, %s15
        %p1141 = scmp.lt.s32.totalorder %s1140, 255
        %s1142 = scalar_select %p1141, %s1140, 255
        %s1143 = smul.addr %s1142, 8
        %s1144 = scalar_lea.vmem %s3, %s1143
      $region44: #{_lambda_.16} parent=39 // pred_fallthru
        _
    $region40: #{_lambda_.16} parent=5 // pred_fallthru
      _
  $region6: #{_lambda_.16} parent=0 // loop_footer
    %s13 = sadd.s32 1, %s9
  $region7: #{_lambda_.16} parent=0 // loop_footer_branch
    %8 = sbr.rel target = $region3
  $region8: #{_lambda_.16} parent=0 // loop_exit
    _

// kernel: _lambda_.18
$region0: #{_lambda_.18}
  #allocation0 [shape = 'u32[]', space=smem, size = 0x4, offset = 0x4, fixed_abs, tag = 'smem constant byte address 0x4 - core index']
  #allocation1 [shape = 'u32[144,128]{1,0:T(1,128)}', space=vmem, size = 0x12000, scoped, tag = 'internal scratch']
  %s0 = inlined_call_operand.vmem [shape: bf16[2048,576], index: 0, kind: input, shape index: {}]
  %s1 = inlined_call_operand.vmem [shape: bf16[576,128], index: 1, kind: input, shape index: {}]
  %s2 = inlined_call_operand.vmem [shape: f32[1,128], index: 2, kind: input, shape index: {}]
  %s3 = inlined_call_operand.vmem [shape: f32[2048,128], index: 3, kind: output, shape index: {}]
  %s4 = sld [smem:[#allocation0]]
  $region45: #{_lambda_.18} parent=0
    _
  %s6 = ssub.s32 1, %s4
  %s7 = scalar_select 0, %s6, %s4
  loop: start=0, step=1, limit=6
  $region2: #{_lambda_.18} parent=0 // loop_pre_header
    _
  $region3: #{_lambda_.18} parent=0 // loop_header
    %s9 = sphi 0, %s13
    %p10 = scmp.ge.s32.totalorder %s9, 6
    %s19 = sphi 0, %s21
    %s22 = sphi 0, %s19
    %s23 = sphi 0, %s22
    %s39 = sphi 0, %s23
    %s43 = sphi 0, %s43
    %s45 = sphi 0, %s43
    %s46 = sphi 0, %s45
    %s60 = sphi 0, %s46
    %s64 = sphi 0, %s64
    %s66 = sphi 0, %s64
    %s67 = sphi 0, %s66
    %s81 = sphi 0, %s67
    %s87 = sphi 0, %s89
    %s90 = sphi 0, %s87
    %s91 = sphi 0, %s90
    %s107 = sphi 0, %s91
  $region4: #{_lambda_.18} parent=0 // loop_header_branch
    %12 = sbr.rel (%p10) target = $region8
  $region5: #{_lambda_.18} parent=0 // loop_body
    %s14 = ssub.s32 %s9, 1
    %s15 = ssub.s32 %s9, 2
    %s16 = sadd.s32 %s9, 1
    %s17 = ssub.s32 %s9, %s16
    %p18 = scmp.eq.s32.totalorder %s17, 0
    %s20 = sadd.s32 %s19, 1
    %s21 = scalar_select %p18, %s19, %s20
    %p24 = pneg %p18
    %p25 = scmp.eq.s32.totalorder %s9, 3
    %p26 = por %p24, %p25
    %p27 = scmp.ne.s32.totalorder %s19, %s22
    %p28 = scmp.eq.s32.totalorder %s9, 0
    %p29 = por %p27, %p28
    %p30 = scmp.ne.s32.totalorder %s19, %s22
    %p31 = scmp.eq.s32.totalorder %s14, 3
    %p32 = por %p30, %p31
    %p33 = scmp.ne.s32.totalorder %s22, %s23
    %p34 = scmp.eq.s32.totalorder %s14, 0
    %p35 = por %p33, %p34
    %p36 = scmp.ne.s32.totalorder %s22, %s23
    %p37 = scmp.eq.s32.totalorder %s15, 3
    %p38 = por %p36, %p37
    %p40 = scmp.ne.s32.totalorder %s23, %s39
    %p41 = scmp.eq.s32.totalorder %s15, 0
    %p42 = por %p40, %p41
    %s44 = sadd.s32 %s43, 1
    %p47 = scmp.eq.s32.totalorder %s9, 3
    %p48 = scmp.ne.s32.totalorder %s43, %s45
    %p49 = scmp.eq.s32.totalorder %s9, 0
    %p50 = por %p48, %p49
    %p51 = scmp.ne.s32.totalorder %s43, %s45
    %p52 = scmp.eq.s32.totalorder %s14, 3
    %p53 = por %p51, %p52
    %p54 = scmp.ne.s32.totalorder %s45, %s46
    %p55 = scmp.eq.s32.totalorder %s14, 0
    %p56 = por %p54, %p55
    %p57 = scmp.ne.s32.totalorder %s45, %s46
    %p58 = scmp.eq.s32.totalorder %s15, 3
    %p59 = por %p57, %p58
    %p61 = scmp.ne.s32.totalorder %s46, %s60
    %p62 = scmp.eq.s32.totalorder %s15, 0
    %p63 = por %p61, %p62
    %s65 = sadd.s32 %s64, 1
    %p68 = scmp.eq.s32.totalorder %s9, 3
    %p69 = scmp.ne.s32.totalorder %s64, %s66
    %p70 = scmp.eq.s32.totalorder %s9, 0
    %p71 = por %p69, %p70
    %p72 = scmp.ne.s32.totalorder %s64, %s66
    %p73 = scmp.eq.s32.totalorder %s14, 3
    %p74 = por %p72, %p73
    %p75 = scmp.ne.s32.totalorder %s66, %s67
    %p76 = scmp.eq.s32.totalorder %s14, 0
    %p77 = por %p75, %p76
    %p78 = scmp.ne.s32.totalorder %s66, %s67
    %p79 = scmp.eq.s32.totalorder %s15, 3
    %p80 = por %p78, %p79
    %p82 = scmp.ne.s32.totalorder %s67, %s81
    %p83 = scmp.eq.s32.totalorder %s15, 0
    %p84 = por %p82, %p83
    %s85 = ssub.s32 %s9, %s16
    %p86 = scmp.eq.s32.totalorder %s85, 0
    %s88 = sadd.s32 %s87, 1
    %s89 = scalar_select %p86, %s87, %s88
    %p92 = pneg %p86
    %p93 = scmp.eq.s32.totalorder %s9, 3
    %p94 = por %p92, %p93
    %p95 = scmp.ne.s32.totalorder %s87, %s90
    %p96 = scmp.eq.s32.totalorder %s9, 0
    %p97 = por %p95, %p96
    %p98 = scmp.ne.s32.totalorder %s87, %s90
    %p99 = scmp.eq.s32.totalorder %s14, 3
    %p100 = por %p98, %p99
    %p101 = scmp.ne.s32.totalorder %s90, %s91
    %p102 = scmp.eq.s32.totalorder %s14, 0
    %p103 = por %p101, %p102
    %p104 = scmp.ne.s32.totalorder %s90, %s91
    %p105 = scmp.eq.s32.totalorder %s15, 3
    %p106 = por %p104, %p105
    %p108 = scmp.ne.s32.totalorder %s91, %s107
    %p109 = scmp.eq.s32.totalorder %s15, 0
    %p110 = por %p108, %p109
    %p111 = scmp.le.s32.totalorder 1, %s9
    %p112 = scmp.lt.s32.totalorder %s9, 5
    %p113 = pnand %p111, %p112
    %p114 = pneg %p113
    // Predicated region
    $region9: #{_lambda_.18} parent=5 // pred_check
      _
    $region10: #{_lambda_.18} parent=5 // pred_check_branch
      %116 = sbr.rel (%p113) target = $region12
    $region11: #{_lambda_.18} parent=5 // pred_region
      %s117 = ssub.s32 %s9, 1
      // Predicated region
      $region13: #{_lambda_.18} parent=11 // pred_check
        %p118 = pneg %p56
      $region14: #{_lambda_.18} parent=11 // pred_check_branch
        %120 = sbr.rel (%p118) target = $region16
      $region15: #{_lambda_.18} parent=11 // pred_region
        _
      $region16: #{_lambda_.18} parent=11 // pred_fallthru
        _
      // Predicated region
      $region17: #{_lambda_.18} parent=11 // pred_check
        %p121 = pneg %p77
      $region18: #{_lambda_.18} parent=11 // pred_check_branch
        %123 = sbr.rel (%p121) target = $region20
      $region19: #{_lambda_.18} parent=11 // pred_region
        _
      $region20: #{_lambda_.18} parent=11 // pred_fallthru
        _
    $region12: #{_lambda_.18} parent=5 // pred_fallthru
      _
    %p124 = scmp.lt.s32.totalorder %s9, 4
    // Predicated region
    $region21: #{_lambda_.18} parent=5 // pred_check
      %p125 = pneg %p124
    $region22: #{_lambda_.18} parent=5 // pred_check_branch
      %127 = sbr.rel (%p125) target = $region24
    $region23: #{_lambda_.18} parent=5 // pred_region
      // Predicated region
      $region25: #{_lambda_.18} parent=23 // pred_check
        %p128 = pneg %p29
      $region26: #{_lambda_.18} parent=23 // pred_check_branch
        %130 = sbr.rel (%p128) target = $region28
      $region27: #{_lambda_.18} parent=23 // pred_region
        %s131 = smul.u32 64, %s9
        %p132 = scmp.lt.s32.totalorder %s131, 255
        %s133 = scalar_select %p132, %s131, 255
        %s134 = smul.addr %s133, 5
        %s135 = smul.addr %s134, 4
        %s136 = scalar_lea.vmem %s0, %s135
        %s137 = smul.u32 64, %s9
      $region28: #{_lambda_.18} parent=23 // pred_fallthru
        _
    $region24: #{_lambda_.18} parent=5 // pred_fallthru
      _
    %p138 = scmp.le.s32.totalorder 1, %s9
    %p139 = scmp.lt.s32.totalorder %s9, 5
    %p140 = pnand %p138, %p139
    %p141 = pneg %p140
    // Predicated region
    $region29: #{_lambda_.18} parent=5 // pred_check
      _
    $region30: #{_lambda_.18} parent=5 // pred_check_branch
      %143 = sbr.rel (%p140) target = $region32
    $region31: #{_lambda_.18} parent=5 // pred_region
      %s144 = ssub.s32 %s9, 1
      %s145 = smul.u32 64, %s14
      %p146 = scmp.lt.s32.totalorder %s145, 255
      %s147 = scalar_select %p146, %s145, 255
      %s148 = smul.addr %s147, 5
      %s149 = smul.addr %s148, 4
      %s150 = scalar_lea.vmem %s0, %s149
      %p151 = pneg %p35
      %p152 = pneg %p32
      %p153 = pneg %p56
      %p154 = pneg %p53
      %p155 = pneg %p77
      %p156 = pneg %p74
      %p157 = pneg %p103
      %p158 = pneg %p100
      %s159 = smul.u32 64, %s14
      %p160 = scmp.lt.s32.totalorder %s159, 255
      %s161 = scalar_select %p160, %s159, 255
      %s162 = smul.addr %s161, 8
      %s163 = scalar_lea.vmem %s3, %s162
      %s164 = smul.u32 64, %s14
      %p165 = scmp.lt.s32.totalorder %s164, 255
      %s166 = scalar_select %p165, %s164, 255
      %s167 = smul.addr %s166, 5
      %s168 = smul.addr %s167, 4
      %s169 = scalar_lea.vmem %s0, %s168
      %s170 = smul.u32 64, %s14
      %s171 = smul.u32 64, %s14
      %p172 = scmp.lt.s32.totalorder %s171, 255
      %s173 = scalar_select %p172, %s171, 255
      %s174 = smul.addr %s173, 8
      %s175 = scalar_lea.vmem %s3, %s174
      %s176 = smul.u32 64, %s14
      %v178 = vld [vmem:[%s169] sm:$0xff]
      %v179 = vld [vmem:[%s169 + $0x8] sm:$0xff]
      %v180 = vld [vmem:[%s169 + $0x10] sm:$0xf]
      %v181 = vld [vmem:[%s169 + $0x14] sm:$0xff]
      %v182 = vld [vmem:[%s169 + $0x1c] sm:$0xff]
      %v183 = vld [vmem:[%s169 + $0x24] sm:$0xf]
      %v184 = vld [vmem:[%s169 + $0x28] sm:$0xff]
      %v185 = vld [vmem:[%s169 + $0x30] sm:$0xff]
      %v186 = vld [vmem:[%s169 + $0x38] sm:$0xf]
      %v187 = vld [vmem:[%s169 + $0x3c] sm:$0xff]
      %v188 = vld [vmem:[%s169 + $0x44] sm:$0xff]
      %v189 = vld [vmem:[%s169 + $0x4c] sm:$0xf]
      %v190 = vld [vmem:[%s169 + $0x50] sm:$0xff]
      %v191 = vld [vmem:[%s169 + $0x58] sm:$0xff]
      %v192 = vld [vmem:[%s169 + $0x60] sm:$0xf]
      %v193 = vld [vmem:[%s169 + $0x64] sm:$0xff]
      %v194 = vld [vmem:[%s169 + $0x6c] sm:$0xff]
      %v195 = vld [vmem:[%s169 + $0x74] sm:$0xf]
      %v196 = vld [vmem:[%s169 + $0x78] sm:$0xff]
      %v197 = vld [vmem:[%s169 + $0x80] sm:$0xff]
      %v198 = vld [vmem:[%s169 + $0x88] sm:$0xf]
      %v199 = vld [vmem:[%s169 + $0x8c] sm:$0xff]
      %v200 = vld [vmem:[%s169 + $0x94] sm:$0xff]
      %v201 = vld [vmem:[%s169 + $0x9c] sm:$0xf]
      %v202 = vld [vmem:[%s169 + $0xa0] sm:$0xff]
      %v203 = vld [vmem:[%s169 + $0xa8] sm:$0xff]
      %v204 = vld [vmem:[%s169 + $0xb0] sm:$0xf]
      %v205 = vld [vmem:[%s169 + $0xb4] sm:$0xff]
      %v206 = vld [vmem:[%s169 + $0xbc] sm:$0xff]
      %v207 = vld [vmem:[%s169 + $0xc4] sm:$0xf]
      %v208 = vld [vmem:[%s169 + $0xc8] sm:$0xff]
      %v209 = vld [vmem:[%s169 + $0xd0] sm:$0xff]
      %v210 = vld [vmem:[%s169 + $0xd8] sm:$0xf]
      %v211 = vld [vmem:[%s169 + $0xdc] sm:$0xff]
      %v212 = vld [vmem:[%s169 + $0xe4] sm:$0xff]
      %v213 = vld [vmem:[%s169 + $0xec] sm:$0xf]
      %v214 = vld [vmem:[%s169 + $0xf0] sm:$0xff]
      %v215 = vld [vmem:[%s169 + $0xf8] sm:$0xff]
      %v216 = vld [vmem:[%s169 + $0x100] sm:$0xf]
      %v217 = vld [vmem:[%s169 + $0x104] sm:$0xff]
      %v218 = vld [vmem:[%s169 + $0x10c] sm:$0xff]
      %v219 = vld [vmem:[%s169 + $0x114] sm:$0xf]
      %v220 = vld [vmem:[%s169 + $0x118] sm:$0xff]
      %v221 = vld [vmem:[%s169 + $0x120] sm:$0xff]
      %v222 = vld [vmem:[%s169 + $0x128] sm:$0xf]
      %v223 = vld [vmem:[%s169 + $0x12c] sm:$0xff]
      %v224 = vld [vmem:[%s169 + $0x134] sm:$0xff]
      %v225 = vld [vmem:[%s169 + $0x13c] sm:$0xf]
      %v226 = vld [vmem:[%s169 + $0x140] sm:$0xff]
      %v227 = vld [vmem:[%s169 + $0x148] sm:$0xff]
      %v228 = vld [vmem:[%s169 + $0x150] sm:$0xf]
      %v229 = vld [vmem:[%s169 + $0x154] sm:$0xff]
      %v230 = vld [vmem:[%s169 + $0x15c] sm:$0xff]
      %v231 = vld [vmem:[%s169 + $0x164] sm:$0xf]
      %v232 = vld [vmem:[%s169 + $0x168] sm:$0xff]
      %v233 = vld [vmem:[%s169 + $0x170] sm:$0xff]
      %v234 = vld [vmem:[%s169 + $0x178] sm:$0xf]
      %v235 = vld [vmem:[%s169 + $0x17c] sm:$0xff]
      %v236 = vld [vmem:[%s169 + $0x184] sm:$0xff]
      %v237 = vld [vmem:[%s169 + $0x18c] sm:$0xf]
      %v238 = vld [vmem:[%s169 + $0x190] sm:$0xff]
      %v239 = vld [vmem:[%s169 + $0x198] sm:$0xff]
      %v240 = vld [vmem:[%s169 + $0x1a0] sm:$0xf]
      %v241 = vld [vmem:[%s169 + $0x1a4] sm:$0xff]
      %v242 = vld [vmem:[%s169 + $0x1ac] sm:$0xff]
      %v243 = vld [vmem:[%s169 + $0x1b4] sm:$0xf]
      %v244 = vld [vmem:[%s169 + $0x1b8] sm:$0xff]
      %v245 = vld [vmem:[%s169 + $0x1c0] sm:$0xff]
      %v246 = vld [vmem:[%s169 + $0x1c8] sm:$0xf]
      %v247 = vld [vmem:[%s169 + $0x1cc] sm:$0xff]
      %v248 = vld [vmem:[%s169 + $0x1d4] sm:$0xff]
      %v249 = vld [vmem:[%s169 + $0x1dc] sm:$0xf]
      %v250 = vld [vmem:[%s169 + $0x1e0] sm:$0xff]
      %v251 = vld [vmem:[%s169 + $0x1e8] sm:$0xff]
      %v252 = vld [vmem:[%s169 + $0x1f0] sm:$0xf]
      %v253 = vld [vmem:[%s169 + $0x1f4] sm:$0xff]
      %v254 = vld [vmem:[%s169 + $0x1fc] sm:$0xff]
      %v255 = vld [vmem:[%s169 + $0x204] sm:$0xf]
      %v256 = vld [vmem:[%s169 + $0x208] sm:$0xff]
      %v257 = vld [vmem:[%s169 + $0x210] sm:$0xff]
      %v258 = vld [vmem:[%s169 + $0x218] sm:$0xf]
      %v259 = vld [vmem:[%s169 + $0x21c] sm:$0xff]
      %v260 = vld [vmem:[%s169 + $0x224] sm:$0xff]
      %v261 = vld [vmem:[%s169 + $0x22c] sm:$0xf]
      %v262 = vld [vmem:[%s169 + $0x230] sm:$0xff]
      %v263 = vld [vmem:[%s169 + $0x238] sm:$0xff]
      %v264 = vld [vmem:[%s169 + $0x240] sm:$0xf]
      %v265 = vld [vmem:[%s169 + $0x244] sm:$0xff]
      %v266 = vld [vmem:[%s169 + $0x24c] sm:$0xff]
      %v267 = vld [vmem:[%s169 + $0x254] sm:$0xf]
      %v268 = vld [vmem:[%s169 + $0x258] sm:$0xff]
      %v269 = vld [vmem:[%s169 + $0x260] sm:$0xff]
      %v270 = vld [vmem:[%s169 + $0x268] sm:$0xf]
      %v271 = vld [vmem:[%s169 + $0x26c] sm:$0xff]
      %v272 = vld [vmem:[%s169 + $0x274] sm:$0xff]
      %v273 = vld [vmem:[%s169 + $0x27c] sm:$0xf]
      %v274 = vld [vmem:[%s169 + $0x280] sm:$0xff]
      %v275 = vld [vmem:[%s169 + $0x288] sm:$0xff]
      %v276 = vld [vmem:[%s169 + $0x290] sm:$0xf]
      %v277 = vld [vmem:[%s169 + $0x294] sm:$0xff]
      %v278 = vld [vmem:[%s169 + $0x29c] sm:$0xff]
      %v279 = vld [vmem:[%s169 + $0x2a4] sm:$0xf]
      %v280 = vld [vmem:[%s169 + $0x2a8] sm:$0xff]
      %v281 = vld [vmem:[%s169 + $0x2b0] sm:$0xff]
      %v282 = vld [vmem:[%s169 + $0x2b8] sm:$0xf]
      %v283 = vld [vmem:[%s169 + $0x2bc] sm:$0xff]
      %v284 = vld [vmem:[%s169 + $0x2c4] sm:$0xff]
      %v285 = vld [vmem:[%s169 + $0x2cc] sm:$0xf]
      %v286 = vld [vmem:[%s169 + $0x2d0] sm:$0xff]
      %v287 = vld [vmem:[%s169 + $0x2d8] sm:$0xff]
      %v288 = vld [vmem:[%s169 + $0x2e0] sm:$0xf]
      %v289 = vld [vmem:[%s169 + $0x2e4] sm:$0xff]
      %v290 = vld [vmem:[%s169 + $0x2ec] sm:$0xff]
      %v291 = vld [vmem:[%s169 + $0x2f4] sm:$0xf]
      %v292 = vld [vmem:[%s169 + $0x2f8] sm:$0xff]
      %v293 = vld [vmem:[%s169 + $0x300] sm:$0xff]
      %v294 = vld [vmem:[%s169 + $0x308] sm:$0xf]
      %v295 = vld [vmem:[%s169 + $0x30c] sm:$0xff]
      %v296 = vld [vmem:[%s169 + $0x314] sm:$0xff]
      %v297 = vld [vmem:[%s169 + $0x31c] sm:$0xf]
      %v298 = vld [vmem:[%s169 + $0x320] sm:$0xff]
      %v299 = vld [vmem:[%s169 + $0x328] sm:$0xff]
      %v300 = vld [vmem:[%s169 + $0x330] sm:$0xf]
      %v301 = vld [vmem:[%s169 + $0x334] sm:$0xff]
      %v302 = vld [vmem:[%s169 + $0x33c] sm:$0xff]
      %v303 = vld [vmem:[%s169 + $0x344] sm:$0xf]
      %v304 = vld [vmem:[%s169 + $0x348] sm:$0xff]
      %v305 = vld [vmem:[%s169 + $0x350] sm:$0xff]
      %v306 = vld [vmem:[%s169 + $0x358] sm:$0xf]
      %v307 = vld [vmem:[%s169 + $0x35c] sm:$0xff]
      %v308 = vld [vmem:[%s169 + $0x364] sm:$0xff]
      %v309 = vld [vmem:[%s169 + $0x36c] sm:$0xf]
      %v310 = vld [vmem:[%s169 + $0x370] sm:$0xff]
      %v311 = vld [vmem:[%s169 + $0x378] sm:$0xff]
      %v312 = vld [vmem:[%s169 + $0x380] sm:$0xf]
      %v313 = vld [vmem:[%s169 + $0x384] sm:$0xff]
      %v314 = vld [vmem:[%s169 + $0x38c] sm:$0xff]
      %v315 = vld [vmem:[%s169 + $0x394] sm:$0xf]
      %v316 = vld [vmem:[%s169 + $0x398] sm:$0xff]
      %v317 = vld [vmem:[%s169 + $0x3a0] sm:$0xff]
      %v318 = vld [vmem:[%s169 + $0x3a8] sm:$0xf]
      %v319 = vld [vmem:[%s169 + $0x3ac] sm:$0xff]
      %v320 = vld [vmem:[%s169 + $0x3b4] sm:$0xff]
      %v321 = vld [vmem:[%s169 + $0x3bc] sm:$0xf]
      %v322 = vld [vmem:[%s169 + $0x3c0] sm:$0xff]
      %v323 = vld [vmem:[%s169 + $0x3c8] sm:$0xff]
      %v324 = vld [vmem:[%s169 + $0x3d0] sm:$0xf]
      %v325 = vld [vmem:[%s169 + $0x3d4] sm:$0xff]
      %v326 = vld [vmem:[%s169 + $0x3dc] sm:$0xff]
      %v327 = vld [vmem:[%s169 + $0x3e4] sm:$0xf]
      %v328 = vld [vmem:[%s169 + $0x3e8] sm:$0xff]
      %v329 = vld [vmem:[%s169 + $0x3f0] sm:$0xff]
      %v330 = vld [vmem:[%s169 + $0x3f8] sm:$0xf]
      %v331 = vld [vmem:[%s169 + $0x3fc] sm:$0xff]
      %v332 = vld [vmem:[%s169 + $0x404] sm:$0xff]
      %v333 = vld [vmem:[%s169 + $0x40c] sm:$0xf]
      %v334 = vld [vmem:[%s169 + $0x410] sm:$0xff]
      %v335 = vld [vmem:[%s169 + $0x418] sm:$0xff]
      %v336 = vld [vmem:[%s169 + $0x420] sm:$0xf]
      %v337 = vld [vmem:[%s169 + $0x424] sm:$0xff]
      %v338 = vld [vmem:[%s169 + $0x42c] sm:$0xff]
      %v339 = vld [vmem:[%s169 + $0x434] sm:$0xf]
      %v340 = vld [vmem:[%s169 + $0x438] sm:$0xff]
      %v341 = vld [vmem:[%s169 + $0x440] sm:$0xff]
      %v342 = vld [vmem:[%s169 + $0x448] sm:$0xf]
      %v343 = vld [vmem:[%s169 + $0x44c] sm:$0xff]
      %v344 = vld [vmem:[%s169 + $0x454] sm:$0xff]
      %v345 = vld [vmem:[%s169 + $0x45c] sm:$0xf]
      %v346 = vld [vmem:[%s169 + $0x460] sm:$0xff]
      %v347 = vld [vmem:[%s169 + $0x468] sm:$0xff]
      %v348 = vld [vmem:[%s169 + $0x470] sm:$0xf]
      %v349 = vld [vmem:[%s169 + $0x474] sm:$0xff]
      %v350 = vld [vmem:[%s169 + $0x47c] sm:$0xff]
      %v351 = vld [vmem:[%s169 + $0x484] sm:$0xf]
      %v352 = vld [vmem:[%s169 + $0x488] sm:$0xff]
      %v353 = vld [vmem:[%s169 + $0x490] sm:$0xff]
      %v354 = vld [vmem:[%s169 + $0x498] sm:$0xf]
      %v355 = vld [vmem:[%s169 + $0x49c] sm:$0xff]
      %v356 = vld [vmem:[%s169 + $0x4a4] sm:$0xff]
      %v357 = vld [vmem:[%s169 + $0x4ac] sm:$0xf]
      %v358 = vld [vmem:[%s169 + $0x4b0] sm:$0xff]
      %v359 = vld [vmem:[%s169 + $0x4b8] sm:$0xff]
      %v360 = vld [vmem:[%s169 + $0x4c0] sm:$0xf]
      %v361 = vld [vmem:[%s169 + $0x4c4] sm:$0xff]
      %v362 = vld [vmem:[%s169 + $0x4cc] sm:$0xff]
      %v363 = vld [vmem:[%s169 + $0x4d4] sm:$0xf]
      %v364 = vld [vmem:[%s169 + $0x4d8] sm:$0xff]
      %v365 = vld [vmem:[%s169 + $0x4e0] sm:$0xff]
      %v366 = vld [vmem:[%s169 + $0x4e8] sm:$0xf]
      %v367 = vld [vmem:[%s169 + $0x4ec] sm:$0xff]
      %v368 = vld [vmem:[%s169 + $0x4f4] sm:$0xff]
      %v369 = vld [vmem:[%s169 + $0x4fc] sm:$0xf]
      %v370 = vld [vmem:[%s1] sm:$0xf]
      %v371 = vld [vmem:[%s1 + $0x4] sm:$0xf]
      %v372 = vld [vmem:[%s1 + $0x8] sm:$0xf]
      %v373 = vld [vmem:[%s1 + $0xc] sm:$0xf]
      %v374 = vld [vmem:[%s1 + $0x10] sm:$0xf]
      %v375 = vld [vmem:[%s1 + $0x14] sm:$0xf]
      %v376 = vld [vmem:[%s1 + $0x18] sm:$0xf]
      %v377 = vld [vmem:[%s1 + $0x1c] sm:$0xf]
      %v378 = vld [vmem:[%s1 + $0x20] sm:$0xf]
      %v379 = vld [vmem:[%s1 + $0x24] sm:$0xf]
      %v380 = vld [vmem:[%s1 + $0x28] sm:$0xf]
      %v381 = vld [vmem:[%s1 + $0x2c] sm:$0xf]
      %v382 = vld [vmem:[%s1 + $0x30] sm:$0xf]
      %v383 = vld [vmem:[%s1 + $0x34] sm:$0xf]
      %v384 = vld [vmem:[%s1 + $0x38] sm:$0xf]
      %v385 = vld [vmem:[%s1 + $0x3c] sm:$0xf]
      %v386 = vld [vmem:[%s1 + $0x40] sm:$0xf]
      %v387 = vld [vmem:[%s1 + $0x44] sm:$0xf]
      %v388 = vld [vmem:[%s1 + $0x48] sm:$0xf]
      %v389 = vld [vmem:[%s1 + $0x4c] sm:$0xf]
      %v390 = vld [vmem:[%s1 + $0x50] sm:$0xf]
      %v391 = vld [vmem:[%s1 + $0x54] sm:$0xf]
      %v392 = vld [vmem:[%s1 + $0x58] sm:$0xf]
      %v393 = vld [vmem:[%s1 + $0x5c] sm:$0xf]
      %v394 = vld [vmem:[%s1 + $0x60] sm:$0xf]
      %v395 = vld [vmem:[%s1 + $0x64] sm:$0xf]
      %v396 = vld [vmem:[%s1 + $0x68] sm:$0xf]
      %v397 = vld [vmem:[%s1 + $0x6c] sm:$0xf]
      %v398 = vld [vmem:[%s1 + $0x70] sm:$0xf]
      %v399 = vld [vmem:[%s1 + $0x74] sm:$0xf]
      %v400 = vld [vmem:[%s1 + $0x78] sm:$0xf]
      %v401 = vld [vmem:[%s1 + $0x7c] sm:$0xf]
      %v402 = vld [vmem:[%s1 + $0x80] sm:$0xf]
      %v403 = vld [vmem:[%s1 + $0x84] sm:$0xf]
      %v404 = vld [vmem:[%s1 + $0x88] sm:$0xf]
      %v405 = vld [vmem:[%s1 + $0x8c] sm:$0xf]
      %v406 = vld [vmem:[%s1 + $0x90] sm:$0xf]
      %v407 = vld [vmem:[%s1 + $0x94] sm:$0xf]
      %v408 = vld [vmem:[%s1 + $0x98] sm:$0xf]
      %v409 = vld [vmem:[%s1 + $0x9c] sm:$0xf]
      %v410 = vld [vmem:[%s1 + $0xa0] sm:$0xf]
      %v411 = vld [vmem:[%s1 + $0xa4] sm:$0xf]
      %v412 = vld [vmem:[%s1 + $0xa8] sm:$0xf]
      %v413 = vld [vmem:[%s1 + $0xac] sm:$0xf]
      %v414 = vld [vmem:[%s1 + $0xb0] sm:$0xf]
      %v415 = vld [vmem:[%s1 + $0xb4] sm:$0xf]
      %v416 = vld [vmem:[%s1 + $0xb8] sm:$0xf]
      %v417 = vld [vmem:[%s1 + $0xbc] sm:$0xf]
      %v418 = vld [vmem:[%s1 + $0xc0] sm:$0xf]
      %v419 = vld [vmem:[%s1 + $0xc4] sm:$0xf]
      %v420 = vld [vmem:[%s1 + $0xc8] sm:$0xf]
      %v421 = vld [vmem:[%s1 + $0xcc] sm:$0xf]
      %v422 = vld [vmem:[%s1 + $0xd0] sm:$0xf]
      %v423 = vld [vmem:[%s1 + $0xd4] sm:$0xf]
      %v424 = vld [vmem:[%s1 + $0xd8] sm:$0xf]
      %v425 = vld [vmem:[%s1 + $0xdc] sm:$0xf]
      %v426 = vld [vmem:[%s1 + $0xe0] sm:$0xf]
      %v427 = vld [vmem:[%s1 + $0xe4] sm:$0xf]
      %v428 = vld [vmem:[%s1 + $0xe8] sm:$0xf]
      %v429 = vld [vmem:[%s1 + $0xec] sm:$0xf]
      %v430 = vld [vmem:[%s1 + $0xf0] sm:$0xf]
      %v431 = vld [vmem:[%s1 + $0xf4] sm:$0xf]
      %v432 = vld [vmem:[%s1 + $0xf8] sm:$0xf]
      %v433 = vld [vmem:[%s1 + $0xfc] sm:$0xf]
      %v434 = vld [vmem:[%s1 + $0x100] sm:$0xf]
      %v435 = vld [vmem:[%s1 + $0x104] sm:$0xf]
      %v436 = vld [vmem:[%s1 + $0x108] sm:$0xf]
      %v437 = vld [vmem:[%s1 + $0x10c] sm:$0xf]
      %v438 = vld [vmem:[%s1 + $0x110] sm:$0xf]
      %v439 = vld [vmem:[%s1 + $0x114] sm:$0xf]
      %v440 = vld [vmem:[%s1 + $0x118] sm:$0xf]
      %v441 = vld [vmem:[%s1 + $0x11c] sm:$0xf]
      %v442 = vld [vmem:[%s2] sm:$0x1]
      %v444 = vlaneseq
      %v445 = vshrl.u32 %v444, 7
      %v446 = vsub.s32 0, %v445
      %v447 = vrot.slane %v442, %v446
      %v641 = vunpack.c.l.b16 %v178
      %v642 = vunpack.c.h.b16 %v178
      %v643 = vunpack.c.l.b16 %v179
      %v644 = vunpack.c.h.b16 %v179
      %v645 = vunpack.c.l.b16 %v180
      %v646 = vunpack.c.l.b16 %v181
      %v647 = vunpack.c.h.b16 %v181
      %v648 = vunpack.c.l.b16 %v182
      %v649 = vunpack.c.h.b16 %v182
      %v650 = vunpack.c.l.b16 %v183
      %v651 = vunpack.c.l.b16 %v184
      %v652 = vunpack.c.h.b16 %v184
      %v653 = vunpack.c.l.b16 %v185
      %v654 = vunpack.c.h.b16 %v185
      %v655 = vunpack.c.l.b16 %v186
      %v656 = vunpack.c.l.b16 %v187
      %v657 = vunpack.c.h.b16 %v187
      %v658 = vunpack.c.l.b16 %v188
      %v659 = vunpack.c.h.b16 %v188
      %v660 = vunpack.c.l.b16 %v189
      %v661 = vunpack.c.l.b16 %v190
      %v662 = vunpack.c.h.b16 %v190
      %v663 = vunpack.c.l.b16 %v191
      %v664 = vunpack.c.h.b16 %v191
      %v665 = vunpack.c.l.b16 %v192
      %v666 = vunpack.c.l.b16 %v193
      %v667 = vunpack.c.h.b16 %v193
      %v668 = vunpack.c.l.b16 %v194
      %v669 = vunpack.c.h.b16 %v194
      %v670 = vunpack.c.l.b16 %v195
      %v671 = vunpack.c.l.b16 %v196
      %v672 = vunpack.c.h.b16 %v196
      %v673 = vunpack.c.l.b16 %v197
      %v674 = vunpack.c.h.b16 %v197
      %v675 = vunpack.c.l.b16 %v198
      %v676 = vunpack.c.l.b16 %v199
      %v677 = vunpack.c.h.b16 %v199
      %v678 = vunpack.c.l.b16 %v200
      %v679 = vunpack.c.h.b16 %v200
      %v680 = vunpack.c.l.b16 %v201
      %v681 = vunpack.c.l.b16 %v202
      %v682 = vunpack.c.h.b16 %v202
      %v683 = vunpack.c.l.b16 %v203
      %v684 = vunpack.c.h.b16 %v203
      %v685 = vunpack.c.l.b16 %v204
      %v686 = vunpack.c.l.b16 %v205
      %v687 = vunpack.c.h.b16 %v205
      %v688 = vunpack.c.l.b16 %v206
      %v689 = vunpack.c.h.b16 %v206
      %v690 = vunpack.c.l.b16 %v207
      %v691 = vunpack.c.l.b16 %v208
      %v692 = vunpack.c.h.b16 %v208
      %v693 = vunpack.c.l.b16 %v209
      %v694 = vunpack.c.h.b16 %v209
      %v695 = vunpack.c.l.b16 %v210
      %v696 = vunpack.c.l.b16 %v211
      %v697 = vunpack.c.h.b16 %v211
      %v698 = vunpack.c.l.b16 %v212
      %v699 = vunpack.c.h.b16 %v212
      %v700 = vunpack.c.l.b16 %v213
      %v701 = vunpack.c.l.b16 %v214
      %v702 = vunpack.c.h.b16 %v214
      %v703 = vunpack.c.l.b16 %v215
      %v704 = vunpack.c.h.b16 %v215
      %v705 = vunpack.c.l.b16 %v216
      %v706 = vunpack.c.l.b16 %v217
      %v707 = vunpack.c.h.b16 %v217
      %v708 = vunpack.c.l.b16 %v218
      %v709 = vunpack.c.h.b16 %v218
      %v710 = vunpack.c.l.b16 %v219
      %v711 = vunpack.c.l.b16 %v220
      %v712 = vunpack.c.h.b16 %v220
      %v713 = vunpack.c.l.b16 %v221
      %v714 = vunpack.c.h.b16 %v221
      %v715 = vunpack.c.l.b16 %v222
      %v716 = vunpack.c.l.b16 %v223
      %v717 = vunpack.c.h.b16 %v223
      %v718 = vunpack.c.l.b16 %v224
      %v719 = vunpack.c.h.b16 %v224
      %v720 = vunpack.c.l.b16 %v225
      %v721 = vunpack.c.l.b16 %v226
      %v722 = vunpack.c.h.b16 %v226
      %v723 = vunpack.c.l.b16 %v227
      %v724 = vunpack.c.h.b16 %v227
      %v725 = vunpack.c.l.b16 %v228
      %v726 = vunpack.c.l.b16 %v229
      %v727 = vunpack.c.h.b16 %v229
      %v728 = vunpack.c.l.b16 %v230
      %v729 = vunpack.c.h.b16 %v230
      %v730 = vunpack.c.l.b16 %v231
      %v731 = vunpack.c.l.b16 %v232
      %v732 = vunpack.c.h.b16 %v232
      %v733 = vunpack.c.l.b16 %v233
      %v734 = vunpack.c.h.b16 %v233
      %v735 = vunpack.c.l.b16 %v234
      %v736 = vunpack.c.l.b16 %v235
      %v737 = vunpack.c.h.b16 %v235
      %v738 = vunpack.c.l.b16 %v236
      %v739 = vunpack.c.h.b16 %v236
      %v740 = vunpack.c.l.b16 %v237
      %v741 = vunpack.c.l.b16 %v238
      %v742 = vunpack.c.h.b16 %v238
      %v743 = vunpack.c.l.b16 %v239
      %v744 = vunpack.c.h.b16 %v239
      %v745 = vunpack.c.l.b16 %v240
      %v746 = vunpack.c.l.b16 %v241
      %v747 = vunpack.c.h.b16 %v241
      %v748 = vunpack.c.l.b16 %v242
      %v749 = vunpack.c.h.b16 %v242
      %v750 = vunpack.c.l.b16 %v243
      %v751 = vunpack.c.l.b16 %v244
      %v752 = vunpack.c.h.b16 %v244
      %v753 = vunpack.c.l.b16 %v245
      %v754 = vunpack.c.h.b16 %v245
      %v755 = vunpack.c.l.b16 %v246
      %v756 = vunpack.c.l.b16 %v247
      %v757 = vunpack.c.h.b16 %v247
      %v758 = vunpack.c.l.b16 %v248
      %v759 = vunpack.c.h.b16 %v248
      %v760 = vunpack.c.l.b16 %v249
      %v761 = vunpack.c.l.b16 %v250
      %v762 = vunpack.c.h.b16 %v250
      %v763 = vunpack.c.l.b16 %v251
      %v764 = vunpack.c.h.b16 %v251
      %v765 = vunpack.c.l.b16 %v252
      %v766 = vunpack.c.l.b16 %v253
      %v767 = vunpack.c.h.b16 %v253
      %v768 = vunpack.c.l.b16 %v254
      %v769 = vunpack.c.h.b16 %v254
      %v770 = vunpack.c.l.b16 %v255
      %v771 = vunpack.c.l.b16 %v256
      %v772 = vunpack.c.h.b16 %v256
      %v773 = vunpack.c.l.b16 %v257
      %v774 = vunpack.c.h.b16 %v257
      %v775 = vunpack.c.l.b16 %v258
      %v776 = vunpack.c.l.b16 %v259
      %v777 = vunpack.c.h.b16 %v259
      %v778 = vunpack.c.l.b16 %v260
      %v779 = vunpack.c.h.b16 %v260
      %v780 = vunpack.c.l.b16 %v261
      %v781 = vunpack.c.l.b16 %v262
      %v782 = vunpack.c.h.b16 %v262
      %v783 = vunpack.c.l.b16 %v263
      %v784 = vunpack.c.h.b16 %v263
      %v785 = vunpack.c.l.b16 %v264
      %v786 = vunpack.c.l.b16 %v265
      %v787 = vunpack.c.h.b16 %v265
      %v788 = vunpack.c.l.b16 %v266
      %v789 = vunpack.c.h.b16 %v266
      %v790 = vunpack.c.l.b16 %v267
      %v791 = vunpack.c.l.b16 %v268
      %v792 = vunpack.c.h.b16 %v268
      %v793 = vunpack.c.l.b16 %v269
      %v794 = vunpack.c.h.b16 %v269
      %v795 = vunpack.c.l.b16 %v270
      %v796 = vunpack.c.l.b16 %v271
      %v797 = vunpack.c.h.b16 %v271
      %v798 = vunpack.c.l.b16 %v272
      %v799 = vunpack.c.h.b16 %v272
      %v800 = vunpack.c.l.b16 %v273
      %v801 = vunpack.c.l.b16 %v274
      %v802 = vunpack.c.h.b16 %v274
      %v803 = vunpack.c.l.b16 %v275
      %v804 = vunpack.c.h.b16 %v275
      %v805 = vunpack.c.l.b16 %v276
      %v806 = vunpack.c.l.b16 %v277
      %v807 = vunpack.c.h.b16 %v277
      %v808 = vunpack.c.l.b16 %v278
      %v809 = vunpack.c.h.b16 %v278
      %v810 = vunpack.c.l.b16 %v279
      %v811 = vunpack.c.l.b16 %v280
      %v812 = vunpack.c.h.b16 %v280
      %v813 = vunpack.c.l.b16 %v281
      %v814 = vunpack.c.h.b16 %v281
      %v815 = vunpack.c.l.b16 %v282
      %v816 = vunpack.c.l.b16 %v283
      %v817 = vunpack.c.h.b16 %v283
      %v818 = vunpack.c.l.b16 %v284
      %v819 = vunpack.c.h.b16 %v284
      %v820 = vunpack.c.l.b16 %v285
      %v821 = vunpack.c.l.b16 %v286
      %v822 = vunpack.c.h.b16 %v286
      %v823 = vunpack.c.l.b16 %v287
      %v824 = vunpack.c.h.b16 %v287
      %v825 = vunpack.c.l.b16 %v288
      %v826 = vunpack.c.l.b16 %v289
      %v827 = vunpack.c.h.b16 %v289
      %v828 = vunpack.c.l.b16 %v290
      %v829 = vunpack.c.h.b16 %v290
      %v830 = vunpack.c.l.b16 %v291
      %v831 = vunpack.c.l.b16 %v292
      %v832 = vunpack.c.h.b16 %v292
      %v833 = vunpack.c.l.b16 %v293
      %v834 = vunpack.c.h.b16 %v293
      %v835 = vunpack.c.l.b16 %v294
      %v836 = vunpack.c.l.b16 %v295
      %v837 = vunpack.c.h.b16 %v295
      %v838 = vunpack.c.l.b16 %v296
      %v839 = vunpack.c.h.b16 %v296
      %v840 = vunpack.c.l.b16 %v297
      %v841 = vunpack.c.l.b16 %v298
      %v842 = vunpack.c.h.b16 %v298
      %v843 = vunpack.c.l.b16 %v299
      %v844 = vunpack.c.h.b16 %v299
      %v845 = vunpack.c.l.b16 %v300
      %v846 = vunpack.c.l.b16 %v301
      %v847 = vunpack.c.h.b16 %v301
      %v848 = vunpack.c.l.b16 %v302
      %v849 = vunpack.c.h.b16 %v302
      %v850 = vunpack.c.l.b16 %v303
      %v851 = vunpack.c.l.b16 %v304
      %v852 = vunpack.c.h.b16 %v304
      %v853 = vunpack.c.l.b16 %v305
      %v854 = vunpack.c.h.b16 %v305
      %v855 = vunpack.c.l.b16 %v306
      %v856 = vunpack.c.l.b16 %v307
      %v857 = vunpack.c.h.b16 %v307
      %v858 = vunpack.c.l.b16 %v308
      %v859 = vunpack.c.h.b16 %v308
      %v860 = vunpack.c.l.b16 %v309
      %v861 = vunpack.c.l.b16 %v310
      %v862 = vunpack.c.h.b16 %v310
      %v863 = vunpack.c.l.b16 %v311
      %v864 = vunpack.c.h.b16 %v311
      %v865 = vunpack.c.l.b16 %v312
      %v866 = vunpack.c.l.b16 %v313
      %v867 = vunpack.c.h.b16 %v313
      %v868 = vunpack.c.l.b16 %v314
      %v869 = vunpack.c.h.b16 %v314
      %v870 = vunpack.c.l.b16 %v315
      %v871 = vunpack.c.l.b16 %v316
      %v872 = vunpack.c.h.b16 %v316
      %v873 = vunpack.c.l.b16 %v317
      %v874 = vunpack.c.h.b16 %v317
      %v875 = vunpack.c.l.b16 %v318
      %v876 = vunpack.c.l.b16 %v319
      %v877 = vunpack.c.h.b16 %v319
      %v878 = vunpack.c.l.b16 %v320
      %v879 = vunpack.c.h.b16 %v320
      %v880 = vunpack.c.l.b16 %v321
      %v881 = vunpack.c.l.b16 %v322
      %v882 = vunpack.c.h.b16 %v322
      %v883 = vunpack.c.l.b16 %v323
      %v884 = vunpack.c.h.b16 %v323
      %v885 = vunpack.c.l.b16 %v324
      %v886 = vunpack.c.l.b16 %v325
      %v887 = vunpack.c.h.b16 %v325
      %v888 = vunpack.c.l.b16 %v326
      %v889 = vunpack.c.h.b16 %v326
      %v890 = vunpack.c.l.b16 %v327
      %v891 = vunpack.c.l.b16 %v328
      %v892 = vunpack.c.h.b16 %v328
      %v893 = vunpack.c.l.b16 %v329
      %v894 = vunpack.c.h.b16 %v329
      %v895 = vunpack.c.l.b16 %v330
      %v896 = vunpack.c.l.b16 %v331
      %v897 = vunpack.c.h.b16 %v331
      %v898 = vunpack.c.l.b16 %v332
      %v899 = vunpack.c.h.b16 %v332
      %v900 = vunpack.c.l.b16 %v333
      %v901 = vunpack.c.l.b16 %v334
      %v902 = vunpack.c.h.b16 %v334
      %v903 = vunpack.c.l.b16 %v335
      %v904 = vunpack.c.h.b16 %v335
      %v905 = vunpack.c.l.b16 %v336
      %v906 = vunpack.c.l.b16 %v337
      %v907 = vunpack.c.h.b16 %v337
      %v908 = vunpack.c.l.b16 %v338
      %v909 = vunpack.c.h.b16 %v338
      %v910 = vunpack.c.l.b16 %v339
      %v911 = vunpack.c.l.b16 %v340
      %v912 = vunpack.c.h.b16 %v340
      %v913 = vunpack.c.l.b16 %v341
      %v914 = vunpack.c.h.b16 %v341
      %v915 = vunpack.c.l.b16 %v342
      %v916 = vunpack.c.l.b16 %v343
      %v917 = vunpack.c.h.b16 %v343
      %v918 = vunpack.c.l.b16 %v344
      %v919 = vunpack.c.h.b16 %v344
      %v920 = vunpack.c.l.b16 %v345
      %v921 = vunpack.c.l.b16 %v346
      %v922 = vunpack.c.h.b16 %v346
      %v923 = vunpack.c.l.b16 %v347
      %v924 = vunpack.c.h.b16 %v347
      %v925 = vunpack.c.l.b16 %v348
      %v926 = vunpack.c.l.b16 %v349
      %v927 = vunpack.c.h.b16 %v349
      %v928 = vunpack.c.l.b16 %v350
      %v929 = vunpack.c.h.b16 %v350
      %v930 = vunpack.c.l.b16 %v351
      %v931 = vunpack.c.l.b16 %v352
      %v932 = vunpack.c.h.b16 %v352
      %v933 = vunpack.c.l.b16 %v353
      %v934 = vunpack.c.h.b16 %v353
      %v935 = vunpack.c.l.b16 %v354
      %v936 = vunpack.c.l.b16 %v355
      %v937 = vunpack.c.h.b16 %v355
      %v938 = vunpack.c.l.b16 %v356
      %v939 = vunpack.c.h.b16 %v356
      %v940 = vunpack.c.l.b16 %v357
      %v941 = vunpack.c.l.b16 %v358
      %v942 = vunpack.c.h.b16 %v358
      %v943 = vunpack.c.l.b16 %v359
      %v944 = vunpack.c.h.b16 %v359
      %v945 = vunpack.c.l.b16 %v360
      %v946 = vunpack.c.l.b16 %v361
      %v947 = vunpack.c.h.b16 %v361
      %v948 = vunpack.c.l.b16 %v362
      %v949 = vunpack.c.h.b16 %v362
      %v950 = vunpack.c.l.b16 %v363
      %v951 = vunpack.c.l.b16 %v364
      %v952 = vunpack.c.h.b16 %v364
      %v953 = vunpack.c.l.b16 %v365
      %v954 = vunpack.c.h.b16 %v365
      %v955 = vunpack.c.l.b16 %v366
      %v956 = vunpack.c.l.b16 %v367
      %v957 = vunpack.c.h.b16 %v367
      %v958 = vunpack.c.l.b16 %v368
      %v959 = vunpack.c.h.b16 %v368
      %v960 = vunpack.c.l.b16 %v369
      %v961 = vpack.c.b16 %v646, %v641
      %v962 = vpack.c.b16 %v647, %v642
      %v963 = vpack.c.b16 %v648, %v643
      %v964 = vpack.c.b16 %v649, %v644
      %v965 = vpack.c.b16 %v650, %v645
      %v966 = vpack.c.b16 %v656, %v651
      %v967 = vpack.c.b16 %v657, %v652
      %v968 = vpack.c.b16 %v658, %v653
      %v969 = vpack.c.b16 %v659, %v654
      %v970 = vpack.c.b16 %v660, %v655
      %v971 = vpack.c.b16 %v666, %v661
      %v972 = vpack.c.b16 %v667, %v662
      %v973 = vpack.c.b16 %v668, %v663
      %v974 = vpack.c.b16 %v669, %v664
      %v975 = vpack.c.b16 %v670, %v665
      %v976 = vpack.c.b16 %v676, %v671
      %v977 = vpack.c.b16 %v677, %v672
      %v978 = vpack.c.b16 %v678, %v673
      %v979 = vpack.c.b16 %v679, %v674
      %v980 = vpack.c.b16 %v680, %v675
      %v981 = vpack.c.b16 %v686, %v681
      %v982 = vpack.c.b16 %v687, %v682
      %v983 = vpack.c.b16 %v688, %v683
      %v984 = vpack.c.b16 %v689, %v684
      %v985 = vpack.c.b16 %v690, %v685
      %v986 = vpack.c.b16 %v696, %v691
      %v987 = vpack.c.b16 %v697, %v692
      %v988 = vpack.c.b16 %v698, %v693
      %v989 = vpack.c.b16 %v699, %v694
      %v990 = vpack.c.b16 %v700, %v695
      %v991 = vpack.c.b16 %v706, %v701
      %v992 = vpack.c.b16 %v707, %v702
      %v993 = vpack.c.b16 %v708, %v703
      %v994 = vpack.c.b16 %v709, %v704
      %v995 = vpack.c.b16 %v710, %v705
      %v996 = vpack.c.b16 %v716, %v711
      %v997 = vpack.c.b16 %v717, %v712
      %v998 = vpack.c.b16 %v718, %v713
      %v999 = vpack.c.b16 %v719, %v714
      %v1000 = vpack.c.b16 %v720, %v715
      %v1001 = vpack.c.b16 %v726, %v721
      %v1002 = vpack.c.b16 %v727, %v722
      %v1003 = vpack.c.b16 %v728, %v723
      %v1004 = vpack.c.b16 %v729, %v724
      %v1005 = vpack.c.b16 %v730, %v725
      %v1006 = vpack.c.b16 %v736, %v731
      %v1007 = vpack.c.b16 %v737, %v732
      %v1008 = vpack.c.b16 %v738, %v733
      %v1009 = vpack.c.b16 %v739, %v734
      %v1010 = vpack.c.b16 %v740, %v735
      %v1011 = vpack.c.b16 %v746, %v741
      %v1012 = vpack.c.b16 %v747, %v742
      %v1013 = vpack.c.b16 %v748, %v743
      %v1014 = vpack.c.b16 %v749, %v744
      %v1015 = vpack.c.b16 %v750, %v745
      %v1016 = vpack.c.b16 %v756, %v751
      %v1017 = vpack.c.b16 %v757, %v752
      %v1018 = vpack.c.b16 %v758, %v753
      %v1019 = vpack.c.b16 %v759, %v754
      %v1020 = vpack.c.b16 %v760, %v755
      %v1021 = vpack.c.b16 %v766, %v761
      %v1022 = vpack.c.b16 %v767, %v762
      %v1023 = vpack.c.b16 %v768, %v763
      %v1024 = vpack.c.b16 %v769, %v764
      %v1025 = vpack.c.b16 %v770, %v765
      %v1026 = vpack.c.b16 %v776, %v771
      %v1027 = vpack.c.b16 %v777, %v772
      %v1028 = vpack.c.b16 %v778, %v773
      %v1029 = vpack.c.b16 %v779, %v774
      %v1030 = vpack.c.b16 %v780, %v775
      %v1031 = vpack.c.b16 %v786, %v781
      %v1032 = vpack.c.b16 %v787, %v782
      %v1033 = vpack.c.b16 %v788, %v783
      %v1034 = vpack.c.b16 %v789, %v784
      %v1035 = vpack.c.b16 %v790, %v785
      %v1036 = vpack.c.b16 %v796, %v791
      %v1037 = vpack.c.b16 %v797, %v792
      %v1038 = vpack.c.b16 %v798, %v793
      %v1039 = vpack.c.b16 %v799, %v794
      %v1040 = vpack.c.b16 %v800, %v795
      %v1041 = vpack.c.b16 %v806, %v801
      %v1042 = vpack.c.b16 %v807, %v802
      %v1043 = vpack.c.b16 %v808, %v803
      %v1044 = vpack.c.b16 %v809, %v804
      %v1045 = vpack.c.b16 %v810, %v805
      %v1046 = vpack.c.b16 %v816, %v811
      %v1047 = vpack.c.b16 %v817, %v812
      %v1048 = vpack.c.b16 %v818, %v813
      %v1049 = vpack.c.b16 %v819, %v814
      %v1050 = vpack.c.b16 %v820, %v815
      %v1051 = vpack.c.b16 %v826, %v821
      %v1052 = vpack.c.b16 %v827, %v822
      %v1053 = vpack.c.b16 %v828, %v823
      %v1054 = vpack.c.b16 %v829, %v824
      %v1055 = vpack.c.b16 %v830, %v825
      %v1056 = vpack.c.b16 %v836, %v831
      %v1057 = vpack.c.b16 %v837, %v832
      %v1058 = vpack.c.b16 %v838, %v833
      %v1059 = vpack.c.b16 %v839, %v834
      %v1060 = vpack.c.b16 %v840, %v835
      %v1061 = vpack.c.b16 %v846, %v841
      %v1062 = vpack.c.b16 %v847, %v842
      %v1063 = vpack.c.b16 %v848, %v843
      %v1064 = vpack.c.b16 %v849, %v844
      %v1065 = vpack.c.b16 %v850, %v845
      %v1066 = vpack.c.b16 %v856, %v851
      %v1067 = vpack.c.b16 %v857, %v852
      %v1068 = vpack.c.b16 %v858, %v853
      %v1069 = vpack.c.b16 %v859, %v854
      %v1070 = vpack.c.b16 %v860, %v855
      %v1071 = vpack.c.b16 %v866, %v861
      %v1072 = vpack.c.b16 %v867, %v862
      %v1073 = vpack.c.b16 %v868, %v863
      %v1074 = vpack.c.b16 %v869, %v864
      %v1075 = vpack.c.b16 %v870, %v865
      %v1076 = vpack.c.b16 %v876, %v871
      %v1077 = vpack.c.b16 %v877, %v872
      %v1078 = vpack.c.b16 %v878, %v873
      %v1079 = vpack.c.b16 %v879, %v874
      %v1080 = vpack.c.b16 %v880, %v875
      %v1081 = vpack.c.b16 %v886, %v881
      %v1082 = vpack.c.b16 %v887, %v882
      %v1083 = vpack.c.b16 %v888, %v883
      %v1084 = vpack.c.b16 %v889, %v884
      %v1085 = vpack.c.b16 %v890, %v885
      %v1086 = vpack.c.b16 %v896, %v891
      %v1087 = vpack.c.b16 %v897, %v892
      %v1088 = vpack.c.b16 %v898, %v893
      %v1089 = vpack.c.b16 %v899, %v894
      %v1090 = vpack.c.b16 %v900, %v895
      %v1091 = vpack.c.b16 %v906, %v901
      %v1092 = vpack.c.b16 %v907, %v902
      %v1093 = vpack.c.b16 %v908, %v903
      %v1094 = vpack.c.b16 %v909, %v904
      %v1095 = vpack.c.b16 %v910, %v905
      %v1096 = vpack.c.b16 %v916, %v911
      %v1097 = vpack.c.b16 %v917, %v912
      %v1098 = vpack.c.b16 %v918, %v913
      %v1099 = vpack.c.b16 %v919, %v914
      %v1100 = vpack.c.b16 %v920, %v915
      %v1101 = vpack.c.b16 %v926, %v921
      %v1102 = vpack.c.b16 %v927, %v922
      %v1103 = vpack.c.b16 %v928, %v923
      %v1104 = vpack.c.b16 %v929, %v924
      %v1105 = vpack.c.b16 %v930, %v925
      %v1106 = vpack.c.b16 %v936, %v931
      %v1107 = vpack.c.b16 %v937, %v932
      %v1108 = vpack.c.b16 %v938, %v933
      %v1109 = vpack.c.b16 %v939, %v934
      %v1110 = vpack.c.b16 %v940, %v935
      %v1111 = vpack.c.b16 %v946, %v941
      %v1112 = vpack.c.b16 %v947, %v942
      %v1113 = vpack.c.b16 %v948, %v943
      %v1114 = vpack.c.b16 %v949, %v944
      %v1115 = vpack.c.b16 %v950, %v945
      %v1116 = vpack.c.b16 %v956, %v951
      %v1117 = vpack.c.b16 %v957, %v952
      %v1118 = vpack.c.b16 %v958, %v953
      %v1119 = vpack.c.b16 %v959, %v954
      %v1120 = vpack.c.b16 %v960, %v955
      %v1321 = vunpack.c.l.b16 %v370
      %v1322 = vunpack.c.l.b16 %v371
      %v1323 = vunpack.c.l.b16 %v372
      %v1324 = vunpack.c.l.b16 %v373
      %v1325 = vunpack.c.l.b16 %v374
      %v1326 = vunpack.c.l.b16 %v375
      %v1327 = vunpack.c.l.b16 %v376
      %v1328 = vunpack.c.l.b16 %v377
      %v1329 = vunpack.c.l.b16 %v378
      %v1330 = vunpack.c.l.b16 %v379
      %v1331 = vunpack.c.l.b16 %v380
      %v1332 = vunpack.c.l.b16 %v381
      %v1333 = vunpack.c.l.b16 %v382
      %v1334 = vunpack.c.l.b16 %v383
      %v1335 = vunpack.c.l.b16 %v384
      %v1336 = vunpack.c.l.b16 %v385
      %v1337 = vunpack.c.l.b16 %v386
      %v1338 = vunpack.c.l.b16 %v387
      %v1339 = vunpack.c.l.b16 %v388
      %v1340 = vunpack.c.l.b16 %v389
      %v1341 = vunpack.c.l.b16 %v390
      %v1342 = vunpack.c.l.b16 %v391
      %v1343 = vunpack.c.l.b16 %v392
      %v1344 = vunpack.c.l.b16 %v393
      %v1345 = vunpack.c.l.b16 %v394
      %v1346 = vunpack.c.l.b16 %v395
      %v1347 = vunpack.c.l.b16 %v396
      %v1348 = vunpack.c.l.b16 %v397
      %v1349 = vunpack.c.l.b16 %v398
      %v1350 = vunpack.c.l.b16 %v399
      %v1351 = vunpack.c.l.b16 %v400
      %v1352 = vunpack.c.l.b16 %v401
      %v1353 = vunpack.c.l.b16 %v402
      %v1354 = vunpack.c.l.b16 %v403
      %v1355 = vunpack.c.l.b16 %v404
      %v1356 = vunpack.c.l.b16 %v405
      %v1357 = vunpack.c.l.b16 %v406
      %v1358 = vunpack.c.l.b16 %v407
      %v1359 = vunpack.c.l.b16 %v408
      %v1360 = vunpack.c.l.b16 %v409
      %v1361 = vunpack.c.l.b16 %v410
      %v1362 = vunpack.c.l.b16 %v411
      %v1363 = vunpack.c.l.b16 %v412
      %v1364 = vunpack.c.l.b16 %v413
      %v1365 = vunpack.c.l.b16 %v414
      %v1366 = vunpack.c.l.b16 %v415
      %v1367 = vunpack.c.l.b16 %v416
      %v1368 = vunpack.c.l.b16 %v417
      %v1369 = vunpack.c.l.b16 %v418
      %v1370 = vunpack.c.l.b16 %v419
      %v1371 = vunpack.c.l.b16 %v420
      %v1372 = vunpack.c.l.b16 %v421
      %v1373 = vunpack.c.l.b16 %v422
      %v1374 = vunpack.c.l.b16 %v423
      %v1375 = vunpack.c.l.b16 %v424
      %v1376 = vunpack.c.l.b16 %v425
      %v1377 = vunpack.c.l.b16 %v426
      %v1378 = vunpack.c.l.b16 %v427
      %v1379 = vunpack.c.l.b16 %v428
      %v1380 = vunpack.c.l.b16 %v429
      %v1381 = vunpack.c.l.b16 %v430
      %v1382 = vunpack.c.l.b16 %v431
      %v1383 = vunpack.c.l.b16 %v432
      %v1384 = vunpack.c.l.b16 %v433
      %v1385 = vunpack.c.l.b16 %v434
      %v1386 = vunpack.c.l.b16 %v435
      %v1387 = vunpack.c.l.b16 %v436
      %v1388 = vunpack.c.l.b16 %v437
      %v1389 = vunpack.c.l.b16 %v438
      %v1390 = vunpack.c.l.b16 %v439
      %v1391 = vunpack.c.l.b16 %v440
      %v1392 = vunpack.c.l.b16 %v441
      %v1393 = vpack.c.b16 %v1322, %v1321
      %v1394 = vpack.c.b16 %v1324, %v1323
      %v1395 = vpack.c.b16 %v1326, %v1325
      %v1396 = vpack.c.b16 %v1328, %v1327
      %v1397 = vpack.c.b16 %v1330, %v1329
      %v1398 = vpack.c.b16 %v1332, %v1331
      %v1399 = vpack.c.b16 %v1334, %v1333
      %v1400 = vpack.c.b16 %v1336, %v1335
      %v1401 = vpack.c.b16 %v1338, %v1337
      %v1402 = vpack.c.b16 %v1340, %v1339
      %v1403 = vpack.c.b16 %v1342, %v1341
      %v1404 = vpack.c.b16 %v1344, %v1343
      %v1405 = vpack.c.b16 %v1346, %v1345
      %v1406 = vpack.c.b16 %v1348, %v1347
      %v1407 = vpack.c.b16 %v1350, %v1349
      %v1408 = vpack.c.b16 %v1352, %v1351
      %v1409 = vpack.c.b16 %v1354, %v1353
      %v1410 = vpack.c.b16 %v1356, %v1355
      %v1411 = vpack.c.b16 %v1358, %v1357
      %v1412 = vpack.c.b16 %v1360, %v1359
      %v1413 = vpack.c.b16 %v1362, %v1361
      %v1414 = vpack.c.b16 %v1364, %v1363
      %v1415 = vpack.c.b16 %v1366, %v1365
      %v1416 = vpack.c.b16 %v1368, %v1367
      %v1417 = vpack.c.b16 %v1370, %v1369
      %v1418 = vpack.c.b16 %v1372, %v1371
      %v1419 = vpack.c.b16 %v1374, %v1373
      %v1420 = vpack.c.b16 %v1376, %v1375
      %v1421 = vpack.c.b16 %v1378, %v1377
      %v1422 = vpack.c.b16 %v1380, %v1379
      %v1423 = vpack.c.b16 %v1382, %v1381
      %v1424 = vpack.c.b16 %v1384, %v1383
      %v1425 = vpack.c.b16 %v1386, %v1385
      %v1426 = vpack.c.b16 %v1388, %v1387
      %v1427 = vpack.c.b16 %v1390, %v1389
      %v1428 = vpack.c.b16 %v1392, %v1391
      %vm1465 = vcmask 523264
      %v1467 = vsel %vm1465, %v965, 0
      %v1470 = vsel %vm1465, %v970, 0
      %v1473 = vsel %vm1465, %v975, 0
      %v1476 = vsel %vm1465, %v980, 0
      %v1479 = vsel %vm1465, %v985, 0
      %v1482 = vsel %vm1465, %v990, 0
      %v1485 = vsel %vm1465, %v995, 0
      %v1488 = vsel %vm1465, %v1000, 0
      %v1491 = vsel %vm1465, %v1005, 0
      %v1494 = vsel %vm1465, %v1010, 0
      %v1497 = vsel %vm1465, %v1015, 0
      %v1500 = vsel %vm1465, %v1020, 0
      %v1503 = vsel %vm1465, %v1025, 0
      %v1506 = vsel %vm1465, %v1030, 0
      %v1509 = vsel %vm1465, %v1035, 0
      %v1512 = vsel %vm1465, %v1040, 0
      %v1515 = vsel %vm1465, %v1045, 0
      %v1518 = vsel %vm1465, %v1050, 0
      %v1521 = vsel %vm1465, %v1055, 0
      %v1524 = vsel %vm1465, %v1060, 0
      %v1527 = vsel %vm1465, %v1065, 0
      %v1530 = vsel %vm1465, %v1070, 0
      %v1533 = vsel %vm1465, %v1075, 0
      %v1536 = vsel %vm1465, %v1080, 0
      %v1539 = vsel %vm1465, %v1085, 0
      %v1542 = vsel %vm1465, %v1090, 0
      %v1545 = vsel %vm1465, %v1095, 0
      %v1548 = vsel %vm1465, %v1100, 0
      %v1551 = vsel %vm1465, %v1105, 0
      %v1554 = vsel %vm1465, %v1110, 0
      %v1557 = vsel %vm1465, %v1115, 0
      %v1560 = vsel %vm1465, %v1120, 0
      %1562 = vmatprep.subr.bf16.mxu0 0
      %1563 = vmatpush1.bf16.msra.mxu0 %v1400
      %1564 = vmatprep.subr.bf16.mxu0 0
      %1565 = vmatpush1.bf16.msra.mxu0 %v1399
      %1566 = vmatprep.subr.bf16.mxu0 0
      %1567 = vmatpush1.bf16.msra.mxu0 %v1398
      %1568 = vmatprep.subr.bf16.mxu0 0
      %1569 = vmatpush1.bf16.msra.mxu0 %v1397
      %1570 = vmatprep.subr.bf16.mxu0 0
      %1571 = vmatpush1.bf16.msra.mxu0 %v1396
      %1572 = vmatprep.subr.bf16.mxu0 0
      %1573 = vmatpush1.bf16.msra.mxu0 %v1395
      %1574 = vmatprep.subr.bf16.mxu0 0
      %1575 = vmatpush1.bf16.msra.mxu0 %v1394
      %1576 = vmatprep.subr.bf16.mxu0 0
      %1577 = vmatpush1.bf16.msra.mxu0 %v1393
      %1578 = vmatprep.subr.bf16.mxu0 0
      %1579 = vmatpush2.bf16.msra.mxu0 %v1408
      %1580 = vmatprep.subr.bf16.mxu0 0
      %1581 = vmatpush2.bf16.msra.mxu0 %v1407
      %1582 = vmatprep.subr.bf16.mxu0 0
      %1583 = vmatpush2.bf16.msra.mxu0 %v1406
      %1584 = vmatprep.subr.bf16.mxu0 0
      %1585 = vmatpush2.bf16.msra.mxu0 %v1405
      %1586 = vmatprep.subr.bf16.mxu0 0
      %1587 = vmatpush2.bf16.msra.mxu0 %v1404
      %1588 = vmatprep.subr.bf16.mxu0 0
      %1589 = vmatpush2.bf16.msra.mxu0 %v1403
      %1590 = vmatprep.subr.bf16.mxu0 0
      %1591 = vmatpush2.bf16.msra.mxu0 %v1402
      %1592 = vmatprep.subr.bf16.mxu0 0
      %1593 = vmatpush2.bf16.msra.mxu0 %v1401
      %1594 = vmatprep.mubr.bf16.mxu0 %v962
      %1595 = vmatmul.mubr.bf16.gmra.mxu0 %v961
      %v1596 = vpop.f32.mrf.mxu0
      %v1597 = vadd.f32 %v447, %v1596
      %v1598 = vpop.f32.mrf.mxu0
      %v1599 = vpop.f32.mrf.mxu0
      %v1600 = vadd.f32 %v447, %v1599
      %v1601 = vpop.f32.mrf.mxu0
      %1602 = vmatprep.mubr.bf16.mxu0 %v967
      %1603 = vmatmul.mubr.bf16.gmra.mxu0 %v966
      %v1604 = vpop.f32.mrf.mxu0
      %v1605 = vadd.f32 %v447, %v1604
      %v1606 = vpop.f32.mrf.mxu0
      %v1607 = vpop.f32.mrf.mxu0
      %v1608 = vadd.f32 %v447, %v1607
      %v1609 = vpop.f32.mrf.mxu0
      %1610 = vmatprep.mubr.bf16.mxu0 %v972
      %1611 = vmatmul.mubr.bf16.gmra.mxu0 %v971
      %v1612 = vpop.f32.mrf.mxu0
      %v1613 = vadd.f32 %v447, %v1612
      %v1614 = vpop.f32.mrf.mxu0
      %v1615 = vpop.f32.mrf.mxu0
      %v1616 = vadd.f32 %v447, %v1615
      %v1617 = vpop.f32.mrf.mxu0
      %1618 = vmatprep.mubr.bf16.mxu0 %v977
      %1619 = vmatmul.mubr.bf16.gmra.mxu0 %v976
      %v1620 = vpop.f32.mrf.mxu0
      %v1621 = vadd.f32 %v447, %v1620
      %v1622 = vpop.f32.mrf.mxu0
      %v1623 = vpop.f32.mrf.mxu0
      %v1624 = vadd.f32 %v447, %v1623
      %v1625 = vpop.f32.mrf.mxu0
      %1626 = vmatprep.mubr.bf16.mxu0 %v982
      %1627 = vmatmul.mubr.bf16.gmra.mxu0 %v981
      %v1628 = vpop.f32.mrf.mxu0
      %v1629 = vadd.f32 %v447, %v1628
      %v1630 = vpop.f32.mrf.mxu0
      %v1631 = vpop.f32.mrf.mxu0
      %v1632 = vadd.f32 %v447, %v1631
      %v1633 = vpop.f32.mrf.mxu0
      %1634 = vmatprep.mubr.bf16.mxu0 %v987
      %1635 = vmatmul.mubr.bf16.gmra.mxu0 %v986
      %v1636 = vpop.f32.mrf.mxu0
      %v1637 = vadd.f32 %v447, %v1636
      %v1638 = vpop.f32.mrf.mxu0
      %v1639 = vpop.f32.mrf.mxu0
      %v1640 = vadd.f32 %v447, %v1639
      %v1641 = vpop.f32.mrf.mxu0
      %1642 = vmatprep.mubr.bf16.mxu0 %v992
      %1643 = vmatmul.mubr.bf16.gmra.mxu0 %v991
      %v1644 = vpop.f32.mrf.mxu0
      %v1645 = vadd.f32 %v447, %v1644
      %v1646 = vpop.f32.mrf.mxu0
      %v1647 = vpop.f32.mrf.mxu0
      %v1648 = vadd.f32 %v447, %v1647
      %v1649 = vpop.f32.mrf.mxu0
      %1650 = vmatprep.mubr.bf16.mxu0 %v997
      %1651 = vmatmul.mubr.bf16.gmra.mxu0 %v996
      %v1652 = vpop.f32.mrf.mxu0
      %v1653 = vadd.f32 %v447, %v1652
      %v1654 = vpop.f32.mrf.mxu0
      %v1655 = vpop.f32.mrf.mxu0
      %v1656 = vadd.f32 %v447, %v1655
      %v1657 = vpop.f32.mrf.mxu0
      %1658 = vmatprep.mubr.bf16.mxu0 %v1002
      %1659 = vmatmul.mubr.bf16.gmra.mxu0 %v1001
      %v1660 = vpop.f32.mrf.mxu0
      %v1661 = vadd.f32 %v447, %v1660
      %v1662 = vpop.f32.mrf.mxu0
      %v1663 = vpop.f32.mrf.mxu0
      %v1664 = vadd.f32 %v447, %v1663
      %v1665 = vpop.f32.mrf.mxu0
      %1666 = vmatprep.mubr.bf16.mxu0 %v1007
      %1667 = vmatmul.mubr.bf16.gmra.mxu0 %v1006
      %v1668 = vpop.f32.mrf.mxu0
      %v1669 = vadd.f32 %v447, %v1668
      %v1670 = vpop.f32.mrf.mxu0
      %v1671 = vpop.f32.mrf.mxu0
      %v1672 = vadd.f32 %v447, %v1671
      %v1673 = vpop.f32.mrf.mxu0
      %1674 = vmatprep.mubr.bf16.mxu0 %v1012
      %1675 = vmatmul.mubr.bf16.gmra.mxu0 %v1011
      %v1676 = vpop.f32.mrf.mxu0
      %v1677 = vadd.f32 %v447, %v1676
      %v1678 = vpop.f32.mrf.mxu0
      %v1679 = vpop.f32.mrf.mxu0
      %v1680 = vadd.f32 %v447, %v1679
      %v1681 = vpop.f32.mrf.mxu0
      %1682 = vmatprep.mubr.bf16.mxu0 %v1017
      %1683 = vmatmul.mubr.bf16.gmra.mxu0 %v1016
      %v1684 = vpop.f32.mrf.mxu0
      %v1685 = vadd.f32 %v447, %v1684
      %v1686 = vpop.f32.mrf.mxu0
      %v1687 = vpop.f32.mrf.mxu0
      %v1688 = vadd.f32 %v447, %v1687
      %v1689 = vpop.f32.mrf.mxu0
      %1690 = vmatprep.mubr.bf16.mxu0 %v1022
      %1691 = vmatmul.mubr.bf16.gmra.mxu0 %v1021
      %v1692 = vpop.f32.mrf.mxu0
      %v1693 = vadd.f32 %v447, %v1692
      %v1694 = vpop.f32.mrf.mxu0
      %v1695 = vpop.f32.mrf.mxu0
      %v1696 = vadd.f32 %v447, %v1695
      %v1697 = vpop.f32.mrf.mxu0
      %1698 = vmatprep.mubr.bf16.mxu0 %v1027
      %1699 = vmatmul.mubr.bf16.gmra.mxu0 %v1026
      %v1700 = vpop.f32.mrf.mxu0
      %v1701 = vadd.f32 %v447, %v1700
      %v1702 = vpop.f32.mrf.mxu0
      %v1703 = vpop.f32.mrf.mxu0
      %v1704 = vadd.f32 %v447, %v1703
      %v1705 = vpop.f32.mrf.mxu0
      %1706 = vmatprep.mubr.bf16.mxu0 %v1032
      %1707 = vmatmul.mubr.bf16.gmra.mxu0 %v1031
      %v1708 = vpop.f32.mrf.mxu0
      %v1709 = vadd.f32 %v447, %v1708
      %v1710 = vpop.f32.mrf.mxu0
      %v1711 = vpop.f32.mrf.mxu0
      %v1712 = vadd.f32 %v447, %v1711
      %v1713 = vpop.f32.mrf.mxu0
      %1714 = vmatprep.mubr.bf16.mxu0 %v1037
      %1715 = vmatmul.mubr.bf16.gmra.mxu0 %v1036
      %v1716 = vpop.f32.mrf.mxu0
      %v1717 = vadd.f32 %v447, %v1716
      %v1718 = vpop.f32.mrf.mxu0
      %v1719 = vpop.f32.mrf.mxu0
      %v1720 = vadd.f32 %v447, %v1719
      %v1721 = vpop.f32.mrf.mxu0
      %1722 = vmatprep.mubr.bf16.mxu0 %v1042
      %1723 = vmatmul.mubr.bf16.gmra.mxu0 %v1041
      %v1724 = vpop.f32.mrf.mxu0
      %v1725 = vadd.f32 %v447, %v1724
      %v1726 = vpop.f32.mrf.mxu0
      %v1727 = vpop.f32.mrf.mxu0
      %v1728 = vadd.f32 %v447, %v1727
      %v1729 = vpop.f32.mrf.mxu0
      %1730 = vmatprep.mubr.bf16.mxu0 %v1047
      %1731 = vmatmul.mubr.bf16.gmra.mxu0 %v1046
      %v1732 = vpop.f32.mrf.mxu0
      %v1733 = vadd.f32 %v447, %v1732
      %v1734 = vpop.f32.mrf.mxu0
      %v1735 = vpop.f32.mrf.mxu0
      %v1736 = vadd.f32 %v447, %v1735
      %v1737 = vpop.f32.mrf.mxu0
      %1738 = vmatprep.mubr.bf16.mxu0 %v1052
      %1739 = vmatmul.mubr.bf16.gmra.mxu0 %v1051
      %v1740 = vpop.f32.mrf.mxu0
      %v1741 = vadd.f32 %v447, %v1740
      %v1742 = vpop.f32.mrf.mxu0
      %v1743 = vpop.f32.mrf.mxu0
      %v1744 = vadd.f32 %v447, %v1743
      %v1745 = vpop.f32.mrf.mxu0
      %1746 = vmatprep.mubr.bf16.mxu0 %v1057
      %1747 = vmatmul.mubr.bf16.gmra.mxu0 %v1056
      %v1748 = vpop.f32.mrf.mxu0
      %v1749 = vadd.f32 %v447, %v1748
      %v1750 = vpop.f32.mrf.mxu0
      %v1751 = vpop.f32.mrf.mxu0
      %v1752 = vadd.f32 %v447, %v1751
      %v1753 = vpop.f32.mrf.mxu0
      %1754 = vmatprep.mubr.bf16.mxu0 %v1062
      %1755 = vmatmul.mubr.bf16.gmra.mxu0 %v1061
      %v1756 = vpop.f32.mrf.mxu0
      %v1757 = vadd.f32 %v447, %v1756
      %v1758 = vpop.f32.mrf.mxu0
      %v1759 = vpop.f32.mrf.mxu0
      %v1760 = vadd.f32 %v447, %v1759
      %v1761 = vpop.f32.mrf.mxu0
      %1762 = vmatprep.mubr.bf16.mxu0 %v1067
      %1763 = vmatmul.mubr.bf16.gmra.mxu0 %v1066
      %v1764 = vpop.f32.mrf.mxu0
      %v1765 = vadd.f32 %v447, %v1764
      %v1766 = vpop.f32.mrf.mxu0
      %v1767 = vpop.f32.mrf.mxu0
      %v1768 = vadd.f32 %v447, %v1767
      %v1769 = vpop.f32.mrf.mxu0
      %1770 = vmatprep.mubr.bf16.mxu0 %v1072
      %1771 = vmatmul.mubr.bf16.gmra.mxu0 %v1071
      %v1772 = vpop.f32.mrf.mxu0
      %v1773 = vadd.f32 %v447, %v1772
      %v1774 = vpop.f32.mrf.mxu0
      %v1775 = vpop.f32.mrf.mxu0
      %v1776 = vadd.f32 %v447, %v1775
      %v1777 = vpop.f32.mrf.mxu0
      %1778 = vmatprep.mubr.bf16.mxu0 %v1077
      %1779 = vmatmul.mubr.bf16.gmra.mxu0 %v1076
      %v1780 = vpop.f32.mrf.mxu0
      %v1781 = vadd.f32 %v447, %v1780
      %v1782 = vpop.f32.mrf.mxu0
      %v1783 = vpop.f32.mrf.mxu0
      %v1784 = vadd.f32 %v447, %v1783
      %v1785 = vpop.f32.mrf.mxu0
      %1786 = vmatprep.mubr.bf16.mxu0 %v1082
      %1787 = vmatmul.mubr.bf16.gmra.mxu0 %v1081
      %v1788 = vpop.f32.mrf.mxu0
      %v1789 = vadd.f32 %v447, %v1788
      %v1790 = vpop.f32.mrf.mxu0
      %v1791 = vpop.f32.mrf.mxu0
      %v1792 = vadd.f32 %v447, %v1791
      %v1793 = vpop.f32.mrf.mxu0
      %1794 = vmatprep.mubr.bf16.mxu0 %v1087
      %1795 = vmatmul.mubr.bf16.gmra.mxu0 %v1086
      %v1796 = vpop.f32.mrf.mxu0
      %v1797 = vadd.f32 %v447, %v1796
      %v1798 = vpop.f32.mrf.mxu0
      %v1799 = vpop.f32.mrf.mxu0
      %v1800 = vadd.f32 %v447, %v1799
      %v1801 = vpop.f32.mrf.mxu0
      %1802 = vmatprep.mubr.bf16.mxu0 %v1092
      %1803 = vmatmul.mubr.bf16.gmra.mxu0 %v1091
      %v1804 = vpop.f32.mrf.mxu0
      %v1805 = vadd.f32 %v447, %v1804
      %v1806 = vpop.f32.mrf.mxu0
      %v1807 = vpop.f32.mrf.mxu0
      %v1808 = vadd.f32 %v447, %v1807
      %v1809 = vpop.f32.mrf.mxu0
      %1810 = vmatprep.mubr.bf16.mxu0 %v1097
      %1811 = vmatmul.mubr.bf16.gmra.mxu0 %v1096
      %v1812 = vpop.f32.mrf.mxu0
      %v1813 = vadd.f32 %v447, %v1812
      %v1814 = vpop.f32.mrf.mxu0
      %v1815 = vpop.f32.mrf.mxu0
      %v1816 = vadd.f32 %v447, %v1815
      %v1817 = vpop.f32.mrf.mxu0
      %1818 = vmatprep.mubr.bf16.mxu0 %v1102
      %1819 = vmatmul.mubr.bf16.gmra.mxu0 %v1101
      %v1820 = vpop.f32.mrf.mxu0
      %v1821 = vadd.f32 %v447, %v1820
      %v1822 = vpop.f32.mrf.mxu0
      %v1823 = vpop.f32.mrf.mxu0
      %v1824 = vadd.f32 %v447, %v1823
      %v1825 = vpop.f32.mrf.mxu0
      %1826 = vmatprep.mubr.bf16.mxu0 %v1107
      %1827 = vmatmul.mubr.bf16.gmra.mxu0 %v1106
      %v1828 = vpop.f32.mrf.mxu0
      %v1829 = vadd.f32 %v447, %v1828
      %v1830 = vpop.f32.mrf.mxu0
      %v1831 = vpop.f32.mrf.mxu0
      %v1832 = vadd.f32 %v447, %v1831
      %v1833 = vpop.f32.mrf.mxu0
      %1834 = vmatprep.mubr.bf16.mxu0 %v1112
      %1835 = vmatmul.mubr.bf16.gmra.mxu0 %v1111
      %v1836 = vpop.f32.mrf.mxu0
      %v1837 = vadd.f32 %v447, %v1836
      %v1838 = vpop.f32.mrf.mxu0
      %v1839 = vpop.f32.mrf.mxu0
      %v1840 = vadd.f32 %v447, %v1839
      %v1841 = vpop.f32.mrf.mxu0
      %1842 = vmatprep.mubr.bf16.mxu0 %v1117
      %1843 = vmatmul.mubr.bf16.gmra.mxu0 %v1116
      %v1844 = vpop.f32.mrf.mxu0
      %v1845 = vadd.f32 %v447, %v1844
      %v1846 = vpop.f32.mrf.mxu0
      %v1847 = vpop.f32.mrf.mxu0
      %v1848 = vadd.f32 %v447, %v1847
      %v1849 = vpop.f32.mrf.mxu0
      %1850 = vdwg.mxu0
      %1851 = vmatprep.subr.bf16.mxu0 0
      %1852 = vmatpush1.bf16.msra.mxu0 %v1416
      %1853 = vmatprep.subr.bf16.mxu0 0
      %1854 = vmatpush1.bf16.msra.mxu0 %v1415
      %1855 = vmatprep.subr.bf16.mxu0 0
      %1856 = vmatpush1.bf16.msra.mxu0 %v1414
      %1857 = vmatprep.subr.bf16.mxu0 0
      %1858 = vmatpush1.bf16.msra.mxu0 %v1413
      %1859 = vmatprep.subr.bf16.mxu0 0
      %1860 = vmatpush1.bf16.msra.mxu0 %v1412
      %1861 = vmatprep.subr.bf16.mxu0 0
      %1862 = vmatpush1.bf16.msra.mxu0 %v1411
      %1863 = vmatprep.subr.bf16.mxu0 0
      %1864 = vmatpush1.bf16.msra.mxu0 %v1410
      %1865 = vmatprep.subr.bf16.mxu0 0
      %1866 = vmatpush1.bf16.msra.mxu0 %v1409
      %1867 = vmatprep.subr.bf16.mxu0 0
      %1868 = vmatpush2.bf16.msra.mxu0 %v1424
      %1869 = vmatprep.subr.bf16.mxu0 0
      %1870 = vmatpush2.bf16.msra.mxu0 %v1423
      %1871 = vmatprep.subr.bf16.mxu0 0
      %1872 = vmatpush2.bf16.msra.mxu0 %v1422
      %1873 = vmatprep.subr.bf16.mxu0 0
      %1874 = vmatpush2.bf16.msra.mxu0 %v1421
      %1875 = vmatprep.subr.bf16.mxu0 0
      %1876 = vmatpush2.bf16.msra.mxu0 %v1420
      %1877 = vmatprep.subr.bf16.mxu0 0
      %1878 = vmatpush2.bf16.msra.mxu0 %v1419
      %1879 = vmatprep.subr.bf16.mxu0 0
      %1880 = vmatpush2.bf16.msra.mxu0 %v1418
      %1881 = vmatprep.subr.bf16.mxu0 0
      %1882 = vmatpush2.bf16.msra.mxu0 %v1417
      %1883 = vmatprep.mubr.bf16.mxu0 %v964
      %1884 = vmatmul.mubr.bf16.gmra.mxu0 %v963
      %v1885 = vpop.f32.mrf.mxu0
      %v1886 = vadd.f32 %v1597, %v1885
      %v1887 = vpop.f32.mrf.mxu0
      %v1888 = vpop.f32.mrf.mxu0
      %v1889 = vadd.f32 %v1600, %v1888
      %v1890 = vpop.f32.mrf.mxu0
      %1891 = vmatprep.mubr.bf16.mxu0 %v969
      %1892 = vmatmul.mubr.bf16.gmra.mxu0 %v968
      %v1893 = vpop.f32.mrf.mxu0
      %v1894 = vadd.f32 %v1605, %v1893
      %v1895 = vpop.f32.mrf.mxu0
      %v1896 = vpop.f32.mrf.mxu0
      %v1897 = vadd.f32 %v1608, %v1896
      %v1898 = vpop.f32.mrf.mxu0
      %1899 = vmatprep.mubr.bf16.mxu0 %v974
      %1900 = vmatmul.mubr.bf16.gmra.mxu0 %v973
      %v1901 = vpop.f32.mrf.mxu0
      %v1902 = vadd.f32 %v1613, %v1901
      %v1903 = vpop.f32.mrf.mxu0
      %v1904 = vpop.f32.mrf.mxu0
      %v1905 = vadd.f32 %v1616, %v1904
      %v1906 = vpop.f32.mrf.mxu0
      %1907 = vmatprep.mubr.bf16.mxu0 %v979
      %1908 = vmatmul.mubr.bf16.gmra.mxu0 %v978
      %v1909 = vpop.f32.mrf.mxu0
      %v1910 = vadd.f32 %v1621, %v1909
      %v1911 = vpop.f32.mrf.mxu0
      %v1912 = vpop.f32.mrf.mxu0
      %v1913 = vadd.f32 %v1624, %v1912
      %v1914 = vpop.f32.mrf.mxu0
      %1915 = vmatprep.mubr.bf16.mxu0 %v984
      %1916 = vmatmul.mubr.bf16.gmra.mxu0 %v983
      %v1917 = vpop.f32.mrf.mxu0
      %v1918 = vadd.f32 %v1629, %v1917
      %v1919 = vpop.f32.mrf.mxu0
      %v1920 = vpop.f32.mrf.mxu0
      %v1921 = vadd.f32 %v1632, %v1920
      %v1922 = vpop.f32.mrf.mxu0
      %1923 = vmatprep.mubr.bf16.mxu0 %v989
      %1924 = vmatmul.mubr.bf16.gmra.mxu0 %v988
      %v1925 = vpop.f32.mrf.mxu0
      %v1926 = vadd.f32 %v1637, %v1925
      %v1927 = vpop.f32.mrf.mxu0
      %v1928 = vpop.f32.mrf.mxu0
      %v1929 = vadd.f32 %v1640, %v1928
      %v1930 = vpop.f32.mrf.mxu0
      %1931 = vmatprep.mubr.bf16.mxu0 %v994
      %1932 = vmatmul.mubr.bf16.gmra.mxu0 %v993
      %v1933 = vpop.f32.mrf.mxu0
      %v1934 = vadd.f32 %v1645, %v1933
      %v1935 = vpop.f32.mrf.mxu0
      %v1936 = vpop.f32.mrf.mxu0
      %v1937 = vadd.f32 %v1648, %v1936
      %v1938 = vpop.f32.mrf.mxu0
      %1939 = vmatprep.mubr.bf16.mxu0 %v999
      %1940 = vmatmul.mubr.bf16.gmra.mxu0 %v998
      %v1941 = vpop.f32.mrf.mxu0
      %v1942 = vadd.f32 %v1653, %v1941
      %v1943 = vpop.f32.mrf.mxu0
      %v1944 = vpop.f32.mrf.mxu0
      %v1945 = vadd.f32 %v1656, %v1944
      %v1946 = vpop.f32.mrf.mxu0
      %1947 = vmatprep.mubr.bf16.mxu0 %v1004
      %1948 = vmatmul.mubr.bf16.gmra.mxu0 %v1003
      %v1949 = vpop.f32.mrf.mxu0
      %v1950 = vadd.f32 %v1661, %v1949
      %v1951 = vpop.f32.mrf.mxu0
      %v1952 = vpop.f32.mrf.mxu0
      %v1953 = vadd.f32 %v1664, %v1952
      %v1954 = vpop.f32.mrf.mxu0
      %1955 = vmatprep.mubr.bf16.mxu0 %v1009
      %1956 = vmatmul.mubr.bf16.gmra.mxu0 %v1008
      %v1957 = vpop.f32.mrf.mxu0
      %v1958 = vadd.f32 %v1669, %v1957
      %v1959 = vpop.f32.mrf.mxu0
      %v1960 = vpop.f32.mrf.mxu0
      %v1961 = vadd.f32 %v1672, %v1960
      %v1962 = vpop.f32.mrf.mxu0
      %1963 = vmatprep.mubr.bf16.mxu0 %v1014
      %1964 = vmatmul.mubr.bf16.gmra.mxu0 %v1013
      %v1965 = vpop.f32.mrf.mxu0
      %v1966 = vadd.f32 %v1677, %v1965
      %v1967 = vpop.f32.mrf.mxu0
      %v1968 = vpop.f32.mrf.mxu0
      %v1969 = vadd.f32 %v1680, %v1968
      %v1970 = vpop.f32.mrf.mxu0
      %1971 = vmatprep.mubr.bf16.mxu0 %v1019
      %1972 = vmatmul.mubr.bf16.gmra.mxu0 %v1018
      %v1973 = vpop.f32.mrf.mxu0
      %v1974 = vadd.f32 %v1685, %v1973
      %v1975 = vpop.f32.mrf.mxu0
      %v1976 = vpop.f32.mrf.mxu0
      %v1977 = vadd.f32 %v1688, %v1976
      %v1978 = vpop.f32.mrf.mxu0
      %1979 = vmatprep.mubr.bf16.mxu0 %v1024
      %1980 = vmatmul.mubr.bf16.gmra.mxu0 %v1023
      %v1981 = vpop.f32.mrf.mxu0
      %v1982 = vadd.f32 %v1693, %v1981
      %v1983 = vpop.f32.mrf.mxu0
      %v1984 = vpop.f32.mrf.mxu0
      %v1985 = vadd.f32 %v1696, %v1984
      %v1986 = vpop.f32.mrf.mxu0
      %1987 = vmatprep.mubr.bf16.mxu0 %v1029
      %1988 = vmatmul.mubr.bf16.gmra.mxu0 %v1028
      %v1989 = vpop.f32.mrf.mxu0
      %v1990 = vadd.f32 %v1701, %v1989
      %v1991 = vpop.f32.mrf.mxu0
      %v1992 = vpop.f32.mrf.mxu0
      %v1993 = vadd.f32 %v1704, %v1992
      %v1994 = vpop.f32.mrf.mxu0
      %1995 = vmatprep.mubr.bf16.mxu0 %v1034
      %1996 = vmatmul.mubr.bf16.gmra.mxu0 %v1033
      %v1997 = vpop.f32.mrf.mxu0
      %v1998 = vadd.f32 %v1709, %v1997
      %v1999 = vpop.f32.mrf.mxu0
      %v2000 = vpop.f32.mrf.mxu0
      %v2001 = vadd.f32 %v1712, %v2000
      %v2002 = vpop.f32.mrf.mxu0
      %2003 = vmatprep.mubr.bf16.mxu0 %v1039
      %2004 = vmatmul.mubr.bf16.gmra.mxu0 %v1038
      %v2005 = vpop.f32.mrf.mxu0
      %v2006 = vadd.f32 %v1717, %v2005
      %v2007 = vpop.f32.mrf.mxu0
      %v2008 = vpop.f32.mrf.mxu0
      %v2009 = vadd.f32 %v1720, %v2008
      %v2010 = vpop.f32.mrf.mxu0
      %2011 = vmatprep.mubr.bf16.mxu0 %v1044
      %2012 = vmatmul.mubr.bf16.gmra.mxu0 %v1043
      %v2013 = vpop.f32.mrf.mxu0
      %v2014 = vadd.f32 %v1725, %v2013
      %v2015 = vpop.f32.mrf.mxu0
      %v2016 = vpop.f32.mrf.mxu0
      %v2017 = vadd.f32 %v1728, %v2016
      %v2018 = vpop.f32.mrf.mxu0
      %2019 = vmatprep.mubr.bf16.mxu0 %v1049
      %2020 = vmatmul.mubr.bf16.gmra.mxu0 %v1048
      %v2021 = vpop.f32.mrf.mxu0
      %v2022 = vadd.f32 %v1733, %v2021
      %v2023 = vpop.f32.mrf.mxu0
      %v2024 = vpop.f32.mrf.mxu0
      %v2025 = vadd.f32 %v1736, %v2024
      %v2026 = vpop.f32.mrf.mxu0
      %2027 = vmatprep.mubr.bf16.mxu0 %v1054
      %2028 = vmatmul.mubr.bf16.gmra.mxu0 %v1053
      %v2029 = vpop.f32.mrf.mxu0
      %v2030 = vadd.f32 %v1741, %v2029
      %v2031 = vpop.f32.mrf.mxu0
      %v2032 = vpop.f32.mrf.mxu0
      %v2033 = vadd.f32 %v1744, %v2032
      %v2034 = vpop.f32.mrf.mxu0
      %2035 = vmatprep.mubr.bf16.mxu0 %v1059
      %2036 = vmatmul.mubr.bf16.gmra.mxu0 %v1058
      %v2037 = vpop.f32.mrf.mxu0
      %v2038 = vadd.f32 %v1749, %v2037
      %v2039 = vpop.f32.mrf.mxu0
      %v2040 = vpop.f32.mrf.mxu0
      %v2041 = vadd.f32 %v1752, %v2040
      %v2042 = vpop.f32.mrf.mxu0
      %2043 = vmatprep.mubr.bf16.mxu0 %v1064
      %2044 = vmatmul.mubr.bf16.gmra.mxu0 %v1063
      %v2045 = vpop.f32.mrf.mxu0
      %v2046 = vadd.f32 %v1757, %v2045
      %v2047 = vpop.f32.mrf.mxu0
      %v2048 = vpop.f32.mrf.mxu0
      %v2049 = vadd.f32 %v1760, %v2048
      %v2050 = vpop.f32.mrf.mxu0
      %2051 = vmatprep.mubr.bf16.mxu0 %v1069
      %2052 = vmatmul.mubr.bf16.gmra.mxu0 %v1068
      %v2053 = vpop.f32.mrf.mxu0
      %v2054 = vadd.f32 %v1765, %v2053
      %v2055 = vpop.f32.mrf.mxu0
      %v2056 = vpop.f32.mrf.mxu0
      %v2057 = vadd.f32 %v1768, %v2056
      %v2058 = vpop.f32.mrf.mxu0
      %2059 = vmatprep.mubr.bf16.mxu0 %v1074
      %2060 = vmatmul.mubr.bf16.gmra.mxu0 %v1073
      %v2061 = vpop.f32.mrf.mxu0
      %v2062 = vadd.f32 %v1773, %v2061
      %v2063 = vpop.f32.mrf.mxu0
      %v2064 = vpop.f32.mrf.mxu0
      %v2065 = vadd.f32 %v1776, %v2064
      %v2066 = vpop.f32.mrf.mxu0
      %2067 = vmatprep.mubr.bf16.mxu0 %v1079
      %2068 = vmatmul.mubr.bf16.gmra.mxu0 %v1078
      %v2069 = vpop.f32.mrf.mxu0
      %v2070 = vadd.f32 %v1781, %v2069
      %v2071 = vpop.f32.mrf.mxu0
      %v2072 = vpop.f32.mrf.mxu0
      %v2073 = vadd.f32 %v1784, %v2072
      %v2074 = vpop.f32.mrf.mxu0
      %2075 = vmatprep.mubr.bf16.mxu0 %v1084
      %2076 = vmatmul.mubr.bf16.gmra.mxu0 %v1083
      %v2077 = vpop.f32.mrf.mxu0
      %v2078 = vadd.f32 %v1789, %v2077
      %v2079 = vpop.f32.mrf.mxu0
      %v2080 = vpop.f32.mrf.mxu0
      %v2081 = vadd.f32 %v1792, %v2080
      %v2082 = vpop.f32.mrf.mxu0
      %2083 = vmatprep.mubr.bf16.mxu0 %v1089
      %2084 = vmatmul.mubr.bf16.gmra.mxu0 %v1088
      %v2085 = vpop.f32.mrf.mxu0
      %v2086 = vadd.f32 %v1797, %v2085
      %v2087 = vpop.f32.mrf.mxu0
      %v2088 = vpop.f32.mrf.mxu0
      %v2089 = vadd.f32 %v1800, %v2088
      %v2090 = vpop.f32.mrf.mxu0
      %2091 = vmatprep.mubr.bf16.mxu0 %v1094
      %2092 = vmatmul.mubr.bf16.gmra.mxu0 %v1093
      %v2093 = vpop.f32.mrf.mxu0
      %v2094 = vadd.f32 %v1805, %v2093
      %v2095 = vpop.f32.mrf.mxu0
      %v2096 = vpop.f32.mrf.mxu0
      %v2097 = vadd.f32 %v1808, %v2096
      %v2098 = vpop.f32.mrf.mxu0
      %2099 = vmatprep.mubr.bf16.mxu0 %v1099
      %2100 = vmatmul.mubr.bf16.gmra.mxu0 %v1098
      %v2101 = vpop.f32.mrf.mxu0
      %v2102 = vadd.f32 %v1813, %v2101
      %v2103 = vpop.f32.mrf.mxu0
      %v2104 = vpop.f32.mrf.mxu0
      %v2105 = vadd.f32 %v1816, %v2104
      %v2106 = vpop.f32.mrf.mxu0
      %2107 = vmatprep.mubr.bf16.mxu0 %v1104
      %2108 = vmatmul.mubr.bf16.gmra.mxu0 %v1103
      %v2109 = vpop.f32.mrf.mxu0
      %v2110 = vadd.f32 %v1821, %v2109
      %v2111 = vpop.f32.mrf.mxu0
      %v2112 = vpop.f32.mrf.mxu0
      %v2113 = vadd.f32 %v1824, %v2112
      %v2114 = vpop.f32.mrf.mxu0
      %2115 = vmatprep.mubr.bf16.mxu0 %v1109
      %2116 = vmatmul.mubr.bf16.gmra.mxu0 %v1108
      %v2117 = vpop.f32.mrf.mxu0
      %v2118 = vadd.f32 %v1829, %v2117
      %v2119 = vpop.f32.mrf.mxu0
      %v2120 = vpop.f32.mrf.mxu0
      %v2121 = vadd.f32 %v1832, %v2120
      %v2122 = vpop.f32.mrf.mxu0
      %2123 = vmatprep.mubr.bf16.mxu0 %v1114
      %2124 = vmatmul.mubr.bf16.gmra.mxu0 %v1113
      %v2125 = vpop.f32.mrf.mxu0
      %v2126 = vadd.f32 %v1837, %v2125
      %v2127 = vpop.f32.mrf.mxu0
      %v2128 = vpop.f32.mrf.mxu0
      %v2129 = vadd.f32 %v1840, %v2128
      %v2130 = vpop.f32.mrf.mxu0
      %2131 = vmatprep.mubr.bf16.mxu0 %v1119
      %2132 = vmatmul.mubr.bf16.gmra.mxu0 %v1118
      %v2133 = vpop.f32.mrf.mxu0
      %v2134 = vadd.f32 %v1845, %v2133
      %v2135 = vpop.f32.mrf.mxu0
      %v2136 = vpop.f32.mrf.mxu0
      %v2137 = vadd.f32 %v1848, %v2136
      %v2138 = vpop.f32.mrf.mxu0
      %2139 = vdwg.mxu0
      %2140 = vmatprep.subr.bf16.mxu0 0
      %2141 = vmatpush1.bf16.msra.mxu0 0
      %2142 = vmatprep.subr.bf16.mxu0 0
      %2143 = vmatpush1.bf16.msra.mxu0 0
      %2144 = vmatprep.subr.bf16.mxu0 0
      %2145 = vmatpush1.bf16.msra.mxu0 0
      %2146 = vmatprep.subr.bf16.mxu0 0
      %2147 = vmatpush1.bf16.msra.mxu0 0
      %2148 = vmatprep.subr.bf16.mxu0 0
      %2149 = vmatpush1.bf16.msra.mxu0 %v1428
      %2150 = vmatprep.subr.bf16.mxu0 0
      %2151 = vmatpush1.bf16.msra.mxu0 %v1427
      %2152 = vmatprep.subr.bf16.mxu0 0
      %2153 = vmatpush1.bf16.msra.mxu0 %v1426
      %2154 = vmatprep.subr.bf16.mxu0 0
      %2155 = vmatpush1.bf16.msra.mxu0 %v1425
      %2156 = vmatprep.subr.bf16.mxu0 0
      %2157 = vmatpush2.bf16.msra.mxu0 0
      %2158 = vmatprep.subr.bf16.mxu0 0
      %2159 = vmatpush2.bf16.msra.mxu0 0
      %2160 = vmatprep.subr.bf16.mxu0 0
      %2161 = vmatpush2.bf16.msra.mxu0 0
      %2162 = vmatprep.subr.bf16.mxu0 0
      %2163 = vmatpush2.bf16.msra.mxu0 0
      %2164 = vmatprep.subr.bf16.mxu0 0
      %2165 = vmatpush2.bf16.msra.mxu0 0
      %2166 = vmatprep.subr.bf16.mxu0 0
      %2167 = vmatpush2.bf16.msra.mxu0 0
      %2168 = vmatprep.subr.bf16.mxu0 0
      %2169 = vmatpush2.bf16.msra.mxu0 0
      %2170 = vmatprep.subr.bf16.mxu0 0
      %2171 = vmatpush2.bf16.msra.mxu0 0
      %2172 = vmatprep.mubr.bf16.mxu0 0
      %2173 = vmatmul.mubr.bf16.gmra.mxu0 %v1467
      %v2174 = vpop.f32.mrf.mxu0
      %v2175 = vadd.f32 %v1886, %v2174
      %v2176 = vpop.f32.mrf.mxu0
      %v2177 = vpop.f32.mrf.mxu0
      %v2178 = vadd.f32 %v1889, %v2177
      %v2179 = vpop.f32.mrf.mxu0
      %2180 = vmatprep.mubr.bf16.mxu0 0
      %2181 = vmatmul.mubr.bf16.gmra.mxu0 %v1470
      %v2182 = vpop.f32.mrf.mxu0
      %v2183 = vadd.f32 %v1894, %v2182
      %v2184 = vpop.f32.mrf.mxu0
      %v2185 = vpop.f32.mrf.mxu0
      %v2186 = vadd.f32 %v1897, %v2185
      %v2187 = vpop.f32.mrf.mxu0
      %2188 = vmatprep.mubr.bf16.mxu0 0
      %2189 = vmatmul.mubr.bf16.gmra.mxu0 %v1473
      %v2190 = vpop.f32.mrf.mxu0
      %v2191 = vadd.f32 %v1902, %v2190
      %v2192 = vpop.f32.mrf.mxu0
      %v2193 = vpop.f32.mrf.mxu0
      %v2194 = vadd.f32 %v1905, %v2193
      %v2195 = vpop.f32.mrf.mxu0
      %2196 = vmatprep.mubr.bf16.mxu0 0
      %2197 = vmatmul.mubr.bf16.gmra.mxu0 %v1476
      %v2198 = vpop.f32.mrf.mxu0
      %v2199 = vadd.f32 %v1910, %v2198
      %v2200 = vpop.f32.mrf.mxu0
      %v2201 = vpop.f32.mrf.mxu0
      %v2202 = vadd.f32 %v1913, %v2201
      %v2203 = vpop.f32.mrf.mxu0
      %2204 = vmatprep.mubr.bf16.mxu0 0
      %2205 = vmatmul.mubr.bf16.gmra.mxu0 %v1479
      %v2206 = vpop.f32.mrf.mxu0
      %v2207 = vadd.f32 %v1918, %v2206
      %v2208 = vpop.f32.mrf.mxu0
      %v2209 = vpop.f32.mrf.mxu0
      %v2210 = vadd.f32 %v1921, %v2209
      %v2211 = vpop.f32.mrf.mxu0
      %2212 = vmatprep.mubr.bf16.mxu0 0
      %2213 = vmatmul.mubr.bf16.gmra.mxu0 %v1482
      %v2214 = vpop.f32.mrf.mxu0
      %v2215 = vadd.f32 %v1926, %v2214
      %v2216 = vpop.f32.mrf.mxu0
      %v2217 = vpop.f32.mrf.mxu0
      %v2218 = vadd.f32 %v1929, %v2217
      %v2219 = vpop.f32.mrf.mxu0
      %2220 = vmatprep.mubr.bf16.mxu0 0
      %2221 = vmatmul.mubr.bf16.gmra.mxu0 %v1485
      %v2222 = vpop.f32.mrf.mxu0
      %v2223 = vadd.f32 %v1934, %v2222
      %v2224 = vpop.f32.mrf.mxu0
      %v2225 = vpop.f32.mrf.mxu0
      %v2226 = vadd.f32 %v1937, %v2225
      %v2227 = vpop.f32.mrf.mxu0
      %2228 = vmatprep.mubr.bf16.mxu0 0
      %2229 = vmatmul.mubr.bf16.gmra.mxu0 %v1488
      %v2230 = vpop.f32.mrf.mxu0
      %v2231 = vadd.f32 %v1942, %v2230
      %v2232 = vpop.f32.mrf.mxu0
      %v2233 = vpop.f32.mrf.mxu0
      %v2234 = vadd.f32 %v1945, %v2233
      %v2235 = vpop.f32.mrf.mxu0
      %2236 = vmatprep.mubr.bf16.mxu0 0
      %2237 = vmatmul.mubr.bf16.gmra.mxu0 %v1491
      %v2238 = vpop.f32.mrf.mxu0
      %v2239 = vadd.f32 %v1950, %v2238
      %v2240 = vpop.f32.mrf.mxu0
      %v2241 = vpop.f32.mrf.mxu0
      %v2242 = vadd.f32 %v1953, %v2241
      %v2243 = vpop.f32.mrf.mxu0
      %2244 = vmatprep.mubr.bf16.mxu0 0
      %2245 = vmatmul.mubr.bf16.gmra.mxu0 %v1494
      %v2246 = vpop.f32.mrf.mxu0
      %v2247 = vadd.f32 %v1958, %v2246
      %v2248 = vpop.f32.mrf.mxu0
      %v2249 = vpop.f32.mrf.mxu0
      %v2250 = vadd.f32 %v1961, %v2249
      %v2251 = vpop.f32.mrf.mxu0
      %2252 = vmatprep.mubr.bf16.mxu0 0
      %2253 = vmatmul.mubr.bf16.gmra.mxu0 %v1497
      %v2254 = vpop.f32.mrf.mxu0
      %v2255 = vadd.f32 %v1966, %v2254
      %v2256 = vpop.f32.mrf.mxu0
      %v2257 = vpop.f32.mrf.mxu0
      %v2258 = vadd.f32 %v1969, %v2257
      %v2259 = vpop.f32.mrf.mxu0
      %2260 = vmatprep.mubr.bf16.mxu0 0
      %2261 = vmatmul.mubr.bf16.gmra.mxu0 %v1500
      %v2262 = vpop.f32.mrf.mxu0
      %v2263 = vadd.f32 %v1974, %v2262
      %v2264 = vpop.f32.mrf.mxu0
      %v2265 = vpop.f32.mrf.mxu0
      %v2266 = vadd.f32 %v1977, %v2265
      %v2267 = vpop.f32.mrf.mxu0
      %2268 = vmatprep.mubr.bf16.mxu0 0
      %2269 = vmatmul.mubr.bf16.gmra.mxu0 %v1503
      %v2270 = vpop.f32.mrf.mxu0
      %v2271 = vadd.f32 %v1982, %v2270
      %v2272 = vpop.f32.mrf.mxu0
      %v2273 = vpop.f32.mrf.mxu0
      %v2274 = vadd.f32 %v1985, %v2273
      %v2275 = vpop.f32.mrf.mxu0
      %2276 = vmatprep.mubr.bf16.mxu0 0
      %2277 = vmatmul.mubr.bf16.gmra.mxu0 %v1506
      %v2278 = vpop.f32.mrf.mxu0
      %v2279 = vadd.f32 %v1990, %v2278
      %v2280 = vpop.f32.mrf.mxu0
      %v2281 = vpop.f32.mrf.mxu0
      %v2282 = vadd.f32 %v1993, %v2281
      %v2283 = vpop.f32.mrf.mxu0
      %2284 = vmatprep.mubr.bf16.mxu0 0
      %2285 = vmatmul.mubr.bf16.gmra.mxu0 %v1509
      %v2286 = vpop.f32.mrf.mxu0
      %v2287 = vadd.f32 %v1998, %v2286
      %v2288 = vpop.f32.mrf.mxu0
      %v2289 = vpop.f32.mrf.mxu0
      %v2290 = vadd.f32 %v2001, %v2289
      %v2291 = vpop.f32.mrf.mxu0
      %2292 = vmatprep.mubr.bf16.mxu0 0
      %2293 = vmatmul.mubr.bf16.gmra.mxu0 %v1512
      %v2294 = vpop.f32.mrf.mxu0
      %v2295 = vadd.f32 %v2006, %v2294
      %v2296 = vpop.f32.mrf.mxu0
      %v2297 = vpop.f32.mrf.mxu0
      %v2298 = vadd.f32 %v2009, %v2297
      %v2299 = vpop.f32.mrf.mxu0
      %2300 = vmatprep.mubr.bf16.mxu0 0
      %2301 = vmatmul.mubr.bf16.gmra.mxu0 %v1515
      %v2302 = vpop.f32.mrf.mxu0
      %v2303 = vadd.f32 %v2014, %v2302
      %v2304 = vpop.f32.mrf.mxu0
      %v2305 = vpop.f32.mrf.mxu0
      %v2306 = vadd.f32 %v2017, %v2305
      %v2307 = vpop.f32.mrf.mxu0
      %2308 = vmatprep.mubr.bf16.mxu0 0
      %2309 = vmatmul.mubr.bf16.gmra.mxu0 %v1518
      %v2310 = vpop.f32.mrf.mxu0
      %v2311 = vadd.f32 %v2022, %v2310
      %v2312 = vpop.f32.mrf.mxu0
      %v2313 = vpop.f32.mrf.mxu0
      %v2314 = vadd.f32 %v2025, %v2313
      %v2315 = vpop.f32.mrf.mxu0
      %2316 = vmatprep.mubr.bf16.mxu0 0
      %2317 = vmatmul.mubr.bf16.gmra.mxu0 %v1521
      %v2318 = vpop.f32.mrf.mxu0
      %v2319 = vadd.f32 %v2030, %v2318
      %v2320 = vpop.f32.mrf.mxu0
      %v2321 = vpop.f32.mrf.mxu0
      %v2322 = vadd.f32 %v2033, %v2321
      %v2323 = vpop.f32.mrf.mxu0
      %2324 = vmatprep.mubr.bf16.mxu0 0
      %2325 = vmatmul.mubr.bf16.gmra.mxu0 %v1524
      %v2326 = vpop.f32.mrf.mxu0
      %v2327 = vadd.f32 %v2038, %v2326
      %v2328 = vpop.f32.mrf.mxu0
      %v2329 = vpop.f32.mrf.mxu0
      %v2330 = vadd.f32 %v2041, %v2329
      %v2331 = vpop.f32.mrf.mxu0
      %2332 = vmatprep.mubr.bf16.mxu0 0
      %2333 = vmatmul.mubr.bf16.gmra.mxu0 %v1527
      %v2334 = vpop.f32.mrf.mxu0
      %v2335 = vadd.f32 %v2046, %v2334
      %v2336 = vpop.f32.mrf.mxu0
      %v2337 = vpop.f32.mrf.mxu0
      %v2338 = vadd.f32 %v2049, %v2337
      %v2339 = vpop.f32.mrf.mxu0
      %2340 = vmatprep.mubr.bf16.mxu0 0
      %2341 = vmatmul.mubr.bf16.gmra.mxu0 %v1530
      %v2342 = vpop.f32.mrf.mxu0
      %v2343 = vadd.f32 %v2054, %v2342
      %v2344 = vpop.f32.mrf.mxu0
      %v2345 = vpop.f32.mrf.mxu0
      %v2346 = vadd.f32 %v2057, %v2345
      %v2347 = vpop.f32.mrf.mxu0
      %2348 = vmatprep.mubr.bf16.mxu0 0
      %2349 = vmatmul.mubr.bf16.gmra.mxu0 %v1533
      %v2350 = vpop.f32.mrf.mxu0
      %v2351 = vadd.f32 %v2062, %v2350
      %v2352 = vpop.f32.mrf.mxu0
      %v2353 = vpop.f32.mrf.mxu0
      %v2354 = vadd.f32 %v2065, %v2353
      %v2355 = vpop.f32.mrf.mxu0
      %2356 = vmatprep.mubr.bf16.mxu0 0
      %2357 = vmatmul.mubr.bf16.gmra.mxu0 %v1536
      %v2358 = vpop.f32.mrf.mxu0
      %v2359 = vadd.f32 %v2070, %v2358
      %v2360 = vpop.f32.mrf.mxu0
      %v2361 = vpop.f32.mrf.mxu0
      %v2362 = vadd.f32 %v2073, %v2361
      %v2363 = vpop.f32.mrf.mxu0
      %2364 = vmatprep.mubr.bf16.mxu0 0
      %2365 = vmatmul.mubr.bf16.gmra.mxu0 %v1539
      %v2366 = vpop.f32.mrf.mxu0
      %v2367 = vadd.f32 %v2078, %v2366
      %v2368 = vpop.f32.mrf.mxu0
      %v2369 = vpop.f32.mrf.mxu0
      %v2370 = vadd.f32 %v2081, %v2369
      %v2371 = vpop.f32.mrf.mxu0
      %2372 = vmatprep.mubr.bf16.mxu0 0
      %2373 = vmatmul.mubr.bf16.gmra.mxu0 %v1542
      %v2374 = vpop.f32.mrf.mxu0
      %v2375 = vadd.f32 %v2086, %v2374
      %v2376 = vpop.f32.mrf.mxu0
      %v2377 = vpop.f32.mrf.mxu0
      %v2378 = vadd.f32 %v2089, %v2377
      %v2379 = vpop.f32.mrf.mxu0
      %2380 = vmatprep.mubr.bf16.mxu0 0
      %2381 = vmatmul.mubr.bf16.gmra.mxu0 %v1545
      %v2382 = vpop.f32.mrf.mxu0
      %v2383 = vadd.f32 %v2094, %v2382
      %v2384 = vpop.f32.mrf.mxu0
      %v2385 = vpop.f32.mrf.mxu0
      %v2386 = vadd.f32 %v2097, %v2385
      %v2387 = vpop.f32.mrf.mxu0
      %2388 = vmatprep.mubr.bf16.mxu0 0
      %2389 = vmatmul.mubr.bf16.gmra.mxu0 %v1548
      %v2390 = vpop.f32.mrf.mxu0
      %v2391 = vadd.f32 %v2102, %v2390
      %v2392 = vpop.f32.mrf.mxu0
      %v2393 = vpop.f32.mrf.mxu0
      %v2394 = vadd.f32 %v2105, %v2393
      %v2395 = vpop.f32.mrf.mxu0
      %2396 = vmatprep.mubr.bf16.mxu0 0
      %2397 = vmatmul.mubr.bf16.gmra.mxu0 %v1551
      %v2398 = vpop.f32.mrf.mxu0
      %v2399 = vadd.f32 %v2110, %v2398
      %v2400 = vpop.f32.mrf.mxu0
      %v2401 = vpop.f32.mrf.mxu0
      %v2402 = vadd.f32 %v2113, %v2401
      %v2403 = vpop.f32.mrf.mxu0
      %2404 = vmatprep.mubr.bf16.mxu0 0
      %2405 = vmatmul.mubr.bf16.gmra.mxu0 %v1554
      %v2406 = vpop.f32.mrf.mxu0
      %v2407 = vadd.f32 %v2118, %v2406
      %v2408 = vpop.f32.mrf.mxu0
      %v2409 = vpop.f32.mrf.mxu0
      %v2410 = vadd.f32 %v2121, %v2409
      %v2411 = vpop.f32.mrf.mxu0
      %2412 = vmatprep.mubr.bf16.mxu0 0
      %2413 = vmatmul.mubr.bf16.gmra.mxu0 %v1557
      %v2414 = vpop.f32.mrf.mxu0
      %v2415 = vadd.f32 %v2126, %v2414
      %v2416 = vpop.f32.mrf.mxu0
      %v2417 = vpop.f32.mrf.mxu0
      %v2418 = vadd.f32 %v2129, %v2417
      %v2419 = vpop.f32.mrf.mxu0
      %2420 = vmatprep.mubr.bf16.mxu0 0
      %2421 = vmatmul.mubr.bf16.gmra.mxu0 %v1560
      %v2422 = vpop.f32.mrf.mxu0
      %v2423 = vadd.f32 %v2134, %v2422
      %v2424 = vpop.f32.mrf.mxu0
      %v2425 = vpop.f32.mrf.mxu0
      %v2426 = vadd.f32 %v2137, %v2425
      %v2427 = vpop.f32.mrf.mxu0
      %2428 = vdwg.mxu0
      %v2429 = vmax.f32 %v2175, 0.0
      %v2430 = vmax.f32 %v2178, 0.0
      %v2431 = vmax.f32 %v2183, 0.0
      %v2432 = vmax.f32 %v2186, 0.0
      %v2433 = vmax.f32 %v2191, 0.0
      %v2434 = vmax.f32 %v2194, 0.0
      %v2435 = vmax.f32 %v2199, 0.0
      %v2436 = vmax.f32 %v2202, 0.0
      %v2437 = vmax.f32 %v2207, 0.0
      %v2438 = vmax.f32 %v2210, 0.0
      %v2439 = vmax.f32 %v2215, 0.0
      %v2440 = vmax.f32 %v2218, 0.0
      %v2441 = vmax.f32 %v2223, 0.0
      %v2442 = vmax.f32 %v2226, 0.0
      %v2443 = vmax.f32 %v2231, 0.0
      %v2444 = vmax.f32 %v2234, 0.0
      %v2445 = vmax.f32 %v2239, 0.0
      %v2446 = vmax.f32 %v2242, 0.0
      %v2447 = vmax.f32 %v2247, 0.0
      %v2448 = vmax.f32 %v2250, 0.0
      %v2449 = vmax.f32 %v2255, 0.0
      %v2450 = vmax.f32 %v2258, 0.0
      %v2451 = vmax.f32 %v2263, 0.0
      %v2452 = vmax.f32 %v2266, 0.0
      %v2453 = vmax.f32 %v2271, 0.0
      %v2454 = vmax.f32 %v2274, 0.0
      %v2455 = vmax.f32 %v2279, 0.0
      %v2456 = vmax.f32 %v2282, 0.0
      %v2457 = vmax.f32 %v2287, 0.0
      %v2458 = vmax.f32 %v2290, 0.0
      %v2459 = vmax.f32 %v2295, 0.0
      %v2460 = vmax.f32 %v2298, 0.0
      %v2461 = vmax.f32 %v2303, 0.0
      %v2462 = vmax.f32 %v2306, 0.0
      %v2463 = vmax.f32 %v2311, 0.0
      %v2464 = vmax.f32 %v2314, 0.0
      %v2465 = vmax.f32 %v2319, 0.0
      %v2466 = vmax.f32 %v2322, 0.0
      %v2467 = vmax.f32 %v2327, 0.0
      %v2468 = vmax.f32 %v2330, 0.0
      %v2469 = vmax.f32 %v2335, 0.0
      %v2470 = vmax.f32 %v2338, 0.0
      %v2471 = vmax.f32 %v2343, 0.0
      %v2472 = vmax.f32 %v2346, 0.0
      %v2473 = vmax.f32 %v2351, 0.0
      %v2474 = vmax.f32 %v2354, 0.0
      %v2475 = vmax.f32 %v2359, 0.0
      %v2476 = vmax.f32 %v2362, 0.0
      %v2477 = vmax.f32 %v2367, 0.0
      %v2478 = vmax.f32 %v2370, 0.0
      %v2479 = vmax.f32 %v2375, 0.0
      %v2480 = vmax.f32 %v2378, 0.0
      %v2481 = vmax.f32 %v2383, 0.0
      %v2482 = vmax.f32 %v2386, 0.0
      %v2483 = vmax.f32 %v2391, 0.0
      %v2484 = vmax.f32 %v2394, 0.0
      %v2485 = vmax.f32 %v2399, 0.0
      %v2486 = vmax.f32 %v2402, 0.0
      %v2487 = vmax.f32 %v2407, 0.0
      %v2488 = vmax.f32 %v2410, 0.0
      %v2489 = vmax.f32 %v2415, 0.0
      %v2490 = vmax.f32 %v2418, 0.0
      %v2491 = vmax.f32 %v2423, 0.0
      %v2492 = vmax.f32 %v2426, 0.0
      %2493 = vst [vmem:[%s175] sm:$0xff] %v2429
      %2494 = vst [vmem:[%s175 + $0x8] sm:$0xff] %v2430
      %2495 = vst [vmem:[%s175 + $0x10] sm:$0xff] %v2431
      %2496 = vst [vmem:[%s175 + $0x18] sm:$0xff] %v2432
      %2497 = vst [vmem:[%s175 + $0x20] sm:$0xff] %v2433
      %2498 = vst [vmem:[%s175 + $0x28] sm:$0xff] %v2434
      %2499 = vst [vmem:[%s175 + $0x30] sm:$0xff] %v2435
      %2500 = vst [vmem:[%s175 + $0x38] sm:$0xff] %v2436
      %2501 = vst [vmem:[%s175 + $0x40] sm:$0xff] %v2437
      %2502 = vst [vmem:[%s175 + $0x48] sm:$0xff] %v2438
      %2503 = vst [vmem:[%s175 + $0x50] sm:$0xff] %v2439
      %2504 = vst [vmem:[%s175 + $0x58] sm:$0xff] %v2440
      %2505 = vst [vmem:[%s175 + $0x60] sm:$0xff] %v2441
      %2506 = vst [vmem:[%s175 + $0x68] sm:$0xff] %v2442
      %2507 = vst [vmem:[%s175 + $0x70] sm:$0xff] %v2443
      %2508 = vst [vmem:[%s175 + $0x78] sm:$0xff] %v2444
      %2509 = vst [vmem:[%s175 + $0x80] sm:$0xff] %v2445
      %2510 = vst [vmem:[%s175 + $0x88] sm:$0xff] %v2446
      %2511 = vst [vmem:[%s175 + $0x90] sm:$0xff] %v2447
      %2512 = vst [vmem:[%s175 + $0x98] sm:$0xff] %v2448
      %2513 = vst [vmem:[%s175 + $0xa0] sm:$0xff] %v2449
      %2514 = vst [vmem:[%s175 + $0xa8] sm:$0xff] %v2450
      %2515 = vst [vmem:[%s175 + $0xb0] sm:$0xff] %v2451
      %2516 = vst [vmem:[%s175 + $0xb8] sm:$0xff] %v2452
      %2517 = vst [vmem:[%s175 + $0xc0] sm:$0xff] %v2453
      %2518 = vst [vmem:[%s175 + $0xc8] sm:$0xff] %v2454
      %2519 = vst [vmem:[%s175 + $0xd0] sm:$0xff] %v2455
      %2520 = vst [vmem:[%s175 + $0xd8] sm:$0xff] %v2456
      %2521 = vst [vmem:[%s175 + $0xe0] sm:$0xff] %v2457
      %2522 = vst [vmem:[%s175 + $0xe8] sm:$0xff] %v2458
      %2523 = vst [vmem:[%s175 + $0xf0] sm:$0xff] %v2459
      %2524 = vst [vmem:[%s175 + $0xf8] sm:$0xff] %v2460
      %2525 = vst [vmem:[%s175 + $0x100] sm:$0xff] %v2461
      %2526 = vst [vmem:[%s175 + $0x108] sm:$0xff] %v2462
      %2527 = vst [vmem:[%s175 + $0x110] sm:$0xff] %v2463
      %2528 = vst [vmem:[%s175 + $0x118] sm:$0xff] %v2464
      %2529 = vst [vmem:[%s175 + $0x120] sm:$0xff] %v2465
      %2530 = vst [vmem:[%s175 + $0x128] sm:$0xff] %v2466
      %2531 = vst [vmem:[%s175 + $0x130] sm:$0xff] %v2467
      %2532 = vst [vmem:[%s175 + $0x138] sm:$0xff] %v2468
      %2533 = vst [vmem:[%s175 + $0x140] sm:$0xff] %v2469
      %2534 = vst [vmem:[%s175 + $0x148] sm:$0xff] %v2470
      %2535 = vst [vmem:[%s175 + $0x150] sm:$0xff] %v2471
      %2536 = vst [vmem:[%s175 + $0x158] sm:$0xff] %v2472
      %2537 = vst [vmem:[%s175 + $0x160] sm:$0xff] %v2473
      %2538 = vst [vmem:[%s175 + $0x168] sm:$0xff] %v2474
      %2539 = vst [vmem:[%s175 + $0x170] sm:$0xff] %v2475
      %2540 = vst [vmem:[%s175 + $0x178] sm:$0xff] %v2476
      %2541 = vst [vmem:[%s175 + $0x180] sm:$0xff] %v2477
      %2542 = vst [vmem:[%s175 + $0x188] sm:$0xff] %v2478
      %2543 = vst [vmem:[%s175 + $0x190] sm:$0xff] %v2479
      %2544 = vst [vmem:[%s175 + $0x198] sm:$0xff] %v2480
      %2545 = vst [vmem:[%s175 + $0x1a0] sm:$0xff] %v2481
      %2546 = vst [vmem:[%s175 + $0x1a8] sm:$0xff] %v2482
      %2547 = vst [vmem:[%s175 + $0x1b0] sm:$0xff] %v2483
      %2548 = vst [vmem:[%s175 + $0x1b8] sm:$0xff] %v2484
      %2549 = vst [vmem:[%s175 + $0x1c0] sm:$0xff] %v2485
      %2550 = vst [vmem:[%s175 + $0x1c8] sm:$0xff] %v2486
      %2551 = vst [vmem:[%s175 + $0x1d0] sm:$0xff] %v2487
      %2552 = vst [vmem:[%s175 + $0x1d8] sm:$0xff] %v2488
      %2553 = vst [vmem:[%s175 + $0x1e0] sm:$0xff] %v2489
      %2554 = vst [vmem:[%s175 + $0x1e8] sm:$0xff] %v2490
      %2555 = vst [vmem:[%s175 + $0x1f0] sm:$0xff] %v2491
      %2556 = vst [vmem:[%s175 + $0x1f8] sm:$0xff] %v2492
      %s2557 = smul.u32 64, %s14
      %p2558 = scmp.lt.s32.totalorder %s2557, 255
      %s2559 = scalar_select %p2558, %s2557, 255
      %s2560 = smul.addr %s2559, 8
      %s2561 = scalar_lea.vmem %s3, %s2560
      // Predicated region
      $region33: #{_lambda_.18} parent=31 // pred_check
        %p2562 = pneg %p100
      $region34: #{_lambda_.18} parent=31 // pred_check_branch
        %2564 = sbr.rel (%p2562) target = $region36
      $region35: #{_lambda_.18} parent=31 // pred_region
        %s2565 = smul.u32 64, %s14
      $region36: #{_lambda_.18} parent=31 // pred_fallthru
        _
    $region32: #{_lambda_.18} parent=5 // pred_fallthru
      _
    %p2566 = scmp.le.s32.totalorder 2, %s9
    // Predicated region
    $region37: #{_lambda_.18} parent=5 // pred_check
      %p2567 = pneg %p2566
    $region38: #{_lambda_.18} parent=5 // pred_check_branch
      %2569 = sbr.rel (%p2567) target = $region40
    $region39: #{_lambda_.18} parent=5 // pred_region
      %s2570 = ssub.s32 %s9, 2
      // Predicated region
      $region41: #{_lambda_.18} parent=39 // pred_check
        %p2571 = pneg %p106
      $region42: #{_lambda_.18} parent=39 // pred_check_branch
        %2573 = sbr.rel (%p2571) target = $region44
      $region43: #{_lambda_.18} parent=39 // pred_region
        %s2574 = smul.u32 64, %s15
        %p2575 = scmp.lt.s32.totalorder %s2574, 255
        %s2576 = scalar_select %p2575, %s2574, 255
        %s2577 = smul.addr %s2576, 8
        %s2578 = scalar_lea.vmem %s3, %s2577
      $region44: #{_lambda_.18} parent=39 // pred_fallthru
        _
    $region40: #{_lambda_.18} parent=5 // pred_fallthru
      _
  $region6: #{_lambda_.18} parent=0 // loop_footer
    %s13 = sadd.s32 1, %s9
  $region7: #{_lambda_.18} parent=0 // loop_footer_branch
    %8 = sbr.rel target = $region3
  $region8: #{_lambda_.18} parent=0 // loop_exit
    _

// kernel: _lambda_.17
$region0: #{_lambda_.17}
  #allocation0 [shape = 'u32[]', space=smem, size = 0x4, offset = 0x4, fixed_abs, tag = 'smem constant byte address 0x4 - core index']
  #allocation1 [shape = 'u32[144,128]{1,0:T(1,128)}', space=vmem, size = 0x12000, scoped, tag = 'internal scratch']
  %s0 = inlined_call_operand.vmem [shape: bf16[2048,288], index: 0, kind: input, shape index: {}]
  %s1 = inlined_call_operand.vmem [shape: bf16[288,128], index: 1, kind: input, shape index: {}]
  %s2 = inlined_call_operand.vmem [shape: f32[1,128], index: 2, kind: input, shape index: {}]
  %s3 = inlined_call_operand.vmem [shape: f32[2048,128], index: 3, kind: output, shape index: {}]
  %s4 = sld [smem:[#allocation0]]
  $region45: #{_lambda_.17} parent=0
    _
  %s6 = ssub.s32 1, %s4
  %s7 = scalar_select 0, %s6, %s4
  loop: start=0, step=1, limit=6
  $region2: #{_lambda_.17} parent=0 // loop_pre_header
    _
  $region3: #{_lambda_.17} parent=0 // loop_header
    %s9 = sphi 0, %s13
    %p10 = scmp.ge.s32.totalorder %s9, 6
    %s19 = sphi 0, %s21
    %s22 = sphi 0, %s19
    %s23 = sphi 0, %s22
    %s39 = sphi 0, %s23
    %s43 = sphi 0, %s43
    %s45 = sphi 0, %s43
    %s46 = sphi 0, %s45
    %s60 = sphi 0, %s46
    %s64 = sphi 0, %s64
    %s66 = sphi 0, %s64
    %s67 = sphi 0, %s66
    %s81 = sphi 0, %s67
    %s87 = sphi 0, %s89
    %s90 = sphi 0, %s87
    %s91 = sphi 0, %s90
    %s107 = sphi 0, %s91
  $region4: #{_lambda_.17} parent=0 // loop_header_branch
    %12 = sbr.rel (%p10) target = $region8
  $region5: #{_lambda_.17} parent=0 // loop_body
    %s14 = ssub.s32 %s9, 1
    %s15 = ssub.s32 %s9, 2
    %s16 = sadd.s32 %s9, 1
    %s17 = ssub.s32 %s9, %s16
    %p18 = scmp.eq.s32.totalorder %s17, 0
    %s20 = sadd.s32 %s19, 1
    %s21 = scalar_select %p18, %s19, %s20
    %p24 = pneg %p18
    %p25 = scmp.eq.s32.totalorder %s9, 3
    %p26 = por %p24, %p25
    %p27 = scmp.ne.s32.totalorder %s19, %s22
    %p28 = scmp.eq.s32.totalorder %s9, 0
    %p29 = por %p27, %p28
    %p30 = scmp.ne.s32.totalorder %s19, %s22
    %p31 = scmp.eq.s32.totalorder %s14, 3
    %p32 = por %p30, %p31
    %p33 = scmp.ne.s32.totalorder %s22, %s23
    %p34 = scmp.eq.s32.totalorder %s14, 0
    %p35 = por %p33, %p34
    %p36 = scmp.ne.s32.totalorder %s22, %s23
    %p37 = scmp.eq.s32.totalorder %s15, 3
    %p38 = por %p36, %p37
    %p40 = scmp.ne.s32.totalorder %s23, %s39
    %p41 = scmp.eq.s32.totalorder %s15, 0
    %p42 = por %p40, %p41
    %s44 = sadd.s32 %s43, 1
    %p47 = scmp.eq.s32.totalorder %s9, 3
    %p48 = scmp.ne.s32.totalorder %s43, %s45
    %p49 = scmp.eq.s32.totalorder %s9, 0
    %p50 = por %p48, %p49
    %p51 = scmp.ne.s32.totalorder %s43, %s45
    %p52 = scmp.eq.s32.totalorder %s14, 3
    %p53 = por %p51, %p52
    %p54 = scmp.ne.s32.totalorder %s45, %s46
    %p55 = scmp.eq.s32.totalorder %s14, 0
    %p56 = por %p54, %p55
    %p57 = scmp.ne.s32.totalorder %s45, %s46
    %p58 = scmp.eq.s32.totalorder %s15, 3
    %p59 = por %p57, %p58
    %p61 = scmp.ne.s32.totalorder %s46, %s60
    %p62 = scmp.eq.s32.totalorder %s15, 0
    %p63 = por %p61, %p62
    %s65 = sadd.s32 %s64, 1
    %p68 = scmp.eq.s32.totalorder %s9, 3
    %p69 = scmp.ne.s32.totalorder %s64, %s66
    %p70 = scmp.eq.s32.totalorder %s9, 0
    %p71 = por %p69, %p70
    %p72 = scmp.ne.s32.totalorder %s64, %s66
    %p73 = scmp.eq.s32.totalorder %s14, 3
    %p74 = por %p72, %p73
    %p75 = scmp.ne.s32.totalorder %s66, %s67
    %p76 = scmp.eq.s32.totalorder %s14, 0
    %p77 = por %p75, %p76
    %p78 = scmp.ne.s32.totalorder %s66, %s67
    %p79 = scmp.eq.s32.totalorder %s15, 3
    %p80 = por %p78, %p79
    %p82 = scmp.ne.s32.totalorder %s67, %s81
    %p83 = scmp.eq.s32.totalorder %s15, 0
    %p84 = por %p82, %p83
    %s85 = ssub.s32 %s9, %s16
    %p86 = scmp.eq.s32.totalorder %s85, 0
    %s88 = sadd.s32 %s87, 1
    %s89 = scalar_select %p86, %s87, %s88
    %p92 = pneg %p86
    %p93 = scmp.eq.s32.totalorder %s9, 3
    %p94 = por %p92, %p93
    %p95 = scmp.ne.s32.totalorder %s87, %s90
    %p96 = scmp.eq.s32.totalorder %s9, 0
    %p97 = por %p95, %p96
    %p98 = scmp.ne.s32.totalorder %s87, %s90
    %p99 = scmp.eq.s32.totalorder %s14, 3
    %p100 = por %p98, %p99
    %p101 = scmp.ne.s32.totalorder %s90, %s91
    %p102 = scmp.eq.s32.totalorder %s14, 0
    %p103 = por %p101, %p102
    %p104 = scmp.ne.s32.totalorder %s90, %s91
    %p105 = scmp.eq.s32.totalorder %s15, 3
    %p106 = por %p104, %p105
    %p108 = scmp.ne.s32.totalorder %s91, %s107
    %p109 = scmp.eq.s32.totalorder %s15, 0
    %p110 = por %p108, %p109
    %p111 = scmp.le.s32.totalorder 1, %s9
    %p112 = scmp.lt.s32.totalorder %s9, 5
    %p113 = pnand %p111, %p112
    %p114 = pneg %p113
    // Predicated region
    $region9: #{_lambda_.17} parent=5 // pred_check
      _
    $region10: #{_lambda_.17} parent=5 // pred_check_branch
      %116 = sbr.rel (%p113) target = $region12
    $region11: #{_lambda_.17} parent=5 // pred_region
      %s117 = ssub.s32 %s9, 1
      // Predicated region
      $region13: #{_lambda_.17} parent=11 // pred_check
        %p118 = pneg %p56
      $region14: #{_lambda_.17} parent=11 // pred_check_branch
        %120 = sbr.rel (%p118) target = $region16
      $region15: #{_lambda_.17} parent=11 // pred_region
        _
      $region16: #{_lambda_.17} parent=11 // pred_fallthru
        _
      // Predicated region
      $region17: #{_lambda_.17} parent=11 // pred_check
        %p121 = pneg %p77
      $region18: #{_lambda_.17} parent=11 // pred_check_branch
        %123 = sbr.rel (%p121) target = $region20
      $region19: #{_lambda_.17} parent=11 // pred_region
        _
      $region20: #{_lambda_.17} parent=11 // pred_fallthru
        _
    $region12: #{_lambda_.17} parent=5 // pred_fallthru
      _
    %p124 = scmp.lt.s32.totalorder %s9, 4
    // Predicated region
    $region21: #{_lambda_.17} parent=5 // pred_check
      %p125 = pneg %p124
    $region22: #{_lambda_.17} parent=5 // pred_check_branch
      %127 = sbr.rel (%p125) target = $region24
    $region23: #{_lambda_.17} parent=5 // pred_region
      // Predicated region
      $region25: #{_lambda_.17} parent=23 // pred_check
        %p128 = pneg %p29
      $region26: #{_lambda_.17} parent=23 // pred_check_branch
        %130 = sbr.rel (%p128) target = $region28
      $region27: #{_lambda_.17} parent=23 // pred_region
        %s131 = smul.u32 64, %s9
        %p132 = scmp.lt.s32.totalorder %s131, 255
        %s133 = scalar_select %p132, %s131, 255
        %s134 = smul.addr %s133, 3
        %s135 = smul.addr %s134, 4
        %s136 = scalar_lea.vmem %s0, %s135
        %s137 = smul.u32 64, %s9
      $region28: #{_lambda_.17} parent=23 // pred_fallthru
        _
    $region24: #{_lambda_.17} parent=5 // pred_fallthru
      _
    %p138 = scmp.le.s32.totalorder 1, %s9
    %p139 = scmp.lt.s32.totalorder %s9, 5
    %p140 = pnand %p138, %p139
    %p141 = pneg %p140
    // Predicated region
    $region29: #{_lambda_.17} parent=5 // pred_check
      _
    $region30: #{_lambda_.17} parent=5 // pred_check_branch
      %143 = sbr.rel (%p140) target = $region32
    $region31: #{_lambda_.17} parent=5 // pred_region
      %s144 = ssub.s32 %s9, 1
      %s145 = smul.u32 64, %s14
      %p146 = scmp.lt.s32.totalorder %s145, 255
      %s147 = scalar_select %p146, %s145, 255
      %s148 = smul.addr %s147, 3
      %s149 = smul.addr %s148, 4
      %s150 = scalar_lea.vmem %s0, %s149
      %p151 = pneg %p35
      %p152 = pneg %p32
      %p153 = pneg %p56
      %p154 = pneg %p53
      %p155 = pneg %p77
      %p156 = pneg %p74
      %p157 = pneg %p103
      %p158 = pneg %p100
      %s159 = smul.u32 64, %s14
      %p160 = scmp.lt.s32.totalorder %s159, 255
      %s161 = scalar_select %p160, %s159, 255
      %s162 = smul.addr %s161, 8
      %s163 = scalar_lea.vmem %s3, %s162
      %s164 = smul.u32 64, %s14
      %p165 = scmp.lt.s32.totalorder %s164, 255
      %s166 = scalar_select %p165, %s164, 255
      %s167 = smul.addr %s166, 3
      %s168 = smul.addr %s167, 4
      %s169 = scalar_lea.vmem %s0, %s168
      %s170 = smul.u32 64, %s14
      %s171 = smul.u32 64, %s14
      %p172 = scmp.lt.s32.totalorder %s171, 255
      %s173 = scalar_select %p172, %s171, 255
      %s174 = smul.addr %s173, 8
      %s175 = scalar_lea.vmem %s3, %s174
      %s176 = smul.u32 64, %s14
      %v178 = vld [vmem:[%s169] sm:$0xff]
      %v179 = vld [vmem:[%s169 + $0x8] sm:$0xf]
      %v180 = vld [vmem:[%s169 + $0xc] sm:$0xff]
      %v181 = vld [vmem:[%s169 + $0x14] sm:$0xf]
      %v182 = vld [vmem:[%s169 + $0x18] sm:$0xff]
      %v183 = vld [vmem:[%s169 + $0x20] sm:$0xf]
      %v184 = vld [vmem:[%s169 + $0x24] sm:$0xff]
      %v185 = vld [vmem:[%s169 + $0x2c] sm:$0xf]
      %v186 = vld [vmem:[%s169 + $0x30] sm:$0xff]
      %v187 = vld [vmem:[%s169 + $0x38] sm:$0xf]
      %v188 = vld [vmem:[%s169 + $0x3c] sm:$0xff]
      %v189 = vld [vmem:[%s169 + $0x44] sm:$0xf]
      %v190 = vld [vmem:[%s169 + $0x48] sm:$0xff]
      %v191 = vld [vmem:[%s169 + $0x50] sm:$0xf]
      %v192 = vld [vmem:[%s169 + $0x54] sm:$0xff]
      %v193 = vld [vmem:[%s169 + $0x5c] sm:$0xf]
      %v194 = vld [vmem:[%s169 + $0x60] sm:$0xff]
      %v195 = vld [vmem:[%s169 + $0x68] sm:$0xf]
      %v196 = vld [vmem:[%s169 + $0x6c] sm:$0xff]
      %v197 = vld [vmem:[%s169 + $0x74] sm:$0xf]
      %v198 = vld [vmem:[%s169 + $0x78] sm:$0xff]
      %v199 = vld [vmem:[%s169 + $0x80] sm:$0xf]
      %v200 = vld [vmem:[%s169 + $0x84] sm:$0xff]
      %v201 = vld [vmem:[%s169 + $0x8c] sm:$0xf]
      %v202 = vld [vmem:[%s169 + $0x90] sm:$0xff]
      %v203 = vld [vmem:[%s169 + $0x98] sm:$0xf]
      %v204 = vld [vmem:[%s169 + $0x9c] sm:$0xff]
      %v205 = vld [vmem:[%s169 + $0xa4] sm:$0xf]
      %v206 = vld [vmem:[%s169 + $0xa8] sm:$0xff]
      %v207 = vld [vmem:[%s169 + $0xb0] sm:$0xf]
      %v208 = vld [vmem:[%s169 + $0xb4] sm:$0xff]
      %v209 = vld [vmem:[%s169 + $0xbc] sm:$0xf]
      %v210 = vld [vmem:[%s169 + $0xc0] sm:$0xff]
      %v211 = vld [vmem:[%s169 + $0xc8] sm:$0xf]
      %v212 = vld [vmem:[%s169 + $0xcc] sm:$0xff]
      %v213 = vld [vmem:[%s169 + $0xd4] sm:$0xf]
      %v214 = vld [vmem:[%s169 + $0xd8] sm:$0xff]
      %v215 = vld [vmem:[%s169 + $0xe0] sm:$0xf]
      %v216 = vld [vmem:[%s169 + $0xe4] sm:$0xff]
      %v217 = vld [vmem:[%s169 + $0xec] sm:$0xf]
      %v218 = vld [vmem:[%s169 + $0xf0] sm:$0xff]
      %v219 = vld [vmem:[%s169 + $0xf8] sm:$0xf]
      %v220 = vld [vmem:[%s169 + $0xfc] sm:$0xff]
      %v221 = vld [vmem:[%s169 + $0x104] sm:$0xf]
      %v222 = vld [vmem:[%s169 + $0x108] sm:$0xff]
      %v223 = vld [vmem:[%s169 + $0x110] sm:$0xf]
      %v224 = vld [vmem:[%s169 + $0x114] sm:$0xff]
      %v225 = vld [vmem:[%s169 + $0x11c] sm:$0xf]
      %v226 = vld [vmem:[%s169 + $0x120] sm:$0xff]
      %v227 = vld [vmem:[%s169 + $0x128] sm:$0xf]
      %v228 = vld [vmem:[%s169 + $0x12c] sm:$0xff]
      %v229 = vld [vmem:[%s169 + $0x134] sm:$0xf]
      %v230 = vld [vmem:[%s169 + $0x138] sm:$0xff]
      %v231 = vld [vmem:[%s169 + $0x140] sm:$0xf]
      %v232 = vld [vmem:[%s169 + $0x144] sm:$0xff]
      %v233 = vld [vmem:[%s169 + $0x14c] sm:$0xf]
      %v234 = vld [vmem:[%s169 + $0x150] sm:$0xff]
      %v235 = vld [vmem:[%s169 + $0x158] sm:$0xf]
      %v236 = vld [vmem:[%s169 + $0x15c] sm:$0xff]
      %v237 = vld [vmem:[%s169 + $0x164] sm:$0xf]
      %v238 = vld [vmem:[%s169 + $0x168] sm:$0xff]
      %v239 = vld [vmem:[%s169 + $0x170] sm:$0xf]
      %v240 = vld [vmem:[%s169 + $0x174] sm:$0xff]
      %v241 = vld [vmem:[%s169 + $0x17c] sm:$0xf]
      %v242 = vld [vmem:[%s169 + $0x180] sm:$0xff]
      %v243 = vld [vmem:[%s169 + $0x188] sm:$0xf]
      %v244 = vld [vmem:[%s169 + $0x18c] sm:$0xff]
      %v245 = vld [vmem:[%s169 + $0x194] sm:$0xf]
      %v246 = vld [vmem:[%s169 + $0x198] sm:$0xff]
      %v247 = vld [vmem:[%s169 + $0x1a0] sm:$0xf]
      %v248 = vld [vmem:[%s169 + $0x1a4] sm:$0xff]
      %v249 = vld [vmem:[%s169 + $0x1ac] sm:$0xf]
      %v250 = vld [vmem:[%s169 + $0x1b0] sm:$0xff]
      %v251 = vld [vmem:[%s169 + $0x1b8] sm:$0xf]
      %v252 = vld [vmem:[%s169 + $0x1bc] sm:$0xff]
      %v253 = vld [vmem:[%s169 + $0x1c4] sm:$0xf]
      %v254 = vld [vmem:[%s169 + $0x1c8] sm:$0xff]
      %v255 = vld [vmem:[%s169 + $0x1d0] sm:$0xf]
      %v256 = vld [vmem:[%s169 + $0x1d4] sm:$0xff]
      %v257 = vld [vmem:[%s169 + $0x1dc] sm:$0xf]
      %v258 = vld [vmem:[%s169 + $0x1e0] sm:$0xff]
      %v259 = vld [vmem:[%s169 + $0x1e8] sm:$0xf]
      %v260 = vld [vmem:[%s169 + $0x1ec] sm:$0xff]
      %v261 = vld [vmem:[%s169 + $0x1f4] sm:$0xf]
      %v262 = vld [vmem:[%s169 + $0x1f8] sm:$0xff]
      %v263 = vld [vmem:[%s169 + $0x200] sm:$0xf]
      %v264 = vld [vmem:[%s169 + $0x204] sm:$0xff]
      %v265 = vld [vmem:[%s169 + $0x20c] sm:$0xf]
      %v266 = vld [vmem:[%s169 + $0x210] sm:$0xff]
      %v267 = vld [vmem:[%s169 + $0x218] sm:$0xf]
      %v268 = vld [vmem:[%s169 + $0x21c] sm:$0xff]
      %v269 = vld [vmem:[%s169 + $0x224] sm:$0xf]
      %v270 = vld [vmem:[%s169 + $0x228] sm:$0xff]
      %v271 = vld [vmem:[%s169 + $0x230] sm:$0xf]
      %v272 = vld [vmem:[%s169 + $0x234] sm:$0xff]
      %v273 = vld [vmem:[%s169 + $0x23c] sm:$0xf]
      %v274 = vld [vmem:[%s169 + $0x240] sm:$0xff]
      %v275 = vld [vmem:[%s169 + $0x248] sm:$0xf]
      %v276 = vld [vmem:[%s169 + $0x24c] sm:$0xff]
      %v277 = vld [vmem:[%s169 + $0x254] sm:$0xf]
      %v278 = vld [vmem:[%s169 + $0x258] sm:$0xff]
      %v279 = vld [vmem:[%s169 + $0x260] sm:$0xf]
      %v280 = vld [vmem:[%s169 + $0x264] sm:$0xff]
      %v281 = vld [vmem:[%s169 + $0x26c] sm:$0xf]
      %v282 = vld [vmem:[%s169 + $0x270] sm:$0xff]
      %v283 = vld [vmem:[%s169 + $0x278] sm:$0xf]
      %v284 = vld [vmem:[%s169 + $0x27c] sm:$0xff]
      %v285 = vld [vmem:[%s169 + $0x284] sm:$0xf]
      %v286 = vld [vmem:[%s169 + $0x288] sm:$0xff]
      %v287 = vld [vmem:[%s169 + $0x290] sm:$0xf]
      %v288 = vld [vmem:[%s169 + $0x294] sm:$0xff]
      %v289 = vld [vmem:[%s169 + $0x29c] sm:$0xf]
      %v290 = vld [vmem:[%s169 + $0x2a0] sm:$0xff]
      %v291 = vld [vmem:[%s169 + $0x2a8] sm:$0xf]
      %v292 = vld [vmem:[%s169 + $0x2ac] sm:$0xff]
      %v293 = vld [vmem:[%s169 + $0x2b4] sm:$0xf]
      %v294 = vld [vmem:[%s169 + $0x2b8] sm:$0xff]
      %v295 = vld [vmem:[%s169 + $0x2c0] sm:$0xf]
      %v296 = vld [vmem:[%s169 + $0x2c4] sm:$0xff]
      %v297 = vld [vmem:[%s169 + $0x2cc] sm:$0xf]
      %v298 = vld [vmem:[%s169 + $0x2d0] sm:$0xff]
      %v299 = vld [vmem:[%s169 + $0x2d8] sm:$0xf]
      %v300 = vld [vmem:[%s169 + $0x2dc] sm:$0xff]
      %v301 = vld [vmem:[%s169 + $0x2e4] sm:$0xf]
      %v302 = vld [vmem:[%s169 + $0x2e8] sm:$0xff]
      %v303 = vld [vmem:[%s169 + $0x2f0] sm:$0xf]
      %v304 = vld [vmem:[%s169 + $0x2f4] sm:$0xff]
      %v305 = vld [vmem:[%s169 + $0x2fc] sm:$0xf]
      %v306 = vld [vmem:[%s1] sm:$0xf]
      %v307 = vld [vmem:[%s1 + $0x4] sm:$0xf]
      %v308 = vld [vmem:[%s1 + $0x8] sm:$0xf]
      %v309 = vld [vmem:[%s1 + $0xc] sm:$0xf]
      %v310 = vld [vmem:[%s1 + $0x10] sm:$0xf]
      %v311 = vld [vmem:[%s1 + $0x14] sm:$0xf]
      %v312 = vld [vmem:[%s1 + $0x18] sm:$0xf]
      %v313 = vld [vmem:[%s1 + $0x1c] sm:$0xf]
      %v314 = vld [vmem:[%s1 + $0x20] sm:$0xf]
      %v315 = vld [vmem:[%s1 + $0x24] sm:$0xf]
      %v316 = vld [vmem:[%s1 + $0x28] sm:$0xf]
      %v317 = vld [vmem:[%s1 + $0x2c] sm:$0xf]
      %v318 = vld [vmem:[%s1 + $0x30] sm:$0xf]
      %v319 = vld [vmem:[%s1 + $0x34] sm:$0xf]
      %v320 = vld [vmem:[%s1 + $0x38] sm:$0xf]
      %v321 = vld [vmem:[%s1 + $0x3c] sm:$0xf]
      %v322 = vld [vmem:[%s1 + $0x40] sm:$0xf]
      %v323 = vld [vmem:[%s1 + $0x44] sm:$0xf]
      %v324 = vld [vmem:[%s1 + $0x48] sm:$0xf]
      %v325 = vld [vmem:[%s1 + $0x4c] sm:$0xf]
      %v326 = vld [vmem:[%s1 + $0x50] sm:$0xf]
      %v327 = vld [vmem:[%s1 + $0x54] sm:$0xf]
      %v328 = vld [vmem:[%s1 + $0x58] sm:$0xf]
      %v329 = vld [vmem:[%s1 + $0x5c] sm:$0xf]
      %v330 = vld [vmem:[%s1 + $0x60] sm:$0xf]
      %v331 = vld [vmem:[%s1 + $0x64] sm:$0xf]
      %v332 = vld [vmem:[%s1 + $0x68] sm:$0xf]
      %v333 = vld [vmem:[%s1 + $0x6c] sm:$0xf]
      %v334 = vld [vmem:[%s1 + $0x70] sm:$0xf]
      %v335 = vld [vmem:[%s1 + $0x74] sm:$0xf]
      %v336 = vld [vmem:[%s1 + $0x78] sm:$0xf]
      %v337 = vld [vmem:[%s1 + $0x7c] sm:$0xf]
      %v338 = vld [vmem:[%s1 + $0x80] sm:$0xf]
      %v339 = vld [vmem:[%s1 + $0x84] sm:$0xf]
      %v340 = vld [vmem:[%s1 + $0x88] sm:$0xf]
      %v341 = vld [vmem:[%s1 + $0x8c] sm:$0xf]
      %v342 = vld [vmem:[%s2] sm:$0x1]
      %v344 = vlaneseq
      %v345 = vshrl.u32 %v344, 7
      %v346 = vsub.s32 0, %v345
      %v347 = vrot.slane %v342, %v346
      %v477 = vunpack.c.l.b16 %v178
      %v478 = vunpack.c.h.b16 %v178
      %v479 = vunpack.c.l.b16 %v179
      %v480 = vunpack.c.l.b16 %v180
      %v481 = vunpack.c.h.b16 %v180
      %v482 = vunpack.c.l.b16 %v181
      %v483 = vunpack.c.l.b16 %v182
      %v484 = vunpack.c.h.b16 %v182
      %v485 = vunpack.c.l.b16 %v183
      %v486 = vunpack.c.l.b16 %v184
      %v487 = vunpack.c.h.b16 %v184
      %v488 = vunpack.c.l.b16 %v185
      %v489 = vunpack.c.l.b16 %v186
      %v490 = vunpack.c.h.b16 %v186
      %v491 = vunpack.c.l.b16 %v187
      %v492 = vunpack.c.l.b16 %v188
      %v493 = vunpack.c.h.b16 %v188
      %v494 = vunpack.c.l.b16 %v189
      %v495 = vunpack.c.l.b16 %v190
      %v496 = vunpack.c.h.b16 %v190
      %v497 = vunpack.c.l.b16 %v191
      %v498 = vunpack.c.l.b16 %v192
      %v499 = vunpack.c.h.b16 %v192
      %v500 = vunpack.c.l.b16 %v193
      %v501 = vunpack.c.l.b16 %v194
      %v502 = vunpack.c.h.b16 %v194
      %v503 = vunpack.c.l.b16 %v195
      %v504 = vunpack.c.l.b16 %v196
      %v505 = vunpack.c.h.b16 %v196
      %v506 = vunpack.c.l.b16 %v197
      %v507 = vunpack.c.l.b16 %v198
      %v508 = vunpack.c.h.b16 %v198
      %v509 = vunpack.c.l.b16 %v199
      %v510 = vunpack.c.l.b16 %v200
      %v511 = vunpack.c.h.b16 %v200
      %v512 = vunpack.c.l.b16 %v201
      %v513 = vunpack.c.l.b16 %v202
      %v514 = vunpack.c.h.b16 %v202
      %v515 = vunpack.c.l.b16 %v203
      %v516 = vunpack.c.l.b16 %v204
      %v517 = vunpack.c.h.b16 %v204
      %v518 = vunpack.c.l.b16 %v205
      %v519 = vunpack.c.l.b16 %v206
      %v520 = vunpack.c.h.b16 %v206
      %v521 = vunpack.c.l.b16 %v207
      %v522 = vunpack.c.l.b16 %v208
      %v523 = vunpack.c.h.b16 %v208
      %v524 = vunpack.c.l.b16 %v209
      %v525 = vunpack.c.l.b16 %v210
      %v526 = vunpack.c.h.b16 %v210
      %v527 = vunpack.c.l.b16 %v211
      %v528 = vunpack.c.l.b16 %v212
      %v529 = vunpack.c.h.b16 %v212
      %v530 = vunpack.c.l.b16 %v213
      %v531 = vunpack.c.l.b16 %v214
      %v532 = vunpack.c.h.b16 %v214
      %v533 = vunpack.c.l.b16 %v215
      %v534 = vunpack.c.l.b16 %v216
      %v535 = vunpack.c.h.b16 %v216
      %v536 = vunpack.c.l.b16 %v217
      %v537 = vunpack.c.l.b16 %v218
      %v538 = vunpack.c.h.b16 %v218
      %v539 = vunpack.c.l.b16 %v219
      %v540 = vunpack.c.l.b16 %v220
      %v541 = vunpack.c.h.b16 %v220
      %v542 = vunpack.c.l.b16 %v221
      %v543 = vunpack.c.l.b16 %v222
      %v544 = vunpack.c.h.b16 %v222
      %v545 = vunpack.c.l.b16 %v223
      %v546 = vunpack.c.l.b16 %v224
      %v547 = vunpack.c.h.b16 %v224
      %v548 = vunpack.c.l.b16 %v225
      %v549 = vunpack.c.l.b16 %v226
      %v550 = vunpack.c.h.b16 %v226
      %v551 = vunpack.c.l.b16 %v227
      %v552 = vunpack.c.l.b16 %v228
      %v553 = vunpack.c.h.b16 %v228
      %v554 = vunpack.c.l.b16 %v229
      %v555 = vunpack.c.l.b16 %v230
      %v556 = vunpack.c.h.b16 %v230
      %v557 = vunpack.c.l.b16 %v231
      %v558 = vunpack.c.l.b16 %v232
      %v559 = vunpack.c.h.b16 %v232
      %v560 = vunpack.c.l.b16 %v233
      %v561 = vunpack.c.l.b16 %v234
      %v562 = vunpack.c.h.b16 %v234
      %v563 = vunpack.c.l.b16 %v235
      %v564 = vunpack.c.l.b16 %v236
      %v565 = vunpack.c.h.b16 %v236
      %v566 = vunpack.c.l.b16 %v237
      %v567 = vunpack.c.l.b16 %v238
      %v568 = vunpack.c.h.b16 %v238
      %v569 = vunpack.c.l.b16 %v239
      %v570 = vunpack.c.l.b16 %v240
      %v571 = vunpack.c.h.b16 %v240
      %v572 = vunpack.c.l.b16 %v241
      %v573 = vunpack.c.l.b16 %v242
      %v574 = vunpack.c.h.b16 %v242
      %v575 = vunpack.c.l.b16 %v243
      %v576 = vunpack.c.l.b16 %v244
      %v577 = vunpack.c.h.b16 %v244
      %v578 = vunpack.c.l.b16 %v245
      %v579 = vunpack.c.l.b16 %v246
      %v580 = vunpack.c.h.b16 %v246
      %v581 = vunpack.c.l.b16 %v247
      %v582 = vunpack.c.l.b16 %v248
      %v583 = vunpack.c.h.b16 %v248
      %v584 = vunpack.c.l.b16 %v249
      %v585 = vunpack.c.l.b16 %v250
      %v586 = vunpack.c.h.b16 %v250
      %v587 = vunpack.c.l.b16 %v251
      %v588 = vunpack.c.l.b16 %v252
      %v589 = vunpack.c.h.b16 %v252
      %v590 = vunpack.c.l.b16 %v253
      %v591 = vunpack.c.l.b16 %v254
      %v592 = vunpack.c.h.b16 %v254
      %v593 = vunpack.c.l.b16 %v255
      %v594 = vunpack.c.l.b16 %v256
      %v595 = vunpack.c.h.b16 %v256
      %v596 = vunpack.c.l.b16 %v257
      %v597 = vunpack.c.l.b16 %v258
      %v598 = vunpack.c.h.b16 %v258
      %v599 = vunpack.c.l.b16 %v259
      %v600 = vunpack.c.l.b16 %v260
      %v601 = vunpack.c.h.b16 %v260
      %v602 = vunpack.c.l.b16 %v261
      %v603 = vunpack.c.l.b16 %v262
      %v604 = vunpack.c.h.b16 %v262
      %v605 = vunpack.c.l.b16 %v263
      %v606 = vunpack.c.l.b16 %v264
      %v607 = vunpack.c.h.b16 %v264
      %v608 = vunpack.c.l.b16 %v265
      %v609 = vunpack.c.l.b16 %v266
      %v610 = vunpack.c.h.b16 %v266
      %v611 = vunpack.c.l.b16 %v267
      %v612 = vunpack.c.l.b16 %v268
      %v613 = vunpack.c.h.b16 %v268
      %v614 = vunpack.c.l.b16 %v269
      %v615 = vunpack.c.l.b16 %v270
      %v616 = vunpack.c.h.b16 %v270
      %v617 = vunpack.c.l.b16 %v271
      %v618 = vunpack.c.l.b16 %v272
      %v619 = vunpack.c.h.b16 %v272
      %v620 = vunpack.c.l.b16 %v273
      %v621 = vunpack.c.l.b16 %v274
      %v622 = vunpack.c.h.b16 %v274
      %v623 = vunpack.c.l.b16 %v275
      %v624 = vunpack.c.l.b16 %v276
      %v625 = vunpack.c.h.b16 %v276
      %v626 = vunpack.c.l.b16 %v277
      %v627 = vunpack.c.l.b16 %v278
      %v628 = vunpack.c.h.b16 %v278
      %v629 = vunpack.c.l.b16 %v279
      %v630 = vunpack.c.l.b16 %v280
      %v631 = vunpack.c.h.b16 %v280
      %v632 = vunpack.c.l.b16 %v281
      %v633 = vunpack.c.l.b16 %v282
      %v634 = vunpack.c.h.b16 %v282
      %v635 = vunpack.c.l.b16 %v283
      %v636 = vunpack.c.l.b16 %v284
      %v637 = vunpack.c.h.b16 %v284
      %v638 = vunpack.c.l.b16 %v285
      %v639 = vunpack.c.l.b16 %v286
      %v640 = vunpack.c.h.b16 %v286
      %v641 = vunpack.c.l.b16 %v287
      %v642 = vunpack.c.l.b16 %v288
      %v643 = vunpack.c.h.b16 %v288
      %v644 = vunpack.c.l.b16 %v289
      %v645 = vunpack.c.l.b16 %v290
      %v646 = vunpack.c.h.b16 %v290
      %v647 = vunpack.c.l.b16 %v291
      %v648 = vunpack.c.l.b16 %v292
      %v649 = vunpack.c.h.b16 %v292
      %v650 = vunpack.c.l.b16 %v293
      %v651 = vunpack.c.l.b16 %v294
      %v652 = vunpack.c.h.b16 %v294
      %v653 = vunpack.c.l.b16 %v295
      %v654 = vunpack.c.l.b16 %v296
      %v655 = vunpack.c.h.b16 %v296
      %v656 = vunpack.c.l.b16 %v297
      %v657 = vunpack.c.l.b16 %v298
      %v658 = vunpack.c.h.b16 %v298
      %v659 = vunpack.c.l.b16 %v299
      %v660 = vunpack.c.l.b16 %v300
      %v661 = vunpack.c.h.b16 %v300
      %v662 = vunpack.c.l.b16 %v301
      %v663 = vunpack.c.l.b16 %v302
      %v664 = vunpack.c.h.b16 %v302
      %v665 = vunpack.c.l.b16 %v303
      %v666 = vunpack.c.l.b16 %v304
      %v667 = vunpack.c.h.b16 %v304
      %v668 = vunpack.c.l.b16 %v305
      %v669 = vpack.c.b16 %v480, %v477
      %v670 = vpack.c.b16 %v481, %v478
      %v671 = vpack.c.b16 %v482, %v479
      %v672 = vpack.c.b16 %v486, %v483
      %v673 = vpack.c.b16 %v487, %v484
      %v674 = vpack.c.b16 %v488, %v485
      %v675 = vpack.c.b16 %v492, %v489
      %v676 = vpack.c.b16 %v493, %v490
      %v677 = vpack.c.b16 %v494, %v491
      %v678 = vpack.c.b16 %v498, %v495
      %v679 = vpack.c.b16 %v499, %v496
      %v680 = vpack.c.b16 %v500, %v497
      %v681 = vpack.c.b16 %v504, %v501
      %v682 = vpack.c.b16 %v505, %v502
      %v683 = vpack.c.b16 %v506, %v503
      %v684 = vpack.c.b16 %v510, %v507
      %v685 = vpack.c.b16 %v511, %v508
      %v686 = vpack.c.b16 %v512, %v509
      %v687 = vpack.c.b16 %v516, %v513
      %v688 = vpack.c.b16 %v517, %v514
      %v689 = vpack.c.b16 %v518, %v515
      %v690 = vpack.c.b16 %v522, %v519
      %v691 = vpack.c.b16 %v523, %v520
      %v692 = vpack.c.b16 %v524, %v521
      %v693 = vpack.c.b16 %v528, %v525
      %v694 = vpack.c.b16 %v529, %v526
      %v695 = vpack.c.b16 %v530, %v527
      %v696 = vpack.c.b16 %v534, %v531
      %v697 = vpack.c.b16 %v535, %v532
      %v698 = vpack.c.b16 %v536, %v533
      %v699 = vpack.c.b16 %v540, %v537
      %v700 = vpack.c.b16 %v541, %v538
      %v701 = vpack.c.b16 %v542, %v539
      %v702 = vpack.c.b16 %v546, %v543
      %v703 = vpack.c.b16 %v547, %v544
      %v704 = vpack.c.b16 %v548, %v545
      %v705 = vpack.c.b16 %v552, %v549
      %v706 = vpack.c.b16 %v553, %v550
      %v707 = vpack.c.b16 %v554, %v551
      %v708 = vpack.c.b16 %v558, %v555
      %v709 = vpack.c.b16 %v559, %v556
      %v710 = vpack.c.b16 %v560, %v557
      %v711 = vpack.c.b16 %v564, %v561
      %v712 = vpack.c.b16 %v565, %v562
      %v713 = vpack.c.b16 %v566, %v563
      %v714 = vpack.c.b16 %v570, %v567
      %v715 = vpack.c.b16 %v571, %v568
      %v716 = vpack.c.b16 %v572, %v569
      %v717 = vpack.c.b16 %v576, %v573
      %v718 = vpack.c.b16 %v577, %v574
      %v719 = vpack.c.b16 %v578, %v575
      %v720 = vpack.c.b16 %v582, %v579
      %v721 = vpack.c.b16 %v583, %v580
      %v722 = vpack.c.b16 %v584, %v581
      %v723 = vpack.c.b16 %v588, %v585
      %v724 = vpack.c.b16 %v589, %v586
      %v725 = vpack.c.b16 %v590, %v587
      %v726 = vpack.c.b16 %v594, %v591
      %v727 = vpack.c.b16 %v595, %v592
      %v728 = vpack.c.b16 %v596, %v593
      %v729 = vpack.c.b16 %v600, %v597
      %v730 = vpack.c.b16 %v601, %v598
      %v731 = vpack.c.b16 %v602, %v599
      %v732 = vpack.c.b16 %v606, %v603
      %v733 = vpack.c.b16 %v607, %v604
      %v734 = vpack.c.b16 %v608, %v605
      %v735 = vpack.c.b16 %v612, %v609
      %v736 = vpack.c.b16 %v613, %v610
      %v737 = vpack.c.b16 %v614, %v611
      %v738 = vpack.c.b16 %v618, %v615
      %v739 = vpack.c.b16 %v619, %v616
      %v740 = vpack.c.b16 %v620, %v617
      %v741 = vpack.c.b16 %v624, %v621
      %v742 = vpack.c.b16 %v625, %v622
      %v743 = vpack.c.b16 %v626, %v623
      %v744 = vpack.c.b16 %v630, %v627
      %v745 = vpack.c.b16 %v631, %v628
      %v746 = vpack.c.b16 %v632, %v629
      %v747 = vpack.c.b16 %v636, %v633
      %v748 = vpack.c.b16 %v637, %v634
      %v749 = vpack.c.b16 %v638, %v635
      %v750 = vpack.c.b16 %v642, %v639
      %v751 = vpack.c.b16 %v643, %v640
      %v752 = vpack.c.b16 %v644, %v641
      %v753 = vpack.c.b16 %v648, %v645
      %v754 = vpack.c.b16 %v649, %v646
      %v755 = vpack.c.b16 %v650, %v647
      %v756 = vpack.c.b16 %v654, %v651
      %v757 = vpack.c.b16 %v655, %v652
      %v758 = vpack.c.b16 %v656, %v653
      %v759 = vpack.c.b16 %v660, %v657
      %v760 = vpack.c.b16 %v661, %v658
      %v761 = vpack.c.b16 %v662, %v659
      %v762 = vpack.c.b16 %v666, %v663
      %v763 = vpack.c.b16 %v667, %v664
      %v764 = vpack.c.b16 %v668, %v665
      %v865 = vunpack.c.l.b16 %v306
      %v866 = vunpack.c.l.b16 %v307
      %v867 = vunpack.c.l.b16 %v308
      %v868 = vunpack.c.l.b16 %v309
      %v869 = vunpack.c.l.b16 %v310
      %v870 = vunpack.c.l.b16 %v311
      %v871 = vunpack.c.l.b16 %v312
      %v872 = vunpack.c.l.b16 %v313
      %v873 = vunpack.c.l.b16 %v314
      %v874 = vunpack.c.l.b16 %v315
      %v875 = vunpack.c.l.b16 %v316
      %v876 = vunpack.c.l.b16 %v317
      %v877 = vunpack.c.l.b16 %v318
      %v878 = vunpack.c.l.b16 %v319
      %v879 = vunpack.c.l.b16 %v320
      %v880 = vunpack.c.l.b16 %v321
      %v881 = vunpack.c.l.b16 %v322
      %v882 = vunpack.c.l.b16 %v323
      %v883 = vunpack.c.l.b16 %v324
      %v884 = vunpack.c.l.b16 %v325
      %v885 = vunpack.c.l.b16 %v326
      %v886 = vunpack.c.l.b16 %v327
      %v887 = vunpack.c.l.b16 %v328
      %v888 = vunpack.c.l.b16 %v329
      %v889 = vunpack.c.l.b16 %v330
      %v890 = vunpack.c.l.b16 %v331
      %v891 = vunpack.c.l.b16 %v332
      %v892 = vunpack.c.l.b16 %v333
      %v893 = vunpack.c.l.b16 %v334
      %v894 = vunpack.c.l.b16 %v335
      %v895 = vunpack.c.l.b16 %v336
      %v896 = vunpack.c.l.b16 %v337
      %v897 = vunpack.c.l.b16 %v338
      %v898 = vunpack.c.l.b16 %v339
      %v899 = vunpack.c.l.b16 %v340
      %v900 = vunpack.c.l.b16 %v341
      %v901 = vpack.c.b16 %v866, %v865
      %v902 = vpack.c.b16 %v868, %v867
      %v903 = vpack.c.b16 %v870, %v869
      %v904 = vpack.c.b16 %v872, %v871
      %v905 = vpack.c.b16 %v874, %v873
      %v906 = vpack.c.b16 %v876, %v875
      %v907 = vpack.c.b16 %v878, %v877
      %v908 = vpack.c.b16 %v880, %v879
      %v909 = vpack.c.b16 %v882, %v881
      %v910 = vpack.c.b16 %v884, %v883
      %v911 = vpack.c.b16 %v886, %v885
      %v912 = vpack.c.b16 %v888, %v887
      %v913 = vpack.c.b16 %v890, %v889
      %v914 = vpack.c.b16 %v892, %v891
      %v915 = vpack.c.b16 %v894, %v893
      %v916 = vpack.c.b16 %v896, %v895
      %v917 = vpack.c.b16 %v898, %v897
      %v918 = vpack.c.b16 %v900, %v899
      %vm937 = vcmask 261120
      %v939 = vsel %vm937, %v671, 0
      %v942 = vsel %vm937, %v674, 0
      %v945 = vsel %vm937, %v677, 0
      %v948 = vsel %vm937, %v680, 0
      %v951 = vsel %vm937, %v683, 0
      %v954 = vsel %vm937, %v686, 0
      %v957 = vsel %vm937, %v689, 0
      %v960 = vsel %vm937, %v692, 0
      %v963 = vsel %vm937, %v695, 0
      %v966 = vsel %vm937, %v698, 0
      %v969 = vsel %vm937, %v701, 0
      %v972 = vsel %vm937, %v704, 0
      %v975 = vsel %vm937, %v707, 0
      %v978 = vsel %vm937, %v710, 0
      %v981 = vsel %vm937, %v713, 0
      %v984 = vsel %vm937, %v716, 0
      %v987 = vsel %vm937, %v719, 0
      %v990 = vsel %vm937, %v722, 0
      %v993 = vsel %vm937, %v725, 0
      %v996 = vsel %vm937, %v728, 0
      %v999 = vsel %vm937, %v731, 0
      %v1002 = vsel %vm937, %v734, 0
      %v1005 = vsel %vm937, %v737, 0
      %v1008 = vsel %vm937, %v740, 0
      %v1011 = vsel %vm937, %v743, 0
      %v1014 = vsel %vm937, %v746, 0
      %v1017 = vsel %vm937, %v749, 0
      %v1020 = vsel %vm937, %v752, 0
      %v1023 = vsel %vm937, %v755, 0
      %v1026 = vsel %vm937, %v758, 0
      %v1029 = vsel %vm937, %v761, 0
      %v1032 = vsel %vm937, %v764, 0
      %1034 = vmatprep.subr.bf16.mxu0 0
      %1035 = vmatpush1.bf16.msra.mxu0 %v908
      %1036 = vmatprep.subr.bf16.mxu0 0
      %1037 = vmatpush1.bf16.msra.mxu0 %v907
      %1038 = vmatprep.subr.bf16.mxu0 0
      %1039 = vmatpush1.bf16.msra.mxu0 %v906
      %1040 = vmatprep.subr.bf16.mxu0 0
      %1041 = vmatpush1.bf16.msra.mxu0 %v905
      %1042 = vmatprep.subr.bf16.mxu0 0
      %1043 = vmatpush1.bf16.msra.mxu0 %v904
      %1044 = vmatprep.subr.bf16.mxu0 0
      %1045 = vmatpush1.bf16.msra.mxu0 %v903
      %1046 = vmatprep.subr.bf16.mxu0 0
      %1047 = vmatpush1.bf16.msra.mxu0 %v902
      %1048 = vmatprep.subr.bf16.mxu0 0
      %1049 = vmatpush1.bf16.msra.mxu0 %v901
      %1050 = vmatprep.subr.bf16.mxu0 0
      %1051 = vmatpush2.bf16.msra.mxu0 %v916
      %1052 = vmatprep.subr.bf16.mxu0 0
      %1053 = vmatpush2.bf16.msra.mxu0 %v915
      %1054 = vmatprep.subr.bf16.mxu0 0
      %1055 = vmatpush2.bf16.msra.mxu0 %v914
      %1056 = vmatprep.subr.bf16.mxu0 0
      %1057 = vmatpush2.bf16.msra.mxu0 %v913
      %1058 = vmatprep.subr.bf16.mxu0 0
      %1059 = vmatpush2.bf16.msra.mxu0 %v912
      %1060 = vmatprep.subr.bf16.mxu0 0
      %1061 = vmatpush2.bf16.msra.mxu0 %v911
      %1062 = vmatprep.subr.bf16.mxu0 0
      %1063 = vmatpush2.bf16.msra.mxu0 %v910
      %1064 = vmatprep.subr.bf16.mxu0 0
      %1065 = vmatpush2.bf16.msra.mxu0 %v909
      %1066 = vmatprep.mubr.bf16.mxu0 %v670
      %1067 = vmatmul.mubr.bf16.gmra.mxu0 %v669
      %v1068 = vpop.f32.mrf.mxu0
      %v1069 = vadd.f32 %v347, %v1068
      %v1070 = vpop.f32.mrf.mxu0
      %v1071 = vpop.f32.mrf.mxu0
      %v1072 = vadd.f32 %v347, %v1071
      %v1073 = vpop.f32.mrf.mxu0
      %1074 = vmatprep.mubr.bf16.mxu0 %v673
      %1075 = vmatmul.mubr.bf16.gmra.mxu0 %v672
      %v1076 = vpop.f32.mrf.mxu0
      %v1077 = vadd.f32 %v347, %v1076
      %v1078 = vpop.f32.mrf.mxu0
      %v1079 = vpop.f32.mrf.mxu0
      %v1080 = vadd.f32 %v347, %v1079
      %v1081 = vpop.f32.mrf.mxu0
      %1082 = vmatprep.mubr.bf16.mxu0 %v676
      %1083 = vmatmul.mubr.bf16.gmra.mxu0 %v675
      %v1084 = vpop.f32.mrf.mxu0
      %v1085 = vadd.f32 %v347, %v1084
      %v1086 = vpop.f32.mrf.mxu0
      %v1087 = vpop.f32.mrf.mxu0
      %v1088 = vadd.f32 %v347, %v1087
      %v1089 = vpop.f32.mrf.mxu0
      %1090 = vmatprep.mubr.bf16.mxu0 %v679
      %1091 = vmatmul.mubr.bf16.gmra.mxu0 %v678
      %v1092 = vpop.f32.mrf.mxu0
      %v1093 = vadd.f32 %v347, %v1092
      %v1094 = vpop.f32.mrf.mxu0
      %v1095 = vpop.f32.mrf.mxu0
      %v1096 = vadd.f32 %v347, %v1095
      %v1097 = vpop.f32.mrf.mxu0
      %1098 = vmatprep.mubr.bf16.mxu0 %v682
      %1099 = vmatmul.mubr.bf16.gmra.mxu0 %v681
      %v1100 = vpop.f32.mrf.mxu0
      %v1101 = vadd.f32 %v347, %v1100
      %v1102 = vpop.f32.mrf.mxu0
      %v1103 = vpop.f32.mrf.mxu0
      %v1104 = vadd.f32 %v347, %v1103
      %v1105 = vpop.f32.mrf.mxu0
      %1106 = vmatprep.mubr.bf16.mxu0 %v685
      %1107 = vmatmul.mubr.bf16.gmra.mxu0 %v684
      %v1108 = vpop.f32.mrf.mxu0
      %v1109 = vadd.f32 %v347, %v1108
      %v1110 = vpop.f32.mrf.mxu0
      %v1111 = vpop.f32.mrf.mxu0
      %v1112 = vadd.f32 %v347, %v1111
      %v1113 = vpop.f32.mrf.mxu0
      %1114 = vmatprep.mubr.bf16.mxu0 %v688
      %1115 = vmatmul.mubr.bf16.gmra.mxu0 %v687
      %v1116 = vpop.f32.mrf.mxu0
      %v1117 = vadd.f32 %v347, %v1116
      %v1118 = vpop.f32.mrf.mxu0
      %v1119 = vpop.f32.mrf.mxu0
      %v1120 = vadd.f32 %v347, %v1119
      %v1121 = vpop.f32.mrf.mxu0
      %1122 = vmatprep.mubr.bf16.mxu0 %v691
      %1123 = vmatmul.mubr.bf16.gmra.mxu0 %v690
      %v1124 = vpop.f32.mrf.mxu0
      %v1125 = vadd.f32 %v347, %v1124
      %v1126 = vpop.f32.mrf.mxu0
      %v1127 = vpop.f32.mrf.mxu0
      %v1128 = vadd.f32 %v347, %v1127
      %v1129 = vpop.f32.mrf.mxu0
      %1130 = vmatprep.mubr.bf16.mxu0 %v694
      %1131 = vmatmul.mubr.bf16.gmra.mxu0 %v693
      %v1132 = vpop.f32.mrf.mxu0
      %v1133 = vadd.f32 %v347, %v1132
      %v1134 = vpop.f32.mrf.mxu0
      %v1135 = vpop.f32.mrf.mxu0
      %v1136 = vadd.f32 %v347, %v1135
      %v1137 = vpop.f32.mrf.mxu0
      %1138 = vmatprep.mubr.bf16.mxu0 %v697
      %1139 = vmatmul.mubr.bf16.gmra.mxu0 %v696
      %v1140 = vpop.f32.mrf.mxu0
      %v1141 = vadd.f32 %v347, %v1140
      %v1142 = vpop.f32.mrf.mxu0
      %v1143 = vpop.f32.mrf.mxu0
      %v1144 = vadd.f32 %v347, %v1143
      %v1145 = vpop.f32.mrf.mxu0
      %1146 = vmatprep.mubr.bf16.mxu0 %v700
      %1147 = vmatmul.mubr.bf16.gmra.mxu0 %v699
      %v1148 = vpop.f32.mrf.mxu0
      %v1149 = vadd.f32 %v347, %v1148
      %v1150 = vpop.f32.mrf.mxu0
      %v1151 = vpop.f32.mrf.mxu0
      %v1152 = vadd.f32 %v347, %v1151
      %v1153 = vpop.f32.mrf.mxu0
      %1154 = vmatprep.mubr.bf16.mxu0 %v703
      %1155 = vmatmul.mubr.bf16.gmra.mxu0 %v702
      %v1156 = vpop.f32.mrf.mxu0
      %v1157 = vadd.f32 %v347, %v1156
      %v1158 = vpop.f32.mrf.mxu0
      %v1159 = vpop.f32.mrf.mxu0
      %v1160 = vadd.f32 %v347, %v1159
      %v1161 = vpop.f32.mrf.mxu0
      %1162 = vmatprep.mubr.bf16.mxu0 %v706
      %1163 = vmatmul.mubr.bf16.gmra.mxu0 %v705
      %v1164 = vpop.f32.mrf.mxu0
      %v1165 = vadd.f32 %v347, %v1164
      %v1166 = vpop.f32.mrf.mxu0
      %v1167 = vpop.f32.mrf.mxu0
      %v1168 = vadd.f32 %v347, %v1167
      %v1169 = vpop.f32.mrf.mxu0
      %1170 = vmatprep.mubr.bf16.mxu0 %v709
      %1171 = vmatmul.mubr.bf16.gmra.mxu0 %v708
      %v1172 = vpop.f32.mrf.mxu0
      %v1173 = vadd.f32 %v347, %v1172
      %v1174 = vpop.f32.mrf.mxu0
      %v1175 = vpop.f32.mrf.mxu0
      %v1176 = vadd.f32 %v347, %v1175
      %v1177 = vpop.f32.mrf.mxu0
      %1178 = vmatprep.mubr.bf16.mxu0 %v712
      %1179 = vmatmul.mubr.bf16.gmra.mxu0 %v711
      %v1180 = vpop.f32.mrf.mxu0
      %v1181 = vadd.f32 %v347, %v1180
      %v1182 = vpop.f32.mrf.mxu0
      %v1183 = vpop.f32.mrf.mxu0
      %v1184 = vadd.f32 %v347, %v1183
      %v1185 = vpop.f32.mrf.mxu0
      %1186 = vmatprep.mubr.bf16.mxu0 %v715
      %1187 = vmatmul.mubr.bf16.gmra.mxu0 %v714
      %v1188 = vpop.f32.mrf.mxu0
      %v1189 = vadd.f32 %v347, %v1188
      %v1190 = vpop.f32.mrf.mxu0
      %v1191 = vpop.f32.mrf.mxu0
      %v1192 = vadd.f32 %v347, %v1191
      %v1193 = vpop.f32.mrf.mxu0
      %1194 = vmatprep.mubr.bf16.mxu0 %v718
      %1195 = vmatmul.mubr.bf16.gmra.mxu0 %v717
      %v1196 = vpop.f32.mrf.mxu0
      %v1197 = vadd.f32 %v347, %v1196
      %v1198 = vpop.f32.mrf.mxu0
      %v1199 = vpop.f32.mrf.mxu0
      %v1200 = vadd.f32 %v347, %v1199
      %v1201 = vpop.f32.mrf.mxu0
      %1202 = vmatprep.mubr.bf16.mxu0 %v721
      %1203 = vmatmul.mubr.bf16.gmra.mxu0 %v720
      %v1204 = vpop.f32.mrf.mxu0
      %v1205 = vadd.f32 %v347, %v1204
      %v1206 = vpop.f32.mrf.mxu0
      %v1207 = vpop.f32.mrf.mxu0
      %v1208 = vadd.f32 %v347, %v1207
      %v1209 = vpop.f32.mrf.mxu0
      %1210 = vmatprep.mubr.bf16.mxu0 %v724
      %1211 = vmatmul.mubr.bf16.gmra.mxu0 %v723
      %v1212 = vpop.f32.mrf.mxu0
      %v1213 = vadd.f32 %v347, %v1212
      %v1214 = vpop.f32.mrf.mxu0
      %v1215 = vpop.f32.mrf.mxu0
      %v1216 = vadd.f32 %v347, %v1215
      %v1217 = vpop.f32.mrf.mxu0
      %1218 = vmatprep.mubr.bf16.mxu0 %v727
      %1219 = vmatmul.mubr.bf16.gmra.mxu0 %v726
      %v1220 = vpop.f32.mrf.mxu0
      %v1221 = vadd.f32 %v347, %v1220
      %v1222 = vpop.f32.mrf.mxu0
      %v1223 = vpop.f32.mrf.mxu0
      %v1224 = vadd.f32 %v347, %v1223
      %v1225 = vpop.f32.mrf.mxu0
      %1226 = vmatprep.mubr.bf16.mxu0 %v730
      %1227 = vmatmul.mubr.bf16.gmra.mxu0 %v729
      %v1228 = vpop.f32.mrf.mxu0
      %v1229 = vadd.f32 %v347, %v1228
      %v1230 = vpop.f32.mrf.mxu0
      %v1231 = vpop.f32.mrf.mxu0
      %v1232 = vadd.f32 %v347, %v1231
      %v1233 = vpop.f32.mrf.mxu0
      %1234 = vmatprep.mubr.bf16.mxu0 %v733
      %1235 = vmatmul.mubr.bf16.gmra.mxu0 %v732
      %v1236 = vpop.f32.mrf.mxu0
      %v1237 = vadd.f32 %v347, %v1236
      %v1238 = vpop.f32.mrf.mxu0
      %v1239 = vpop.f32.mrf.mxu0
      %v1240 = vadd.f32 %v347, %v1239
      %v1241 = vpop.f32.mrf.mxu0
      %1242 = vmatprep.mubr.bf16.mxu0 %v736
      %1243 = vmatmul.mubr.bf16.gmra.mxu0 %v735
      %v1244 = vpop.f32.mrf.mxu0
      %v1245 = vadd.f32 %v347, %v1244
      %v1246 = vpop.f32.mrf.mxu0
      %v1247 = vpop.f32.mrf.mxu0
      %v1248 = vadd.f32 %v347, %v1247
      %v1249 = vpop.f32.mrf.mxu0
      %1250 = vmatprep.mubr.bf16.mxu0 %v739
      %1251 = vmatmul.mubr.bf16.gmra.mxu0 %v738
      %v1252 = vpop.f32.mrf.mxu0
      %v1253 = vadd.f32 %v347, %v1252
      %v1254 = vpop.f32.mrf.mxu0
      %v1255 = vpop.f32.mrf.mxu0
      %v1256 = vadd.f32 %v347, %v1255
      %v1257 = vpop.f32.mrf.mxu0
      %1258 = vmatprep.mubr.bf16.mxu0 %v742
      %1259 = vmatmul.mubr.bf16.gmra.mxu0 %v741
      %v1260 = vpop.f32.mrf.mxu0
      %v1261 = vadd.f32 %v347, %v1260
      %v1262 = vpop.f32.mrf.mxu0
      %v1263 = vpop.f32.mrf.mxu0
      %v1264 = vadd.f32 %v347, %v1263
      %v1265 = vpop.f32.mrf.mxu0
      %1266 = vmatprep.mubr.bf16.mxu0 %v745
      %1267 = vmatmul.mubr.bf16.gmra.mxu0 %v744
      %v1268 = vpop.f32.mrf.mxu0
      %v1269 = vadd.f32 %v347, %v1268
      %v1270 = vpop.f32.mrf.mxu0
      %v1271 = vpop.f32.mrf.mxu0
      %v1272 = vadd.f32 %v347, %v1271
      %v1273 = vpop.f32.mrf.mxu0
      %1274 = vmatprep.mubr.bf16.mxu0 %v748
      %1275 = vmatmul.mubr.bf16.gmra.mxu0 %v747
      %v1276 = vpop.f32.mrf.mxu0
      %v1277 = vadd.f32 %v347, %v1276
      %v1278 = vpop.f32.mrf.mxu0
      %v1279 = vpop.f32.mrf.mxu0
      %v1280 = vadd.f32 %v347, %v1279
      %v1281 = vpop.f32.mrf.mxu0
      %1282 = vmatprep.mubr.bf16.mxu0 %v751
      %1283 = vmatmul.mubr.bf16.gmra.mxu0 %v750
      %v1284 = vpop.f32.mrf.mxu0
      %v1285 = vadd.f32 %v347, %v1284
      %v1286 = vpop.f32.mrf.mxu0
      %v1287 = vpop.f32.mrf.mxu0
      %v1288 = vadd.f32 %v347, %v1287
      %v1289 = vpop.f32.mrf.mxu0
      %1290 = vmatprep.mubr.bf16.mxu0 %v754
      %1291 = vmatmul.mubr.bf16.gmra.mxu0 %v753
      %v1292 = vpop.f32.mrf.mxu0
      %v1293 = vadd.f32 %v347, %v1292
      %v1294 = vpop.f32.mrf.mxu0
      %v1295 = vpop.f32.mrf.mxu0
      %v1296 = vadd.f32 %v347, %v1295
      %v1297 = vpop.f32.mrf.mxu0
      %1298 = vmatprep.mubr.bf16.mxu0 %v757
      %1299 = vmatmul.mubr.bf16.gmra.mxu0 %v756
      %v1300 = vpop.f32.mrf.mxu0
      %v1301 = vadd.f32 %v347, %v1300
      %v1302 = vpop.f32.mrf.mxu0
      %v1303 = vpop.f32.mrf.mxu0
      %v1304 = vadd.f32 %v347, %v1303
      %v1305 = vpop.f32.mrf.mxu0
      %1306 = vmatprep.mubr.bf16.mxu0 %v760
      %1307 = vmatmul.mubr.bf16.gmra.mxu0 %v759
      %v1308 = vpop.f32.mrf.mxu0
      %v1309 = vadd.f32 %v347, %v1308
      %v1310 = vpop.f32.mrf.mxu0
      %v1311 = vpop.f32.mrf.mxu0
      %v1312 = vadd.f32 %v347, %v1311
      %v1313 = vpop.f32.mrf.mxu0
      %1314 = vmatprep.mubr.bf16.mxu0 %v763
      %1315 = vmatmul.mubr.bf16.gmra.mxu0 %v762
      %v1316 = vpop.f32.mrf.mxu0
      %v1317 = vadd.f32 %v347, %v1316
      %v1318 = vpop.f32.mrf.mxu0
      %v1319 = vpop.f32.mrf.mxu0
      %v1320 = vadd.f32 %v347, %v1319
      %v1321 = vpop.f32.mrf.mxu0
      %1322 = vdwg.mxu0
      %1323 = vmatprep.subr.bf16.mxu0 0
      %1324 = vmatpush1.bf16.msra.mxu0 0
      %1325 = vmatprep.subr.bf16.mxu0 0
      %1326 = vmatpush1.bf16.msra.mxu0 0
      %1327 = vmatprep.subr.bf16.mxu0 0
      %1328 = vmatpush1.bf16.msra.mxu0 0
      %1329 = vmatprep.subr.bf16.mxu0 0
      %1330 = vmatpush1.bf16.msra.mxu0 0
      %1331 = vmatprep.subr.bf16.mxu0 0
      %1332 = vmatpush1.bf16.msra.mxu0 0
      %1333 = vmatprep.subr.bf16.mxu0 0
      %1334 = vmatpush1.bf16.msra.mxu0 0
      %1335 = vmatprep.subr.bf16.mxu0 0
      %1336 = vmatpush1.bf16.msra.mxu0 %v918
      %1337 = vmatprep.subr.bf16.mxu0 0
      %1338 = vmatpush1.bf16.msra.mxu0 %v917
      %1339 = vmatprep.subr.bf16.mxu0 0
      %1340 = vmatpush2.bf16.msra.mxu0 0
      %1341 = vmatprep.subr.bf16.mxu0 0
      %1342 = vmatpush2.bf16.msra.mxu0 0
      %1343 = vmatprep.subr.bf16.mxu0 0
      %1344 = vmatpush2.bf16.msra.mxu0 0
      %1345 = vmatprep.subr.bf16.mxu0 0
      %1346 = vmatpush2.bf16.msra.mxu0 0
      %1347 = vmatprep.subr.bf16.mxu0 0
      %1348 = vmatpush2.bf16.msra.mxu0 0
      %1349 = vmatprep.subr.bf16.mxu0 0
      %1350 = vmatpush2.bf16.msra.mxu0 0
      %1351 = vmatprep.subr.bf16.mxu0 0
      %1352 = vmatpush2.bf16.msra.mxu0 0
      %1353 = vmatprep.subr.bf16.mxu0 0
      %1354 = vmatpush2.bf16.msra.mxu0 0
      %1355 = vmatprep.mubr.bf16.mxu0 0
      %1356 = vmatmul.mubr.bf16.gmra.mxu0 %v939
      %v1357 = vpop.f32.mrf.mxu0
      %v1358 = vadd.f32 %v1069, %v1357
      %v1359 = vpop.f32.mrf.mxu0
      %v1360 = vpop.f32.mrf.mxu0
      %v1361 = vadd.f32 %v1072, %v1360
      %v1362 = vpop.f32.mrf.mxu0
      %1363 = vmatprep.mubr.bf16.mxu0 0
      %1364 = vmatmul.mubr.bf16.gmra.mxu0 %v942
      %v1365 = vpop.f32.mrf.mxu0
      %v1366 = vadd.f32 %v1077, %v1365
      %v1367 = vpop.f32.mrf.mxu0
      %v1368 = vpop.f32.mrf.mxu0
      %v1369 = vadd.f32 %v1080, %v1368
      %v1370 = vpop.f32.mrf.mxu0
      %1371 = vmatprep.mubr.bf16.mxu0 0
      %1372 = vmatmul.mubr.bf16.gmra.mxu0 %v945
      %v1373 = vpop.f32.mrf.mxu0
      %v1374 = vadd.f32 %v1085, %v1373
      %v1375 = vpop.f32.mrf.mxu0
      %v1376 = vpop.f32.mrf.mxu0
      %v1377 = vadd.f32 %v1088, %v1376
      %v1378 = vpop.f32.mrf.mxu0
      %1379 = vmatprep.mubr.bf16.mxu0 0
      %1380 = vmatmul.mubr.bf16.gmra.mxu0 %v948
      %v1381 = vpop.f32.mrf.mxu0
      %v1382 = vadd.f32 %v1093, %v1381
      %v1383 = vpop.f32.mrf.mxu0
      %v1384 = vpop.f32.mrf.mxu0
      %v1385 = vadd.f32 %v1096, %v1384
      %v1386 = vpop.f32.mrf.mxu0
      %1387 = vmatprep.mubr.bf16.mxu0 0
      %1388 = vmatmul.mubr.bf16.gmra.mxu0 %v951
      %v1389 = vpop.f32.mrf.mxu0
      %v1390 = vadd.f32 %v1101, %v1389
      %v1391 = vpop.f32.mrf.mxu0
      %v1392 = vpop.f32.mrf.mxu0
      %v1393 = vadd.f32 %v1104, %v1392
      %v1394 = vpop.f32.mrf.mxu0
      %1395 = vmatprep.mubr.bf16.mxu0 0
      %1396 = vmatmul.mubr.bf16.gmra.mxu0 %v954
      %v1397 = vpop.f32.mrf.mxu0
      %v1398 = vadd.f32 %v1109, %v1397
      %v1399 = vpop.f32.mrf.mxu0
      %v1400 = vpop.f32.mrf.mxu0
      %v1401 = vadd.f32 %v1112, %v1400
      %v1402 = vpop.f32.mrf.mxu0
      %1403 = vmatprep.mubr.bf16.mxu0 0
      %1404 = vmatmul.mubr.bf16.gmra.mxu0 %v957
      %v1405 = vpop.f32.mrf.mxu0
      %v1406 = vadd.f32 %v1117, %v1405
      %v1407 = vpop.f32.mrf.mxu0
      %v1408 = vpop.f32.mrf.mxu0
      %v1409 = vadd.f32 %v1120, %v1408
      %v1410 = vpop.f32.mrf.mxu0
      %1411 = vmatprep.mubr.bf16.mxu0 0
      %1412 = vmatmul.mubr.bf16.gmra.mxu0 %v960
      %v1413 = vpop.f32.mrf.mxu0
      %v1414 = vadd.f32 %v1125, %v1413
      %v1415 = vpop.f32.mrf.mxu0
      %v1416 = vpop.f32.mrf.mxu0
      %v1417 = vadd.f32 %v1128, %v1416
      %v1418 = vpop.f32.mrf.mxu0
      %1419 = vmatprep.mubr.bf16.mxu0 0
      %1420 = vmatmul.mubr.bf16.gmra.mxu0 %v963
      %v1421 = vpop.f32.mrf.mxu0
      %v1422 = vadd.f32 %v1133, %v1421
      %v1423 = vpop.f32.mrf.mxu0
      %v1424 = vpop.f32.mrf.mxu0
      %v1425 = vadd.f32 %v1136, %v1424
      %v1426 = vpop.f32.mrf.mxu0
      %1427 = vmatprep.mubr.bf16.mxu0 0
      %1428 = vmatmul.mubr.bf16.gmra.mxu0 %v966
      %v1429 = vpop.f32.mrf.mxu0
      %v1430 = vadd.f32 %v1141, %v1429
      %v1431 = vpop.f32.mrf.mxu0
      %v1432 = vpop.f32.mrf.mxu0
      %v1433 = vadd.f32 %v1144, %v1432
      %v1434 = vpop.f32.mrf.mxu0
      %1435 = vmatprep.mubr.bf16.mxu0 0
      %1436 = vmatmul.mubr.bf16.gmra.mxu0 %v969
      %v1437 = vpop.f32.mrf.mxu0
      %v1438 = vadd.f32 %v1149, %v1437
      %v1439 = vpop.f32.mrf.mxu0
      %v1440 = vpop.f32.mrf.mxu0
      %v1441 = vadd.f32 %v1152, %v1440
      %v1442 = vpop.f32.mrf.mxu0
      %1443 = vmatprep.mubr.bf16.mxu0 0
      %1444 = vmatmul.mubr.bf16.gmra.mxu0 %v972
      %v1445 = vpop.f32.mrf.mxu0
      %v1446 = vadd.f32 %v1157, %v1445
      %v1447 = vpop.f32.mrf.mxu0
      %v1448 = vpop.f32.mrf.mxu0
      %v1449 = vadd.f32 %v1160, %v1448
      %v1450 = vpop.f32.mrf.mxu0
      %1451 = vmatprep.mubr.bf16.mxu0 0
      %1452 = vmatmul.mubr.bf16.gmra.mxu0 %v975
      %v1453 = vpop.f32.mrf.mxu0
      %v1454 = vadd.f32 %v1165, %v1453
      %v1455 = vpop.f32.mrf.mxu0
      %v1456 = vpop.f32.mrf.mxu0
      %v1457 = vadd.f32 %v1168, %v1456
      %v1458 = vpop.f32.mrf.mxu0
      %1459 = vmatprep.mubr.bf16.mxu0 0
      %1460 = vmatmul.mubr.bf16.gmra.mxu0 %v978
      %v1461 = vpop.f32.mrf.mxu0
      %v1462 = vadd.f32 %v1173, %v1461
      %v1463 = vpop.f32.mrf.mxu0
      %v1464 = vpop.f32.mrf.mxu0
      %v1465 = vadd.f32 %v1176, %v1464
      %v1466 = vpop.f32.mrf.mxu0
      %1467 = vmatprep.mubr.bf16.mxu0 0
      %1468 = vmatmul.mubr.bf16.gmra.mxu0 %v981
      %v1469 = vpop.f32.mrf.mxu0
      %v1470 = vadd.f32 %v1181, %v1469
      %v1471 = vpop.f32.mrf.mxu0
      %v1472 = vpop.f32.mrf.mxu0
      %v1473 = vadd.f32 %v1184, %v1472
      %v1474 = vpop.f32.mrf.mxu0
      %1475 = vmatprep.mubr.bf16.mxu0 0
      %1476 = vmatmul.mubr.bf16.gmra.mxu0 %v984
      %v1477 = vpop.f32.mrf.mxu0
      %v1478 = vadd.f32 %v1189, %v1477
      %v1479 = vpop.f32.mrf.mxu0
      %v1480 = vpop.f32.mrf.mxu0
      %v1481 = vadd.f32 %v1192, %v1480
      %v1482 = vpop.f32.mrf.mxu0
      %1483 = vmatprep.mubr.bf16.mxu0 0
      %1484 = vmatmul.mubr.bf16.gmra.mxu0 %v987
      %v1485 = vpop.f32.mrf.mxu0
      %v1486 = vadd.f32 %v1197, %v1485
      %v1487 = vpop.f32.mrf.mxu0
      %v1488 = vpop.f32.mrf.mxu0
      %v1489 = vadd.f32 %v1200, %v1488
      %v1490 = vpop.f32.mrf.mxu0
      %1491 = vmatprep.mubr.bf16.mxu0 0
      %1492 = vmatmul.mubr.bf16.gmra.mxu0 %v990
      %v1493 = vpop.f32.mrf.mxu0
      %v1494 = vadd.f32 %v1205, %v1493
      %v1495 = vpop.f32.mrf.mxu0
      %v1496 = vpop.f32.mrf.mxu0
      %v1497 = vadd.f32 %v1208, %v1496
      %v1498 = vpop.f32.mrf.mxu0
      %1499 = vmatprep.mubr.bf16.mxu0 0
      %1500 = vmatmul.mubr.bf16.gmra.mxu0 %v993
      %v1501 = vpop.f32.mrf.mxu0
      %v1502 = vadd.f32 %v1213, %v1501
      %v1503 = vpop.f32.mrf.mxu0
      %v1504 = vpop.f32.mrf.mxu0
      %v1505 = vadd.f32 %v1216, %v1504
      %v1506 = vpop.f32.mrf.mxu0
      %1507 = vmatprep.mubr.bf16.mxu0 0
      %1508 = vmatmul.mubr.bf16.gmra.mxu0 %v996
      %v1509 = vpop.f32.mrf.mxu0
      %v1510 = vadd.f32 %v1221, %v1509
      %v1511 = vpop.f32.mrf.mxu0
      %v1512 = vpop.f32.mrf.mxu0
      %v1513 = vadd.f32 %v1224, %v1512
      %v1514 = vpop.f32.mrf.mxu0
      %1515 = vmatprep.mubr.bf16.mxu0 0
      %1516 = vmatmul.mubr.bf16.gmra.mxu0 %v999
      %v1517 = vpop.f32.mrf.mxu0
      %v1518 = vadd.f32 %v1229, %v1517
      %v1519 = vpop.f32.mrf.mxu0
      %v1520 = vpop.f32.mrf.mxu0
      %v1521 = vadd.f32 %v1232, %v1520
      %v1522 = vpop.f32.mrf.mxu0
      %1523 = vmatprep.mubr.bf16.mxu0 0
      %1524 = vmatmul.mubr.bf16.gmra.mxu0 %v1002
      %v1525 = vpop.f32.mrf.mxu0
      %v1526 = vadd.f32 %v1237, %v1525
      %v1527 = vpop.f32.mrf.mxu0
      %v1528 = vpop.f32.mrf.mxu0
      %v1529 = vadd.f32 %v1240, %v1528
      %v1530 = vpop.f32.mrf.mxu0
      %1531 = vmatprep.mubr.bf16.mxu0 0
      %1532 = vmatmul.mubr.bf16.gmra.mxu0 %v1005
      %v1533 = vpop.f32.mrf.mxu0
      %v1534 = vadd.f32 %v1245, %v1533
      %v1535 = vpop.f32.mrf.mxu0
      %v1536 = vpop.f32.mrf.mxu0
      %v1537 = vadd.f32 %v1248, %v1536
      %v1538 = vpop.f32.mrf.mxu0
      %1539 = vmatprep.mubr.bf16.mxu0 0
      %1540 = vmatmul.mubr.bf16.gmra.mxu0 %v1008
      %v1541 = vpop.f32.mrf.mxu0
      %v1542 = vadd.f32 %v1253, %v1541
      %v1543 = vpop.f32.mrf.mxu0
      %v1544 = vpop.f32.mrf.mxu0
      %v1545 = vadd.f32 %v1256, %v1544
      %v1546 = vpop.f32.mrf.mxu0
      %1547 = vmatprep.mubr.bf16.mxu0 0
      %1548 = vmatmul.mubr.bf16.gmra.mxu0 %v1011
      %v1549 = vpop.f32.mrf.mxu0
      %v1550 = vadd.f32 %v1261, %v1549
      %v1551 = vpop.f32.mrf.mxu0
      %v1552 = vpop.f32.mrf.mxu0
      %v1553 = vadd.f32 %v1264, %v1552
      %v1554 = vpop.f32.mrf.mxu0
      %1555 = vmatprep.mubr.bf16.mxu0 0
      %1556 = vmatmul.mubr.bf16.gmra.mxu0 %v1014
      %v1557 = vpop.f32.mrf.mxu0
      %v1558 = vadd.f32 %v1269, %v1557
      %v1559 = vpop.f32.mrf.mxu0
      %v1560 = vpop.f32.mrf.mxu0
      %v1561 = vadd.f32 %v1272, %v1560
      %v1562 = vpop.f32.mrf.mxu0
      %1563 = vmatprep.mubr.bf16.mxu0 0
      %1564 = vmatmul.mubr.bf16.gmra.mxu0 %v1017
      %v1565 = vpop.f32.mrf.mxu0
      %v1566 = vadd.f32 %v1277, %v1565
      %v1567 = vpop.f32.mrf.mxu0
      %v1568 = vpop.f32.mrf.mxu0
      %v1569 = vadd.f32 %v1280, %v1568
      %v1570 = vpop.f32.mrf.mxu0
      %1571 = vmatprep.mubr.bf16.mxu0 0
      %1572 = vmatmul.mubr.bf16.gmra.mxu0 %v1020
      %v1573 = vpop.f32.mrf.mxu0
      %v1574 = vadd.f32 %v1285, %v1573
      %v1575 = vpop.f32.mrf.mxu0
      %v1576 = vpop.f32.mrf.mxu0
      %v1577 = vadd.f32 %v1288, %v1576
      %v1578 = vpop.f32.mrf.mxu0
      %1579 = vmatprep.mubr.bf16.mxu0 0
      %1580 = vmatmul.mubr.bf16.gmra.mxu0 %v1023
      %v1581 = vpop.f32.mrf.mxu0
      %v1582 = vadd.f32 %v1293, %v1581
      %v1583 = vpop.f32.mrf.mxu0
      %v1584 = vpop.f32.mrf.mxu0
      %v1585 = vadd.f32 %v1296, %v1584
      %v1586 = vpop.f32.mrf.mxu0
      %1587 = vmatprep.mubr.bf16.mxu0 0
      %1588 = vmatmul.mubr.bf16.gmra.mxu0 %v1026
      %v1589 = vpop.f32.mrf.mxu0
      %v1590 = vadd.f32 %v1301, %v1589
      %v1591 = vpop.f32.mrf.mxu0
      %v1592 = vpop.f32.mrf.mxu0
      %v1593 = vadd.f32 %v1304, %v1592
      %v1594 = vpop.f32.mrf.mxu0
      %1595 = vmatprep.mubr.bf16.mxu0 0
      %1596 = vmatmul.mubr.bf16.gmra.mxu0 %v1029
      %v1597 = vpop.f32.mrf.mxu0
      %v1598 = vadd.f32 %v1309, %v1597
      %v1599 = vpop.f32.mrf.mxu0
      %v1600 = vpop.f32.mrf.mxu0
      %v1601 = vadd.f32 %v1312, %v1600
      %v1602 = vpop.f32.mrf.mxu0
      %1603 = vmatprep.mubr.bf16.mxu0 0
      %1604 = vmatmul.mubr.bf16.gmra.mxu0 %v1032
      %v1605 = vpop.f32.mrf.mxu0
      %v1606 = vadd.f32 %v1317, %v1605
      %v1607 = vpop.f32.mrf.mxu0
      %v1608 = vpop.f32.mrf.mxu0
      %v1609 = vadd.f32 %v1320, %v1608
      %v1610 = vpop.f32.mrf.mxu0
      %1611 = vdwg.mxu0
      %v1612 = vmax.f32 %v1358, 0.0
      %v1613 = vmax.f32 %v1361, 0.0
      %v1614 = vmax.f32 %v1366, 0.0
      %v1615 = vmax.f32 %v1369, 0.0
      %v1616 = vmax.f32 %v1374, 0.0
      %v1617 = vmax.f32 %v1377, 0.0
      %v1618 = vmax.f32 %v1382, 0.0
      %v1619 = vmax.f32 %v1385, 0.0
      %v1620 = vmax.f32 %v1390, 0.0
      %v1621 = vmax.f32 %v1393, 0.0
      %v1622 = vmax.f32 %v1398, 0.0
      %v1623 = vmax.f32 %v1401, 0.0
      %v1624 = vmax.f32 %v1406, 0.0
      %v1625 = vmax.f32 %v1409, 0.0
      %v1626 = vmax.f32 %v1414, 0.0
      %v1627 = vmax.f32 %v1417, 0.0
      %v1628 = vmax.f32 %v1422, 0.0
      %v1629 = vmax.f32 %v1425, 0.0
      %v1630 = vmax.f32 %v1430, 0.0
      %v1631 = vmax.f32 %v1433, 0.0
      %v1632 = vmax.f32 %v1438, 0.0
      %v1633 = vmax.f32 %v1441, 0.0
      %v1634 = vmax.f32 %v1446, 0.0
      %v1635 = vmax.f32 %v1449, 0.0
      %v1636 = vmax.f32 %v1454, 0.0
      %v1637 = vmax.f32 %v1457, 0.0
      %v1638 = vmax.f32 %v1462, 0.0
      %v1639 = vmax.f32 %v1465, 0.0
      %v1640 = vmax.f32 %v1470, 0.0
      %v1641 = vmax.f32 %v1473, 0.0
      %v1642 = vmax.f32 %v1478, 0.0
      %v1643 = vmax.f32 %v1481, 0.0
      %v1644 = vmax.f32 %v1486, 0.0
      %v1645 = vmax.f32 %v1489, 0.0
      %v1646 = vmax.f32 %v1494, 0.0
      %v1647 = vmax.f32 %v1497, 0.0
      %v1648 = vmax.f32 %v1502, 0.0
      %v1649 = vmax.f32 %v1505, 0.0
      %v1650 = vmax.f32 %v1510, 0.0
      %v1651 = vmax.f32 %v1513, 0.0
      %v1652 = vmax.f32 %v1518, 0.0
      %v1653 = vmax.f32 %v1521, 0.0
      %v1654 = vmax.f32 %v1526, 0.0
      %v1655 = vmax.f32 %v1529, 0.0
      %v1656 = vmax.f32 %v1534, 0.0
      %v1657 = vmax.f32 %v1537, 0.0
      %v1658 = vmax.f32 %v1542, 0.0
      %v1659 = vmax.f32 %v1545, 0.0
      %v1660 = vmax.f32 %v1550, 0.0
      %v1661 = vmax.f32 %v1553, 0.0
      %v1662 = vmax.f32 %v1558, 0.0
      %v1663 = vmax.f32 %v1561, 0.0
      %v1664 = vmax.f32 %v1566, 0.0
      %v1665 = vmax.f32 %v1569, 0.0
      %v1666 = vmax.f32 %v1574, 0.0
      %v1667 = vmax.f32 %v1577, 0.0
      %v1668 = vmax.f32 %v1582, 0.0
      %v1669 = vmax.f32 %v1585, 0.0
      %v1670 = vmax.f32 %v1590, 0.0
      %v1671 = vmax.f32 %v1593, 0.0
      %v1672 = vmax.f32 %v1598, 0.0
      %v1673 = vmax.f32 %v1601, 0.0
      %v1674 = vmax.f32 %v1606, 0.0
      %v1675 = vmax.f32 %v1609, 0.0
      %1676 = vst [vmem:[%s175] sm:$0xff] %v1612
      %1677 = vst [vmem:[%s175 + $0x8] sm:$0xff] %v1613
      %1678 = vst [vmem:[%s175 + $0x10] sm:$0xff] %v1614
      %1679 = vst [vmem:[%s175 + $0x18] sm:$0xff] %v1615
      %1680 = vst [vmem:[%s175 + $0x20] sm:$0xff] %v1616
      %1681 = vst [vmem:[%s175 + $0x28] sm:$0xff] %v1617
      %1682 = vst [vmem:[%s175 + $0x30] sm:$0xff] %v1618
      %1683 = vst [vmem:[%s175 + $0x38] sm:$0xff] %v1619
      %1684 = vst [vmem:[%s175 + $0x40] sm:$0xff] %v1620
      %1685 = vst [vmem:[%s175 + $0x48] sm:$0xff] %v1621
      %1686 = vst [vmem:[%s175 + $0x50] sm:$0xff] %v1622
      %1687 = vst [vmem:[%s175 + $0x58] sm:$0xff] %v1623
      %1688 = vst [vmem:[%s175 + $0x60] sm:$0xff] %v1624
      %1689 = vst [vmem:[%s175 + $0x68] sm:$0xff] %v1625
      %1690 = vst [vmem:[%s175 + $0x70] sm:$0xff] %v1626
      %1691 = vst [vmem:[%s175 + $0x78] sm:$0xff] %v1627
      %1692 = vst [vmem:[%s175 + $0x80] sm:$0xff] %v1628
      %1693 = vst [vmem:[%s175 + $0x88] sm:$0xff] %v1629
      %1694 = vst [vmem:[%s175 + $0x90] sm:$0xff] %v1630
      %1695 = vst [vmem:[%s175 + $0x98] sm:$0xff] %v1631
      %1696 = vst [vmem:[%s175 + $0xa0] sm:$0xff] %v1632
      %1697 = vst [vmem:[%s175 + $0xa8] sm:$0xff] %v1633
      %1698 = vst [vmem:[%s175 + $0xb0] sm:$0xff] %v1634
      %1699 = vst [vmem:[%s175 + $0xb8] sm:$0xff] %v1635
      %1700 = vst [vmem:[%s175 + $0xc0] sm:$0xff] %v1636
      %1701 = vst [vmem:[%s175 + $0xc8] sm:$0xff] %v1637
      %1702 = vst [vmem:[%s175 + $0xd0] sm:$0xff] %v1638
      %1703 = vst [vmem:[%s175 + $0xd8] sm:$0xff] %v1639
      %1704 = vst [vmem:[%s175 + $0xe0] sm:$0xff] %v1640
      %1705 = vst [vmem:[%s175 + $0xe8] sm:$0xff] %v1641
      %1706 = vst [vmem:[%s175 + $0xf0] sm:$0xff] %v1642
      %1707 = vst [vmem:[%s175 + $0xf8] sm:$0xff] %v1643
      %1708 = vst [vmem:[%s175 + $0x100] sm:$0xff] %v1644
      %1709 = vst [vmem:[%s175 + $0x108] sm:$0xff] %v1645
      %1710 = vst [vmem:[%s175 + $0x110] sm:$0xff] %v1646
      %1711 = vst [vmem:[%s175 + $0x118] sm:$0xff] %v1647
      %1712 = vst [vmem:[%s175 + $0x120] sm:$0xff] %v1648
      %1713 = vst [vmem:[%s175 + $0x128] sm:$0xff] %v1649
      %1714 = vst [vmem:[%s175 + $0x130] sm:$0xff] %v1650
      %1715 = vst [vmem:[%s175 + $0x138] sm:$0xff] %v1651
      %1716 = vst [vmem:[%s175 + $0x140] sm:$0xff] %v1652
      %1717 = vst [vmem:[%s175 + $0x148] sm:$0xff] %v1653
      %1718 = vst [vmem:[%s175 + $0x150] sm:$0xff] %v1654
      %1719 = vst [vmem:[%s175 + $0x158] sm:$0xff] %v1655
      %1720 = vst [vmem:[%s175 + $0x160] sm:$0xff] %v1656
      %1721 = vst [vmem:[%s175 + $0x168] sm:$0xff] %v1657
      %1722 = vst [vmem:[%s175 + $0x170] sm:$0xff] %v1658
      %1723 = vst [vmem:[%s175 + $0x178] sm:$0xff] %v1659
      %1724 = vst [vmem:[%s175 + $0x180] sm:$0xff] %v1660
      %1725 = vst [vmem:[%s175 + $0x188] sm:$0xff] %v1661
      %1726 = vst [vmem:[%s175 + $0x190] sm:$0xff] %v1662
      %1727 = vst [vmem:[%s175 + $0x198] sm:$0xff] %v1663
      %1728 = vst [vmem:[%s175 + $0x1a0] sm:$0xff] %v1664
      %1729 = vst [vmem:[%s175 + $0x1a8] sm:$0xff] %v1665
      %1730 = vst [vmem:[%s175 + $0x1b0] sm:$0xff] %v1666
      %1731 = vst [vmem:[%s175 + $0x1b8] sm:$0xff] %v1667
      %1732 = vst [vmem:[%s175 + $0x1c0] sm:$0xff] %v1668
      %1733 = vst [vmem:[%s175 + $0x1c8] sm:$0xff] %v1669
      %1734 = vst [vmem:[%s175 + $0x1d0] sm:$0xff] %v1670
      %1735 = vst [vmem:[%s175 + $0x1d8] sm:$0xff] %v1671
      %1736 = vst [vmem:[%s175 + $0x1e0] sm:$0xff] %v1672
      %1737 = vst [vmem:[%s175 + $0x1e8] sm:$0xff] %v1673
      %1738 = vst [vmem:[%s175 + $0x1f0] sm:$0xff] %v1674
      %1739 = vst [vmem:[%s175 + $0x1f8] sm:$0xff] %v1675
      %s1740 = smul.u32 64, %s14
      %p1741 = scmp.lt.s32.totalorder %s1740, 255
      %s1742 = scalar_select %p1741, %s1740, 255
      %s1743 = smul.addr %s1742, 8
      %s1744 = scalar_lea.vmem %s3, %s1743
      // Predicated region
      $region33: #{_lambda_.17} parent=31 // pred_check
        %p1745 = pneg %p100
      $region34: #{_lambda_.17} parent=31 // pred_check_branch
        %1747 = sbr.rel (%p1745) target = $region36
      $region35: #{_lambda_.17} parent=31 // pred_region
        %s1748 = smul.u32 64, %s14
      $region36: #{_lambda_.17} parent=31 // pred_fallthru
        _
    $region32: #{_lambda_.17} parent=5 // pred_fallthru
      _
    %p1749 = scmp.le.s32.totalorder 2, %s9
    // Predicated region
    $region37: #{_lambda_.17} parent=5 // pred_check
      %p1750 = pneg %p1749
    $region38: #{_lambda_.17} parent=5 // pred_check_branch
      %1752 = sbr.rel (%p1750) target = $region40
    $region39: #{_lambda_.17} parent=5 // pred_region
      %s1753 = ssub.s32 %s9, 2
      // Predicated region
      $region41: #{_lambda_.17} parent=39 // pred_check
        %p1754 = pneg %p106
      $region42: #{_lambda_.17} parent=39 // pred_check_branch
        %1756 = sbr.rel (%p1754) target = $region44
      $region43: #{_lambda_.17} parent=39 // pred_region
        %s1757 = smul.u32 64, %s15
        %p1758 = scmp.lt.s32.totalorder %s1757, 255
        %s1759 = scalar_select %p1758, %s1757, 255
        %s1760 = smul.addr %s1759, 8
        %s1761 = scalar_lea.vmem %s3, %s1760
      $region44: #{_lambda_.17} parent=39 // pred_fallthru
        _
    $region40: #{_lambda_.17} parent=5 // pred_fallthru
      _
  $region6: #{_lambda_.17} parent=0 // loop_footer
    %s13 = sadd.s32 1, %s9
  $region7: #{_lambda_.17} parent=0 // loop_footer_branch
    %8 = sbr.rel target = $region3
  $region8: #{_lambda_.17} parent=0 // loop_exit
    _

// kernel: _lambda_.19
$region0: #{_lambda_.19}
  #allocation0 [shape = 'u32[]', space=smem, size = 0x4, offset = 0x4, fixed_abs, tag = 'smem constant byte address 0x4 - core index']
  #allocation1 [shape = 'u32[144,128]{1,0:T(1,128)}', space=vmem, size = 0x12000, scoped, tag = 'internal scratch']
  %s0 = inlined_call_operand.vmem [shape: bf16[2048,400], index: 0, kind: input, shape index: {}]
  %s1 = inlined_call_operand.vmem [shape: bf16[400,128], index: 1, kind: input, shape index: {}]
  %s2 = inlined_call_operand.vmem [shape: f32[1,128], index: 2, kind: input, shape index: {}]
  %s3 = inlined_call_operand.vmem [shape: f32[2048,128], index: 3, kind: output, shape index: {}]
  %s4 = sld [smem:[#allocation0]]
  $region45: #{_lambda_.19} parent=0
    _
  %s6 = ssub.s32 1, %s4
  %s7 = scalar_select 0, %s6, %s4
  loop: start=0, step=1, limit=6
  $region2: #{_lambda_.19} parent=0 // loop_pre_header
    _
  $region3: #{_lambda_.19} parent=0 // loop_header
    %s9 = sphi 0, %s13
    %p10 = scmp.ge.s32.totalorder %s9, 6
    %s19 = sphi 0, %s21
    %s22 = sphi 0, %s19
    %s23 = sphi 0, %s22
    %s39 = sphi 0, %s23
    %s43 = sphi 0, %s43
    %s45 = sphi 0, %s43
    %s46 = sphi 0, %s45
    %s60 = sphi 0, %s46
    %s64 = sphi 0, %s64
    %s66 = sphi 0, %s64
    %s67 = sphi 0, %s66
    %s81 = sphi 0, %s67
    %s87 = sphi 0, %s89
    %s90 = sphi 0, %s87
    %s91 = sphi 0, %s90
    %s107 = sphi 0, %s91
  $region4: #{_lambda_.19} parent=0 // loop_header_branch
    %12 = sbr.rel (%p10) target = $region8
  $region5: #{_lambda_.19} parent=0 // loop_body
    %s14 = ssub.s32 %s9, 1
    %s15 = ssub.s32 %s9, 2
    %s16 = sadd.s32 %s9, 1
    %s17 = ssub.s32 %s9, %s16
    %p18 = scmp.eq.s32.totalorder %s17, 0
    %s20 = sadd.s32 %s19, 1
    %s21 = scalar_select %p18, %s19, %s20
    %p24 = pneg %p18
    %p25 = scmp.eq.s32.totalorder %s9, 3
    %p26 = por %p24, %p25
    %p27 = scmp.ne.s32.totalorder %s19, %s22
    %p28 = scmp.eq.s32.totalorder %s9, 0
    %p29 = por %p27, %p28
    %p30 = scmp.ne.s32.totalorder %s19, %s22
    %p31 = scmp.eq.s32.totalorder %s14, 3
    %p32 = por %p30, %p31
    %p33 = scmp.ne.s32.totalorder %s22, %s23
    %p34 = scmp.eq.s32.totalorder %s14, 0
    %p35 = por %p33, %p34
    %p36 = scmp.ne.s32.totalorder %s22, %s23
    %p37 = scmp.eq.s32.totalorder %s15, 3
    %p38 = por %p36, %p37
    %p40 = scmp.ne.s32.totalorder %s23, %s39
    %p41 = scmp.eq.s32.totalorder %s15, 0
    %p42 = por %p40, %p41
    %s44 = sadd.s32 %s43, 1
    %p47 = scmp.eq.s32.totalorder %s9, 3
    %p48 = scmp.ne.s32.totalorder %s43, %s45
    %p49 = scmp.eq.s32.totalorder %s9, 0
    %p50 = por %p48, %p49
    %p51 = scmp.ne.s32.totalorder %s43, %s45
    %p52 = scmp.eq.s32.totalorder %s14, 3
    %p53 = por %p51, %p52
    %p54 = scmp.ne.s32.totalorder %s45, %s46
    %p55 = scmp.eq.s32.totalorder %s14, 0
    %p56 = por %p54, %p55
    %p57 = scmp.ne.s32.totalorder %s45, %s46
    %p58 = scmp.eq.s32.totalorder %s15, 3
    %p59 = por %p57, %p58
    %p61 = scmp.ne.s32.totalorder %s46, %s60
    %p62 = scmp.eq.s32.totalorder %s15, 0
    %p63 = por %p61, %p62
    %s65 = sadd.s32 %s64, 1
    %p68 = scmp.eq.s32.totalorder %s9, 3
    %p69 = scmp.ne.s32.totalorder %s64, %s66
    %p70 = scmp.eq.s32.totalorder %s9, 0
    %p71 = por %p69, %p70
    %p72 = scmp.ne.s32.totalorder %s64, %s66
    %p73 = scmp.eq.s32.totalorder %s14, 3
    %p74 = por %p72, %p73
    %p75 = scmp.ne.s32.totalorder %s66, %s67
    %p76 = scmp.eq.s32.totalorder %s14, 0
    %p77 = por %p75, %p76
    %p78 = scmp.ne.s32.totalorder %s66, %s67
    %p79 = scmp.eq.s32.totalorder %s15, 3
    %p80 = por %p78, %p79
    %p82 = scmp.ne.s32.totalorder %s67, %s81
    %p83 = scmp.eq.s32.totalorder %s15, 0
    %p84 = por %p82, %p83
    %s85 = ssub.s32 %s9, %s16
    %p86 = scmp.eq.s32.totalorder %s85, 0
    %s88 = sadd.s32 %s87, 1
    %s89 = scalar_select %p86, %s87, %s88
    %p92 = pneg %p86
    %p93 = scmp.eq.s32.totalorder %s9, 3
    %p94 = por %p92, %p93
    %p95 = scmp.ne.s32.totalorder %s87, %s90
    %p96 = scmp.eq.s32.totalorder %s9, 0
    %p97 = por %p95, %p96
    %p98 = scmp.ne.s32.totalorder %s87, %s90
    %p99 = scmp.eq.s32.totalorder %s14, 3
    %p100 = por %p98, %p99
    %p101 = scmp.ne.s32.totalorder %s90, %s91
    %p102 = scmp.eq.s32.totalorder %s14, 0
    %p103 = por %p101, %p102
    %p104 = scmp.ne.s32.totalorder %s90, %s91
    %p105 = scmp.eq.s32.totalorder %s15, 3
    %p106 = por %p104, %p105
    %p108 = scmp.ne.s32.totalorder %s91, %s107
    %p109 = scmp.eq.s32.totalorder %s15, 0
    %p110 = por %p108, %p109
    %p111 = scmp.le.s32.totalorder 1, %s9
    %p112 = scmp.lt.s32.totalorder %s9, 5
    %p113 = pnand %p111, %p112
    %p114 = pneg %p113
    // Predicated region
    $region9: #{_lambda_.19} parent=5 // pred_check
      _
    $region10: #{_lambda_.19} parent=5 // pred_check_branch
      %116 = sbr.rel (%p113) target = $region12
    $region11: #{_lambda_.19} parent=5 // pred_region
      %s117 = ssub.s32 %s9, 1
      // Predicated region
      $region13: #{_lambda_.19} parent=11 // pred_check
        %p118 = pneg %p56
      $region14: #{_lambda_.19} parent=11 // pred_check_branch
        %120 = sbr.rel (%p118) target = $region16
      $region15: #{_lambda_.19} parent=11 // pred_region
        _
      $region16: #{_lambda_.19} parent=11 // pred_fallthru
        _
      // Predicated region
      $region17: #{_lambda_.19} parent=11 // pred_check
        %p121 = pneg %p77
      $region18: #{_lambda_.19} parent=11 // pred_check_branch
        %123 = sbr.rel (%p121) target = $region20
      $region19: #{_lambda_.19} parent=11 // pred_region
        _
      $region20: #{_lambda_.19} parent=11 // pred_fallthru
        _
    $region12: #{_lambda_.19} parent=5 // pred_fallthru
      _
    %p124 = scmp.lt.s32.totalorder %s9, 4
    // Predicated region
    $region21: #{_lambda_.19} parent=5 // pred_check
      %p125 = pneg %p124
    $region22: #{_lambda_.19} parent=5 // pred_check_branch
      %127 = sbr.rel (%p125) target = $region24
    $region23: #{_lambda_.19} parent=5 // pred_region
      // Predicated region
      $region25: #{_lambda_.19} parent=23 // pred_check
        %p128 = pneg %p29
      $region26: #{_lambda_.19} parent=23 // pred_check_branch
        %130 = sbr.rel (%p128) target = $region28
      $region27: #{_lambda_.19} parent=23 // pred_region
        %s131 = smul.u32 64, %s9
        %p132 = scmp.lt.s32.totalorder %s131, 255
        %s133 = scalar_select %p132, %s131, 255
        %s134 = smul.addr %s133, 4
        %s135 = smul.addr %s134, 4
        %s136 = scalar_lea.vmem %s0, %s135
        %s137 = smul.u32 64, %s9
      $region28: #{_lambda_.19} parent=23 // pred_fallthru
        _
    $region24: #{_lambda_.19} parent=5 // pred_fallthru
      _
    %p138 = scmp.le.s32.totalorder 1, %s9
    %p139 = scmp.lt.s32.totalorder %s9, 5
    %p140 = pnand %p138, %p139
    %p141 = pneg %p140
    // Predicated region
    $region29: #{_lambda_.19} parent=5 // pred_check
      _
    $region30: #{_lambda_.19} parent=5 // pred_check_branch
      %143 = sbr.rel (%p140) target = $region32
    $region31: #{_lambda_.19} parent=5 // pred_region
      %s144 = ssub.s32 %s9, 1
      %s145 = smul.u32 64, %s14
      %p146 = scmp.lt.s32.totalorder %s145, 255
      %s147 = scalar_select %p146, %s145, 255
      %s148 = smul.addr %s147, 4
      %s149 = smul.addr %s148, 4
      %s150 = scalar_lea.vmem %s0, %s149
      %p151 = pneg %p35
      %p152 = pneg %p32
      %p153 = pneg %p56
      %p154 = pneg %p53
      %p155 = pneg %p77
      %p156 = pneg %p74
      %p157 = pneg %p103
      %p158 = pneg %p100
      %s159 = smul.u32 64, %s14
      %p160 = scmp.lt.s32.totalorder %s159, 255
      %s161 = scalar_select %p160, %s159, 255
      %s162 = smul.addr %s161, 8
      %s163 = scalar_lea.vmem %s3, %s162
      %s164 = smul.u32 64, %s14
      %p165 = scmp.lt.s32.totalorder %s164, 255
      %s166 = scalar_select %p165, %s164, 255
      %s167 = smul.addr %s166, 4
      %s168 = smul.addr %s167, 4
      %s169 = scalar_lea.vmem %s0, %s168
      %s170 = smul.u32 64, %s14
      %s171 = smul.u32 64, %s14
      %p172 = scmp.lt.s32.totalorder %s171, 255
      %s173 = scalar_select %p172, %s171, 255
      %s174 = smul.addr %s173, 8
      %s175 = scalar_lea.vmem %s3, %s174
      %s176 = smul.u32 64, %s14
      %v178 = vld [vmem:[%s169] sm:$0xff]
      %v179 = vld [vmem:[%s169 + $0x8] sm:$0xff]
      %v180 = vld [vmem:[%s169 + $0x10] sm:$0xff]
      %v181 = vld [vmem:[%s169 + $0x18] sm:$0xff]
      %v182 = vld [vmem:[%s169 + $0x20] sm:$0xff]
      %v183 = vld [vmem:[%s169 + $0x28] sm:$0xff]
      %v184 = vld [vmem:[%s169 + $0x30] sm:$0xff]
      %v185 = vld [vmem:[%s169 + $0x38] sm:$0xff]
      %v186 = vld [vmem:[%s169 + $0x40] sm:$0xff]
      %v187 = vld [vmem:[%s169 + $0x48] sm:$0xff]
      %v188 = vld [vmem:[%s169 + $0x50] sm:$0xff]
      %v189 = vld [vmem:[%s169 + $0x58] sm:$0xff]
      %v190 = vld [vmem:[%s169 + $0x60] sm:$0xff]
      %v191 = vld [vmem:[%s169 + $0x68] sm:$0xff]
      %v192 = vld [vmem:[%s169 + $0x70] sm:$0xff]
      %v193 = vld [vmem:[%s169 + $0x78] sm:$0xff]
      %v194 = vld [vmem:[%s169 + $0x80] sm:$0xff]
      %v195 = vld [vmem:[%s169 + $0x88] sm:$0xff]
      %v196 = vld [vmem:[%s169 + $0x90] sm:$0xff]
      %v197 = vld [vmem:[%s169 + $0x98] sm:$0xff]
      %v198 = vld [vmem:[%s169 + $0xa0] sm:$0xff]
      %v199 = vld [vmem:[%s169 + $0xa8] sm:$0xff]
      %v200 = vld [vmem:[%s169 + $0xb0] sm:$0xff]
      %v201 = vld [vmem:[%s169 + $0xb8] sm:$0xff]
      %v202 = vld [vmem:[%s169 + $0xc0] sm:$0xff]
      %v203 = vld [vmem:[%s169 + $0xc8] sm:$0xff]
      %v204 = vld [vmem:[%s169 + $0xd0] sm:$0xff]
      %v205 = vld [vmem:[%s169 + $0xd8] sm:$0xff]
      %v206 = vld [vmem:[%s169 + $0xe0] sm:$0xff]
      %v207 = vld [vmem:[%s169 + $0xe8] sm:$0xff]
      %v208 = vld [vmem:[%s169 + $0xf0] sm:$0xff]
      %v209 = vld [vmem:[%s169 + $0xf8] sm:$0xff]
      %v210 = vld [vmem:[%s169 + $0x100] sm:$0xff]
      %v211 = vld [vmem:[%s169 + $0x108] sm:$0xff]
      %v212 = vld [vmem:[%s169 + $0x110] sm:$0xff]
      %v213 = vld [vmem:[%s169 + $0x118] sm:$0xff]
      %v214 = vld [vmem:[%s169 + $0x120] sm:$0xff]
      %v215 = vld [vmem:[%s169 + $0x128] sm:$0xff]
      %v216 = vld [vmem:[%s169 + $0x130] sm:$0xff]
      %v217 = vld [vmem:[%s169 + $0x138] sm:$0xff]
      %v218 = vld [vmem:[%s169 + $0x140] sm:$0xff]
      %v219 = vld [vmem:[%s169 + $0x148] sm:$0xff]
      %v220 = vld [vmem:[%s169 + $0x150] sm:$0xff]
      %v221 = vld [vmem:[%s169 + $0x158] sm:$0xff]
      %v222 = vld [vmem:[%s169 + $0x160] sm:$0xff]
      %v223 = vld [vmem:[%s169 + $0x168] sm:$0xff]
      %v224 = vld [vmem:[%s169 + $0x170] sm:$0xff]
      %v225 = vld [vmem:[%s169 + $0x178] sm:$0xff]
      %v226 = vld [vmem:[%s169 + $0x180] sm:$0xff]
      %v227 = vld [vmem:[%s169 + $0x188] sm:$0xff]
      %v228 = vld [vmem:[%s169 + $0x190] sm:$0xff]
      %v229 = vld [vmem:[%s169 + $0x198] sm:$0xff]
      %v230 = vld [vmem:[%s169 + $0x1a0] sm:$0xff]
      %v231 = vld [vmem:[%s169 + $0x1a8] sm:$0xff]
      %v232 = vld [vmem:[%s169 + $0x1b0] sm:$0xff]
      %v233 = vld [vmem:[%s169 + $0x1b8] sm:$0xff]
      %v234 = vld [vmem:[%s169 + $0x1c0] sm:$0xff]
      %v235 = vld [vmem:[%s169 + $0x1c8] sm:$0xff]
      %v236 = vld [vmem:[%s169 + $0x1d0] sm:$0xff]
      %v237 = vld [vmem:[%s169 + $0x1d8] sm:$0xff]
      %v238 = vld [vmem:[%s169 + $0x1e0] sm:$0xff]
      %v239 = vld [vmem:[%s169 + $0x1e8] sm:$0xff]
      %v240 = vld [vmem:[%s169 + $0x1f0] sm:$0xff]
      %v241 = vld [vmem:[%s169 + $0x1f8] sm:$0xff]
      %v242 = vld [vmem:[%s169 + $0x200] sm:$0xff]
      %v243 = vld [vmem:[%s169 + $0x208] sm:$0xff]
      %v244 = vld [vmem:[%s169 + $0x210] sm:$0xff]
      %v245 = vld [vmem:[%s169 + $0x218] sm:$0xff]
      %v246 = vld [vmem:[%s169 + $0x220] sm:$0xff]
      %v247 = vld [vmem:[%s169 + $0x228] sm:$0xff]
      %v248 = vld [vmem:[%s169 + $0x230] sm:$0xff]
      %v249 = vld [vmem:[%s169 + $0x238] sm:$0xff]
      %v250 = vld [vmem:[%s169 + $0x240] sm:$0xff]
      %v251 = vld [vmem:[%s169 + $0x248] sm:$0xff]
      %v252 = vld [vmem:[%s169 + $0x250] sm:$0xff]
      %v253 = vld [vmem:[%s169 + $0x258] sm:$0xff]
      %v254 = vld [vmem:[%s169 + $0x260] sm:$0xff]
      %v255 = vld [vmem:[%s169 + $0x268] sm:$0xff]
      %v256 = vld [vmem:[%s169 + $0x270] sm:$0xff]
      %v257 = vld [vmem:[%s169 + $0x278] sm:$0xff]
      %v258 = vld [vmem:[%s169 + $0x280] sm:$0xff]
      %v259 = vld [vmem:[%s169 + $0x288] sm:$0xff]
      %v260 = vld [vmem:[%s169 + $0x290] sm:$0xff]
      %v261 = vld [vmem:[%s169 + $0x298] sm:$0xff]
      %v262 = vld [vmem:[%s169 + $0x2a0] sm:$0xff]
      %v263 = vld [vmem:[%s169 + $0x2a8] sm:$0xff]
      %v264 = vld [vmem:[%s169 + $0x2b0] sm:$0xff]
      %v265 = vld [vmem:[%s169 + $0x2b8] sm:$0xff]
      %v266 = vld [vmem:[%s169 + $0x2c0] sm:$0xff]
      %v267 = vld [vmem:[%s169 + $0x2c8] sm:$0xff]
      %v268 = vld [vmem:[%s169 + $0x2d0] sm:$0xff]
      %v269 = vld [vmem:[%s169 + $0x2d8] sm:$0xff]
      %v270 = vld [vmem:[%s169 + $0x2e0] sm:$0xff]
      %v271 = vld [vmem:[%s169 + $0x2e8] sm:$0xff]
      %v272 = vld [vmem:[%s169 + $0x2f0] sm:$0xff]
      %v273 = vld [vmem:[%s169 + $0x2f8] sm:$0xff]
      %v274 = vld [vmem:[%s169 + $0x300] sm:$0xff]
      %v275 = vld [vmem:[%s169 + $0x308] sm:$0xff]
      %v276 = vld [vmem:[%s169 + $0x310] sm:$0xff]
      %v277 = vld [vmem:[%s169 + $0x318] sm:$0xff]
      %v278 = vld [vmem:[%s169 + $0x320] sm:$0xff]
      %v279 = vld [vmem:[%s169 + $0x328] sm:$0xff]
      %v280 = vld [vmem:[%s169 + $0x330] sm:$0xff]
      %v281 = vld [vmem:[%s169 + $0x338] sm:$0xff]
      %v282 = vld [vmem:[%s169 + $0x340] sm:$0xff]
      %v283 = vld [vmem:[%s169 + $0x348] sm:$0xff]
      %v284 = vld [vmem:[%s169 + $0x350] sm:$0xff]
      %v285 = vld [vmem:[%s169 + $0x358] sm:$0xff]
      %v286 = vld [vmem:[%s169 + $0x360] sm:$0xff]
      %v287 = vld [vmem:[%s169 + $0x368] sm:$0xff]
      %v288 = vld [vmem:[%s169 + $0x370] sm:$0xff]
      %v289 = vld [vmem:[%s169 + $0x378] sm:$0xff]
      %v290 = vld [vmem:[%s169 + $0x380] sm:$0xff]
      %v291 = vld [vmem:[%s169 + $0x388] sm:$0xff]
      %v292 = vld [vmem:[%s169 + $0x390] sm:$0xff]
      %v293 = vld [vmem:[%s169 + $0x398] sm:$0xff]
      %v294 = vld [vmem:[%s169 + $0x3a0] sm:$0xff]
      %v295 = vld [vmem:[%s169 + $0x3a8] sm:$0xff]
      %v296 = vld [vmem:[%s169 + $0x3b0] sm:$0xff]
      %v297 = vld [vmem:[%s169 + $0x3b8] sm:$0xff]
      %v298 = vld [vmem:[%s169 + $0x3c0] sm:$0xff]
      %v299 = vld [vmem:[%s169 + $0x3c8] sm:$0xff]
      %v300 = vld [vmem:[%s169 + $0x3d0] sm:$0xff]
      %v301 = vld [vmem:[%s169 + $0x3d8] sm:$0xff]
      %v302 = vld [vmem:[%s169 + $0x3e0] sm:$0xff]
      %v303 = vld [vmem:[%s169 + $0x3e8] sm:$0xff]
      %v304 = vld [vmem:[%s169 + $0x3f0] sm:$0xff]
      %v305 = vld [vmem:[%s169 + $0x3f8] sm:$0xff]
      %v306 = vld [vmem:[%s1] sm:$0xf]
      %v307 = vld [vmem:[%s1 + $0x4] sm:$0xf]
      %v308 = vld [vmem:[%s1 + $0x8] sm:$0xf]
      %v309 = vld [vmem:[%s1 + $0xc] sm:$0xf]
      %v310 = vld [vmem:[%s1 + $0x10] sm:$0xf]
      %v311 = vld [vmem:[%s1 + $0x14] sm:$0xf]
      %v312 = vld [vmem:[%s1 + $0x18] sm:$0xf]
      %v313 = vld [vmem:[%s1 + $0x1c] sm:$0xf]
      %v314 = vld [vmem:[%s1 + $0x20] sm:$0xf]
      %v315 = vld [vmem:[%s1 + $0x24] sm:$0xf]
      %v316 = vld [vmem:[%s1 + $0x28] sm:$0xf]
      %v317 = vld [vmem:[%s1 + $0x2c] sm:$0xf]
      %v318 = vld [vmem:[%s1 + $0x30] sm:$0xf]
      %v319 = vld [vmem:[%s1 + $0x34] sm:$0xf]
      %v320 = vld [vmem:[%s1 + $0x38] sm:$0xf]
      %v321 = vld [vmem:[%s1 + $0x3c] sm:$0xf]
      %v322 = vld [vmem:[%s1 + $0x40] sm:$0xf]
      %v323 = vld [vmem:[%s1 + $0x44] sm:$0xf]
      %v324 = vld [vmem:[%s1 + $0x48] sm:$0xf]
      %v325 = vld [vmem:[%s1 + $0x4c] sm:$0xf]
      %v326 = vld [vmem:[%s1 + $0x50] sm:$0xf]
      %v327 = vld [vmem:[%s1 + $0x54] sm:$0xf]
      %v328 = vld [vmem:[%s1 + $0x58] sm:$0xf]
      %v329 = vld [vmem:[%s1 + $0x5c] sm:$0xf]
      %v330 = vld [vmem:[%s1 + $0x60] sm:$0xf]
      %v331 = vld [vmem:[%s1 + $0x64] sm:$0xf]
      %v332 = vld [vmem:[%s1 + $0x68] sm:$0xf]
      %v333 = vld [vmem:[%s1 + $0x6c] sm:$0xf]
      %v334 = vld [vmem:[%s1 + $0x70] sm:$0xf]
      %v335 = vld [vmem:[%s1 + $0x74] sm:$0xf]
      %v336 = vld [vmem:[%s1 + $0x78] sm:$0xf]
      %v337 = vld [vmem:[%s1 + $0x7c] sm:$0xf]
      %v338 = vld [vmem:[%s1 + $0x80] sm:$0xf]
      %v339 = vld [vmem:[%s1 + $0x84] sm:$0xf]
      %v340 = vld [vmem:[%s1 + $0x88] sm:$0xf]
      %v341 = vld [vmem:[%s1 + $0x8c] sm:$0xf]
      %v342 = vld [vmem:[%s1 + $0x90] sm:$0xf]
      %v343 = vld [vmem:[%s1 + $0x94] sm:$0xf]
      %v344 = vld [vmem:[%s1 + $0x98] sm:$0xf]
      %v345 = vld [vmem:[%s1 + $0x9c] sm:$0xf]
      %v346 = vld [vmem:[%s1 + $0xa0] sm:$0xf]
      %v347 = vld [vmem:[%s1 + $0xa4] sm:$0xf]
      %v348 = vld [vmem:[%s1 + $0xa8] sm:$0xf]
      %v349 = vld [vmem:[%s1 + $0xac] sm:$0xf]
      %v350 = vld [vmem:[%s1 + $0xb0] sm:$0xf]
      %v351 = vld [vmem:[%s1 + $0xb4] sm:$0xf]
      %v352 = vld [vmem:[%s1 + $0xb8] sm:$0xf]
      %v353 = vld [vmem:[%s1 + $0xbc] sm:$0xf]
      %v354 = vld [vmem:[%s1 + $0xc0] sm:$0xf]
      %v355 = vld [vmem:[%s1 + $0xc4] sm:$0xf]
      %v356 = vld [vmem:[%s2] sm:$0x1]
      %v358 = vlaneseq
      %v359 = vshrl.u32 %v358, 7
      %v360 = vsub.s32 0, %v359
      %v361 = vrot.slane %v356, %v360
      %v491 = vunpack.c.l.b16 %v178
      %v492 = vunpack.c.h.b16 %v178
      %v493 = vunpack.c.l.b16 %v179
      %v494 = vunpack.c.h.b16 %v179
      %v495 = vunpack.c.l.b16 %v180
      %v496 = vunpack.c.h.b16 %v180
      %v497 = vunpack.c.l.b16 %v181
      %v498 = vunpack.c.h.b16 %v181
      %v499 = vunpack.c.l.b16 %v182
      %v500 = vunpack.c.h.b16 %v182
      %v501 = vunpack.c.l.b16 %v183
      %v502 = vunpack.c.h.b16 %v183
      %v503 = vunpack.c.l.b16 %v184
      %v504 = vunpack.c.h.b16 %v184
      %v505 = vunpack.c.l.b16 %v185
      %v506 = vunpack.c.h.b16 %v185
      %v507 = vunpack.c.l.b16 %v186
      %v508 = vunpack.c.h.b16 %v186
      %v509 = vunpack.c.l.b16 %v187
      %v510 = vunpack.c.h.b16 %v187
      %v511 = vunpack.c.l.b16 %v188
      %v512 = vunpack.c.h.b16 %v188
      %v513 = vunpack.c.l.b16 %v189
      %v514 = vunpack.c.h.b16 %v189
      %v515 = vunpack.c.l.b16 %v190
      %v516 = vunpack.c.h.b16 %v190
      %v517 = vunpack.c.l.b16 %v191
      %v518 = vunpack.c.h.b16 %v191
      %v519 = vunpack.c.l.b16 %v192
      %v520 = vunpack.c.h.b16 %v192
      %v521 = vunpack.c.l.b16 %v193
      %v522 = vunpack.c.h.b16 %v193
      %v523 = vunpack.c.l.b16 %v194
      %v524 = vunpack.c.h.b16 %v194
      %v525 = vunpack.c.l.b16 %v195
      %v526 = vunpack.c.h.b16 %v195
      %v527 = vunpack.c.l.b16 %v196
      %v528 = vunpack.c.h.b16 %v196
      %v529 = vunpack.c.l.b16 %v197
      %v530 = vunpack.c.h.b16 %v197
      %v531 = vunpack.c.l.b16 %v198
      %v532 = vunpack.c.h.b16 %v198
      %v533 = vunpack.c.l.b16 %v199
      %v534 = vunpack.c.h.b16 %v199
      %v535 = vunpack.c.l.b16 %v200
      %v536 = vunpack.c.h.b16 %v200
      %v537 = vunpack.c.l.b16 %v201
      %v538 = vunpack.c.h.b16 %v201
      %v539 = vunpack.c.l.b16 %v202
      %v540 = vunpack.c.h.b16 %v202
      %v541 = vunpack.c.l.b16 %v203
      %v542 = vunpack.c.h.b16 %v203
      %v543 = vunpack.c.l.b16 %v204
      %v544 = vunpack.c.h.b16 %v204
      %v545 = vunpack.c.l.b16 %v205
      %v546 = vunpack.c.h.b16 %v205
      %v547 = vunpack.c.l.b16 %v206
      %v548 = vunpack.c.h.b16 %v206
      %v549 = vunpack.c.l.b16 %v207
      %v550 = vunpack.c.h.b16 %v207
      %v551 = vunpack.c.l.b16 %v208
      %v552 = vunpack.c.h.b16 %v208
      %v553 = vunpack.c.l.b16 %v209
      %v554 = vunpack.c.h.b16 %v209
      %v555 = vunpack.c.l.b16 %v210
      %v556 = vunpack.c.h.b16 %v210
      %v557 = vunpack.c.l.b16 %v211
      %v558 = vunpack.c.h.b16 %v211
      %v559 = vunpack.c.l.b16 %v212
      %v560 = vunpack.c.h.b16 %v212
      %v561 = vunpack.c.l.b16 %v213
      %v562 = vunpack.c.h.b16 %v213
      %v563 = vunpack.c.l.b16 %v214
      %v564 = vunpack.c.h.b16 %v214
      %v565 = vunpack.c.l.b16 %v215
      %v566 = vunpack.c.h.b16 %v215
      %v567 = vunpack.c.l.b16 %v216
      %v568 = vunpack.c.h.b16 %v216
      %v569 = vunpack.c.l.b16 %v217
      %v570 = vunpack.c.h.b16 %v217
      %v571 = vunpack.c.l.b16 %v218
      %v572 = vunpack.c.h.b16 %v218
      %v573 = vunpack.c.l.b16 %v219
      %v574 = vunpack.c.h.b16 %v219
      %v575 = vunpack.c.l.b16 %v220
      %v576 = vunpack.c.h.b16 %v220
      %v577 = vunpack.c.l.b16 %v221
      %v578 = vunpack.c.h.b16 %v221
      %v579 = vunpack.c.l.b16 %v222
      %v580 = vunpack.c.h.b16 %v222
      %v581 = vunpack.c.l.b16 %v223
      %v582 = vunpack.c.h.b16 %v223
      %v583 = vunpack.c.l.b16 %v224
      %v584 = vunpack.c.h.b16 %v224
      %v585 = vunpack.c.l.b16 %v225
      %v586 = vunpack.c.h.b16 %v225
      %v587 = vunpack.c.l.b16 %v226
      %v588 = vunpack.c.h.b16 %v226
      %v589 = vunpack.c.l.b16 %v227
      %v590 = vunpack.c.h.b16 %v227
      %v591 = vunpack.c.l.b16 %v228
      %v592 = vunpack.c.h.b16 %v228
      %v593 = vunpack.c.l.b16 %v229
      %v594 = vunpack.c.h.b16 %v229
      %v595 = vunpack.c.l.b16 %v230
      %v596 = vunpack.c.h.b16 %v230
      %v597 = vunpack.c.l.b16 %v231
      %v598 = vunpack.c.h.b16 %v231
      %v599 = vunpack.c.l.b16 %v232
      %v600 = vunpack.c.h.b16 %v232
      %v601 = vunpack.c.l.b16 %v233
      %v602 = vunpack.c.h.b16 %v233
      %v603 = vunpack.c.l.b16 %v234
      %v604 = vunpack.c.h.b16 %v234
      %v605 = vunpack.c.l.b16 %v235
      %v606 = vunpack.c.h.b16 %v235
      %v607 = vunpack.c.l.b16 %v236
      %v608 = vunpack.c.h.b16 %v236
      %v609 = vunpack.c.l.b16 %v237
      %v610 = vunpack.c.h.b16 %v237
      %v611 = vunpack.c.l.b16 %v238
      %v612 = vunpack.c.h.b16 %v238
      %v613 = vunpack.c.l.b16 %v239
      %v614 = vunpack.c.h.b16 %v239
      %v615 = vunpack.c.l.b16 %v240
      %v616 = vunpack.c.h.b16 %v240
      %v617 = vunpack.c.l.b16 %v241
      %v618 = vunpack.c.h.b16 %v241
      %v619 = vunpack.c.l.b16 %v242
      %v620 = vunpack.c.h.b16 %v242
      %v621 = vunpack.c.l.b16 %v243
      %v622 = vunpack.c.h.b16 %v243
      %v623 = vunpack.c.l.b16 %v244
      %v624 = vunpack.c.h.b16 %v244
      %v625 = vunpack.c.l.b16 %v245
      %v626 = vunpack.c.h.b16 %v245
      %v627 = vunpack.c.l.b16 %v246
      %v628 = vunpack.c.h.b16 %v246
      %v629 = vunpack.c.l.b16 %v247
      %v630 = vunpack.c.h.b16 %v247
      %v631 = vunpack.c.l.b16 %v248
      %v632 = vunpack.c.h.b16 %v248
      %v633 = vunpack.c.l.b16 %v249
      %v634 = vunpack.c.h.b16 %v249
      %v635 = vunpack.c.l.b16 %v250
      %v636 = vunpack.c.h.b16 %v250
      %v637 = vunpack.c.l.b16 %v251
      %v638 = vunpack.c.h.b16 %v251
      %v639 = vunpack.c.l.b16 %v252
      %v640 = vunpack.c.h.b16 %v252
      %v641 = vunpack.c.l.b16 %v253
      %v642 = vunpack.c.h.b16 %v253
      %v643 = vunpack.c.l.b16 %v254
      %v644 = vunpack.c.h.b16 %v254
      %v645 = vunpack.c.l.b16 %v255
      %v646 = vunpack.c.h.b16 %v255
      %v647 = vunpack.c.l.b16 %v256
      %v648 = vunpack.c.h.b16 %v256
      %v649 = vunpack.c.l.b16 %v257
      %v650 = vunpack.c.h.b16 %v257
      %v651 = vunpack.c.l.b16 %v258
      %v652 = vunpack.c.h.b16 %v258
      %v653 = vunpack.c.l.b16 %v259
      %v654 = vunpack.c.h.b16 %v259
      %v655 = vunpack.c.l.b16 %v260
      %v656 = vunpack.c.h.b16 %v260
      %v657 = vunpack.c.l.b16 %v261
      %v658 = vunpack.c.h.b16 %v261
      %v659 = vunpack.c.l.b16 %v262
      %v660 = vunpack.c.h.b16 %v262
      %v661 = vunpack.c.l.b16 %v263
      %v662 = vunpack.c.h.b16 %v263
      %v663 = vunpack.c.l.b16 %v264
      %v664 = vunpack.c.h.b16 %v264
      %v665 = vunpack.c.l.b16 %v265
      %v666 = vunpack.c.h.b16 %v265
      %v667 = vunpack.c.l.b16 %v266
      %v668 = vunpack.c.h.b16 %v266
      %v669 = vunpack.c.l.b16 %v267
      %v670 = vunpack.c.h.b16 %v267
      %v671 = vunpack.c.l.b16 %v268
      %v672 = vunpack.c.h.b16 %v268
      %v673 = vunpack.c.l.b16 %v269
      %v674 = vunpack.c.h.b16 %v269
      %v675 = vunpack.c.l.b16 %v270
      %v676 = vunpack.c.h.b16 %v270
      %v677 = vunpack.c.l.b16 %v271
      %v678 = vunpack.c.h.b16 %v271
      %v679 = vunpack.c.l.b16 %v272
      %v680 = vunpack.c.h.b16 %v272
      %v681 = vunpack.c.l.b16 %v273
      %v682 = vunpack.c.h.b16 %v273
      %v683 = vunpack.c.l.b16 %v274
      %v684 = vunpack.c.h.b16 %v274
      %v685 = vunpack.c.l.b16 %v275
      %v686 = vunpack.c.h.b16 %v275
      %v687 = vunpack.c.l.b16 %v276
      %v688 = vunpack.c.h.b16 %v276
      %v689 = vunpack.c.l.b16 %v277
      %v690 = vunpack.c.h.b16 %v277
      %v691 = vunpack.c.l.b16 %v278
      %v692 = vunpack.c.h.b16 %v278
      %v693 = vunpack.c.l.b16 %v279
      %v694 = vunpack.c.h.b16 %v279
      %v695 = vunpack.c.l.b16 %v280
      %v696 = vunpack.c.h.b16 %v280
      %v697 = vunpack.c.l.b16 %v281
      %v698 = vunpack.c.h.b16 %v281
      %v699 = vunpack.c.l.b16 %v282
      %v700 = vunpack.c.h.b16 %v282
      %v701 = vunpack.c.l.b16 %v283
      %v702 = vunpack.c.h.b16 %v283
      %v703 = vunpack.c.l.b16 %v284
      %v704 = vunpack.c.h.b16 %v284
      %v705 = vunpack.c.l.b16 %v285
      %v706 = vunpack.c.h.b16 %v285
      %v707 = vunpack.c.l.b16 %v286
      %v708 = vunpack.c.h.b16 %v286
      %v709 = vunpack.c.l.b16 %v287
      %v710 = vunpack.c.h.b16 %v287
      %v711 = vunpack.c.l.b16 %v288
      %v712 = vunpack.c.h.b16 %v288
      %v713 = vunpack.c.l.b16 %v289
      %v714 = vunpack.c.h.b16 %v289
      %v715 = vunpack.c.l.b16 %v290
      %v716 = vunpack.c.h.b16 %v290
      %v717 = vunpack.c.l.b16 %v291
      %v718 = vunpack.c.h.b16 %v291
      %v719 = vunpack.c.l.b16 %v292
      %v720 = vunpack.c.h.b16 %v292
      %v721 = vunpack.c.l.b16 %v293
      %v722 = vunpack.c.h.b16 %v293
      %v723 = vunpack.c.l.b16 %v294
      %v724 = vunpack.c.h.b16 %v294
      %v725 = vunpack.c.l.b16 %v295
      %v726 = vunpack.c.h.b16 %v295
      %v727 = vunpack.c.l.b16 %v296
      %v728 = vunpack.c.h.b16 %v296
      %v729 = vunpack.c.l.b16 %v297
      %v730 = vunpack.c.h.b16 %v297
      %v731 = vunpack.c.l.b16 %v298
      %v732 = vunpack.c.h.b16 %v298
      %v733 = vunpack.c.l.b16 %v299
      %v734 = vunpack.c.h.b16 %v299
      %v735 = vunpack.c.l.b16 %v300
      %v736 = vunpack.c.h.b16 %v300
      %v737 = vunpack.c.l.b16 %v301
      %v738 = vunpack.c.h.b16 %v301
      %v739 = vunpack.c.l.b16 %v302
      %v740 = vunpack.c.h.b16 %v302
      %v741 = vunpack.c.l.b16 %v303
      %v742 = vunpack.c.h.b16 %v303
      %v743 = vunpack.c.l.b16 %v304
      %v744 = vunpack.c.h.b16 %v304
      %v745 = vunpack.c.l.b16 %v305
      %v746 = vunpack.c.h.b16 %v305
      %v747 = vpack.c.b16 %v495, %v491
      %v748 = vpack.c.b16 %v496, %v492
      %v749 = vpack.c.b16 %v497, %v493
      %v750 = vpack.c.b16 %v498, %v494
      %v751 = vpack.c.b16 %v503, %v499
      %v752 = vpack.c.b16 %v504, %v500
      %v753 = vpack.c.b16 %v505, %v501
      %v754 = vpack.c.b16 %v506, %v502
      %v755 = vpack.c.b16 %v511, %v507
      %v756 = vpack.c.b16 %v512, %v508
      %v757 = vpack.c.b16 %v513, %v509
      %v758 = vpack.c.b16 %v514, %v510
      %v759 = vpack.c.b16 %v519, %v515
      %v760 = vpack.c.b16 %v520, %v516
      %v761 = vpack.c.b16 %v521, %v517
      %v762 = vpack.c.b16 %v522, %v518
      %v763 = vpack.c.b16 %v527, %v523
      %v764 = vpack.c.b16 %v528, %v524
      %v765 = vpack.c.b16 %v529, %v525
      %v766 = vpack.c.b16 %v530, %v526
      %v767 = vpack.c.b16 %v535, %v531
      %v768 = vpack.c.b16 %v536, %v532
      %v769 = vpack.c.b16 %v537, %v533
      %v770 = vpack.c.b16 %v538, %v534
      %v771 = vpack.c.b16 %v543, %v539
      %v772 = vpack.c.b16 %v544, %v540
      %v773 = vpack.c.b16 %v545, %v541
      %v774 = vpack.c.b16 %v546, %v542
      %v775 = vpack.c.b16 %v551, %v547
      %v776 = vpack.c.b16 %v552, %v548
      %v777 = vpack.c.b16 %v553, %v549
      %v778 = vpack.c.b16 %v554, %v550
      %v779 = vpack.c.b16 %v559, %v555
      %v780 = vpack.c.b16 %v560, %v556
      %v781 = vpack.c.b16 %v561, %v557
      %v782 = vpack.c.b16 %v562, %v558
      %v783 = vpack.c.b16 %v567, %v563
      %v784 = vpack.c.b16 %v568, %v564
      %v785 = vpack.c.b16 %v569, %v565
      %v786 = vpack.c.b16 %v570, %v566
      %v787 = vpack.c.b16 %v575, %v571
      %v788 = vpack.c.b16 %v576, %v572
      %v789 = vpack.c.b16 %v577, %v573
      %v790 = vpack.c.b16 %v578, %v574
      %v791 = vpack.c.b16 %v583, %v579
      %v792 = vpack.c.b16 %v584, %v580
      %v793 = vpack.c.b16 %v585, %v581
      %v794 = vpack.c.b16 %v586, %v582
      %v795 = vpack.c.b16 %v591, %v587
      %v796 = vpack.c.b16 %v592, %v588
      %v797 = vpack.c.b16 %v593, %v589
      %v798 = vpack.c.b16 %v594, %v590
      %v799 = vpack.c.b16 %v599, %v595
      %v800 = vpack.c.b16 %v600, %v596
      %v801 = vpack.c.b16 %v601, %v597
      %v802 = vpack.c.b16 %v602, %v598
      %v803 = vpack.c.b16 %v607, %v603
      %v804 = vpack.c.b16 %v608, %v604
      %v805 = vpack.c.b16 %v609, %v605
      %v806 = vpack.c.b16 %v610, %v606
      %v807 = vpack.c.b16 %v615, %v611
      %v808 = vpack.c.b16 %v616, %v612
      %v809 = vpack.c.b16 %v617, %v613
      %v810 = vpack.c.b16 %v618, %v614
      %v811 = vpack.c.b16 %v623, %v619
      %v812 = vpack.c.b16 %v624, %v620
      %v813 = vpack.c.b16 %v625, %v621
      %v814 = vpack.c.b16 %v626, %v622
      %v815 = vpack.c.b16 %v631, %v627
      %v816 = vpack.c.b16 %v632, %v628
      %v817 = vpack.c.b16 %v633, %v629
      %v818 = vpack.c.b16 %v634, %v630
      %v819 = vpack.c.b16 %v639, %v635
      %v820 = vpack.c.b16 %v640, %v636
      %v821 = vpack.c.b16 %v641, %v637
      %v822 = vpack.c.b16 %v642, %v638
      %v823 = vpack.c.b16 %v647, %v643
      %v824 = vpack.c.b16 %v648, %v644
      %v825 = vpack.c.b16 %v649, %v645
      %v826 = vpack.c.b16 %v650, %v646
      %v827 = vpack.c.b16 %v655, %v651
      %v828 = vpack.c.b16 %v656, %v652
      %v829 = vpack.c.b16 %v657, %v653
      %v830 = vpack.c.b16 %v658, %v654
      %v831 = vpack.c.b16 %v663, %v659
      %v832 = vpack.c.b16 %v664, %v660
      %v833 = vpack.c.b16 %v665, %v661
      %v834 = vpack.c.b16 %v666, %v662
      %v835 = vpack.c.b16 %v671, %v667
      %v836 = vpack.c.b16 %v672, %v668
      %v837 = vpack.c.b16 %v673, %v669
      %v838 = vpack.c.b16 %v674, %v670
      %v839 = vpack.c.b16 %v679, %v675
      %v840 = vpack.c.b16 %v680, %v676
      %v841 = vpack.c.b16 %v681, %v677
      %v842 = vpack.c.b16 %v682, %v678
      %v843 = vpack.c.b16 %v687, %v683
      %v844 = vpack.c.b16 %v688, %v684
      %v845 = vpack.c.b16 %v689, %v685
      %v846 = vpack.c.b16 %v690, %v686
      %v847 = vpack.c.b16 %v695, %v691
      %v848 = vpack.c.b16 %v696, %v692
      %v849 = vpack.c.b16 %v697, %v693
      %v850 = vpack.c.b16 %v698, %v694
      %v851 = vpack.c.b16 %v703, %v699
      %v852 = vpack.c.b16 %v704, %v700
      %v853 = vpack.c.b16 %v705, %v701
      %v854 = vpack.c.b16 %v706, %v702
      %v855 = vpack.c.b16 %v711, %v707
      %v856 = vpack.c.b16 %v712, %v708
      %v857 = vpack.c.b16 %v713, %v709
      %v858 = vpack.c.b16 %v714, %v710
      %v859 = vpack.c.b16 %v719, %v715
      %v860 = vpack.c.b16 %v720, %v716
      %v861 = vpack.c.b16 %v721, %v717
      %v862 = vpack.c.b16 %v722, %v718
      %v863 = vpack.c.b16 %v727, %v723
      %v864 = vpack.c.b16 %v728, %v724
      %v865 = vpack.c.b16 %v729, %v725
      %v866 = vpack.c.b16 %v730, %v726
      %v867 = vpack.c.b16 %v735, %v731
      %v868 = vpack.c.b16 %v736, %v732
      %v869 = vpack.c.b16 %v737, %v733
      %v870 = vpack.c.b16 %v738, %v734
      %v871 = vpack.c.b16 %v743, %v739
      %v872 = vpack.c.b16 %v744, %v740
      %v873 = vpack.c.b16 %v745, %v741
      %v874 = vpack.c.b16 %v746, %v742
      %v1021 = vunpack.c.l.b16 %v306
      %v1022 = vunpack.c.l.b16 %v307
      %v1023 = vunpack.c.l.b16 %v308
      %v1024 = vunpack.c.l.b16 %v309
      %v1025 = vunpack.c.l.b16 %v310
      %v1026 = vunpack.c.l.b16 %v311
      %v1027 = vunpack.c.l.b16 %v312
      %v1028 = vunpack.c.l.b16 %v313
      %v1029 = vunpack.c.l.b16 %v314
      %v1030 = vunpack.c.l.b16 %v315
      %v1031 = vunpack.c.l.b16 %v316
      %v1032 = vunpack.c.l.b16 %v317
      %v1033 = vunpack.c.l.b16 %v318
      %v1034 = vunpack.c.l.b16 %v319
      %v1035 = vunpack.c.l.b16 %v320
      %v1036 = vunpack.c.l.b16 %v321
      %v1037 = vunpack.c.l.b16 %v322
      %v1038 = vunpack.c.l.b16 %v323
      %v1039 = vunpack.c.l.b16 %v324
      %v1040 = vunpack.c.l.b16 %v325
      %v1041 = vunpack.c.l.b16 %v326
      %v1042 = vunpack.c.l.b16 %v327
      %v1043 = vunpack.c.l.b16 %v328
      %v1044 = vunpack.c.l.b16 %v329
      %v1045 = vunpack.c.l.b16 %v330
      %v1046 = vunpack.c.l.b16 %v331
      %v1047 = vunpack.c.l.b16 %v332
      %v1048 = vunpack.c.l.b16 %v333
      %v1049 = vunpack.c.l.b16 %v334
      %v1050 = vunpack.c.l.b16 %v335
      %v1051 = vunpack.c.l.b16 %v336
      %v1052 = vunpack.c.l.b16 %v337
      %v1053 = vunpack.c.l.b16 %v338
      %v1054 = vunpack.c.l.b16 %v339
      %v1055 = vunpack.c.l.b16 %v340
      %v1056 = vunpack.c.l.b16 %v341
      %v1057 = vunpack.c.l.b16 %v342
      %v1058 = vunpack.c.l.b16 %v343
      %v1059 = vunpack.c.l.b16 %v344
      %v1060 = vunpack.c.l.b16 %v345
      %v1061 = vunpack.c.l.b16 %v346
      %v1062 = vunpack.c.l.b16 %v347
      %v1063 = vunpack.c.l.b16 %v348
      %v1064 = vunpack.c.l.b16 %v349
      %v1065 = vunpack.c.l.b16 %v350
      %v1066 = vunpack.c.l.b16 %v351
      %v1067 = vunpack.c.l.b16 %v352
      %v1068 = vunpack.c.l.b16 %v353
      %v1069 = vunpack.c.l.b16 %v354
      %v1070 = vunpack.c.l.b16 %v355
      %v1071 = vpack.c.b16 %v1022, %v1021
      %v1072 = vpack.c.b16 %v1024, %v1023
      %v1073 = vpack.c.b16 %v1026, %v1025
      %v1074 = vpack.c.b16 %v1028, %v1027
      %v1075 = vpack.c.b16 %v1030, %v1029
      %v1076 = vpack.c.b16 %v1032, %v1031
      %v1077 = vpack.c.b16 %v1034, %v1033
      %v1078 = vpack.c.b16 %v1036, %v1035
      %v1079 = vpack.c.b16 %v1038, %v1037
      %v1080 = vpack.c.b16 %v1040, %v1039
      %v1081 = vpack.c.b16 %v1042, %v1041
      %v1082 = vpack.c.b16 %v1044, %v1043
      %v1083 = vpack.c.b16 %v1046, %v1045
      %v1084 = vpack.c.b16 %v1048, %v1047
      %v1085 = vpack.c.b16 %v1050, %v1049
      %v1086 = vpack.c.b16 %v1052, %v1051
      %v1087 = vpack.c.b16 %v1054, %v1053
      %v1088 = vpack.c.b16 %v1056, %v1055
      %v1089 = vpack.c.b16 %v1058, %v1057
      %v1090 = vpack.c.b16 %v1060, %v1059
      %v1091 = vpack.c.b16 %v1062, %v1061
      %v1092 = vpack.c.b16 %v1064, %v1063
      %v1093 = vpack.c.b16 %v1066, %v1065
      %v1094 = vpack.c.b16 %v1068, %v1067
      %v1095 = vpack.c.b16 %v1070, %v1069
      %vm1121 = vcmask 130048
      %v1123 = vsel %vm1121, %v750, 0
      %v1126 = vsel %vm1121, %v754, 0
      %v1129 = vsel %vm1121, %v758, 0
      %v1132 = vsel %vm1121, %v762, 0
      %v1135 = vsel %vm1121, %v766, 0
      %v1138 = vsel %vm1121, %v770, 0
      %v1141 = vsel %vm1121, %v774, 0
      %v1144 = vsel %vm1121, %v778, 0
      %v1147 = vsel %vm1121, %v782, 0
      %v1150 = vsel %vm1121, %v786, 0
      %v1153 = vsel %vm1121, %v790, 0
      %v1156 = vsel %vm1121, %v794, 0
      %v1159 = vsel %vm1121, %v798, 0
      %v1162 = vsel %vm1121, %v802, 0
      %v1165 = vsel %vm1121, %v806, 0
      %v1168 = vsel %vm1121, %v810, 0
      %v1171 = vsel %vm1121, %v814, 0
      %v1174 = vsel %vm1121, %v818, 0
      %v1177 = vsel %vm1121, %v822, 0
      %v1180 = vsel %vm1121, %v826, 0
      %v1183 = vsel %vm1121, %v830, 0
      %v1186 = vsel %vm1121, %v834, 0
      %v1189 = vsel %vm1121, %v838, 0
      %v1192 = vsel %vm1121, %v842, 0
      %v1195 = vsel %vm1121, %v846, 0
      %v1198 = vsel %vm1121, %v850, 0
      %v1201 = vsel %vm1121, %v854, 0
      %v1204 = vsel %vm1121, %v858, 0
      %v1207 = vsel %vm1121, %v862, 0
      %v1210 = vsel %vm1121, %v866, 0
      %v1213 = vsel %vm1121, %v870, 0
      %v1216 = vsel %vm1121, %v874, 0
      %1218 = vmatprep.subr.bf16.mxu0 0
      %1219 = vmatpush1.bf16.msra.mxu0 %v1078
      %1220 = vmatprep.subr.bf16.mxu0 0
      %1221 = vmatpush1.bf16.msra.mxu0 %v1077
      %1222 = vmatprep.subr.bf16.mxu0 0
      %1223 = vmatpush1.bf16.msra.mxu0 %v1076
      %1224 = vmatprep.subr.bf16.mxu0 0
      %1225 = vmatpush1.bf16.msra.mxu0 %v1075
      %1226 = vmatprep.subr.bf16.mxu0 0
      %1227 = vmatpush1.bf16.msra.mxu0 %v1074
      %1228 = vmatprep.subr.bf16.mxu0 0
      %1229 = vmatpush1.bf16.msra.mxu0 %v1073
      %1230 = vmatprep.subr.bf16.mxu0 0
      %1231 = vmatpush1.bf16.msra.mxu0 %v1072
      %1232 = vmatprep.subr.bf16.mxu0 0
      %1233 = vmatpush1.bf16.msra.mxu0 %v1071
      %1234 = vmatprep.subr.bf16.mxu0 0
      %1235 = vmatpush2.bf16.msra.mxu0 %v1086
      %1236 = vmatprep.subr.bf16.mxu0 0
      %1237 = vmatpush2.bf16.msra.mxu0 %v1085
      %1238 = vmatprep.subr.bf16.mxu0 0
      %1239 = vmatpush2.bf16.msra.mxu0 %v1084
      %1240 = vmatprep.subr.bf16.mxu0 0
      %1241 = vmatpush2.bf16.msra.mxu0 %v1083
      %1242 = vmatprep.subr.bf16.mxu0 0
      %1243 = vmatpush2.bf16.msra.mxu0 %v1082
      %1244 = vmatprep.subr.bf16.mxu0 0
      %1245 = vmatpush2.bf16.msra.mxu0 %v1081
      %1246 = vmatprep.subr.bf16.mxu0 0
      %1247 = vmatpush2.bf16.msra.mxu0 %v1080
      %1248 = vmatprep.subr.bf16.mxu0 0
      %1249 = vmatpush2.bf16.msra.mxu0 %v1079
      %1250 = vmatprep.mubr.bf16.mxu0 %v748
      %1251 = vmatmul.mubr.bf16.gmra.mxu0 %v747
      %v1252 = vpop.f32.mrf.mxu0
      %v1253 = vadd.f32 %v361, %v1252
      %v1254 = vpop.f32.mrf.mxu0
      %v1255 = vpop.f32.mrf.mxu0
      %v1256 = vadd.f32 %v361, %v1255
      %v1257 = vpop.f32.mrf.mxu0
      %1258 = vmatprep.mubr.bf16.mxu0 %v752
      %1259 = vmatmul.mubr.bf16.gmra.mxu0 %v751
      %v1260 = vpop.f32.mrf.mxu0
      %v1261 = vadd.f32 %v361, %v1260
      %v1262 = vpop.f32.mrf.mxu0
      %v1263 = vpop.f32.mrf.mxu0
      %v1264 = vadd.f32 %v361, %v1263
      %v1265 = vpop.f32.mrf.mxu0
      %1266 = vmatprep.mubr.bf16.mxu0 %v756
      %1267 = vmatmul.mubr.bf16.gmra.mxu0 %v755
      %v1268 = vpop.f32.mrf.mxu0
      %v1269 = vadd.f32 %v361, %v1268
      %v1270 = vpop.f32.mrf.mxu0
      %v1271 = vpop.f32.mrf.mxu0
      %v1272 = vadd.f32 %v361, %v1271
      %v1273 = vpop.f32.mrf.mxu0
      %1274 = vmatprep.mubr.bf16.mxu0 %v760
      %1275 = vmatmul.mubr.bf16.gmra.mxu0 %v759
      %v1276 = vpop.f32.mrf.mxu0
      %v1277 = vadd.f32 %v361, %v1276
      %v1278 = vpop.f32.mrf.mxu0
      %v1279 = vpop.f32.mrf.mxu0
      %v1280 = vadd.f32 %v361, %v1279
      %v1281 = vpop.f32.mrf.mxu0
      %1282 = vmatprep.mubr.bf16.mxu0 %v764
      %1283 = vmatmul.mubr.bf16.gmra.mxu0 %v763
      %v1284 = vpop.f32.mrf.mxu0
      %v1285 = vadd.f32 %v361, %v1284
      %v1286 = vpop.f32.mrf.mxu0
      %v1287 = vpop.f32.mrf.mxu0
      %v1288 = vadd.f32 %v361, %v1287
      %v1289 = vpop.f32.mrf.mxu0
      %1290 = vmatprep.mubr.bf16.mxu0 %v768
      %1291 = vmatmul.mubr.bf16.gmra.mxu0 %v767
      %v1292 = vpop.f32.mrf.mxu0
      %v1293 = vadd.f32 %v361, %v1292
      %v1294 = vpop.f32.mrf.mxu0
      %v1295 = vpop.f32.mrf.mxu0
      %v1296 = vadd.f32 %v361, %v1295
      %v1297 = vpop.f32.mrf.mxu0
      %1298 = vmatprep.mubr.bf16.mxu0 %v772
      %1299 = vmatmul.mubr.bf16.gmra.mxu0 %v771
      %v1300 = vpop.f32.mrf.mxu0
      %v1301 = vadd.f32 %v361, %v1300
      %v1302 = vpop.f32.mrf.mxu0
      %v1303 = vpop.f32.mrf.mxu0
      %v1304 = vadd.f32 %v361, %v1303
      %v1305 = vpop.f32.mrf.mxu0
      %1306 = vmatprep.mubr.bf16.mxu0 %v776
      %1307 = vmatmul.mubr.bf16.gmra.mxu0 %v775
      %v1308 = vpop.f32.mrf.mxu0
      %v1309 = vadd.f32 %v361, %v1308
      %v1310 = vpop.f32.mrf.mxu0
      %v1311 = vpop.f32.mrf.mxu0
      %v1312 = vadd.f32 %v361, %v1311
      %v1313 = vpop.f32.mrf.mxu0
      %1314 = vmatprep.mubr.bf16.mxu0 %v780
      %1315 = vmatmul.mubr.bf16.gmra.mxu0 %v779
      %v1316 = vpop.f32.mrf.mxu0
      %v1317 = vadd.f32 %v361, %v1316
      %v1318 = vpop.f32.mrf.mxu0
      %v1319 = vpop.f32.mrf.mxu0
      %v1320 = vadd.f32 %v361, %v1319
      %v1321 = vpop.f32.mrf.mxu0
      %1322 = vmatprep.mubr.bf16.mxu0 %v784
      %1323 = vmatmul.mubr.bf16.gmra.mxu0 %v783
      %v1324 = vpop.f32.mrf.mxu0
      %v1325 = vadd.f32 %v361, %v1324
      %v1326 = vpop.f32.mrf.mxu0
      %v1327 = vpop.f32.mrf.mxu0
      %v1328 = vadd.f32 %v361, %v1327
      %v1329 = vpop.f32.mrf.mxu0
      %1330 = vmatprep.mubr.bf16.mxu0 %v788
      %1331 = vmatmul.mubr.bf16.gmra.mxu0 %v787
      %v1332 = vpop.f32.mrf.mxu0
      %v1333 = vadd.f32 %v361, %v1332
      %v1334 = vpop.f32.mrf.mxu0
      %v1335 = vpop.f32.mrf.mxu0
      %v1336 = vadd.f32 %v361, %v1335
      %v1337 = vpop.f32.mrf.mxu0
      %1338 = vmatprep.mubr.bf16.mxu0 %v792
      %1339 = vmatmul.mubr.bf16.gmra.mxu0 %v791
      %v1340 = vpop.f32.mrf.mxu0
      %v1341 = vadd.f32 %v361, %v1340
      %v1342 = vpop.f32.mrf.mxu0
      %v1343 = vpop.f32.mrf.mxu0
      %v1344 = vadd.f32 %v361, %v1343
      %v1345 = vpop.f32.mrf.mxu0
      %1346 = vmatprep.mubr.bf16.mxu0 %v796
      %1347 = vmatmul.mubr.bf16.gmra.mxu0 %v795
      %v1348 = vpop.f32.mrf.mxu0
      %v1349 = vadd.f32 %v361, %v1348
      %v1350 = vpop.f32.mrf.mxu0
      %v1351 = vpop.f32.mrf.mxu0
      %v1352 = vadd.f32 %v361, %v1351
      %v1353 = vpop.f32.mrf.mxu0
      %1354 = vmatprep.mubr.bf16.mxu0 %v800
      %1355 = vmatmul.mubr.bf16.gmra.mxu0 %v799
      %v1356 = vpop.f32.mrf.mxu0
      %v1357 = vadd.f32 %v361, %v1356
      %v1358 = vpop.f32.mrf.mxu0
      %v1359 = vpop.f32.mrf.mxu0
      %v1360 = vadd.f32 %v361, %v1359
      %v1361 = vpop.f32.mrf.mxu0
      %1362 = vmatprep.mubr.bf16.mxu0 %v804
      %1363 = vmatmul.mubr.bf16.gmra.mxu0 %v803
      %v1364 = vpop.f32.mrf.mxu0
      %v1365 = vadd.f32 %v361, %v1364
      %v1366 = vpop.f32.mrf.mxu0
      %v1367 = vpop.f32.mrf.mxu0
      %v1368 = vadd.f32 %v361, %v1367
      %v1369 = vpop.f32.mrf.mxu0
      %1370 = vmatprep.mubr.bf16.mxu0 %v808
      %1371 = vmatmul.mubr.bf16.gmra.mxu0 %v807
      %v1372 = vpop.f32.mrf.mxu0
      %v1373 = vadd.f32 %v361, %v1372
      %v1374 = vpop.f32.mrf.mxu0
      %v1375 = vpop.f32.mrf.mxu0
      %v1376 = vadd.f32 %v361, %v1375
      %v1377 = vpop.f32.mrf.mxu0
      %1378 = vmatprep.mubr.bf16.mxu0 %v812
      %1379 = vmatmul.mubr.bf16.gmra.mxu0 %v811
      %v1380 = vpop.f32.mrf.mxu0
      %v1381 = vadd.f32 %v361, %v1380
      %v1382 = vpop.f32.mrf.mxu0
      %v1383 = vpop.f32.mrf.mxu0
      %v1384 = vadd.f32 %v361, %v1383
      %v1385 = vpop.f32.mrf.mxu0
      %1386 = vmatprep.mubr.bf16.mxu0 %v816
      %1387 = vmatmul.mubr.bf16.gmra.mxu0 %v815
      %v1388 = vpop.f32.mrf.mxu0
      %v1389 = vadd.f32 %v361, %v1388
      %v1390 = vpop.f32.mrf.mxu0
      %v1391 = vpop.f32.mrf.mxu0
      %v1392 = vadd.f32 %v361, %v1391
      %v1393 = vpop.f32.mrf.mxu0
      %1394 = vmatprep.mubr.bf16.mxu0 %v820
      %1395 = vmatmul.mubr.bf16.gmra.mxu0 %v819
      %v1396 = vpop.f32.mrf.mxu0
      %v1397 = vadd.f32 %v361, %v1396
      %v1398 = vpop.f32.mrf.mxu0
      %v1399 = vpop.f32.mrf.mxu0
      %v1400 = vadd.f32 %v361, %v1399
      %v1401 = vpop.f32.mrf.mxu0
      %1402 = vmatprep.mubr.bf16.mxu0 %v824
      %1403 = vmatmul.mubr.bf16.gmra.mxu0 %v823
      %v1404 = vpop.f32.mrf.mxu0
      %v1405 = vadd.f32 %v361, %v1404
      %v1406 = vpop.f32.mrf.mxu0
      %v1407 = vpop.f32.mrf.mxu0
      %v1408 = vadd.f32 %v361, %v1407
      %v1409 = vpop.f32.mrf.mxu0
      %1410 = vmatprep.mubr.bf16.mxu0 %v828
      %1411 = vmatmul.mubr.bf16.gmra.mxu0 %v827
      %v1412 = vpop.f32.mrf.mxu0
      %v1413 = vadd.f32 %v361, %v1412
      %v1414 = vpop.f32.mrf.mxu0
      %v1415 = vpop.f32.mrf.mxu0
      %v1416 = vadd.f32 %v361, %v1415
      %v1417 = vpop.f32.mrf.mxu0
      %1418 = vmatprep.mubr.bf16.mxu0 %v832
      %1419 = vmatmul.mubr.bf16.gmra.mxu0 %v831
      %v1420 = vpop.f32.mrf.mxu0
      %v1421 = vadd.f32 %v361, %v1420
      %v1422 = vpop.f32.mrf.mxu0
      %v1423 = vpop.f32.mrf.mxu0
      %v1424 = vadd.f32 %v361, %v1423
      %v1425 = vpop.f32.mrf.mxu0
      %1426 = vmatprep.mubr.bf16.mxu0 %v836
      %1427 = vmatmul.mubr.bf16.gmra.mxu0 %v835
      %v1428 = vpop.f32.mrf.mxu0
      %v1429 = vadd.f32 %v361, %v1428
      %v1430 = vpop.f32.mrf.mxu0
      %v1431 = vpop.f32.mrf.mxu0
      %v1432 = vadd.f32 %v361, %v1431
      %v1433 = vpop.f32.mrf.mxu0
      %1434 = vmatprep.mubr.bf16.mxu0 %v840
      %1435 = vmatmul.mubr.bf16.gmra.mxu0 %v839
      %v1436 = vpop.f32.mrf.mxu0
      %v1437 = vadd.f32 %v361, %v1436
      %v1438 = vpop.f32.mrf.mxu0
      %v1439 = vpop.f32.mrf.mxu0
      %v1440 = vadd.f32 %v361, %v1439
      %v1441 = vpop.f32.mrf.mxu0
      %1442 = vmatprep.mubr.bf16.mxu0 %v844
      %1443 = vmatmul.mubr.bf16.gmra.mxu0 %v843
      %v1444 = vpop.f32.mrf.mxu0
      %v1445 = vadd.f32 %v361, %v1444
      %v1446 = vpop.f32.mrf.mxu0
      %v1447 = vpop.f32.mrf.mxu0
      %v1448 = vadd.f32 %v361, %v1447
      %v1449 = vpop.f32.mrf.mxu0
      %1450 = vmatprep.mubr.bf16.mxu0 %v848
      %1451 = vmatmul.mubr.bf16.gmra.mxu0 %v847
      %v1452 = vpop.f32.mrf.mxu0
      %v1453 = vadd.f32 %v361, %v1452
      %v1454 = vpop.f32.mrf.mxu0
      %v1455 = vpop.f32.mrf.mxu0
      %v1456 = vadd.f32 %v361, %v1455
      %v1457 = vpop.f32.mrf.mxu0
      %1458 = vmatprep.mubr.bf16.mxu0 %v852
      %1459 = vmatmul.mubr.bf16.gmra.mxu0 %v851
      %v1460 = vpop.f32.mrf.mxu0
      %v1461 = vadd.f32 %v361, %v1460
      %v1462 = vpop.f32.mrf.mxu0
      %v1463 = vpop.f32.mrf.mxu0
      %v1464 = vadd.f32 %v361, %v1463
      %v1465 = vpop.f32.mrf.mxu0
      %1466 = vmatprep.mubr.bf16.mxu0 %v856
      %1467 = vmatmul.mubr.bf16.gmra.mxu0 %v855
      %v1468 = vpop.f32.mrf.mxu0
      %v1469 = vadd.f32 %v361, %v1468
      %v1470 = vpop.f32.mrf.mxu0
      %v1471 = vpop.f32.mrf.mxu0
      %v1472 = vadd.f32 %v361, %v1471
      %v1473 = vpop.f32.mrf.mxu0
      %1474 = vmatprep.mubr.bf16.mxu0 %v860
      %1475 = vmatmul.mubr.bf16.gmra.mxu0 %v859
      %v1476 = vpop.f32.mrf.mxu0
      %v1477 = vadd.f32 %v361, %v1476
      %v1478 = vpop.f32.mrf.mxu0
      %v1479 = vpop.f32.mrf.mxu0
      %v1480 = vadd.f32 %v361, %v1479
      %v1481 = vpop.f32.mrf.mxu0
      %1482 = vmatprep.mubr.bf16.mxu0 %v864
      %1483 = vmatmul.mubr.bf16.gmra.mxu0 %v863
      %v1484 = vpop.f32.mrf.mxu0
      %v1485 = vadd.f32 %v361, %v1484
      %v1486 = vpop.f32.mrf.mxu0
      %v1487 = vpop.f32.mrf.mxu0
      %v1488 = vadd.f32 %v361, %v1487
      %v1489 = vpop.f32.mrf.mxu0
      %1490 = vmatprep.mubr.bf16.mxu0 %v868
      %1491 = vmatmul.mubr.bf16.gmra.mxu0 %v867
      %v1492 = vpop.f32.mrf.mxu0
      %v1493 = vadd.f32 %v361, %v1492
      %v1494 = vpop.f32.mrf.mxu0
      %v1495 = vpop.f32.mrf.mxu0
      %v1496 = vadd.f32 %v361, %v1495
      %v1497 = vpop.f32.mrf.mxu0
      %1498 = vmatprep.mubr.bf16.mxu0 %v872
      %1499 = vmatmul.mubr.bf16.gmra.mxu0 %v871
      %v1500 = vpop.f32.mrf.mxu0
      %v1501 = vadd.f32 %v361, %v1500
      %v1502 = vpop.f32.mrf.mxu0
      %v1503 = vpop.f32.mrf.mxu0
      %v1504 = vadd.f32 %v361, %v1503
      %v1505 = vpop.f32.mrf.mxu0
      %1506 = vdwg.mxu0
      %1507 = vmatprep.subr.bf16.mxu0 0
      %1508 = vmatpush1.bf16.msra.mxu0 %v1094
      %1509 = vmatprep.subr.bf16.mxu0 0
      %1510 = vmatpush1.bf16.msra.mxu0 %v1093
      %1511 = vmatprep.subr.bf16.mxu0 0
      %1512 = vmatpush1.bf16.msra.mxu0 %v1092
      %1513 = vmatprep.subr.bf16.mxu0 0
      %1514 = vmatpush1.bf16.msra.mxu0 %v1091
      %1515 = vmatprep.subr.bf16.mxu0 0
      %1516 = vmatpush1.bf16.msra.mxu0 %v1090
      %1517 = vmatprep.subr.bf16.mxu0 0
      %1518 = vmatpush1.bf16.msra.mxu0 %v1089
      %1519 = vmatprep.subr.bf16.mxu0 0
      %1520 = vmatpush1.bf16.msra.mxu0 %v1088
      %1521 = vmatprep.subr.bf16.mxu0 0
      %1522 = vmatpush1.bf16.msra.mxu0 %v1087
      %1523 = vmatprep.subr.bf16.mxu0 0
      %1524 = vmatpush2.bf16.msra.mxu0 0
      %1525 = vmatprep.subr.bf16.mxu0 0
      %1526 = vmatpush2.bf16.msra.mxu0 0
      %1527 = vmatprep.subr.bf16.mxu0 0
      %1528 = vmatpush2.bf16.msra.mxu0 0
      %1529 = vmatprep.subr.bf16.mxu0 0
      %1530 = vmatpush2.bf16.msra.mxu0 0
      %1531 = vmatprep.subr.bf16.mxu0 0
      %1532 = vmatpush2.bf16.msra.mxu0 0
      %1533 = vmatprep.subr.bf16.mxu0 0
      %1534 = vmatpush2.bf16.msra.mxu0 0
      %1535 = vmatprep.subr.bf16.mxu0 0
      %1536 = vmatpush2.bf16.msra.mxu0 0
      %1537 = vmatprep.subr.bf16.mxu0 0
      %1538 = vmatpush2.bf16.msra.mxu0 %v1095
      %1539 = vmatprep.mubr.bf16.mxu0 %v1123
      %1540 = vmatmul.mubr.bf16.gmra.mxu0 %v749
      %v1541 = vpop.f32.mrf.mxu0
      %v1542 = vadd.f32 %v1253, %v1541
      %v1543 = vpop.f32.mrf.mxu0
      %v1544 = vpop.f32.mrf.mxu0
      %v1545 = vadd.f32 %v1256, %v1544
      %v1546 = vpop.f32.mrf.mxu0
      %1547 = vmatprep.mubr.bf16.mxu0 %v1126
      %1548 = vmatmul.mubr.bf16.gmra.mxu0 %v753
      %v1549 = vpop.f32.mrf.mxu0
      %v1550 = vadd.f32 %v1261, %v1549
      %v1551 = vpop.f32.mrf.mxu0
      %v1552 = vpop.f32.mrf.mxu0
      %v1553 = vadd.f32 %v1264, %v1552
      %v1554 = vpop.f32.mrf.mxu0
      %1555 = vmatprep.mubr.bf16.mxu0 %v1129
      %1556 = vmatmul.mubr.bf16.gmra.mxu0 %v757
      %v1557 = vpop.f32.mrf.mxu0
      %v1558 = vadd.f32 %v1269, %v1557
      %v1559 = vpop.f32.mrf.mxu0
      %v1560 = vpop.f32.mrf.mxu0
      %v1561 = vadd.f32 %v1272, %v1560
      %v1562 = vpop.f32.mrf.mxu0
      %1563 = vmatprep.mubr.bf16.mxu0 %v1132
      %1564 = vmatmul.mubr.bf16.gmra.mxu0 %v761
      %v1565 = vpop.f32.mrf.mxu0
      %v1566 = vadd.f32 %v1277, %v1565
      %v1567 = vpop.f32.mrf.mxu0
      %v1568 = vpop.f32.mrf.mxu0
      %v1569 = vadd.f32 %v1280, %v1568
      %v1570 = vpop.f32.mrf.mxu0
      %1571 = vmatprep.mubr.bf16.mxu0 %v1135
      %1572 = vmatmul.mubr.bf16.gmra.mxu0 %v765
      %v1573 = vpop.f32.mrf.mxu0
      %v1574 = vadd.f32 %v1285, %v1573
      %v1575 = vpop.f32.mrf.mxu0
      %v1576 = vpop.f32.mrf.mxu0
      %v1577 = vadd.f32 %v1288, %v1576
      %v1578 = vpop.f32.mrf.mxu0
      %1579 = vmatprep.mubr.bf16.mxu0 %v1138
      %1580 = vmatmul.mubr.bf16.gmra.mxu0 %v769
      %v1581 = vpop.f32.mrf.mxu0
      %v1582 = vadd.f32 %v1293, %v1581
      %v1583 = vpop.f32.mrf.mxu0
      %v1584 = vpop.f32.mrf.mxu0
      %v1585 = vadd.f32 %v1296, %v1584
      %v1586 = vpop.f32.mrf.mxu0
      %1587 = vmatprep.mubr.bf16.mxu0 %v1141
      %1588 = vmatmul.mubr.bf16.gmra.mxu0 %v773
      %v1589 = vpop.f32.mrf.mxu0
      %v1590 = vadd.f32 %v1301, %v1589
      %v1591 = vpop.f32.mrf.mxu0
      %v1592 = vpop.f32.mrf.mxu0
      %v1593 = vadd.f32 %v1304, %v1592
      %v1594 = vpop.f32.mrf.mxu0
      %1595 = vmatprep.mubr.bf16.mxu0 %v1144
      %1596 = vmatmul.mubr.bf16.gmra.mxu0 %v777
      %v1597 = vpop.f32.mrf.mxu0
      %v1598 = vadd.f32 %v1309, %v1597
      %v1599 = vpop.f32.mrf.mxu0
      %v1600 = vpop.f32.mrf.mxu0
      %v1601 = vadd.f32 %v1312, %v1600
      %v1602 = vpop.f32.mrf.mxu0
      %1603 = vmatprep.mubr.bf16.mxu0 %v1147
      %1604 = vmatmul.mubr.bf16.gmra.mxu0 %v781
      %v1605 = vpop.f32.mrf.mxu0
      %v1606 = vadd.f32 %v1317, %v1605
      %v1607 = vpop.f32.mrf.mxu0
      %v1608 = vpop.f32.mrf.mxu0
      %v1609 = vadd.f32 %v1320, %v1608
      %v1610 = vpop.f32.mrf.mxu0
      %1611 = vmatprep.mubr.bf16.mxu0 %v1150
      %1612 = vmatmul.mubr.bf16.gmra.mxu0 %v785
      %v1613 = vpop.f32.mrf.mxu0
      %v1614 = vadd.f32 %v1325, %v1613
      %v1615 = vpop.f32.mrf.mxu0
      %v1616 = vpop.f32.mrf.mxu0
      %v1617 = vadd.f32 %v1328, %v1616
      %v1618 = vpop.f32.mrf.mxu0
      %1619 = vmatprep.mubr.bf16.mxu0 %v1153
      %1620 = vmatmul.mubr.bf16.gmra.mxu0 %v789
      %v1621 = vpop.f32.mrf.mxu0
      %v1622 = vadd.f32 %v1333, %v1621
      %v1623 = vpop.f32.mrf.mxu0
      %v1624 = vpop.f32.mrf.mxu0
      %v1625 = vadd.f32 %v1336, %v1624
      %v1626 = vpop.f32.mrf.mxu0
      %1627 = vmatprep.mubr.bf16.mxu0 %v1156
      %1628 = vmatmul.mubr.bf16.gmra.mxu0 %v793
      %v1629 = vpop.f32.mrf.mxu0
      %v1630 = vadd.f32 %v1341, %v1629
      %v1631 = vpop.f32.mrf.mxu0
      %v1632 = vpop.f32.mrf.mxu0
      %v1633 = vadd.f32 %v1344, %v1632
      %v1634 = vpop.f32.mrf.mxu0
      %1635 = vmatprep.mubr.bf16.mxu0 %v1159
      %1636 = vmatmul.mubr.bf16.gmra.mxu0 %v797
      %v1637 = vpop.f32.mrf.mxu0
      %v1638 = vadd.f32 %v1349, %v1637
      %v1639 = vpop.f32.mrf.mxu0
      %v1640 = vpop.f32.mrf.mxu0
      %v1641 = vadd.f32 %v1352, %v1640
      %v1642 = vpop.f32.mrf.mxu0
      %1643 = vmatprep.mubr.bf16.mxu0 %v1162
      %1644 = vmatmul.mubr.bf16.gmra.mxu0 %v801
      %v1645 = vpop.f32.mrf.mxu0
      %v1646 = vadd.f32 %v1357, %v1645
      %v1647 = vpop.f32.mrf.mxu0
      %v1648 = vpop.f32.mrf.mxu0
      %v1649 = vadd.f32 %v1360, %v1648
      %v1650 = vpop.f32.mrf.mxu0
      %1651 = vmatprep.mubr.bf16.mxu0 %v1165
      %1652 = vmatmul.mubr.bf16.gmra.mxu0 %v805
      %v1653 = vpop.f32.mrf.mxu0
      %v1654 = vadd.f32 %v1365, %v1653
      %v1655 = vpop.f32.mrf.mxu0
      %v1656 = vpop.f32.mrf.mxu0
      %v1657 = vadd.f32 %v1368, %v1656
      %v1658 = vpop.f32.mrf.mxu0
      %1659 = vmatprep.mubr.bf16.mxu0 %v1168
      %1660 = vmatmul.mubr.bf16.gmra.mxu0 %v809
      %v1661 = vpop.f32.mrf.mxu0
      %v1662 = vadd.f32 %v1373, %v1661
      %v1663 = vpop.f32.mrf.mxu0
      %v1664 = vpop.f32.mrf.mxu0
      %v1665 = vadd.f32 %v1376, %v1664
      %v1666 = vpop.f32.mrf.mxu0
      %1667 = vmatprep.mubr.bf16.mxu0 %v1171
      %1668 = vmatmul.mubr.bf16.gmra.mxu0 %v813
      %v1669 = vpop.f32.mrf.mxu0
      %v1670 = vadd.f32 %v1381, %v1669
      %v1671 = vpop.f32.mrf.mxu0
      %v1672 = vpop.f32.mrf.mxu0
      %v1673 = vadd.f32 %v1384, %v1672
      %v1674 = vpop.f32.mrf.mxu0
      %1675 = vmatprep.mubr.bf16.mxu0 %v1174
      %1676 = vmatmul.mubr.bf16.gmra.mxu0 %v817
      %v1677 = vpop.f32.mrf.mxu0
      %v1678 = vadd.f32 %v1389, %v1677
      %v1679 = vpop.f32.mrf.mxu0
      %v1680 = vpop.f32.mrf.mxu0
      %v1681 = vadd.f32 %v1392, %v1680
      %v1682 = vpop.f32.mrf.mxu0
      %1683 = vmatprep.mubr.bf16.mxu0 %v1177
      %1684 = vmatmul.mubr.bf16.gmra.mxu0 %v821
      %v1685 = vpop.f32.mrf.mxu0
      %v1686 = vadd.f32 %v1397, %v1685
      %v1687 = vpop.f32.mrf.mxu0
      %v1688 = vpop.f32.mrf.mxu0
      %v1689 = vadd.f32 %v1400, %v1688
      %v1690 = vpop.f32.mrf.mxu0
      %1691 = vmatprep.mubr.bf16.mxu0 %v1180
      %1692 = vmatmul.mubr.bf16.gmra.mxu0 %v825
      %v1693 = vpop.f32.mrf.mxu0
      %v1694 = vadd.f32 %v1405, %v1693
      %v1695 = vpop.f32.mrf.mxu0
      %v1696 = vpop.f32.mrf.mxu0
      %v1697 = vadd.f32 %v1408, %v1696
      %v1698 = vpop.f32.mrf.mxu0
      %1699 = vmatprep.mubr.bf16.mxu0 %v1183
      %1700 = vmatmul.mubr.bf16.gmra.mxu0 %v829
      %v1701 = vpop.f32.mrf.mxu0
      %v1702 = vadd.f32 %v1413, %v1701
      %v1703 = vpop.f32.mrf.mxu0
      %v1704 = vpop.f32.mrf.mxu0
      %v1705 = vadd.f32 %v1416, %v1704
      %v1706 = vpop.f32.mrf.mxu0
      %1707 = vmatprep.mubr.bf16.mxu0 %v1186
      %1708 = vmatmul.mubr.bf16.gmra.mxu0 %v833
      %v1709 = vpop.f32.mrf.mxu0
      %v1710 = vadd.f32 %v1421, %v1709
      %v1711 = vpop.f32.mrf.mxu0
      %v1712 = vpop.f32.mrf.mxu0
      %v1713 = vadd.f32 %v1424, %v1712
      %v1714 = vpop.f32.mrf.mxu0
      %1715 = vmatprep.mubr.bf16.mxu0 %v1189
      %1716 = vmatmul.mubr.bf16.gmra.mxu0 %v837
      %v1717 = vpop.f32.mrf.mxu0
      %v1718 = vadd.f32 %v1429, %v1717
      %v1719 = vpop.f32.mrf.mxu0
      %v1720 = vpop.f32.mrf.mxu0
      %v1721 = vadd.f32 %v1432, %v1720
      %v1722 = vpop.f32.mrf.mxu0
      %1723 = vmatprep.mubr.bf16.mxu0 %v1192
      %1724 = vmatmul.mubr.bf16.gmra.mxu0 %v841
      %v1725 = vpop.f32.mrf.mxu0
      %v1726 = vadd.f32 %v1437, %v1725
      %v1727 = vpop.f32.mrf.mxu0
      %v1728 = vpop.f32.mrf.mxu0
      %v1729 = vadd.f32 %v1440, %v1728
      %v1730 = vpop.f32.mrf.mxu0
      %1731 = vmatprep.mubr.bf16.mxu0 %v1195
      %1732 = vmatmul.mubr.bf16.gmra.mxu0 %v845
      %v1733 = vpop.f32.mrf.mxu0
      %v1734 = vadd.f32 %v1445, %v1733
      %v1735 = vpop.f32.mrf.mxu0
      %v1736 = vpop.f32.mrf.mxu0
      %v1737 = vadd.f32 %v1448, %v1736
      %v1738 = vpop.f32.mrf.mxu0
      %1739 = vmatprep.mubr.bf16.mxu0 %v1198
      %1740 = vmatmul.mubr.bf16.gmra.mxu0 %v849
      %v1741 = vpop.f32.mrf.mxu0
      %v1742 = vadd.f32 %v1453, %v1741
      %v1743 = vpop.f32.mrf.mxu0
      %v1744 = vpop.f32.mrf.mxu0
      %v1745 = vadd.f32 %v1456, %v1744
      %v1746 = vpop.f32.mrf.mxu0
      %1747 = vmatprep.mubr.bf16.mxu0 %v1201
      %1748 = vmatmul.mubr.bf16.gmra.mxu0 %v853
      %v1749 = vpop.f32.mrf.mxu0
      %v1750 = vadd.f32 %v1461, %v1749
      %v1751 = vpop.f32.mrf.mxu0
      %v1752 = vpop.f32.mrf.mxu0
      %v1753 = vadd.f32 %v1464, %v1752
      %v1754 = vpop.f32.mrf.mxu0
      %1755 = vmatprep.mubr.bf16.mxu0 %v1204
      %1756 = vmatmul.mubr.bf16.gmra.mxu0 %v857
      %v1757 = vpop.f32.mrf.mxu0
      %v1758 = vadd.f32 %v1469, %v1757
      %v1759 = vpop.f32.mrf.mxu0
      %v1760 = vpop.f32.mrf.mxu0
      %v1761 = vadd.f32 %v1472, %v1760
      %v1762 = vpop.f32.mrf.mxu0
      %1763 = vmatprep.mubr.bf16.mxu0 %v1207
      %1764 = vmatmul.mubr.bf16.gmra.mxu0 %v861
      %v1765 = vpop.f32.mrf.mxu0
      %v1766 = vadd.f32 %v1477, %v1765
      %v1767 = vpop.f32.mrf.mxu0
      %v1768 = vpop.f32.mrf.mxu0
      %v1769 = vadd.f32 %v1480, %v1768
      %v1770 = vpop.f32.mrf.mxu0
      %1771 = vmatprep.mubr.bf16.mxu0 %v1210
      %1772 = vmatmul.mubr.bf16.gmra.mxu0 %v865
      %v1773 = vpop.f32.mrf.mxu0
      %v1774 = vadd.f32 %v1485, %v1773
      %v1775 = vpop.f32.mrf.mxu0
      %v1776 = vpop.f32.mrf.mxu0
      %v1777 = vadd.f32 %v1488, %v1776
      %v1778 = vpop.f32.mrf.mxu0
      %1779 = vmatprep.mubr.bf16.mxu0 %v1213
      %1780 = vmatmul.mubr.bf16.gmra.mxu0 %v869
      %v1781 = vpop.f32.mrf.mxu0
      %v1782 = vadd.f32 %v1493, %v1781
      %v1783 = vpop.f32.mrf.mxu0
      %v1784 = vpop.f32.mrf.mxu0
      %v1785 = vadd.f32 %v1496, %v1784
      %v1786 = vpop.f32.mrf.mxu0
      %1787 = vmatprep.mubr.bf16.mxu0 %v1216
      %1788 = vmatmul.mubr.bf16.gmra.mxu0 %v873
      %v1789 = vpop.f32.mrf.mxu0
      %v1790 = vadd.f32 %v1501, %v1789
      %v1791 = vpop.f32.mrf.mxu0
      %v1792 = vpop.f32.mrf.mxu0
      %v1793 = vadd.f32 %v1504, %v1792
      %v1794 = vpop.f32.mrf.mxu0
      %1795 = vdwg.mxu0
      %v1796 = vmax.f32 %v1542, 0.0
      %v1797 = vmax.f32 %v1545, 0.0
      %v1798 = vmax.f32 %v1550, 0.0
      %v1799 = vmax.f32 %v1553, 0.0
      %v1800 = vmax.f32 %v1558, 0.0
      %v1801 = vmax.f32 %v1561, 0.0
      %v1802 = vmax.f32 %v1566, 0.0
      %v1803 = vmax.f32 %v1569, 0.0
      %v1804 = vmax.f32 %v1574, 0.0
      %v1805 = vmax.f32 %v1577, 0.0
      %v1806 = vmax.f32 %v1582, 0.0
      %v1807 = vmax.f32 %v1585, 0.0
      %v1808 = vmax.f32 %v1590, 0.0
      %v1809 = vmax.f32 %v1593, 0.0
      %v1810 = vmax.f32 %v1598, 0.0
      %v1811 = vmax.f32 %v1601, 0.0
      %v1812 = vmax.f32 %v1606, 0.0
      %v1813 = vmax.f32 %v1609, 0.0
      %v1814 = vmax.f32 %v1614, 0.0
      %v1815 = vmax.f32 %v1617, 0.0
      %v1816 = vmax.f32 %v1622, 0.0
      %v1817 = vmax.f32 %v1625, 0.0
      %v1818 = vmax.f32 %v1630, 0.0
      %v1819 = vmax.f32 %v1633, 0.0
      %v1820 = vmax.f32 %v1638, 0.0
      %v1821 = vmax.f32 %v1641, 0.0
      %v1822 = vmax.f32 %v1646, 0.0
      %v1823 = vmax.f32 %v1649, 0.0
      %v1824 = vmax.f32 %v1654, 0.0
      %v1825 = vmax.f32 %v1657, 0.0
      %v1826 = vmax.f32 %v1662, 0.0
      %v1827 = vmax.f32 %v1665, 0.0
      %v1828 = vmax.f32 %v1670, 0.0
      %v1829 = vmax.f32 %v1673, 0.0
      %v1830 = vmax.f32 %v1678, 0.0
      %v1831 = vmax.f32 %v1681, 0.0
      %v1832 = vmax.f32 %v1686, 0.0
      %v1833 = vmax.f32 %v1689, 0.0
      %v1834 = vmax.f32 %v1694, 0.0
      %v1835 = vmax.f32 %v1697, 0.0
      %v1836 = vmax.f32 %v1702, 0.0
      %v1837 = vmax.f32 %v1705, 0.0
      %v1838 = vmax.f32 %v1710, 0.0
      %v1839 = vmax.f32 %v1713, 0.0
      %v1840 = vmax.f32 %v1718, 0.0
      %v1841 = vmax.f32 %v1721, 0.0
      %v1842 = vmax.f32 %v1726, 0.0
      %v1843 = vmax.f32 %v1729, 0.0
      %v1844 = vmax.f32 %v1734, 0.0
      %v1845 = vmax.f32 %v1737, 0.0
      %v1846 = vmax.f32 %v1742, 0.0
      %v1847 = vmax.f32 %v1745, 0.0
      %v1848 = vmax.f32 %v1750, 0.0
      %v1849 = vmax.f32 %v1753, 0.0
      %v1850 = vmax.f32 %v1758, 0.0
      %v1851 = vmax.f32 %v1761, 0.0
      %v1852 = vmax.f32 %v1766, 0.0
      %v1853 = vmax.f32 %v1769, 0.0
      %v1854 = vmax.f32 %v1774, 0.0
      %v1855 = vmax.f32 %v1777, 0.0
      %v1856 = vmax.f32 %v1782, 0.0
      %v1857 = vmax.f32 %v1785, 0.0
      %v1858 = vmax.f32 %v1790, 0.0
      %v1859 = vmax.f32 %v1793, 0.0
      %1860 = vst [vmem:[%s175] sm:$0xff] %v1796
      %1861 = vst [vmem:[%s175 + $0x8] sm:$0xff] %v1797
      %1862 = vst [vmem:[%s175 + $0x10] sm:$0xff] %v1798
      %1863 = vst [vmem:[%s175 + $0x18] sm:$0xff] %v1799
      %1864 = vst [vmem:[%s175 + $0x20] sm:$0xff] %v1800
      %1865 = vst [vmem:[%s175 + $0x28] sm:$0xff] %v1801
      %1866 = vst [vmem:[%s175 + $0x30] sm:$0xff] %v1802
      %1867 = vst [vmem:[%s175 + $0x38] sm:$0xff] %v1803
      %1868 = vst [vmem:[%s175 + $0x40] sm:$0xff] %v1804
      %1869 = vst [vmem:[%s175 + $0x48] sm:$0xff] %v1805
      %1870 = vst [vmem:[%s175 + $0x50] sm:$0xff] %v1806
      %1871 = vst [vmem:[%s175 + $0x58] sm:$0xff] %v1807
      %1872 = vst [vmem:[%s175 + $0x60] sm:$0xff] %v1808
      %1873 = vst [vmem:[%s175 + $0x68] sm:$0xff] %v1809
      %1874 = vst [vmem:[%s175 + $0x70] sm:$0xff] %v1810
      %1875 = vst [vmem:[%s175 + $0x78] sm:$0xff] %v1811
      %1876 = vst [vmem:[%s175 + $0x80] sm:$0xff] %v1812
      %1877 = vst [vmem:[%s175 + $0x88] sm:$0xff] %v1813
      %1878 = vst [vmem:[%s175 + $0x90] sm:$0xff] %v1814
      %1879 = vst [vmem:[%s175 + $0x98] sm:$0xff] %v1815
      %1880 = vst [vmem:[%s175 + $0xa0] sm:$0xff] %v1816
      %1881 = vst [vmem:[%s175 + $0xa8] sm:$0xff] %v1817
      %1882 = vst [vmem:[%s175 + $0xb0] sm:$0xff] %v1818
      %1883 = vst [vmem:[%s175 + $0xb8] sm:$0xff] %v1819
      %1884 = vst [vmem:[%s175 + $0xc0] sm:$0xff] %v1820
      %1885 = vst [vmem:[%s175 + $0xc8] sm:$0xff] %v1821
      %1886 = vst [vmem:[%s175 + $0xd0] sm:$0xff] %v1822
      %1887 = vst [vmem:[%s175 + $0xd8] sm:$0xff] %v1823
      %1888 = vst [vmem:[%s175 + $0xe0] sm:$0xff] %v1824
      %1889 = vst [vmem:[%s175 + $0xe8] sm:$0xff] %v1825
      %1890 = vst [vmem:[%s175 + $0xf0] sm:$0xff] %v1826
      %1891 = vst [vmem:[%s175 + $0xf8] sm:$0xff] %v1827
      %1892 = vst [vmem:[%s175 + $0x100] sm:$0xff] %v1828
      %1893 = vst [vmem:[%s175 + $0x108] sm:$0xff] %v1829
      %1894 = vst [vmem:[%s175 + $0x110] sm:$0xff] %v1830
      %1895 = vst [vmem:[%s175 + $0x118] sm:$0xff] %v1831
      %1896 = vst [vmem:[%s175 + $0x120] sm:$0xff] %v1832
      %1897 = vst [vmem:[%s175 + $0x128] sm:$0xff] %v1833
      %1898 = vst [vmem:[%s175 + $0x130] sm:$0xff] %v1834
      %1899 = vst [vmem:[%s175 + $0x138] sm:$0xff] %v1835
      %1900 = vst [vmem:[%s175 + $0x140] sm:$0xff] %v1836
      %1901 = vst [vmem:[%s175 + $0x148] sm:$0xff] %v1837
      %1902 = vst [vmem:[%s175 + $0x150] sm:$0xff] %v1838
      %1903 = vst [vmem:[%s175 + $0x158] sm:$0xff] %v1839
      %1904 = vst [vmem:[%s175 + $0x160] sm:$0xff] %v1840
      %1905 = vst [vmem:[%s175 + $0x168] sm:$0xff] %v1841
      %1906 = vst [vmem:[%s175 + $0x170] sm:$0xff] %v1842
      %1907 = vst [vmem:[%s175 + $0x178] sm:$0xff] %v1843
      %1908 = vst [vmem:[%s175 + $0x180] sm:$0xff] %v1844
      %1909 = vst [vmem:[%s175 + $0x188] sm:$0xff] %v1845
      %1910 = vst [vmem:[%s175 + $0x190] sm:$0xff] %v1846
      %1911 = vst [vmem:[%s175 + $0x198] sm:$0xff] %v1847
      %1912 = vst [vmem:[%s175 + $0x1a0] sm:$0xff] %v1848
      %1913 = vst [vmem:[%s175 + $0x1a8] sm:$0xff] %v1849
      %1914 = vst [vmem:[%s175 + $0x1b0] sm:$0xff] %v1850
      %1915 = vst [vmem:[%s175 + $0x1b8] sm:$0xff] %v1851
      %1916 = vst [vmem:[%s175 + $0x1c0] sm:$0xff] %v1852
      %1917 = vst [vmem:[%s175 + $0x1c8] sm:$0xff] %v1853
      %1918 = vst [vmem:[%s175 + $0x1d0] sm:$0xff] %v1854
      %1919 = vst [vmem:[%s175 + $0x1d8] sm:$0xff] %v1855
      %1920 = vst [vmem:[%s175 + $0x1e0] sm:$0xff] %v1856
      %1921 = vst [vmem:[%s175 + $0x1e8] sm:$0xff] %v1857
      %1922 = vst [vmem:[%s175 + $0x1f0] sm:$0xff] %v1858
      %1923 = vst [vmem:[%s175 + $0x1f8] sm:$0xff] %v1859
      %s1924 = smul.u32 64, %s14
      %p1925 = scmp.lt.s32.totalorder %s1924, 255
      %s1926 = scalar_select %p1925, %s1924, 255
      %s1927 = smul.addr %s1926, 8
      %s1928 = scalar_lea.vmem %s3, %s1927
      // Predicated region
      $region33: #{_lambda_.19} parent=31 // pred_check
        %p1929 = pneg %p100
      $region34: #{_lambda_.19} parent=31 // pred_check_branch
        %1931 = sbr.rel (%p1929) target = $region36
      $region35: #{_lambda_.19} parent=31 // pred_region
        %s1932 = smul.u32 64, %s14
      $region36: #{_lambda_.19} parent=31 // pred_fallthru
        _
    $region32: #{_lambda_.19} parent=5 // pred_fallthru
      _
    %p1933 = scmp.le.s32.totalorder 2, %s9
    // Predicated region
    $region37: #{_lambda_.19} parent=5 // pred_check
      %p1934 = pneg %p1933
    $region38: #{_lambda_.19} parent=5 // pred_check_branch
      %1936 = sbr.rel (%p1934) target = $region40
    $region39: #{_lambda_.19} parent=5 // pred_region
      %s1937 = ssub.s32 %s9, 2
      // Predicated region
      $region41: #{_lambda_.19} parent=39 // pred_check
        %p1938 = pneg %p106
      $region42: #{_lambda_.19} parent=39 // pred_check_branch
        %1940 = sbr.rel (%p1938) target = $region44
      $region43: #{_lambda_.19} parent=39 // pred_region
        %s1941 = smul.u32 64, %s15
        %p1942 = scmp.lt.s32.totalorder %s1941, 255
        %s1943 = scalar_select %p1942, %s1941, 255
        %s1944 = smul.addr %s1943, 8
        %s1945 = scalar_lea.vmem %s3, %s1944
      $region44: #{_lambda_.19} parent=39 // pred_fallthru
        _
    $region40: #{_lambda_.19} parent=5 // pred_fallthru
      _
  $region6: #{_lambda_.19} parent=0 // loop_footer
    %s13 = sadd.s32 1, %s9
  $region7: #{_lambda_.19} parent=0 // loop_footer_branch
    %8 = sbr.rel target = $region3
  $region8: #{_lambda_.19} parent=0 // loop_exit
    _

// kernel: _lambda_.21
$region0: #{_lambda_.21}
  #allocation0 [shape = 'u32[]', space=smem, size = 0x4, offset = 0x4, fixed_abs, tag = 'smem constant byte address 0x4 - core index']
  #allocation1 [shape = 'u32[144,128]{1,0:T(1,128)}', space=vmem, size = 0x12000, scoped, tag = 'internal scratch']
  %s0 = inlined_call_operand.vmem [shape: bf16[2048,288], index: 0, kind: input, shape index: {}]
  %s1 = inlined_call_operand.vmem [shape: bf16[288,128], index: 1, kind: input, shape index: {}]
  %s2 = inlined_call_operand.vmem [shape: f32[1,128], index: 2, kind: input, shape index: {}]
  %s3 = inlined_call_operand.vmem [shape: f32[2048,128], index: 3, kind: output, shape index: {}]
  %s4 = sld [smem:[#allocation0]]
  $region45: #{_lambda_.21} parent=0
    _
  %s6 = ssub.s32 1, %s4
  %s7 = scalar_select 0, %s6, %s4
  loop: start=0, step=1, limit=6
  $region2: #{_lambda_.21} parent=0 // loop_pre_header
    _
  $region3: #{_lambda_.21} parent=0 // loop_header
    %s9 = sphi 0, %s13
    %p10 = scmp.ge.s32.totalorder %s9, 6
    %s19 = sphi 0, %s21
    %s22 = sphi 0, %s19
    %s23 = sphi 0, %s22
    %s39 = sphi 0, %s23
    %s43 = sphi 0, %s43
    %s45 = sphi 0, %s43
    %s46 = sphi 0, %s45
    %s60 = sphi 0, %s46
    %s64 = sphi 0, %s64
    %s66 = sphi 0, %s64
    %s67 = sphi 0, %s66
    %s81 = sphi 0, %s67
    %s87 = sphi 0, %s89
    %s90 = sphi 0, %s87
    %s91 = sphi 0, %s90
    %s107 = sphi 0, %s91
  $region4: #{_lambda_.21} parent=0 // loop_header_branch
    %12 = sbr.rel (%p10) target = $region8
  $region5: #{_lambda_.21} parent=0 // loop_body
    %s14 = ssub.s32 %s9, 1
    %s15 = ssub.s32 %s9, 2
    %s16 = sadd.s32 %s9, 1
    %s17 = ssub.s32 %s9, %s16
    %p18 = scmp.eq.s32.totalorder %s17, 0
    %s20 = sadd.s32 %s19, 1
    %s21 = scalar_select %p18, %s19, %s20
    %p24 = pneg %p18
    %p25 = scmp.eq.s32.totalorder %s9, 3
    %p26 = por %p24, %p25
    %p27 = scmp.ne.s32.totalorder %s19, %s22
    %p28 = scmp.eq.s32.totalorder %s9, 0
    %p29 = por %p27, %p28
    %p30 = scmp.ne.s32.totalorder %s19, %s22
    %p31 = scmp.eq.s32.totalorder %s14, 3
    %p32 = por %p30, %p31
    %p33 = scmp.ne.s32.totalorder %s22, %s23
    %p34 = scmp.eq.s32.totalorder %s14, 0
    %p35 = por %p33, %p34
    %p36 = scmp.ne.s32.totalorder %s22, %s23
    %p37 = scmp.eq.s32.totalorder %s15, 3
    %p38 = por %p36, %p37
    %p40 = scmp.ne.s32.totalorder %s23, %s39
    %p41 = scmp.eq.s32.totalorder %s15, 0
    %p42 = por %p40, %p41
    %s44 = sadd.s32 %s43, 1
    %p47 = scmp.eq.s32.totalorder %s9, 3
    %p48 = scmp.ne.s32.totalorder %s43, %s45
    %p49 = scmp.eq.s32.totalorder %s9, 0
    %p50 = por %p48, %p49
    %p51 = scmp.ne.s32.totalorder %s43, %s45
    %p52 = scmp.eq.s32.totalorder %s14, 3
    %p53 = por %p51, %p52
    %p54 = scmp.ne.s32.totalorder %s45, %s46
    %p55 = scmp.eq.s32.totalorder %s14, 0
    %p56 = por %p54, %p55
    %p57 = scmp.ne.s32.totalorder %s45, %s46
    %p58 = scmp.eq.s32.totalorder %s15, 3
    %p59 = por %p57, %p58
    %p61 = scmp.ne.s32.totalorder %s46, %s60
    %p62 = scmp.eq.s32.totalorder %s15, 0
    %p63 = por %p61, %p62
    %s65 = sadd.s32 %s64, 1
    %p68 = scmp.eq.s32.totalorder %s9, 3
    %p69 = scmp.ne.s32.totalorder %s64, %s66
    %p70 = scmp.eq.s32.totalorder %s9, 0
    %p71 = por %p69, %p70
    %p72 = scmp.ne.s32.totalorder %s64, %s66
    %p73 = scmp.eq.s32.totalorder %s14, 3
    %p74 = por %p72, %p73
    %p75 = scmp.ne.s32.totalorder %s66, %s67
    %p76 = scmp.eq.s32.totalorder %s14, 0
    %p77 = por %p75, %p76
    %p78 = scmp.ne.s32.totalorder %s66, %s67
    %p79 = scmp.eq.s32.totalorder %s15, 3
    %p80 = por %p78, %p79
    %p82 = scmp.ne.s32.totalorder %s67, %s81
    %p83 = scmp.eq.s32.totalorder %s15, 0
    %p84 = por %p82, %p83
    %s85 = ssub.s32 %s9, %s16
    %p86 = scmp.eq.s32.totalorder %s85, 0
    %s88 = sadd.s32 %s87, 1
    %s89 = scalar_select %p86, %s87, %s88
    %p92 = pneg %p86
    %p93 = scmp.eq.s32.totalorder %s9, 3
    %p94 = por %p92, %p93
    %p95 = scmp.ne.s32.totalorder %s87, %s90
    %p96 = scmp.eq.s32.totalorder %s9, 0
    %p97 = por %p95, %p96
    %p98 = scmp.ne.s32.totalorder %s87, %s90
    %p99 = scmp.eq.s32.totalorder %s14, 3
    %p100 = por %p98, %p99
    %p101 = scmp.ne.s32.totalorder %s90, %s91
    %p102 = scmp.eq.s32.totalorder %s14, 0
    %p103 = por %p101, %p102
    %p104 = scmp.ne.s32.totalorder %s90, %s91
    %p105 = scmp.eq.s32.totalorder %s15, 3
    %p106 = por %p104, %p105
    %p108 = scmp.ne.s32.totalorder %s91, %s107
    %p109 = scmp.eq.s32.totalorder %s15, 0
    %p110 = por %p108, %p109
    %p111 = scmp.le.s32.totalorder 1, %s9
    %p112 = scmp.lt.s32.totalorder %s9, 5
    %p113 = pnand %p111, %p112
    %p114 = pneg %p113
    // Predicated region
    $region9: #{_lambda_.21} parent=5 // pred_check
      _
    $region10: #{_lambda_.21} parent=5 // pred_check_branch
      %116 = sbr.rel (%p113) target = $region12
    $region11: #{_lambda_.21} parent=5 // pred_region
      %s117 = ssub.s32 %s9, 1
      // Predicated region
      $region13: #{_lambda_.21} parent=11 // pred_check
        %p118 = pneg %p56
      $region14: #{_lambda_.21} parent=11 // pred_check_branch
        %120 = sbr.rel (%p118) target = $region16
      $region15: #{_lambda_.21} parent=11 // pred_region
        _
      $region16: #{_lambda_.21} parent=11 // pred_fallthru
        _
      // Predicated region
      $region17: #{_lambda_.21} parent=11 // pred_check
        %p121 = pneg %p77
      $region18: #{_lambda_.21} parent=11 // pred_check_branch
        %123 = sbr.rel (%p121) target = $region20
      $region19: #{_lambda_.21} parent=11 // pred_region
        _
      $region20: #{_lambda_.21} parent=11 // pred_fallthru
        _
    $region12: #{_lambda_.21} parent=5 // pred_fallthru
      _
    %p124 = scmp.lt.s32.totalorder %s9, 4
    // Predicated region
    $region21: #{_lambda_.21} parent=5 // pred_check
      %p125 = pneg %p124
    $region22: #{_lambda_.21} parent=5 // pred_check_branch
      %127 = sbr.rel (%p125) target = $region24
    $region23: #{_lambda_.21} parent=5 // pred_region
      // Predicated region
      $region25: #{_lambda_.21} parent=23 // pred_check
        %p128 = pneg %p29
      $region26: #{_lambda_.21} parent=23 // pred_check_branch
        %130 = sbr.rel (%p128) target = $region28
      $region27: #{_lambda_.21} parent=23 // pred_region
        %s131 = smul.u32 64, %s9
        %p132 = scmp.lt.s32.totalorder %s131, 255
        %s133 = scalar_select %p132, %s131, 255
        %s134 = smul.addr %s133, 3
        %s135 = smul.addr %s134, 4
        %s136 = scalar_lea.vmem %s0, %s135
        %s137 = smul.u32 64, %s9
      $region28: #{_lambda_.21} parent=23 // pred_fallthru
        _
    $region24: #{_lambda_.21} parent=5 // pred_fallthru
      _
    %p138 = scmp.le.s32.totalorder 1, %s9
    %p139 = scmp.lt.s32.totalorder %s9, 5
    %p140 = pnand %p138, %p139
    %p141 = pneg %p140
    // Predicated region
    $region29: #{_lambda_.21} parent=5 // pred_check
      _
    $region30: #{_lambda_.21} parent=5 // pred_check_branch
      %143 = sbr.rel (%p140) target = $region32
    $region31: #{_lambda_.21} parent=5 // pred_region
      %s144 = ssub.s32 %s9, 1
      %s145 = smul.u32 64, %s14
      %p146 = scmp.lt.s32.totalorder %s145, 255
      %s147 = scalar_select %p146, %s145, 255
      %s148 = smul.addr %s147, 3
      %s149 = smul.addr %s148, 4
      %s150 = scalar_lea.vmem %s0, %s149
      %p151 = pneg %p35
      %p152 = pneg %p32
      %p153 = pneg %p56
      %p154 = pneg %p53
      %p155 = pneg %p77
      %p156 = pneg %p74
      %p157 = pneg %p103
      %p158 = pneg %p100
      %s159 = smul.u32 64, %s14
      %p160 = scmp.lt.s32.totalorder %s159, 255
      %s161 = scalar_select %p160, %s159, 255
      %s162 = smul.addr %s161, 8
      %s163 = scalar_lea.vmem %s3, %s162
      %s164 = smul.u32 64, %s14
      %p165 = scmp.lt.s32.totalorder %s164, 255
      %s166 = scalar_select %p165, %s164, 255
      %s167 = smul.addr %s166, 3
      %s168 = smul.addr %s167, 4
      %s169 = scalar_lea.vmem %s0, %s168
      %s170 = smul.u32 64, %s14
      %s171 = smul.u32 64, %s14
      %p172 = scmp.lt.s32.totalorder %s171, 255
      %s173 = scalar_select %p172, %s171, 255
      %s174 = smul.addr %s173, 8
      %s175 = scalar_lea.vmem %s3, %s174
      %s176 = smul.u32 64, %s14
      %v178 = vld [vmem:[%s169] sm:$0xff]
      %v179 = vld [vmem:[%s169 + $0x8] sm:$0xf]
      %v180 = vld [vmem:[%s169 + $0xc] sm:$0xff]
      %v181 = vld [vmem:[%s169 + $0x14] sm:$0xf]
      %v182 = vld [vmem:[%s169 + $0x18] sm:$0xff]
      %v183 = vld [vmem:[%s169 + $0x20] sm:$0xf]
      %v184 = vld [vmem:[%s169 + $0x24] sm:$0xff]
      %v185 = vld [vmem:[%s169 + $0x2c] sm:$0xf]
      %v186 = vld [vmem:[%s169 + $0x30] sm:$0xff]
      %v187 = vld [vmem:[%s169 + $0x38] sm:$0xf]
      %v188 = vld [vmem:[%s169 + $0x3c] sm:$0xff]
      %v189 = vld [vmem:[%s169 + $0x44] sm:$0xf]
      %v190 = vld [vmem:[%s169 + $0x48] sm:$0xff]
      %v191 = vld [vmem:[%s169 + $0x50] sm:$0xf]
      %v192 = vld [vmem:[%s169 + $0x54] sm:$0xff]
      %v193 = vld [vmem:[%s169 + $0x5c] sm:$0xf]
      %v194 = vld [vmem:[%s169 + $0x60] sm:$0xff]
      %v195 = vld [vmem:[%s169 + $0x68] sm:$0xf]
      %v196 = vld [vmem:[%s169 + $0x6c] sm:$0xff]
      %v197 = vld [vmem:[%s169 + $0x74] sm:$0xf]
      %v198 = vld [vmem:[%s169 + $0x78] sm:$0xff]
      %v199 = vld [vmem:[%s169 + $0x80] sm:$0xf]
      %v200 = vld [vmem:[%s169 + $0x84] sm:$0xff]
      %v201 = vld [vmem:[%s169 + $0x8c] sm:$0xf]
      %v202 = vld [vmem:[%s169 + $0x90] sm:$0xff]
      %v203 = vld [vmem:[%s169 + $0x98] sm:$0xf]
      %v204 = vld [vmem:[%s169 + $0x9c] sm:$0xff]
      %v205 = vld [vmem:[%s169 + $0xa4] sm:$0xf]
      %v206 = vld [vmem:[%s169 + $0xa8] sm:$0xff]
      %v207 = vld [vmem:[%s169 + $0xb0] sm:$0xf]
      %v208 = vld [vmem:[%s169 + $0xb4] sm:$0xff]
      %v209 = vld [vmem:[%s169 + $0xbc] sm:$0xf]
      %v210 = vld [vmem:[%s169 + $0xc0] sm:$0xff]
      %v211 = vld [vmem:[%s169 + $0xc8] sm:$0xf]
      %v212 = vld [vmem:[%s169 + $0xcc] sm:$0xff]
      %v213 = vld [vmem:[%s169 + $0xd4] sm:$0xf]
      %v214 = vld [vmem:[%s169 + $0xd8] sm:$0xff]
      %v215 = vld [vmem:[%s169 + $0xe0] sm:$0xf]
      %v216 = vld [vmem:[%s169 + $0xe4] sm:$0xff]
      %v217 = vld [vmem:[%s169 + $0xec] sm:$0xf]
      %v218 = vld [vmem:[%s169 + $0xf0] sm:$0xff]
      %v219 = vld [vmem:[%s169 + $0xf8] sm:$0xf]
      %v220 = vld [vmem:[%s169 + $0xfc] sm:$0xff]
      %v221 = vld [vmem:[%s169 + $0x104] sm:$0xf]
      %v222 = vld [vmem:[%s169 + $0x108] sm:$0xff]
      %v223 = vld [vmem:[%s169 + $0x110] sm:$0xf]
      %v224 = vld [vmem:[%s169 + $0x114] sm:$0xff]
      %v225 = vld [vmem:[%s169 + $0x11c] sm:$0xf]
      %v226 = vld [vmem:[%s169 + $0x120] sm:$0xff]
      %v227 = vld [vmem:[%s169 + $0x128] sm:$0xf]
      %v228 = vld [vmem:[%s169 + $0x12c] sm:$0xff]
      %v229 = vld [vmem:[%s169 + $0x134] sm:$0xf]
      %v230 = vld [vmem:[%s169 + $0x138] sm:$0xff]
      %v231 = vld [vmem:[%s169 + $0x140] sm:$0xf]
      %v232 = vld [vmem:[%s169 + $0x144] sm:$0xff]
      %v233 = vld [vmem:[%s169 + $0x14c] sm:$0xf]
      %v234 = vld [vmem:[%s169 + $0x150] sm:$0xff]
      %v235 = vld [vmem:[%s169 + $0x158] sm:$0xf]
      %v236 = vld [vmem:[%s169 + $0x15c] sm:$0xff]
      %v237 = vld [vmem:[%s169 + $0x164] sm:$0xf]
      %v238 = vld [vmem:[%s169 + $0x168] sm:$0xff]
      %v239 = vld [vmem:[%s169 + $0x170] sm:$0xf]
      %v240 = vld [vmem:[%s169 + $0x174] sm:$0xff]
      %v241 = vld [vmem:[%s169 + $0x17c] sm:$0xf]
      %v242 = vld [vmem:[%s169 + $0x180] sm:$0xff]
      %v243 = vld [vmem:[%s169 + $0x188] sm:$0xf]
      %v244 = vld [vmem:[%s169 + $0x18c] sm:$0xff]
      %v245 = vld [vmem:[%s169 + $0x194] sm:$0xf]
      %v246 = vld [vmem:[%s169 + $0x198] sm:$0xff]
      %v247 = vld [vmem:[%s169 + $0x1a0] sm:$0xf]
      %v248 = vld [vmem:[%s169 + $0x1a4] sm:$0xff]
      %v249 = vld [vmem:[%s169 + $0x1ac] sm:$0xf]
      %v250 = vld [vmem:[%s169 + $0x1b0] sm:$0xff]
      %v251 = vld [vmem:[%s169 + $0x1b8] sm:$0xf]
      %v252 = vld [vmem:[%s169 + $0x1bc] sm:$0xff]
      %v253 = vld [vmem:[%s169 + $0x1c4] sm:$0xf]
      %v254 = vld [vmem:[%s169 + $0x1c8] sm:$0xff]
      %v255 = vld [vmem:[%s169 + $0x1d0] sm:$0xf]
      %v256 = vld [vmem:[%s169 + $0x1d4] sm:$0xff]
      %v257 = vld [vmem:[%s169 + $0x1dc] sm:$0xf]
      %v258 = vld [vmem:[%s169 + $0x1e0] sm:$0xff]
      %v259 = vld [vmem:[%s169 + $0x1e8] sm:$0xf]
      %v260 = vld [vmem:[%s169 + $0x1ec] sm:$0xff]
      %v261 = vld [vmem:[%s169 + $0x1f4] sm:$0xf]
      %v262 = vld [vmem:[%s169 + $0x1f8] sm:$0xff]
      %v263 = vld [vmem:[%s169 + $0x200] sm:$0xf]
      %v264 = vld [vmem:[%s169 + $0x204] sm:$0xff]
      %v265 = vld [vmem:[%s169 + $0x20c] sm:$0xf]
      %v266 = vld [vmem:[%s169 + $0x210] sm:$0xff]
      %v267 = vld [vmem:[%s169 + $0x218] sm:$0xf]
      %v268 = vld [vmem:[%s169 + $0x21c] sm:$0xff]
      %v269 = vld [vmem:[%s169 + $0x224] sm:$0xf]
      %v270 = vld [vmem:[%s169 + $0x228] sm:$0xff]
      %v271 = vld [vmem:[%s169 + $0x230] sm:$0xf]
      %v272 = vld [vmem:[%s169 + $0x234] sm:$0xff]
      %v273 = vld [vmem:[%s169 + $0x23c] sm:$0xf]
      %v274 = vld [vmem:[%s169 + $0x240] sm:$0xff]
      %v275 = vld [vmem:[%s169 + $0x248] sm:$0xf]
      %v276 = vld [vmem:[%s169 + $0x24c] sm:$0xff]
      %v277 = vld [vmem:[%s169 + $0x254] sm:$0xf]
      %v278 = vld [vmem:[%s169 + $0x258] sm:$0xff]
      %v279 = vld [vmem:[%s169 + $0x260] sm:$0xf]
      %v280 = vld [vmem:[%s169 + $0x264] sm:$0xff]
      %v281 = vld [vmem:[%s169 + $0x26c] sm:$0xf]
      %v282 = vld [vmem:[%s169 + $0x270] sm:$0xff]
      %v283 = vld [vmem:[%s169 + $0x278] sm:$0xf]
      %v284 = vld [vmem:[%s169 + $0x27c] sm:$0xff]
      %v285 = vld [vmem:[%s169 + $0x284] sm:$0xf]
      %v286 = vld [vmem:[%s169 + $0x288] sm:$0xff]
      %v287 = vld [vmem:[%s169 + $0x290] sm:$0xf]
      %v288 = vld [vmem:[%s169 + $0x294] sm:$0xff]
      %v289 = vld [vmem:[%s169 + $0x29c] sm:$0xf]
      %v290 = vld [vmem:[%s169 + $0x2a0] sm:$0xff]
      %v291 = vld [vmem:[%s169 + $0x2a8] sm:$0xf]
      %v292 = vld [vmem:[%s169 + $0x2ac] sm:$0xff]
      %v293 = vld [vmem:[%s169 + $0x2b4] sm:$0xf]
      %v294 = vld [vmem:[%s169 + $0x2b8] sm:$0xff]
      %v295 = vld [vmem:[%s169 + $0x2c0] sm:$0xf]
      %v296 = vld [vmem:[%s169 + $0x2c4] sm:$0xff]
      %v297 = vld [vmem:[%s169 + $0x2cc] sm:$0xf]
      %v298 = vld [vmem:[%s169 + $0x2d0] sm:$0xff]
      %v299 = vld [vmem:[%s169 + $0x2d8] sm:$0xf]
      %v300 = vld [vmem:[%s169 + $0x2dc] sm:$0xff]
      %v301 = vld [vmem:[%s169 + $0x2e4] sm:$0xf]
      %v302 = vld [vmem:[%s169 + $0x2e8] sm:$0xff]
      %v303 = vld [vmem:[%s169 + $0x2f0] sm:$0xf]
      %v304 = vld [vmem:[%s169 + $0x2f4] sm:$0xff]
      %v305 = vld [vmem:[%s169 + $0x2fc] sm:$0xf]
      %v306 = vld [vmem:[%s1] sm:$0xf]
      %v307 = vld [vmem:[%s1 + $0x4] sm:$0xf]
      %v308 = vld [vmem:[%s1 + $0x8] sm:$0xf]
      %v309 = vld [vmem:[%s1 + $0xc] sm:$0xf]
      %v310 = vld [vmem:[%s1 + $0x10] sm:$0xf]
      %v311 = vld [vmem:[%s1 + $0x14] sm:$0xf]
      %v312 = vld [vmem:[%s1 + $0x18] sm:$0xf]
      %v313 = vld [vmem:[%s1 + $0x1c] sm:$0xf]
      %v314 = vld [vmem:[%s1 + $0x20] sm:$0xf]
      %v315 = vld [vmem:[%s1 + $0x24] sm:$0xf]
      %v316 = vld [vmem:[%s1 + $0x28] sm:$0xf]
      %v317 = vld [vmem:[%s1 + $0x2c] sm:$0xf]
      %v318 = vld [vmem:[%s1 + $0x30] sm:$0xf]
      %v319 = vld [vmem:[%s1 + $0x34] sm:$0xf]
      %v320 = vld [vmem:[%s1 + $0x38] sm:$0xf]
      %v321 = vld [vmem:[%s1 + $0x3c] sm:$0xf]
      %v322 = vld [vmem:[%s1 + $0x40] sm:$0xf]
      %v323 = vld [vmem:[%s1 + $0x44] sm:$0xf]
      %v324 = vld [vmem:[%s1 + $0x48] sm:$0xf]
      %v325 = vld [vmem:[%s1 + $0x4c] sm:$0xf]
      %v326 = vld [vmem:[%s1 + $0x50] sm:$0xf]
      %v327 = vld [vmem:[%s1 + $0x54] sm:$0xf]
      %v328 = vld [vmem:[%s1 + $0x58] sm:$0xf]
      %v329 = vld [vmem:[%s1 + $0x5c] sm:$0xf]
      %v330 = vld [vmem:[%s1 + $0x60] sm:$0xf]
      %v331 = vld [vmem:[%s1 + $0x64] sm:$0xf]
      %v332 = vld [vmem:[%s1 + $0x68] sm:$0xf]
      %v333 = vld [vmem:[%s1 + $0x6c] sm:$0xf]
      %v334 = vld [vmem:[%s1 + $0x70] sm:$0xf]
      %v335 = vld [vmem:[%s1 + $0x74] sm:$0xf]
      %v336 = vld [vmem:[%s1 + $0x78] sm:$0xf]
      %v337 = vld [vmem:[%s1 + $0x7c] sm:$0xf]
      %v338 = vld [vmem:[%s1 + $0x80] sm:$0xf]
      %v339 = vld [vmem:[%s1 + $0x84] sm:$0xf]
      %v340 = vld [vmem:[%s1 + $0x88] sm:$0xf]
      %v341 = vld [vmem:[%s1 + $0x8c] sm:$0xf]
      %v342 = vld [vmem:[%s2] sm:$0x1]
      %v344 = vlaneseq
      %v345 = vshrl.u32 %v344, 7
      %v346 = vsub.s32 0, %v345
      %v347 = vrot.slane %v342, %v346
      %v477 = vunpack.c.l.b16 %v178
      %v478 = vunpack.c.h.b16 %v178
      %v479 = vunpack.c.l.b16 %v179
      %v480 = vunpack.c.l.b16 %v180
      %v481 = vunpack.c.h.b16 %v180
      %v482 = vunpack.c.l.b16 %v181
      %v483 = vunpack.c.l.b16 %v182
      %v484 = vunpack.c.h.b16 %v182
      %v485 = vunpack.c.l.b16 %v183
      %v486 = vunpack.c.l.b16 %v184
      %v487 = vunpack.c.h.b16 %v184
      %v488 = vunpack.c.l.b16 %v185
      %v489 = vunpack.c.l.b16 %v186
      %v490 = vunpack.c.h.b16 %v186
      %v491 = vunpack.c.l.b16 %v187
      %v492 = vunpack.c.l.b16 %v188
      %v493 = vunpack.c.h.b16 %v188
      %v494 = vunpack.c.l.b16 %v189
      %v495 = vunpack.c.l.b16 %v190
      %v496 = vunpack.c.h.b16 %v190
      %v497 = vunpack.c.l.b16 %v191
      %v498 = vunpack.c.l.b16 %v192
      %v499 = vunpack.c.h.b16 %v192
      %v500 = vunpack.c.l.b16 %v193
      %v501 = vunpack.c.l.b16 %v194
      %v502 = vunpack.c.h.b16 %v194
      %v503 = vunpack.c.l.b16 %v195
      %v504 = vunpack.c.l.b16 %v196
      %v505 = vunpack.c.h.b16 %v196
      %v506 = vunpack.c.l.b16 %v197
      %v507 = vunpack.c.l.b16 %v198
      %v508 = vunpack.c.h.b16 %v198
      %v509 = vunpack.c.l.b16 %v199
      %v510 = vunpack.c.l.b16 %v200
      %v511 = vunpack.c.h.b16 %v200
      %v512 = vunpack.c.l.b16 %v201
      %v513 = vunpack.c.l.b16 %v202
      %v514 = vunpack.c.h.b16 %v202
      %v515 = vunpack.c.l.b16 %v203
      %v516 = vunpack.c.l.b16 %v204
      %v517 = vunpack.c.h.b16 %v204
      %v518 = vunpack.c.l.b16 %v205
      %v519 = vunpack.c.l.b16 %v206
      %v520 = vunpack.c.h.b16 %v206
      %v521 = vunpack.c.l.b16 %v207
      %v522 = vunpack.c.l.b16 %v208
      %v523 = vunpack.c.h.b16 %v208
      %v524 = vunpack.c.l.b16 %v209
      %v525 = vunpack.c.l.b16 %v210
      %v526 = vunpack.c.h.b16 %v210
      %v527 = vunpack.c.l.b16 %v211
      %v528 = vunpack.c.l.b16 %v212
      %v529 = vunpack.c.h.b16 %v212
      %v530 = vunpack.c.l.b16 %v213
      %v531 = vunpack.c.l.b16 %v214
      %v532 = vunpack.c.h.b16 %v214
      %v533 = vunpack.c.l.b16 %v215
      %v534 = vunpack.c.l.b16 %v216
      %v535 = vunpack.c.h.b16 %v216
      %v536 = vunpack.c.l.b16 %v217
      %v537 = vunpack.c.l.b16 %v218
      %v538 = vunpack.c.h.b16 %v218
      %v539 = vunpack.c.l.b16 %v219
      %v540 = vunpack.c.l.b16 %v220
      %v541 = vunpack.c.h.b16 %v220
      %v542 = vunpack.c.l.b16 %v221
      %v543 = vunpack.c.l.b16 %v222
      %v544 = vunpack.c.h.b16 %v222
      %v545 = vunpack.c.l.b16 %v223
      %v546 = vunpack.c.l.b16 %v224
      %v547 = vunpack.c.h.b16 %v224
      %v548 = vunpack.c.l.b16 %v225
      %v549 = vunpack.c.l.b16 %v226
      %v550 = vunpack.c.h.b16 %v226
      %v551 = vunpack.c.l.b16 %v227
      %v552 = vunpack.c.l.b16 %v228
      %v553 = vunpack.c.h.b16 %v228
      %v554 = vunpack.c.l.b16 %v229
      %v555 = vunpack.c.l.b16 %v230
      %v556 = vunpack.c.h.b16 %v230
      %v557 = vunpack.c.l.b16 %v231
      %v558 = vunpack.c.l.b16 %v232
      %v559 = vunpack.c.h.b16 %v232
      %v560 = vunpack.c.l.b16 %v233
      %v561 = vunpack.c.l.b16 %v234
      %v562 = vunpack.c.h.b16 %v234
      %v563 = vunpack.c.l.b16 %v235
      %v564 = vunpack.c.l.b16 %v236
      %v565 = vunpack.c.h.b16 %v236
      %v566 = vunpack.c.l.b16 %v237
      %v567 = vunpack.c.l.b16 %v238
      %v568 = vunpack.c.h.b16 %v238
      %v569 = vunpack.c.l.b16 %v239
      %v570 = vunpack.c.l.b16 %v240
      %v571 = vunpack.c.h.b16 %v240
      %v572 = vunpack.c.l.b16 %v241
      %v573 = vunpack.c.l.b16 %v242
      %v574 = vunpack.c.h.b16 %v242
      %v575 = vunpack.c.l.b16 %v243
      %v576 = vunpack.c.l.b16 %v244
      %v577 = vunpack.c.h.b16 %v244
      %v578 = vunpack.c.l.b16 %v245
      %v579 = vunpack.c.l.b16 %v246
      %v580 = vunpack.c.h.b16 %v246
      %v581 = vunpack.c.l.b16 %v247
      %v582 = vunpack.c.l.b16 %v248
      %v583 = vunpack.c.h.b16 %v248
      %v584 = vunpack.c.l.b16 %v249
      %v585 = vunpack.c.l.b16 %v250
      %v586 = vunpack.c.h.b16 %v250
      %v587 = vunpack.c.l.b16 %v251
      %v588 = vunpack.c.l.b16 %v252
      %v589 = vunpack.c.h.b16 %v252
      %v590 = vunpack.c.l.b16 %v253
      %v591 = vunpack.c.l.b16 %v254
      %v592 = vunpack.c.h.b16 %v254
      %v593 = vunpack.c.l.b16 %v255
      %v594 = vunpack.c.l.b16 %v256
      %v595 = vunpack.c.h.b16 %v256
      %v596 = vunpack.c.l.b16 %v257
      %v597 = vunpack.c.l.b16 %v258
      %v598 = vunpack.c.h.b16 %v258
      %v599 = vunpack.c.l.b16 %v259
      %v600 = vunpack.c.l.b16 %v260
      %v601 = vunpack.c.h.b16 %v260
      %v602 = vunpack.c.l.b16 %v261
      %v603 = vunpack.c.l.b16 %v262
      %v604 = vunpack.c.h.b16 %v262
      %v605 = vunpack.c.l.b16 %v263
      %v606 = vunpack.c.l.b16 %v264
      %v607 = vunpack.c.h.b16 %v264
      %v608 = vunpack.c.l.b16 %v265
      %v609 = vunpack.c.l.b16 %v266
      %v610 = vunpack.c.h.b16 %v266
      %v611 = vunpack.c.l.b16 %v267
      %v612 = vunpack.c.l.b16 %v268
      %v613 = vunpack.c.h.b16 %v268
      %v614 = vunpack.c.l.b16 %v269
      %v615 = vunpack.c.l.b16 %v270
      %v616 = vunpack.c.h.b16 %v270
      %v617 = vunpack.c.l.b16 %v271
      %v618 = vunpack.c.l.b16 %v272
      %v619 = vunpack.c.h.b16 %v272
      %v620 = vunpack.c.l.b16 %v273
      %v621 = vunpack.c.l.b16 %v274
      %v622 = vunpack.c.h.b16 %v274
      %v623 = vunpack.c.l.b16 %v275
      %v624 = vunpack.c.l.b16 %v276
      %v625 = vunpack.c.h.b16 %v276
      %v626 = vunpack.c.l.b16 %v277
      %v627 = vunpack.c.l.b16 %v278
      %v628 = vunpack.c.h.b16 %v278
      %v629 = vunpack.c.l.b16 %v279
      %v630 = vunpack.c.l.b16 %v280
      %v631 = vunpack.c.h.b16 %v280
      %v632 = vunpack.c.l.b16 %v281
      %v633 = vunpack.c.l.b16 %v282
      %v634 = vunpack.c.h.b16 %v282
      %v635 = vunpack.c.l.b16 %v283
      %v636 = vunpack.c.l.b16 %v284
      %v637 = vunpack.c.h.b16 %v284
      %v638 = vunpack.c.l.b16 %v285
      %v639 = vunpack.c.l.b16 %v286
      %v640 = vunpack.c.h.b16 %v286
      %v641 = vunpack.c.l.b16 %v287
      %v642 = vunpack.c.l.b16 %v288
      %v643 = vunpack.c.h.b16 %v288
      %v644 = vunpack.c.l.b16 %v289
      %v645 = vunpack.c.l.b16 %v290
      %v646 = vunpack.c.h.b16 %v290
      %v647 = vunpack.c.l.b16 %v291
      %v648 = vunpack.c.l.b16 %v292
      %v649 = vunpack.c.h.b16 %v292
      %v650 = vunpack.c.l.b16 %v293
      %v651 = vunpack.c.l.b16 %v294
      %v652 = vunpack.c.h.b16 %v294
      %v653 = vunpack.c.l.b16 %v295
      %v654 = vunpack.c.l.b16 %v296
      %v655 = vunpack.c.h.b16 %v296
      %v656 = vunpack.c.l.b16 %v297
      %v657 = vunpack.c.l.b16 %v298
      %v658 = vunpack.c.h.b16 %v298
      %v659 = vunpack.c.l.b16 %v299
      %v660 = vunpack.c.l.b16 %v300
      %v661 = vunpack.c.h.b16 %v300
      %v662 = vunpack.c.l.b16 %v301
      %v663 = vunpack.c.l.b16 %v302
      %v664 = vunpack.c.h.b16 %v302
      %v665 = vunpack.c.l.b16 %v303
      %v666 = vunpack.c.l.b16 %v304
      %v667 = vunpack.c.h.b16 %v304
      %v668 = vunpack.c.l.b16 %v305
      %v669 = vpack.c.b16 %v480, %v477
      %v670 = vpack.c.b16 %v481, %v478
      %v671 = vpack.c.b16 %v482, %v479
      %v672 = vpack.c.b16 %v486, %v483
      %v673 = vpack.c.b16 %v487, %v484
      %v674 = vpack.c.b16 %v488, %v485
      %v675 = vpack.c.b16 %v492, %v489
      %v676 = vpack.c.b16 %v493, %v490
      %v677 = vpack.c.b16 %v494, %v491
      %v678 = vpack.c.b16 %v498, %v495
      %v679 = vpack.c.b16 %v499, %v496
      %v680 = vpack.c.b16 %v500, %v497
      %v681 = vpack.c.b16 %v504, %v501
      %v682 = vpack.c.b16 %v505, %v502
      %v683 = vpack.c.b16 %v506, %v503
      %v684 = vpack.c.b16 %v510, %v507
      %v685 = vpack.c.b16 %v511, %v508
      %v686 = vpack.c.b16 %v512, %v509
      %v687 = vpack.c.b16 %v516, %v513
      %v688 = vpack.c.b16 %v517, %v514
      %v689 = vpack.c.b16 %v518, %v515
      %v690 = vpack.c.b16 %v522, %v519
      %v691 = vpack.c.b16 %v523, %v520
      %v692 = vpack.c.b16 %v524, %v521
      %v693 = vpack.c.b16 %v528, %v525
      %v694 = vpack.c.b16 %v529, %v526
      %v695 = vpack.c.b16 %v530, %v527
      %v696 = vpack.c.b16 %v534, %v531
      %v697 = vpack.c.b16 %v535, %v532
      %v698 = vpack.c.b16 %v536, %v533
      %v699 = vpack.c.b16 %v540, %v537
      %v700 = vpack.c.b16 %v541, %v538
      %v701 = vpack.c.b16 %v542, %v539
      %v702 = vpack.c.b16 %v546, %v543
      %v703 = vpack.c.b16 %v547, %v544
      %v704 = vpack.c.b16 %v548, %v545
      %v705 = vpack.c.b16 %v552, %v549
      %v706 = vpack.c.b16 %v553, %v550
      %v707 = vpack.c.b16 %v554, %v551
      %v708 = vpack.c.b16 %v558, %v555
      %v709 = vpack.c.b16 %v559, %v556
      %v710 = vpack.c.b16 %v560, %v557
      %v711 = vpack.c.b16 %v564, %v561
      %v712 = vpack.c.b16 %v565, %v562
      %v713 = vpack.c.b16 %v566, %v563
      %v714 = vpack.c.b16 %v570, %v567
      %v715 = vpack.c.b16 %v571, %v568
      %v716 = vpack.c.b16 %v572, %v569
      %v717 = vpack.c.b16 %v576, %v573
      %v718 = vpack.c.b16 %v577, %v574
      %v719 = vpack.c.b16 %v578, %v575
      %v720 = vpack.c.b16 %v582, %v579
      %v721 = vpack.c.b16 %v583, %v580
      %v722 = vpack.c.b16 %v584, %v581
      %v723 = vpack.c.b16 %v588, %v585
      %v724 = vpack.c.b16 %v589, %v586
      %v725 = vpack.c.b16 %v590, %v587
      %v726 = vpack.c.b16 %v594, %v591
      %v727 = vpack.c.b16 %v595, %v592
      %v728 = vpack.c.b16 %v596, %v593
      %v729 = vpack.c.b16 %v600, %v597
      %v730 = vpack.c.b16 %v601, %v598
      %v731 = vpack.c.b16 %v602, %v599
      %v732 = vpack.c.b16 %v606, %v603
      %v733 = vpack.c.b16 %v607, %v604
      %v734 = vpack.c.b16 %v608, %v605
      %v735 = vpack.c.b16 %v612, %v609
      %v736 = vpack.c.b16 %v613, %v610
      %v737 = vpack.c.b16 %v614, %v611
      %v738 = vpack.c.b16 %v618, %v615
      %v739 = vpack.c.b16 %v619, %v616
      %v740 = vpack.c.b16 %v620, %v617
      %v741 = vpack.c.b16 %v624, %v621
      %v742 = vpack.c.b16 %v625, %v622
      %v743 = vpack.c.b16 %v626, %v623
      %v744 = vpack.c.b16 %v630, %v627
      %v745 = vpack.c.b16 %v631, %v628
      %v746 = vpack.c.b16 %v632, %v629
      %v747 = vpack.c.b16 %v636, %v633
      %v748 = vpack.c.b16 %v637, %v634
      %v749 = vpack.c.b16 %v638, %v635
      %v750 = vpack.c.b16 %v642, %v639
      %v751 = vpack.c.b16 %v643, %v640
      %v752 = vpack.c.b16 %v644, %v641
      %v753 = vpack.c.b16 %v648, %v645
      %v754 = vpack.c.b16 %v649, %v646
      %v755 = vpack.c.b16 %v650, %v647
      %v756 = vpack.c.b16 %v654, %v651
      %v757 = vpack.c.b16 %v655, %v652
      %v758 = vpack.c.b16 %v656, %v653
      %v759 = vpack.c.b16 %v660, %v657
      %v760 = vpack.c.b16 %v661, %v658
      %v761 = vpack.c.b16 %v662, %v659
      %v762 = vpack.c.b16 %v666, %v663
      %v763 = vpack.c.b16 %v667, %v664
      %v764 = vpack.c.b16 %v668, %v665
      %v865 = vunpack.c.l.b16 %v306
      %v866 = vunpack.c.l.b16 %v307
      %v867 = vunpack.c.l.b16 %v308
      %v868 = vunpack.c.l.b16 %v309
      %v869 = vunpack.c.l.b16 %v310
      %v870 = vunpack.c.l.b16 %v311
      %v871 = vunpack.c.l.b16 %v312
      %v872 = vunpack.c.l.b16 %v313
      %v873 = vunpack.c.l.b16 %v314
      %v874 = vunpack.c.l.b16 %v315
      %v875 = vunpack.c.l.b16 %v316
      %v876 = vunpack.c.l.b16 %v317
      %v877 = vunpack.c.l.b16 %v318
      %v878 = vunpack.c.l.b16 %v319
      %v879 = vunpack.c.l.b16 %v320
      %v880 = vunpack.c.l.b16 %v321
      %v881 = vunpack.c.l.b16 %v322
      %v882 = vunpack.c.l.b16 %v323
      %v883 = vunpack.c.l.b16 %v324
      %v884 = vunpack.c.l.b16 %v325
      %v885 = vunpack.c.l.b16 %v326
      %v886 = vunpack.c.l.b16 %v327
      %v887 = vunpack.c.l.b16 %v328
      %v888 = vunpack.c.l.b16 %v329
      %v889 = vunpack.c.l.b16 %v330
      %v890 = vunpack.c.l.b16 %v331
      %v891 = vunpack.c.l.b16 %v332
      %v892 = vunpack.c.l.b16 %v333
      %v893 = vunpack.c.l.b16 %v334
      %v894 = vunpack.c.l.b16 %v335
      %v895 = vunpack.c.l.b16 %v336
      %v896 = vunpack.c.l.b16 %v337
      %v897 = vunpack.c.l.b16 %v338
      %v898 = vunpack.c.l.b16 %v339
      %v899 = vunpack.c.l.b16 %v340
      %v900 = vunpack.c.l.b16 %v341
      %v901 = vpack.c.b16 %v866, %v865
      %v902 = vpack.c.b16 %v868, %v867
      %v903 = vpack.c.b16 %v870, %v869
      %v904 = vpack.c.b16 %v872, %v871
      %v905 = vpack.c.b16 %v874, %v873
      %v906 = vpack.c.b16 %v876, %v875
      %v907 = vpack.c.b16 %v878, %v877
      %v908 = vpack.c.b16 %v880, %v879
      %v909 = vpack.c.b16 %v882, %v881
      %v910 = vpack.c.b16 %v884, %v883
      %v911 = vpack.c.b16 %v886, %v885
      %v912 = vpack.c.b16 %v888, %v887
      %v913 = vpack.c.b16 %v890, %v889
      %v914 = vpack.c.b16 %v892, %v891
      %v915 = vpack.c.b16 %v894, %v893
      %v916 = vpack.c.b16 %v896, %v895
      %v917 = vpack.c.b16 %v898, %v897
      %v918 = vpack.c.b16 %v900, %v899
      %vm937 = vcmask 261120
      %v939 = vsel %vm937, %v671, 0
      %v942 = vsel %vm937, %v674, 0
      %v945 = vsel %vm937, %v677, 0
      %v948 = vsel %vm937, %v680, 0
      %v951 = vsel %vm937, %v683, 0
      %v954 = vsel %vm937, %v686, 0
      %v957 = vsel %vm937, %v689, 0
      %v960 = vsel %vm937, %v692, 0
      %v963 = vsel %vm937, %v695, 0
      %v966 = vsel %vm937, %v698, 0
      %v969 = vsel %vm937, %v701, 0
      %v972 = vsel %vm937, %v704, 0
      %v975 = vsel %vm937, %v707, 0
      %v978 = vsel %vm937, %v710, 0
      %v981 = vsel %vm937, %v713, 0
      %v984 = vsel %vm937, %v716, 0
      %v987 = vsel %vm937, %v719, 0
      %v990 = vsel %vm937, %v722, 0
      %v993 = vsel %vm937, %v725, 0
      %v996 = vsel %vm937, %v728, 0
      %v999 = vsel %vm937, %v731, 0
      %v1002 = vsel %vm937, %v734, 0
      %v1005 = vsel %vm937, %v737, 0
      %v1008 = vsel %vm937, %v740, 0
      %v1011 = vsel %vm937, %v743, 0
      %v1014 = vsel %vm937, %v746, 0
      %v1017 = vsel %vm937, %v749, 0
      %v1020 = vsel %vm937, %v752, 0
      %v1023 = vsel %vm937, %v755, 0
      %v1026 = vsel %vm937, %v758, 0
      %v1029 = vsel %vm937, %v761, 0
      %v1032 = vsel %vm937, %v764, 0
      %1034 = vmatprep.subr.bf16.mxu0 0
      %1035 = vmatpush1.bf16.msra.mxu0 %v908
      %1036 = vmatprep.subr.bf16.mxu0 0
      %1037 = vmatpush1.bf16.msra.mxu0 %v907
      %1038 = vmatprep.subr.bf16.mxu0 0
      %1039 = vmatpush1.bf16.msra.mxu0 %v906
      %1040 = vmatprep.subr.bf16.mxu0 0
      %1041 = vmatpush1.bf16.msra.mxu0 %v905
      %1042 = vmatprep.subr.bf16.mxu0 0
      %1043 = vmatpush1.bf16.msra.mxu0 %v904
      %1044 = vmatprep.subr.bf16.mxu0 0
      %1045 = vmatpush1.bf16.msra.mxu0 %v903
      %1046 = vmatprep.subr.bf16.mxu0 0
      %1047 = vmatpush1.bf16.msra.mxu0 %v902
      %1048 = vmatprep.subr.bf16.mxu0 0
      %1049 = vmatpush1.bf16.msra.mxu0 %v901
      %1050 = vmatprep.subr.bf16.mxu0 0
      %1051 = vmatpush2.bf16.msra.mxu0 %v916
      %1052 = vmatprep.subr.bf16.mxu0 0
      %1053 = vmatpush2.bf16.msra.mxu0 %v915
      %1054 = vmatprep.subr.bf16.mxu0 0
      %1055 = vmatpush2.bf16.msra.mxu0 %v914
      %1056 = vmatprep.subr.bf16.mxu0 0
      %1057 = vmatpush2.bf16.msra.mxu0 %v913
      %1058 = vmatprep.subr.bf16.mxu0 0
      %1059 = vmatpush2.bf16.msra.mxu0 %v912
      %1060 = vmatprep.subr.bf16.mxu0 0
      %1061 = vmatpush2.bf16.msra.mxu0 %v911
      %1062 = vmatprep.subr.bf16.mxu0 0
      %1063 = vmatpush2.bf16.msra.mxu0 %v910
      %1064 = vmatprep.subr.bf16.mxu0 0
      %1065 = vmatpush2.bf16.msra.mxu0 %v909
      %1066 = vmatprep.mubr.bf16.mxu0 %v670
      %1067 = vmatmul.mubr.bf16.gmra.mxu0 %v669
      %v1068 = vpop.f32.mrf.mxu0
      %v1069 = vadd.f32 %v347, %v1068
      %v1070 = vpop.f32.mrf.mxu0
      %v1071 = vpop.f32.mrf.mxu0
      %v1072 = vadd.f32 %v347, %v1071
      %v1073 = vpop.f32.mrf.mxu0
      %1074 = vmatprep.mubr.bf16.mxu0 %v673
      %1075 = vmatmul.mubr.bf16.gmra.mxu0 %v672
      %v1076 = vpop.f32.mrf.mxu0
      %v1077 = vadd.f32 %v347, %v1076
      %v1078 = vpop.f32.mrf.mxu0
      %v1079 = vpop.f32.mrf.mxu0
      %v1080 = vadd.f32 %v347, %v1079
      %v1081 = vpop.f32.mrf.mxu0
      %1082 = vmatprep.mubr.bf16.mxu0 %v676
      %1083 = vmatmul.mubr.bf16.gmra.mxu0 %v675
      %v1084 = vpop.f32.mrf.mxu0
      %v1085 = vadd.f32 %v347, %v1084
      %v1086 = vpop.f32.mrf.mxu0
      %v1087 = vpop.f32.mrf.mxu0
      %v1088 = vadd.f32 %v347, %v1087
      %v1089 = vpop.f32.mrf.mxu0
      %1090 = vmatprep.mubr.bf16.mxu0 %v679
      %1091 = vmatmul.mubr.bf16.gmra.mxu0 %v678
      %v1092 = vpop.f32.mrf.mxu0
      %v1093 = vadd.f32 %v347, %v1092
      %v1094 = vpop.f32.mrf.mxu0
      %v1095 = vpop.f32.mrf.mxu0
      %v1096 = vadd.f32 %v347, %v1095
      %v1097 = vpop.f32.mrf.mxu0
      %1098 = vmatprep.mubr.bf16.mxu0 %v682
      %1099 = vmatmul.mubr.bf16.gmra.mxu0 %v681
      %v1100 = vpop.f32.mrf.mxu0
      %v1101 = vadd.f32 %v347, %v1100
      %v1102 = vpop.f32.mrf.mxu0
      %v1103 = vpop.f32.mrf.mxu0
      %v1104 = vadd.f32 %v347, %v1103
      %v1105 = vpop.f32.mrf.mxu0
      %1106 = vmatprep.mubr.bf16.mxu0 %v685
      %1107 = vmatmul.mubr.bf16.gmra.mxu0 %v684
      %v1108 = vpop.f32.mrf.mxu0
      %v1109 = vadd.f32 %v347, %v1108
      %v1110 = vpop.f32.mrf.mxu0
      %v1111 = vpop.f32.mrf.mxu0
      %v1112 = vadd.f32 %v347, %v1111
      %v1113 = vpop.f32.mrf.mxu0
      %1114 = vmatprep.mubr.bf16.mxu0 %v688
      %1115 = vmatmul.mubr.bf16.gmra.mxu0 %v687
      %v1116 = vpop.f32.mrf.mxu0
      %v1117 = vadd.f32 %v347, %v1116
      %v1118 = vpop.f32.mrf.mxu0
      %v1119 = vpop.f32.mrf.mxu0
      %v1120 = vadd.f32 %v347, %v1119
      %v1121 = vpop.f32.mrf.mxu0
      %1122 = vmatprep.mubr.bf16.mxu0 %v691
      %1123 = vmatmul.mubr.bf16.gmra.mxu0 %v690
      %v1124 = vpop.f32.mrf.mxu0
      %v1125 = vadd.f32 %v347, %v1124
      %v1126 = vpop.f32.mrf.mxu0
      %v1127 = vpop.f32.mrf.mxu0
      %v1128 = vadd.f32 %v347, %v1127
      %v1129 = vpop.f32.mrf.mxu0
      %1130 = vmatprep.mubr.bf16.mxu0 %v694
      %1131 = vmatmul.mubr.bf16.gmra.mxu0 %v693
      %v1132 = vpop.f32.mrf.mxu0
      %v1133 = vadd.f32 %v347, %v1132
      %v1134 = vpop.f32.mrf.mxu0
      %v1135 = vpop.f32.mrf.mxu0
      %v1136 = vadd.f32 %v347, %v1135
      %v1137 = vpop.f32.mrf.mxu0
      %1138 = vmatprep.mubr.bf16.mxu0 %v697
      %1139 = vmatmul.mubr.bf16.gmra.mxu0 %v696
      %v1140 = vpop.f32.mrf.mxu0
      %v1141 = vadd.f32 %v347, %v1140
      %v1142 = vpop.f32.mrf.mxu0
      %v1143 = vpop.f32.mrf.mxu0
      %v1144 = vadd.f32 %v347, %v1143
      %v1145 = vpop.f32.mrf.mxu0
      %1146 = vmatprep.mubr.bf16.mxu0 %v700
      %1147 = vmatmul.mubr.bf16.gmra.mxu0 %v699
      %v1148 = vpop.f32.mrf.mxu0
      %v1149 = vadd.f32 %v347, %v1148
      %v1150 = vpop.f32.mrf.mxu0
      %v1151 = vpop.f32.mrf.mxu0
      %v1152 = vadd.f32 %v347, %v1151
      %v1153 = vpop.f32.mrf.mxu0
      %1154 = vmatprep.mubr.bf16.mxu0 %v703
      %1155 = vmatmul.mubr.bf16.gmra.mxu0 %v702
      %v1156 = vpop.f32.mrf.mxu0
      %v1157 = vadd.f32 %v347, %v1156
      %v1158 = vpop.f32.mrf.mxu0
      %v1159 = vpop.f32.mrf.mxu0
      %v1160 = vadd.f32 %v347, %v1159
      %v1161 = vpop.f32.mrf.mxu0
      %1162 = vmatprep.mubr.bf16.mxu0 %v706
      %1163 = vmatmul.mubr.bf16.gmra.mxu0 %v705
      %v1164 = vpop.f32.mrf.mxu0
      %v1165 = vadd.f32 %v347, %v1164
      %v1166 = vpop.f32.mrf.mxu0
      %v1167 = vpop.f32.mrf.mxu0
      %v1168 = vadd.f32 %v347, %v1167
      %v1169 = vpop.f32.mrf.mxu0
      %1170 = vmatprep.mubr.bf16.mxu0 %v709
      %1171 = vmatmul.mubr.bf16.gmra.mxu0 %v708
      %v1172 = vpop.f32.mrf.mxu0
      %v1173 = vadd.f32 %v347, %v1172
      %v1174 = vpop.f32.mrf.mxu0
      %v1175 = vpop.f32.mrf.mxu0
      %v1176 = vadd.f32 %v347, %v1175
      %v1177 = vpop.f32.mrf.mxu0
      %1178 = vmatprep.mubr.bf16.mxu0 %v712
      %1179 = vmatmul.mubr.bf16.gmra.mxu0 %v711
      %v1180 = vpop.f32.mrf.mxu0
      %v1181 = vadd.f32 %v347, %v1180
      %v1182 = vpop.f32.mrf.mxu0
      %v1183 = vpop.f32.mrf.mxu0
      %v1184 = vadd.f32 %v347, %v1183
      %v1185 = vpop.f32.mrf.mxu0
      %1186 = vmatprep.mubr.bf16.mxu0 %v715
      %1187 = vmatmul.mubr.bf16.gmra.mxu0 %v714
      %v1188 = vpop.f32.mrf.mxu0
      %v1189 = vadd.f32 %v347, %v1188
      %v1190 = vpop.f32.mrf.mxu0
      %v1191 = vpop.f32.mrf.mxu0
      %v1192 = vadd.f32 %v347, %v1191
      %v1193 = vpop.f32.mrf.mxu0
      %1194 = vmatprep.mubr.bf16.mxu0 %v718
      %1195 = vmatmul.mubr.bf16.gmra.mxu0 %v717
      %v1196 = vpop.f32.mrf.mxu0
      %v1197 = vadd.f32 %v347, %v1196
      %v1198 = vpop.f32.mrf.mxu0
      %v1199 = vpop.f32.mrf.mxu0
      %v1200 = vadd.f32 %v347, %v1199
      %v1201 = vpop.f32.mrf.mxu0
      %1202 = vmatprep.mubr.bf16.mxu0 %v721
      %1203 = vmatmul.mubr.bf16.gmra.mxu0 %v720
      %v1204 = vpop.f32.mrf.mxu0
      %v1205 = vadd.f32 %v347, %v1204
      %v1206 = vpop.f32.mrf.mxu0
      %v1207 = vpop.f32.mrf.mxu0
      %v1208 = vadd.f32 %v347, %v1207
      %v1209 = vpop.f32.mrf.mxu0
      %1210 = vmatprep.mubr.bf16.mxu0 %v724
      %1211 = vmatmul.mubr.bf16.gmra.mxu0 %v723
      %v1212 = vpop.f32.mrf.mxu0
      %v1213 = vadd.f32 %v347, %v1212
      %v1214 = vpop.f32.mrf.mxu0
      %v1215 = vpop.f32.mrf.mxu0
      %v1216 = vadd.f32 %v347, %v1215
      %v1217 = vpop.f32.mrf.mxu0
      %1218 = vmatprep.mubr.bf16.mxu0 %v727
      %1219 = vmatmul.mubr.bf16.gmra.mxu0 %v726
      %v1220 = vpop.f32.mrf.mxu0
      %v1221 = vadd.f32 %v347, %v1220
      %v1222 = vpop.f32.mrf.mxu0
      %v1223 = vpop.f32.mrf.mxu0
      %v1224 = vadd.f32 %v347, %v1223
      %v1225 = vpop.f32.mrf.mxu0
      %1226 = vmatprep.mubr.bf16.mxu0 %v730
      %1227 = vmatmul.mubr.bf16.gmra.mxu0 %v729
      %v1228 = vpop.f32.mrf.mxu0
      %v1229 = vadd.f32 %v347, %v1228
      %v1230 = vpop.f32.mrf.mxu0
      %v1231 = vpop.f32.mrf.mxu0
      %v1232 = vadd.f32 %v347, %v1231
      %v1233 = vpop.f32.mrf.mxu0
      %1234 = vmatprep.mubr.bf16.mxu0 %v733
      %1235 = vmatmul.mubr.bf16.gmra.mxu0 %v732
      %v1236 = vpop.f32.mrf.mxu0
      %v1237 = vadd.f32 %v347, %v1236
      %v1238 = vpop.f32.mrf.mxu0
      %v1239 = vpop.f32.mrf.mxu0
      %v1240 = vadd.f32 %v347, %v1239
      %v1241 = vpop.f32.mrf.mxu0
      %1242 = vmatprep.mubr.bf16.mxu0 %v736
      %1243 = vmatmul.mubr.bf16.gmra.mxu0 %v735
      %v1244 = vpop.f32.mrf.mxu0
      %v1245 = vadd.f32 %v347, %v1244
      %v1246 = vpop.f32.mrf.mxu0
      %v1247 = vpop.f32.mrf.mxu0
      %v1248 = vadd.f32 %v347, %v1247
      %v1249 = vpop.f32.mrf.mxu0
      %1250 = vmatprep.mubr.bf16.mxu0 %v739
      %1251 = vmatmul.mubr.bf16.gmra.mxu0 %v738
      %v1252 = vpop.f32.mrf.mxu0
      %v1253 = vadd.f32 %v347, %v1252
      %v1254 = vpop.f32.mrf.mxu0
      %v1255 = vpop.f32.mrf.mxu0
      %v1256 = vadd.f32 %v347, %v1255
      %v1257 = vpop.f32.mrf.mxu0
      %1258 = vmatprep.mubr.bf16.mxu0 %v742
      %1259 = vmatmul.mubr.bf16.gmra.mxu0 %v741
      %v1260 = vpop.f32.mrf.mxu0
      %v1261 = vadd.f32 %v347, %v1260
      %v1262 = vpop.f32.mrf.mxu0
      %v1263 = vpop.f32.mrf.mxu0
      %v1264 = vadd.f32 %v347, %v1263
      %v1265 = vpop.f32.mrf.mxu0
      %1266 = vmatprep.mubr.bf16.mxu0 %v745
      %1267 = vmatmul.mubr.bf16.gmra.mxu0 %v744
      %v1268 = vpop.f32.mrf.mxu0
      %v1269 = vadd.f32 %v347, %v1268
      %v1270 = vpop.f32.mrf.mxu0
      %v1271 = vpop.f32.mrf.mxu0
      %v1272 = vadd.f32 %v347, %v1271
      %v1273 = vpop.f32.mrf.mxu0
      %1274 = vmatprep.mubr.bf16.mxu0 %v748
      %1275 = vmatmul.mubr.bf16.gmra.mxu0 %v747
      %v1276 = vpop.f32.mrf.mxu0
      %v1277 = vadd.f32 %v347, %v1276
      %v1278 = vpop.f32.mrf.mxu0
      %v1279 = vpop.f32.mrf.mxu0
      %v1280 = vadd.f32 %v347, %v1279
      %v1281 = vpop.f32.mrf.mxu0
      %1282 = vmatprep.mubr.bf16.mxu0 %v751
      %1283 = vmatmul.mubr.bf16.gmra.mxu0 %v750
      %v1284 = vpop.f32.mrf.mxu0
      %v1285 = vadd.f32 %v347, %v1284
      %v1286 = vpop.f32.mrf.mxu0
      %v1287 = vpop.f32.mrf.mxu0
      %v1288 = vadd.f32 %v347, %v1287
      %v1289 = vpop.f32.mrf.mxu0
      %1290 = vmatprep.mubr.bf16.mxu0 %v754
      %1291 = vmatmul.mubr.bf16.gmra.mxu0 %v753
      %v1292 = vpop.f32.mrf.mxu0
      %v1293 = vadd.f32 %v347, %v1292
      %v1294 = vpop.f32.mrf.mxu0
      %v1295 = vpop.f32.mrf.mxu0
      %v1296 = vadd.f32 %v347, %v1295
      %v1297 = vpop.f32.mrf.mxu0
      %1298 = vmatprep.mubr.bf16.mxu0 %v757
      %1299 = vmatmul.mubr.bf16.gmra.mxu0 %v756
      %v1300 = vpop.f32.mrf.mxu0
      %v1301 = vadd.f32 %v347, %v1300
      %v1302 = vpop.f32.mrf.mxu0
      %v1303 = vpop.f32.mrf.mxu0
      %v1304 = vadd.f32 %v347, %v1303
      %v1305 = vpop.f32.mrf.mxu0
      %1306 = vmatprep.mubr.bf16.mxu0 %v760
      %1307 = vmatmul.mubr.bf16.gmra.mxu0 %v759
      %v1308 = vpop.f32.mrf.mxu0
      %v1309 = vadd.f32 %v347, %v1308
      %v1310 = vpop.f32.mrf.mxu0
      %v1311 = vpop.f32.mrf.mxu0
      %v1312 = vadd.f32 %v347, %v1311
      %v1313 = vpop.f32.mrf.mxu0
      %1314 = vmatprep.mubr.bf16.mxu0 %v763
      %1315 = vmatmul.mubr.bf16.gmra.mxu0 %v762
      %v1316 = vpop.f32.mrf.mxu0
      %v1317 = vadd.f32 %v347, %v1316
      %v1318 = vpop.f32.mrf.mxu0
      %v1319 = vpop.f32.mrf.mxu0
      %v1320 = vadd.f32 %v347, %v1319
      %v1321 = vpop.f32.mrf.mxu0
      %1322 = vdwg.mxu0
      %1323 = vmatprep.subr.bf16.mxu0 0
      %1324 = vmatpush1.bf16.msra.mxu0 0
      %1325 = vmatprep.subr.bf16.mxu0 0
      %1326 = vmatpush1.bf16.msra.mxu0 0
      %1327 = vmatprep.subr.bf16.mxu0 0
      %1328 = vmatpush1.bf16.msra.mxu0 0
      %1329 = vmatprep.subr.bf16.mxu0 0
      %1330 = vmatpush1.bf16.msra.mxu0 0
      %1331 = vmatprep.subr.bf16.mxu0 0
      %1332 = vmatpush1.bf16.msra.mxu0 0
      %1333 = vmatprep.subr.bf16.mxu0 0
      %1334 = vmatpush1.bf16.msra.mxu0 0
      %1335 = vmatprep.subr.bf16.mxu0 0
      %1336 = vmatpush1.bf16.msra.mxu0 %v918
      %1337 = vmatprep.subr.bf16.mxu0 0
      %1338 = vmatpush1.bf16.msra.mxu0 %v917
      %1339 = vmatprep.subr.bf16.mxu0 0
      %1340 = vmatpush2.bf16.msra.mxu0 0
      %1341 = vmatprep.subr.bf16.mxu0 0
      %1342 = vmatpush2.bf16.msra.mxu0 0
      %1343 = vmatprep.subr.bf16.mxu0 0
      %1344 = vmatpush2.bf16.msra.mxu0 0
      %1345 = vmatprep.subr.bf16.mxu0 0
      %1346 = vmatpush2.bf16.msra.mxu0 0
      %1347 = vmatprep.subr.bf16.mxu0 0
      %1348 = vmatpush2.bf16.msra.mxu0 0
      %1349 = vmatprep.subr.bf16.mxu0 0
      %1350 = vmatpush2.bf16.msra.mxu0 0
      %1351 = vmatprep.subr.bf16.mxu0 0
      %1352 = vmatpush2.bf16.msra.mxu0 0
      %1353 = vmatprep.subr.bf16.mxu0 0
      %1354 = vmatpush2.bf16.msra.mxu0 0
      %1355 = vmatprep.mubr.bf16.mxu0 0
      %1356 = vmatmul.mubr.bf16.gmra.mxu0 %v939
      %v1357 = vpop.f32.mrf.mxu0
      %v1358 = vadd.f32 %v1069, %v1357
      %v1359 = vpop.f32.mrf.mxu0
      %v1360 = vpop.f32.mrf.mxu0
      %v1361 = vadd.f32 %v1072, %v1360
      %v1362 = vpop.f32.mrf.mxu0
      %1363 = vmatprep.mubr.bf16.mxu0 0
      %1364 = vmatmul.mubr.bf16.gmra.mxu0 %v942
      %v1365 = vpop.f32.mrf.mxu0
      %v1366 = vadd.f32 %v1077, %v1365
      %v1367 = vpop.f32.mrf.mxu0
      %v1368 = vpop.f32.mrf.mxu0
      %v1369 = vadd.f32 %v1080, %v1368
      %v1370 = vpop.f32.mrf.mxu0
      %1371 = vmatprep.mubr.bf16.mxu0 0
      %1372 = vmatmul.mubr.bf16.gmra.mxu0 %v945
      %v1373 = vpop.f32.mrf.mxu0
      %v1374 = vadd.f32 %v1085, %v1373
      %v1375 = vpop.f32.mrf.mxu0
      %v1376 = vpop.f32.mrf.mxu0
      %v1377 = vadd.f32 %v1088, %v1376
      %v1378 = vpop.f32.mrf.mxu0
      %1379 = vmatprep.mubr.bf16.mxu0 0
      %1380 = vmatmul.mubr.bf16.gmra.mxu0 %v948
      %v1381 = vpop.f32.mrf.mxu0
      %v1382 = vadd.f32 %v1093, %v1381
      %v1383 = vpop.f32.mrf.mxu0
      %v1384 = vpop.f32.mrf.mxu0
      %v1385 = vadd.f32 %v1096, %v1384
      %v1386 = vpop.f32.mrf.mxu0
      %1387 = vmatprep.mubr.bf16.mxu0 0
      %1388 = vmatmul.mubr.bf16.gmra.mxu0 %v951
      %v1389 = vpop.f32.mrf.mxu0
      %v1390 = vadd.f32 %v1101, %v1389
      %v1391 = vpop.f32.mrf.mxu0
      %v1392 = vpop.f32.mrf.mxu0
      %v1393 = vadd.f32 %v1104, %v1392
      %v1394 = vpop.f32.mrf.mxu0
      %1395 = vmatprep.mubr.bf16.mxu0 0
      %1396 = vmatmul.mubr.bf16.gmra.mxu0 %v954
      %v1397 = vpop.f32.mrf.mxu0
      %v1398 = vadd.f32 %v1109, %v1397
      %v1399 = vpop.f32.mrf.mxu0
      %v1400 = vpop.f32.mrf.mxu0
      %v1401 = vadd.f32 %v1112, %v1400
      %v1402 = vpop.f32.mrf.mxu0
      %1403 = vmatprep.mubr.bf16.mxu0 0
      %1404 = vmatmul.mubr.bf16.gmra.mxu0 %v957
      %v1405 = vpop.f32.mrf.mxu0
      %v1406 = vadd.f32 %v1117, %v1405
      %v1407 = vpop.f32.mrf.mxu0
      %v1408 = vpop.f32.mrf.mxu0
      %v1409 = vadd.f32 %v1120, %v1408
      %v1410 = vpop.f32.mrf.mxu0
      %1411 = vmatprep.mubr.bf16.mxu0 0
      %1412 = vmatmul.mubr.bf16.gmra.mxu0 %v960
      %v1413 = vpop.f32.mrf.mxu0
      %v1414 = vadd.f32 %v1125, %v1413
      %v1415 = vpop.f32.mrf.mxu0
      %v1416 = vpop.f32.mrf.mxu0
      %v1417 = vadd.f32 %v1128, %v1416
      %v1418 = vpop.f32.mrf.mxu0
      %1419 = vmatprep.mubr.bf16.mxu0 0
      %1420 = vmatmul.mubr.bf16.gmra.mxu0 %v963
      %v1421 = vpop.f32.mrf.mxu0
      %v1422 = vadd.f32 %v1133, %v1421
      %v1423 = vpop.f32.mrf.mxu0
      %v1424 = vpop.f32.mrf.mxu0
      %v1425 = vadd.f32 %v1136, %v1424
      %v1426 = vpop.f32.mrf.mxu0
      %1427 = vmatprep.mubr.bf16.mxu0 0
      %1428 = vmatmul.mubr.bf16.gmra.mxu0 %v966
      %v1429 = vpop.f32.mrf.mxu0
      %v1430 = vadd.f32 %v1141, %v1429
      %v1431 = vpop.f32.mrf.mxu0
      %v1432 = vpop.f32.mrf.mxu0
      %v1433 = vadd.f32 %v1144, %v1432
      %v1434 = vpop.f32.mrf.mxu0
      %1435 = vmatprep.mubr.bf16.mxu0 0
      %1436 = vmatmul.mubr.bf16.gmra.mxu0 %v969
      %v1437 = vpop.f32.mrf.mxu0
      %v1438 = vadd.f32 %v1149, %v1437
      %v1439 = vpop.f32.mrf.mxu0
      %v1440 = vpop.f32.mrf.mxu0
      %v1441 = vadd.f32 %v1152, %v1440
      %v1442 = vpop.f32.mrf.mxu0
      %1443 = vmatprep.mubr.bf16.mxu0 0
      %1444 = vmatmul.mubr.bf16.gmra.mxu0 %v972
      %v1445 = vpop.f32.mrf.mxu0
      %v1446 = vadd.f32 %v1157, %v1445
      %v1447 = vpop.f32.mrf.mxu0
      %v1448 = vpop.f32.mrf.mxu0
      %v1449 = vadd.f32 %v1160, %v1448
      %v1450 = vpop.f32.mrf.mxu0
      %1451 = vmatprep.mubr.bf16.mxu0 0
      %1452 = vmatmul.mubr.bf16.gmra.mxu0 %v975
      %v1453 = vpop.f32.mrf.mxu0
      %v1454 = vadd.f32 %v1165, %v1453
      %v1455 = vpop.f32.mrf.mxu0
      %v1456 = vpop.f32.mrf.mxu0
      %v1457 = vadd.f32 %v1168, %v1456
      %v1458 = vpop.f32.mrf.mxu0
      %1459 = vmatprep.mubr.bf16.mxu0 0
      %1460 = vmatmul.mubr.bf16.gmra.mxu0 %v978
      %v1461 = vpop.f32.mrf.mxu0
      %v1462 = vadd.f32 %v1173, %v1461
      %v1463 = vpop.f32.mrf.mxu0
      %v1464 = vpop.f32.mrf.mxu0
      %v1465 = vadd.f32 %v1176, %v1464
      %v1466 = vpop.f32.mrf.mxu0
      %1467 = vmatprep.mubr.bf16.mxu0 0
      %1468 = vmatmul.mubr.bf16.gmra.mxu0 %v981
      %v1469 = vpop.f32.mrf.mxu0
      %v1470 = vadd.f32 %v1181, %v1469
      %v1471 = vpop.f32.mrf.mxu0
      %v1472 = vpop.f32.mrf.mxu0
      %v1473 = vadd.f32 %v1184, %v1472
      %v1474 = vpop.f32.mrf.mxu0
      %1475 = vmatprep.mubr.bf16.mxu0 0
      %1476 = vmatmul.mubr.bf16.gmra.mxu0 %v984
      %v1477 = vpop.f32.mrf.mxu0
      %v1478 = vadd.f32 %v1189, %v1477
      %v1479 = vpop.f32.mrf.mxu0
      %v1480 = vpop.f32.mrf.mxu0
      %v1481 = vadd.f32 %v1192, %v1480
      %v1482 = vpop.f32.mrf.mxu0
      %1483 = vmatprep.mubr.bf16.mxu0 0
      %1484 = vmatmul.mubr.bf16.gmra.mxu0 %v987
      %v1485 = vpop.f32.mrf.mxu0
      %v1486 = vadd.f32 %v1197, %v1485
      %v1487 = vpop.f32.mrf.mxu0
      %v1488 = vpop.f32.mrf.mxu0
      %v1489 = vadd.f32 %v1200, %v1488
      %v1490 = vpop.f32.mrf.mxu0
      %1491 = vmatprep.mubr.bf16.mxu0 0
      %1492 = vmatmul.mubr.bf16.gmra.mxu0 %v990
      %v1493 = vpop.f32.mrf.mxu0
      %v1494 = vadd.f32 %v1205, %v1493
      %v1495 = vpop.f32.mrf.mxu0
      %v1496 = vpop.f32.mrf.mxu0
      %v1497 = vadd.f32 %v1208, %v1496
      %v1498 = vpop.f32.mrf.mxu0
      %1499 = vmatprep.mubr.bf16.mxu0 0
      %1500 = vmatmul.mubr.bf16.gmra.mxu0 %v993
      %v1501 = vpop.f32.mrf.mxu0
      %v1502 = vadd.f32 %v1213, %v1501
      %v1503 = vpop.f32.mrf.mxu0
      %v1504 = vpop.f32.mrf.mxu0
      %v1505 = vadd.f32 %v1216, %v1504
      %v1506 = vpop.f32.mrf.mxu0
      %1507 = vmatprep.mubr.bf16.mxu0 0
      %1508 = vmatmul.mubr.bf16.gmra.mxu0 %v996
      %v1509 = vpop.f32.mrf.mxu0
      %v1510 = vadd.f32 %v1221, %v1509
      %v1511 = vpop.f32.mrf.mxu0
      %v1512 = vpop.f32.mrf.mxu0
      %v1513 = vadd.f32 %v1224, %v1512
      %v1514 = vpop.f32.mrf.mxu0
      %1515 = vmatprep.mubr.bf16.mxu0 0
      %1516 = vmatmul.mubr.bf16.gmra.mxu0 %v999
      %v1517 = vpop.f32.mrf.mxu0
      %v1518 = vadd.f32 %v1229, %v1517
      %v1519 = vpop.f32.mrf.mxu0
      %v1520 = vpop.f32.mrf.mxu0
      %v1521 = vadd.f32 %v1232, %v1520
      %v1522 = vpop.f32.mrf.mxu0
      %1523 = vmatprep.mubr.bf16.mxu0 0
      %1524 = vmatmul.mubr.bf16.gmra.mxu0 %v1002
      %v1525 = vpop.f32.mrf.mxu0
      %v1526 = vadd.f32 %v1237, %v1525
      %v1527 = vpop.f32.mrf.mxu0
      %v1528 = vpop.f32.mrf.mxu0
      %v1529 = vadd.f32 %v1240, %v1528
      %v1530 = vpop.f32.mrf.mxu0
      %1531 = vmatprep.mubr.bf16.mxu0 0
      %1532 = vmatmul.mubr.bf16.gmra.mxu0 %v1005
      %v1533 = vpop.f32.mrf.mxu0
      %v1534 = vadd.f32 %v1245, %v1533
      %v1535 = vpop.f32.mrf.mxu0
      %v1536 = vpop.f32.mrf.mxu0
      %v1537 = vadd.f32 %v1248, %v1536
      %v1538 = vpop.f32.mrf.mxu0
      %1539 = vmatprep.mubr.bf16.mxu0 0
      %1540 = vmatmul.mubr.bf16.gmra.mxu0 %v1008
      %v1541 = vpop.f32.mrf.mxu0
      %v1542 = vadd.f32 %v1253, %v1541
      %v1543 = vpop.f32.mrf.mxu0
      %v1544 = vpop.f32.mrf.mxu0
      %v1545 = vadd.f32 %v1256, %v1544
      %v1546 = vpop.f32.mrf.mxu0
      %1547 = vmatprep.mubr.bf16.mxu0 0
      %1548 = vmatmul.mubr.bf16.gmra.mxu0 %v1011
      %v1549 = vpop.f32.mrf.mxu0
      %v1550 = vadd.f32 %v1261, %v1549
      %v1551 = vpop.f32.mrf.mxu0
      %v1552 = vpop.f32.mrf.mxu0
      %v1553 = vadd.f32 %v1264, %v1552
      %v1554 = vpop.f32.mrf.mxu0
      %1555 = vmatprep.mubr.bf16.mxu0 0
      %1556 = vmatmul.mubr.bf16.gmra.mxu0 %v1014
      %v1557 = vpop.f32.mrf.mxu0
      %v1558 = vadd.f32 %v1269, %v1557
      %v1559 = vpop.f32.mrf.mxu0
      %v1560 = vpop.f32.mrf.mxu0
      %v1561 = vadd.f32 %v1272, %v1560
      %v1562 = vpop.f32.mrf.mxu0
      %1563 = vmatprep.mubr.bf16.mxu0 0
      %1564 = vmatmul.mubr.bf16.gmra.mxu0 %v1017
      %v1565 = vpop.f32.mrf.mxu0
      %v1566 = vadd.f32 %v1277, %v1565
      %v1567 = vpop.f32.mrf.mxu0
      %v1568 = vpop.f32.mrf.mxu0
      %v1569 = vadd.f32 %v1280, %v1568
      %v1570 = vpop.f32.mrf.mxu0
      %1571 = vmatprep.mubr.bf16.mxu0 0
      %1572 = vmatmul.mubr.bf16.gmra.mxu0 %v1020
      %v1573 = vpop.f32.mrf.mxu0
      %v1574 = vadd.f32 %v1285, %v1573
      %v1575 = vpop.f32.mrf.mxu0
      %v1576 = vpop.f32.mrf.mxu0
      %v1577 = vadd.f32 %v1288, %v1576
      %v1578 = vpop.f32.mrf.mxu0
      %1579 = vmatprep.mubr.bf16.mxu0 0
      %1580 = vmatmul.mubr.bf16.gmra.mxu0 %v1023
      %v1581 = vpop.f32.mrf.mxu0
      %v1582 = vadd.f32 %v1293, %v1581
      %v1583 = vpop.f32.mrf.mxu0
      %v1584 = vpop.f32.mrf.mxu0
      %v1585 = vadd.f32 %v1296, %v1584
      %v1586 = vpop.f32.mrf.mxu0
      %1587 = vmatprep.mubr.bf16.mxu0 0
      %1588 = vmatmul.mubr.bf16.gmra.mxu0 %v1026
      %v1589 = vpop.f32.mrf.mxu0
      %v1590 = vadd.f32 %v1301, %v1589
      %v1591 = vpop.f32.mrf.mxu0
      %v1592 = vpop.f32.mrf.mxu0
      %v1593 = vadd.f32 %v1304, %v1592
      %v1594 = vpop.f32.mrf.mxu0
      %1595 = vmatprep.mubr.bf16.mxu0 0
      %1596 = vmatmul.mubr.bf16.gmra.mxu0 %v1029
      %v1597 = vpop.f32.mrf.mxu0
      %v1598 = vadd.f32 %v1309, %v1597
      %v1599 = vpop.f32.mrf.mxu0
      %v1600 = vpop.f32.mrf.mxu0
      %v1601 = vadd.f32 %v1312, %v1600
      %v1602 = vpop.f32.mrf.mxu0
      %1603 = vmatprep.mubr.bf16.mxu0 0
      %1604 = vmatmul.mubr.bf16.gmra.mxu0 %v1032
      %v1605 = vpop.f32.mrf.mxu0
      %v1606 = vadd.f32 %v1317, %v1605
      %v1607 = vpop.f32.mrf.mxu0
      %v1608 = vpop.f32.mrf.mxu0
      %v1609 = vadd.f32 %v1320, %v1608
      %v1610 = vpop.f32.mrf.mxu0
      %1611 = vdwg.mxu0
      %1612 = vst [vmem:[%s175] sm:$0xff] %v1358
      %1613 = vst [vmem:[%s175 + $0x8] sm:$0xff] %v1361
      %1614 = vst [vmem:[%s175 + $0x10] sm:$0xff] %v1366
      %1615 = vst [vmem:[%s175 + $0x18] sm:$0xff] %v1369
      %1616 = vst [vmem:[%s175 + $0x20] sm:$0xff] %v1374
      %1617 = vst [vmem:[%s175 + $0x28] sm:$0xff] %v1377
      %1618 = vst [vmem:[%s175 + $0x30] sm:$0xff] %v1382
      %1619 = vst [vmem:[%s175 + $0x38] sm:$0xff] %v1385
      %1620 = vst [vmem:[%s175 + $0x40] sm:$0xff] %v1390
      %1621 = vst [vmem:[%s175 + $0x48] sm:$0xff] %v1393
      %1622 = vst [vmem:[%s175 + $0x50] sm:$0xff] %v1398
      %1623 = vst [vmem:[%s175 + $0x58] sm:$0xff] %v1401
      %1624 = vst [vmem:[%s175 + $0x60] sm:$0xff] %v1406
      %1625 = vst [vmem:[%s175 + $0x68] sm:$0xff] %v1409
      %1626 = vst [vmem:[%s175 + $0x70] sm:$0xff] %v1414
      %1627 = vst [vmem:[%s175 + $0x78] sm:$0xff] %v1417
      %1628 = vst [vmem:[%s175 + $0x80] sm:$0xff] %v1422
      %1629 = vst [vmem:[%s175 + $0x88] sm:$0xff] %v1425
      %1630 = vst [vmem:[%s175 + $0x90] sm:$0xff] %v1430
      %1631 = vst [vmem:[%s175 + $0x98] sm:$0xff] %v1433
      %1632 = vst [vmem:[%s175 + $0xa0] sm:$0xff] %v1438
      %1633 = vst [vmem:[%s175 + $0xa8] sm:$0xff] %v1441
      %1634 = vst [vmem:[%s175 + $0xb0] sm:$0xff] %v1446
      %1635 = vst [vmem:[%s175 + $0xb8] sm:$0xff] %v1449
      %1636 = vst [vmem:[%s175 + $0xc0] sm:$0xff] %v1454
      %1637 = vst [vmem:[%s175 + $0xc8] sm:$0xff] %v1457
      %1638 = vst [vmem:[%s175 + $0xd0] sm:$0xff] %v1462
      %1639 = vst [vmem:[%s175 + $0xd8] sm:$0xff] %v1465
      %1640 = vst [vmem:[%s175 + $0xe0] sm:$0xff] %v1470
      %1641 = vst [vmem:[%s175 + $0xe8] sm:$0xff] %v1473
      %1642 = vst [vmem:[%s175 + $0xf0] sm:$0xff] %v1478
      %1643 = vst [vmem:[%s175 + $0xf8] sm:$0xff] %v1481
      %1644 = vst [vmem:[%s175 + $0x100] sm:$0xff] %v1486
      %1645 = vst [vmem:[%s175 + $0x108] sm:$0xff] %v1489
      %1646 = vst [vmem:[%s175 + $0x110] sm:$0xff] %v1494
      %1647 = vst [vmem:[%s175 + $0x118] sm:$0xff] %v1497
      %1648 = vst [vmem:[%s175 + $0x120] sm:$0xff] %v1502
      %1649 = vst [vmem:[%s175 + $0x128] sm:$0xff] %v1505
      %1650 = vst [vmem:[%s175 + $0x130] sm:$0xff] %v1510
      %1651 = vst [vmem:[%s175 + $0x138] sm:$0xff] %v1513
      %1652 = vst [vmem:[%s175 + $0x140] sm:$0xff] %v1518
      %1653 = vst [vmem:[%s175 + $0x148] sm:$0xff] %v1521
      %1654 = vst [vmem:[%s175 + $0x150] sm:$0xff] %v1526
      %1655 = vst [vmem:[%s175 + $0x158] sm:$0xff] %v1529
      %1656 = vst [vmem:[%s175 + $0x160] sm:$0xff] %v1534
      %1657 = vst [vmem:[%s175 + $0x168] sm:$0xff] %v1537
      %1658 = vst [vmem:[%s175 + $0x170] sm:$0xff] %v1542
      %1659 = vst [vmem:[%s175 + $0x178] sm:$0xff] %v1545
      %1660 = vst [vmem:[%s175 + $0x180] sm:$0xff] %v1550
      %1661 = vst [vmem:[%s175 + $0x188] sm:$0xff] %v1553
      %1662 = vst [vmem:[%s175 + $0x190] sm:$0xff] %v1558
      %1663 = vst [vmem:[%s175 + $0x198] sm:$0xff] %v1561
      %1664 = vst [vmem:[%s175 + $0x1a0] sm:$0xff] %v1566
      %1665 = vst [vmem:[%s175 + $0x1a8] sm:$0xff] %v1569
      %1666 = vst [vmem:[%s175 + $0x1b0] sm:$0xff] %v1574
      %1667 = vst [vmem:[%s175 + $0x1b8] sm:$0xff] %v1577
      %1668 = vst [vmem:[%s175 + $0x1c0] sm:$0xff] %v1582
      %1669 = vst [vmem:[%s175 + $0x1c8] sm:$0xff] %v1585
      %1670 = vst [vmem:[%s175 + $0x1d0] sm:$0xff] %v1590
      %1671 = vst [vmem:[%s175 + $0x1d8] sm:$0xff] %v1593
      %1672 = vst [vmem:[%s175 + $0x1e0] sm:$0xff] %v1598
      %1673 = vst [vmem:[%s175 + $0x1e8] sm:$0xff] %v1601
      %1674 = vst [vmem:[%s175 + $0x1f0] sm:$0xff] %v1606
      %1675 = vst [vmem:[%s175 + $0x1f8] sm:$0xff] %v1609
      %s1676 = smul.u32 64, %s14
      %p1677 = scmp.lt.s32.totalorder %s1676, 255
      %s1678 = scalar_select %p1677, %s1676, 255
      %s1679 = smul.addr %s1678, 8
      %s1680 = scalar_lea.vmem %s3, %s1679
      // Predicated region
      $region33: #{_lambda_.21} parent=31 // pred_check
        %p1681 = pneg %p100
      $region34: #{_lambda_.21} parent=31 // pred_check_branch
        %1683 = sbr.rel (%p1681) target = $region36
      $region35: #{_lambda_.21} parent=31 // pred_region
        %s1684 = smul.u32 64, %s14
      $region36: #{_lambda_.21} parent=31 // pred_fallthru
        _
    $region32: #{_lambda_.21} parent=5 // pred_fallthru
      _
    %p1685 = scmp.le.s32.totalorder 2, %s9
    // Predicated region
    $region37: #{_lambda_.21} parent=5 // pred_check
      %p1686 = pneg %p1685
    $region38: #{_lambda_.21} parent=5 // pred_check_branch
      %1688 = sbr.rel (%p1686) target = $region40
    $region39: #{_lambda_.21} parent=5 // pred_region
      %s1689 = ssub.s32 %s9, 2
      // Predicated region
      $region41: #{_lambda_.21} parent=39 // pred_check
        %p1690 = pneg %p106
      $region42: #{_lambda_.21} parent=39 // pred_check_branch
        %1692 = sbr.rel (%p1690) target = $region44
      $region43: #{_lambda_.21} parent=39 // pred_region
        %s1693 = smul.u32 64, %s15
        %p1694 = scmp.lt.s32.totalorder %s1693, 255
        %s1695 = scalar_select %p1694, %s1693, 255
        %s1696 = smul.addr %s1695, 8
        %s1697 = scalar_lea.vmem %s3, %s1696
      $region44: #{_lambda_.21} parent=39 // pred_fallthru
        _
    $region40: #{_lambda_.21} parent=5 // pred_fallthru
      _
  $region6: #{_lambda_.21} parent=0 // loop_footer
    %s13 = sadd.s32 1, %s9
  $region7: #{_lambda_.21} parent=0 // loop_footer_branch
    %8 = sbr.rel target = $region3
  $region8: #{_lambda_.21} parent=0 // loop_exit
    _

</llo_original>
